<compile_context>
chip_gen: v7x
topology: tpu7x:2x2x1
jax: 0.10.0
libtpu: 0.0.40
codegen_flags: <defaults>
</compile_context>

<pallas_src>
import math

import jax
import jax.numpy as jnp
from jax.experimental import pallas as pl
from jax.experimental.pallas import tpu as pltpu

# ----------------------------- tiny config ---------------------------------
VOCAB = 128
HIDDEN = 32
N_LAYERS = 4          # >= 4 so hidden_states[-4:] are the last 4 encoder layers
N_HEADS = 4
HEAD_DIM = HIDDEN // N_HEADS
FFN = 64
N_LABELS = 2
MAX_SEQ = 16
EPS = 1e-5
LOGIT_PAD = 128       # lane-dense logits store width (sliced back to N_LABELS)


# --------------------------- in-kernel helpers ------------------------------
def _layernorm(x, g, b):
    mu = jnp.mean(x, axis=-1, keepdims=True)
    var = jnp.mean(jnp.square(x - mu), axis=-1, keepdims=True)
    return (x - mu) * jax.lax.rsqrt(var + EPS) * g + b


def _gelu(x):
    # TODO(synk): HF RoBERTa uses exact erf-GELU; tanh approximation keeps the
    # whole op on the VPU/EUP and is guaranteed to lower in Mosaic.
    c = math.sqrt(2.0 / math.pi)
    return 0.5 * x * (1.0 + jnp.tanh(c * (x + 0.044715 * x * x * x)))


def _split_heads(x, base):
    """(S, HIDDEN) lane group starting at `base` -> (N_HEADS, S, HEAD_DIM).

    Built with leading-axis stacking only (no lane reshapes / transposes),
    so it lowers cheaply and feeds leading-batch dot_generals.
    """
    return jnp.stack(
        [x[:, base + h * HEAD_DIM: base + (h + 1) * HEAD_DIM]
         for h in range(N_HEADS)],
        axis=0)


# ------------------------------ fused kernel --------------------------------
def _fused_kernel(nodes_ref, mask_ref, word_emb_ref, pos_type_ref,
                  wqkv_ref, woh_ref, w1_ref, w2_ref, lvec_ref,
                  cls_w_ref, outw_ref, misc_ref,
                  logits_ref, emb_out_ref):
    """Embedding + full encoder stack + classification head for one example."""
    S = nodes_ref.shape[1]
    scale = 1.0 / math.sqrt(HEAD_DIM)

    # ---- token embedding in-kernel: one-hot (S, VOCAB) @ table on the MXU ----
    ids = nodes_ref[0]                                              # (S, 1) int32
    onehot = jnp.where(
        ids == jax.lax.broadcasted_iota(jnp.int32, (S, VOCAB), 1),
        1.0, 0.0).astype(jnp.bfloat16)                              # (S, VOCAB)
    x = jnp.dot(onehot, word_emb_ref[...],
                preferred_element_type=jnp.float32) + pos_type_ref[...]
    # TODO(synk): HF RoBERTa offsets position ids by padding_idx+1 and skips
    # pad tokens; simple 0..S-1 positions are used here (synthetic weights).
    h = _layernorm(x, misc_ref[0:1, :HIDDEN], misc_ref[1:2, :HIDDEN])

    # Additive key-side mask bias, hoisted and pre-broadcast ONCE to the full
    # (N_HEADS, S, S) score shape (no per-layer re-broadcast on the VPU).
    maskf = mask_ref[0].astype(jnp.float32)                         # (1, S)
    bias = jnp.broadcast_to(((1.0 - maskf) * -1e9)[None, :, :],
                            (N_HEADS, S, S))

    for l in range(N_LAYERS):
        vec = lvec_ref[l]                                           # (8, 3*HIDDEN)
        bqkv = vec[0:1, :]
        bo = vec[1:2, :HIDDEN]
        ln1g = vec[2:3, :HIDDEN]
        ln1b = vec[3:4, :HIDDEN]
        b1 = vec[4:5, :FFN]
        b2 = vec[5:6, :HIDDEN]
        ln2g = vec[6:7, :HIDDEN]
        ln2b = vec[7:8, :HIDDEN]

        # --- fused QKV projection: one (S,H)x(H,3H) bf16 MXU matmul ---
        qkv = jnp.dot(h.astype(jnp.bfloat16), wqkv_ref[l],
                      preferred_element_type=jnp.float32) + bqkv    # (S, 3H)

        # --- all heads at once: leading-batch dot_generals (no head loop) ---
        qh = _split_heads(qkv, 0)                                   # (NH, S, HD)
        kh = _split_heads(qkv, HIDDEN)
        vh = _split_heads(qkv, 2 * HIDDEN)
        s = jax.lax.dot_general(
            qh, kh, (((2,), (2,)), ((0,), (0,))),
            preferred_element_type=jnp.float32) * scale + bias      # (NH, S, S)
        s = s - jnp.max(s, axis=-1, keepdims=True)
        p = jnp.exp(s)
        p = p * pl.reciprocal(jnp.sum(p, axis=-1, keepdims=True), approx=True)
        o = jax.lax.dot_general(
            p, vh, (((2,), (1,)), ((0,), (0,))),
            preferred_element_type=jnp.float32)                     # (NH, S, HD)

        # Output projection done per-head as a batched matmul against the
        # per-head-reshaped wo, then reduced over heads: avoids transposing
        # the head axis back into lanes / any lane concat.
        proj = jax.lax.dot_general(
            o.astype(jnp.bfloat16), woh_ref[l], (((2,), (1,)), ((0,), (0,))),
            preferred_element_type=jnp.float32)                     # (NH, S, H)
        attn_out = jnp.sum(proj, axis=0) + bo                       # (S, H)
        h = _layernorm(attn_out + h, ln1g, ln1b)

        # --- feed forward ---
        ffn = _gelu(jnp.dot(h.astype(jnp.bfloat16), w1_ref[l],
                            preferred_element_type=jnp.float32) + b1)
        ffn_out = jnp.dot(ffn.astype(jnp.bfloat16), w2_ref[l],
                          preferred_element_type=jnp.float32) + b2
        h = _layernorm(ffn_out + h, ln2g, ln2b)

        # hidden_states[-4:]: write straight into the lane-dense output tile.
        if l >= N_LAYERS - 4:
            j = l - (N_LAYERS - 4)
            emb_out_ref[0, :, j * HIDDEN:(j + 1) * HIDDEN] = h

    # RobertaClassificationHead on the <s> token: dense + tanh -> out_proj.
    # out_proj weights are zero-padded to 128 lanes so the store is lane-dense.
    cls = h[0:1, :]
    hcls = jnp.tanh(jnp.dot(cls.astype(jnp.bfloat16), cls_w_ref[...],
                            preferred_element_type=jnp.float32)
                    + misc_ref[2:3, :HIDDEN])
    logits = jnp.dot(hcls.astype(jnp.bfloat16), outw_ref[...],
                     preferred_element_type=jnp.float32) + misc_ref[3:4, :]
    logits_ref[0] = logits                                          # (1, 128)


# ------------------------------ parameters ----------------------------------
def init_params(key):
    ks = jax.random.split(key, 9)

    def normal(k, shape, scale=0.02):
        return scale * jax.random.normal(k, shape, dtype=jnp.float32)

    return {
        "word_emb": normal(ks[0], (VOCAB, HIDDEN)),
        "pos_emb": normal(ks[1], (MAX_SEQ, HIDDEN)),
        "type_emb": normal(ks[2], (1, HIDDEN)),
        "emb_ln_g": jnp.ones((1, HIDDEN), jnp.float32),
        "emb_ln_b": jnp.zeros((1, HIDDEN), jnp.float32),
        # Per-layer weights stacked on a leading axis, QKV fused along N.
        "wqkv": normal(ks[3], (N_LAYERS, HIDDEN, 3 * HIDDEN)),
        "bqkv": jnp.zeros((N_LAYERS, 1, 3 * HIDDEN), jnp.float32),
        "wo": normal(ks[4], (N_LAYERS, HIDDEN, HIDDEN)),
        "bo": jnp.zeros((N_LAYERS, 1, HIDDEN), jnp.float32),
        "ln1_g": jnp.ones((N_LAYERS, 1, HIDDEN), jnp.float32),
        "ln1_b": jnp.zeros((N_LAYERS, 1, HIDDEN), jnp.float32),
        "w1": normal(ks[5], (N_LAYERS, HIDDEN, FFN)),
        "b1": jnp.zeros((N_LAYERS, 1, FFN), jnp.float32),
        "w2": normal(ks[6], (N_LAYERS, FFN, HIDDEN)),
        "b2": jnp.zeros((N_LAYERS, 1, HIDDEN), jnp.float32),
        "ln2_g": jnp.ones((N_LAYERS, 1, HIDDEN), jnp.float32),
        "ln2_b": jnp.zeros((N_LAYERS, 1, HIDDEN), jnp.float32),
        "cls_w": normal(ks[7], (HIDDEN, HIDDEN)),
        "cls_b": jnp.zeros((1, HIDDEN), jnp.float32),
        "out_w": normal(ks[8], (HIDDEN, N_LABELS)),
        "out_b": jnp.zeros((1, N_LABELS), jnp.float32),
    }


def pack_params(p):
    """Pack natural params into the kernel's resident-weight operands (once)."""
    bf16 = jnp.bfloat16

    def pad_last(x, width):
        return jnp.pad(x, [(0, 0)] * (x.ndim - 1) + [(0, width - x.shape[-1])])

    # Per-layer small vectors -> one (N_LAYERS, 8, 3*HIDDEN) array: rows are
    # [bqkv, bo, ln1_g, ln1_b, b1, b2, ln2_g, ln2_b]  (1 DMA instead of 8).
    lvec = jnp.concatenate(
        [pad_last(p[n], 3 * HIDDEN) for n in
         ("bqkv", "bo", "ln1_g", "ln1_b", "b1", "b2", "ln2_g", "ln2_b")],
        axis=1)

    # Embedding-LN + head biases -> one (4, 128) array:
    # rows [emb_ln_g, emb_ln_b, cls_b, out_b(padded)].
    misc = jnp.concatenate(
        [pad_last(p[n], LOGIT_PAD)
         for n in ("emb_ln_g", "emb_ln_b", "cls_b", "out_b")],
        axis=0)

    return (
        p["word_emb"].astype(bf16),                                  # (VOCAB, H)
        (p["pos_emb"] + p["type_emb"]).astype(jnp.float32),          # (MAX_SEQ, H)
        p["wqkv"].astype(bf16),                                      # (L, H, 3H)
        p["wo"].reshape(N_LAYERS, N_HEADS, HEAD_DIM, HIDDEN).astype(bf16),
        p["w1"].astype(bf16),                                        # (L, H, FFN)
        p["w2"].astype(bf16),                                        # (L, FFN, H)
        lvec,                                                        # (L, 8, 3H) f32
        p["cls_w"].astype(bf16),                                     # (H, H)
        pad_last(p["out_w"], LOGIT_PAD).astype(bf16),                # (H, 128)
        misc,                                                        # (4, 128) f32
    )


def _const_spec(arr):
    zeros = (0,) * arr.ndim
    return pl.BlockSpec(arr.shape, lambda b, _z=zeros: _z)


# ------------------------------ forward pass ---------------------------------
@jax.jit
def e2e_bertweet_forward(packed, nodes, mask):
    """Returns (logits, embedding) where embedding = concat of last 4 hidden states."""
    B, S = nodes.shape
    (word_emb, pos_type, wqkv, woh, w1, w2, lvec, cls_w, out_w, misc) = packed

    nodes3 = nodes.astype(jnp.int32).reshape(B, S, 1)
    mask3 = mask.astype(jnp.int32).reshape(B, 1, S)

    in_specs = [
        pl.BlockSpec((1, S, 1), lambda b: (b, 0, 0)),       # token ids
        pl.BlockSpec((1, 1, S), lambda b: (b, 0, 0)),       # attention mask
        _const_spec(word_emb),                               # embedding table
        pl.BlockSpec((S, HIDDEN), lambda b: (0, 0)),         # pos+type rows [0,S)
        _const_spec(wqkv), _const_spec(woh), _const_spec(w1), _const_spec(w2),
        _const_spec(lvec), _const_spec(cls_w), _const_spec(out_w),
        _const_spec(misc),
    ]
    out_specs = (pl.BlockSpec((1, 1, LOGIT_PAD), lambda b: (b, 0, 0)),
                 pl.BlockSpec((1, S, 4 * HIDDEN), lambda b: (b, 0, 0)))
    out_shape = (jax.ShapeDtypeStruct((B, 1, LOGIT_PAD), jnp.float32),
                 jax.ShapeDtypeStruct((B, S, 4 * HIDDEN), jnp.float32))

    logits_pad, embedding = pl.pallas_call(
        _fused_kernel,
        grid=(B,),
        in_specs=in_specs,
        out_specs=out_specs,
        out_shape=out_shape,
        compiler_params=pltpu.CompilerParams(
            dimension_semantics=("parallel",)),   # one example per TC on v7x
    )(nodes3, mask3, word_emb, pos_type, wqkv, woh, w1, w2, lvec, cls_w,
      out_w, misc)

    return logits_pad[:, 0, :N_LABELS], embedding


# ----------------------------------- main ------------------------------------
if __name__ == "__main__":
    key = jax.random.PRNGKey(0)
    pkey, nkey = jax.random.split(key)
    params = init_params(pkey)
    packed = pack_params(params)

    B, S = 2, 8
    nodes = jax.random.randint(nkey, (B, S), 0, VOCAB, dtype=jnp.int32)
    mask = jnp.ones((B, S), dtype=jnp.int32).at[1, 6:].set(0)   # pad tail of seq 1

    logits, embedding = e2e_bertweet_forward(packed, nodes, mask)
    jax.block_until_ready((logits, embedding))

    assert logits.shape == (B, N_LABELS)
    assert embedding.shape == (B, S, 4 * HIDDEN)
    assert bool(jnp.all(jnp.isfinite(logits)))
    assert bool(jnp.all(jnp.isfinite(embedding)))
    print("KERNEL_OK")
</pallas_src>

<mosaic_0001>
module attributes {stable_mosaic.version = 11 : i64} {
  func.func @_fused_kernel(%arg0: i32, %arg1: memref<1x8x1xi32, #tpu.memory_space<vmem>>, %arg2: memref<1x1x8xi32, #tpu.memory_space<vmem>>, %arg3: memref<128x32xbf16, #tpu.memory_space<vmem>>, %arg4: memref<8x32xf32, #tpu.memory_space<vmem>>, %arg5: memref<4x32x96xbf16, #tpu.memory_space<vmem>>, %arg6: memref<4x4x8x32xbf16, #tpu.memory_space<vmem>>, %arg7: memref<4x32x64xbf16, #tpu.memory_space<vmem>>, %arg8: memref<4x64x32xbf16, #tpu.memory_space<vmem>>, %arg9: memref<4x8x96xf32, #tpu.memory_space<vmem>>, %arg10: memref<32x32xbf16, #tpu.memory_space<vmem>>, %arg11: memref<32x128xbf16, #tpu.memory_space<vmem>>, %arg12: memref<4x128xf32, #tpu.memory_space<vmem>>, %arg13: memref<1x1x128xf32, #tpu.memory_space<vmem>>, %arg14: memref<1x8x128xf32, #tpu.memory_space<vmem>>) attributes {dimension_semantics = [#tpu.dimension_semantics<parallel>], iteration_bounds = array<i64: 2>, scalar_prefetch = 0 : i64, scratch_operands = 0 : i64, tpu.core_type = #tpu.core_type<tc>, window_params = [{transform_indices = @transform_0, window_bounds = array<i64: 1, 8, 1>}, {transform_indices = @transform_1, window_bounds = array<i64: 1, 1, 8>}, {pipeline_mode = #tpu.pipeline_mode<synchronous>, transform_indices = @transform_2, window_bounds = array<i64: 128, 32>}, {transform_indices = @transform_3, window_bounds = array<i64: 8, 32>}, {pipeline_mode = #tpu.pipeline_mode<synchronous>, transform_indices = @transform_4, window_bounds = array<i64: 4, 32, 96>}, {pipeline_mode = #tpu.pipeline_mode<synchronous>, transform_indices = @transform_5, window_bounds = array<i64: 4, 4, 8, 32>}, {pipeline_mode = #tpu.pipeline_mode<synchronous>, transform_indices = @transform_6, window_bounds = array<i64: 4, 32, 64>}, {pipeline_mode = #tpu.pipeline_mode<synchronous>, transform_indices = @transform_7, window_bounds = array<i64: 4, 64, 32>}, {pipeline_mode = #tpu.pipeline_mode<synchronous>, transform_indices = @transform_8, window_bounds = array<i64: 4, 8, 96>}, {pipeline_mode = #tpu.pipeline_mode<synchronous>, transform_indices = @transform_9, window_bounds = array<i64: 32, 32>}, {pipeline_mode = #tpu.pipeline_mode<synchronous>, transform_indices = @transform_10, window_bounds = array<i64: 32, 128>}, {pipeline_mode = #tpu.pipeline_mode<synchronous>, transform_indices = @transform_11, window_bounds = array<i64: 4, 128>}, {transform_indices = @transform_12, window_bounds = array<i64: 1, 1, 128>}, {transform_indices = @transform_13, window_bounds = array<i64: 1, 8, 128>}]} {
    %c0 = arith.constant 0 : index
    %c0_0 = arith.constant 0 : index
    %c0_1 = arith.constant 0 : index
    %0 = vector.load %arg1[%c0, %c0_0, %c0_1] : memref<1x8x1xi32, #tpu.memory_space<vmem>>, vector<1x8x1xi32>
    %1 = vector.shape_cast %0 : vector<1x8x1xi32> to vector<8x1xi32>
    %2 = tpu.iota {dimensions = array<i32: 1>} : vector<8x128xi32>
    %3 = vector.broadcast %1 : vector<8x1xi32> to vector<8x128xi32>
    %4 = arith.cmpi eq, %3, %2 : vector<8x128xi32>
    %cst = arith.constant 1.000000e+00 : f32
    %cst_2 = arith.constant 0.000000e+00 : f32
    %5 = vector.broadcast %cst : f32 to vector<8x128xf32>
    %6 = vector.broadcast %cst_2 : f32 to vector<8x128xf32>
    %7 = arith.select %4, %5, %6 : vector<8x128xi1>, vector<8x128xf32>
    %8 = arith.truncf %7 : vector<8x128xf32> to vector<8x128xbf16>
    %c0_3 = arith.constant 0 : index
    %c0_4 = arith.constant 0 : index
    %9 = vector.load %arg3[%c0_3, %c0_4] : memref<128x32xbf16, #tpu.memory_space<vmem>>, vector<128x32xbf16>
    %cst_5 = arith.constant dense<0.000000e+00> : vector<8x32xf32>
    %10 = tpu.matmul %8, %9, %cst_5 {dimension_numbers = #tpu.dot_dimension_numbers<[1], [0], [0], [1], [0, 0, 1, 1], [], []>} : vector<8x128xbf16>, vector<128x32xbf16>, vector<8x32xf32> -> vector<8x32xf32>
    %c0_6 = arith.constant 0 : index
    %c0_7 = arith.constant 0 : index
    %11 = vector.load %arg4[%c0_6, %c0_7] : memref<8x32xf32, #tpu.memory_space<vmem>>, vector<8x32xf32>
    %12 = arith.addf %10, %11 : vector<8x32xf32>
    %c0_8 = arith.constant 0 : index
    %c0_9 = arith.constant 0 : index
    %13 = vector.load %arg12[%c0_8, %c0_9] : memref<4x128xf32, #tpu.memory_space<vmem>>, vector<1x32xf32>
    %c1 = arith.constant 1 : index
    %c0_10 = arith.constant 0 : index
    %14 = vector.load %arg12[%c1, %c0_10] : memref<4x128xf32, #tpu.memory_space<vmem>>, vector<1x32xf32>
    %cst_11 = arith.constant dense<0.000000e+00> : vector<8xf32>
    %15 = vector.multi_reduction <add>, %12, %cst_11 [1] : vector<8x32xf32> to vector<8xf32>
    %16 = vector.shape_cast %15 : vector<8xf32> to vector<8x1xf32>
    %cst_12 = arith.constant 3.200000e+01 : f32
    %17 = vector.broadcast %cst_12 : f32 to vector<8x1xf32>
    %18 = arith.divf %16, %17 : vector<8x1xf32>
    %19 = vector.broadcast %18 : vector<8x1xf32> to vector<8x32xf32>
    %20 = arith.subf %12, %19 : vector<8x32xf32>
    %21 = arith.mulf %20, %20 : vector<8x32xf32>
    %cst_13 = arith.constant dense<0.000000e+00> : vector<8xf32>
    %22 = vector.multi_reduction <add>, %21, %cst_13 [1] : vector<8x32xf32> to vector<8xf32>
    %23 = vector.shape_cast %22 : vector<8xf32> to vector<8x1xf32>
    %cst_14 = arith.constant 3.200000e+01 : f32
    %24 = vector.broadcast %cst_14 : f32 to vector<8x1xf32>
    %25 = arith.divf %23, %24 : vector<8x1xf32>
    %26 = vector.broadcast %18 : vector<8x1xf32> to vector<8x32xf32>
    %27 = arith.subf %12, %26 : vector<8x32xf32>
    %cst_15 = arith.constant 9.99999974E-6 : f32
    %28 = vector.broadcast %cst_15 : f32 to vector<8x1xf32>
    %29 = arith.addf %25, %28 : vector<8x1xf32>
    %30 = math.rsqrt %29 : vector<8x1xf32>
    %31 = vector.broadcast %30 : vector<8x1xf32> to vector<8x32xf32>
    %32 = arith.mulf %27, %31 : vector<8x32xf32>
    %33 = vector.broadcast %13 : vector<1x32xf32> to vector<8x32xf32>
    %34 = arith.mulf %32, %33 : vector<8x32xf32>
    %35 = vector.broadcast %14 : vector<1x32xf32> to vector<8x32xf32>
    %36 = arith.addf %34, %35 : vector<8x32xf32>
    %c0_16 = arith.constant 0 : index
    %c0_17 = arith.constant 0 : index
    %c0_18 = arith.constant 0 : index
    %37 = vector.load %arg2[%c0_16, %c0_17, %c0_18] : memref<1x1x8xi32, #tpu.memory_space<vmem>>, vector<1x1x8xi32>
    %38 = vector.shape_cast %37 : vector<1x1x8xi32> to vector<1x8xi32>
    %39 = arith.sitofp %38 : vector<1x8xi32> to vector<1x8xf32>
    %cst_19 = arith.constant 1.000000e+00 : f32
    %40 = vector.broadcast %cst_19 : f32 to vector<1x8xf32>
    %41 = arith.subf %40, %39 : vector<1x8xf32>
    %cst_20 = arith.constant -1.000000e+09 : f32
    %42 = vector.broadcast %cst_20 : f32 to vector<1x8xf32>
    %43 = arith.mulf %41, %42 : vector<1x8xf32>
    %44 = vector.shape_cast %43 : vector<1x8xf32> to vector<1x1x8xf32>
    %45 = vector.shape_cast %44 : vector<1x1x8xf32> to vector<1x1x8xf32>
    %46 = vector.broadcast %45 : vector<1x1x8xf32> to vector<4x8x8xf32>
    %c0_21 = arith.constant 0 : index
    %c0_22 = arith.constant 0 : index
    %c0_23 = arith.constant 0 : index
    %47 = vector.load %arg9[%c0_21, %c0_22, %c0_23] : memref<4x8x96xf32, #tpu.memory_space<vmem>>, vector<1x8x96xf32>
    %48 = vector.shape_cast %47 : vector<1x8x96xf32> to vector<8x96xf32>
    %49 = vector.extract_strided_slice %48 {offsets = [0, 0], sizes = [1, 96], strides = [1, 1]} : vector<8x96xf32> to vector<1x96xf32>
    %50 = vector.extract_strided_slice %48 {offsets = [1, 0], sizes = [1, 32], strides = [1, 1]} : vector<8x96xf32> to vector<1x32xf32>
    %51 = vector.extract_strided_slice %48 {offsets = [2, 0], sizes = [1, 32], strides = [1, 1]} : vector<8x96xf32> to vector<1x32xf32>
    %52 = vector.extract_strided_slice %48 {offsets = [3, 0], sizes = [1, 32], strides = [1, 1]} : vector<8x96xf32> to vector<1x32xf32>
    %53 = vector.extract_strided_slice %48 {offsets = [4, 0], sizes = [1, 64], strides = [1, 1]} : vector<8x96xf32> to vector<1x64xf32>
    %54 = vector.extract_strided_slice %48 {offsets = [5, 0], sizes = [1, 32], strides = [1, 1]} : vector<8x96xf32> to vector<1x32xf32>
    %55 = vector.extract_strided_slice %48 {offsets = [6, 0], sizes = [1, 32], strides = [1, 1]} : vector<8x96xf32> to vector<1x32xf32>
    %56 = vector.extract_strided_slice %48 {offsets = [7, 0], sizes = [1, 32], strides = [1, 1]} : vector<8x96xf32> to vector<1x32xf32>
    %57 = arith.truncf %36 : vector<8x32xf32> to vector<8x32xbf16>
    %c0_24 = arith.constant 0 : index
    %c0_25 = arith.constant 0 : index
    %c0_26 = arith.constant 0 : index
    %58 = vector.load %arg5[%c0_24, %c0_25, %c0_26] : memref<4x32x96xbf16, #tpu.memory_space<vmem>>, vector<1x32x96xbf16>
    %59 = vector.shape_cast %58 : vector<1x32x96xbf16> to vector<32x96xbf16>
    %cst_27 = arith.constant dense<0.000000e+00> : vector<8x96xf32>
    %60 = tpu.matmul %57, %59, %cst_27 {dimension_numbers = #tpu.dot_dimension_numbers<[1], [0], [0], [1], [0, 0, 1, 1], [], []>} : vector<8x32xbf16>, vector<32x96xbf16>, vector<8x96xf32> -> vector<8x96xf32>
    %61 = vector.broadcast %49 : vector<1x96xf32> to vector<8x96xf32>
    %62 = arith.addf %60, %61 : vector<8x96xf32>
    %63 = vector.extract_strided_slice %62 {offsets = [0, 0], sizes = [8, 8], strides = [1, 1]} : vector<8x96xf32> to vector<8x8xf32>
    %64 = vector.extract_strided_slice %62 {offsets = [0, 8], sizes = [8, 8], strides = [1, 1]} : vector<8x96xf32> to vector<8x8xf32>
    %65 = vector.extract_strided_slice %62 {offsets = [0, 16], sizes = [8, 8], strides = [1, 1]} : vector<8x96xf32> to vector<8x8xf32>
    %66 = vector.extract_strided_slice %62 {offsets = [0, 24], sizes = [8, 8], strides = [1, 1]} : vector<8x96xf32> to vector<8x8xf32>
    %67 = vector.shape_cast %63 : vector<8x8xf32> to vector<1x8x8xf32>
    %68 = vector.shape_cast %64 : vector<8x8xf32> to vector<1x8x8xf32>
    %69 = vector.shape_cast %65 : vector<8x8xf32> to vector<1x8x8xf32>
    %70 = vector.shape_cast %66 : vector<8x8xf32> to vector<1x8x8xf32>
    %71 = tpu.concatenate %67, %68, %69, %70 in 0 : vector<1x8x8xf32>, vector<1x8x8xf32>, vector<1x8x8xf32>, vector<1x8x8xf32> -> vector<4x8x8xf32>
    %72 = vector.extract_strided_slice %62 {offsets = [0, 32], sizes = [8, 8], strides = [1, 1]} : vector<8x96xf32> to vector<8x8xf32>
    %73 = vector.extract_strided_slice %62 {offsets = [0, 40], sizes = [8, 8], strides = [1, 1]} : vector<8x96xf32> to vector<8x8xf32>
    %74 = vector.extract_strided_slice %62 {offsets = [0, 48], sizes = [8, 8], strides = [1, 1]} : vector<8x96xf32> to vector<8x8xf32>
    %75 = vector.extract_strided_slice %62 {offsets = [0, 56], sizes = [8, 8], strides = [1, 1]} : vector<8x96xf32> to vector<8x8xf32>
    %76 = vector.shape_cast %72 : vector<8x8xf32> to vector<1x8x8xf32>
    %77 = vector.shape_cast %73 : vector<8x8xf32> to vector<1x8x8xf32>
    %78 = vector.shape_cast %74 : vector<8x8xf32> to vector<1x8x8xf32>
    %79 = vector.shape_cast %75 : vector<8x8xf32> to vector<1x8x8xf32>
    %80 = tpu.concatenate %76, %77, %78, %79 in 0 : vector<1x8x8xf32>, vector<1x8x8xf32>, vector<1x8x8xf32>, vector<1x8x8xf32> -> vector<4x8x8xf32>
    %81 = vector.extract_strided_slice %62 {offsets = [0, 64], sizes = [8, 8], strides = [1, 1]} : vector<8x96xf32> to vector<8x8xf32>
    %82 = vector.extract_strided_slice %62 {offsets = [0, 72], sizes = [8, 8], strides = [1, 1]} : vector<8x96xf32> to vector<8x8xf32>
    %83 = vector.extract_strided_slice %62 {offsets = [0, 80], sizes = [8, 8], strides = [1, 1]} : vector<8x96xf32> to vector<8x8xf32>
    %84 = vector.extract_strided_slice %62 {offsets = [0, 88], sizes = [8, 8], strides = [1, 1]} : vector<8x96xf32> to vector<8x8xf32>
    %85 = vector.shape_cast %81 : vector<8x8xf32> to vector<1x8x8xf32>
    %86 = vector.shape_cast %82 : vector<8x8xf32> to vector<1x8x8xf32>
    %87 = vector.shape_cast %83 : vector<8x8xf32> to vector<1x8x8xf32>
    %88 = vector.shape_cast %84 : vector<8x8xf32> to vector<1x8x8xf32>
    %89 = tpu.concatenate %85, %86, %87, %88 in 0 : vector<1x8x8xf32>, vector<1x8x8xf32>, vector<1x8x8xf32>, vector<1x8x8xf32> -> vector<4x8x8xf32>
    %cst_28 = arith.constant dense<0.000000e+00> : vector<4x8x8xf32>
    %90 = tpu.matmul %71, %80, %cst_28 {dimension_numbers = #tpu.dot_dimension_numbers<[2], [2], [1], [1], [0, 0, 0, 1, 1, 1], [0], [0]>} : vector<4x8x8xf32>, vector<4x8x8xf32>, vector<4x8x8xf32> -> vector<4x8x8xf32>
    %cst_29 = arith.constant 0.353553385 : f32
    %91 = vector.broadcast %cst_29 : f32 to vector<4x8x8xf32>
    %92 = arith.mulf %90, %91 : vector<4x8x8xf32>
    %93 = arith.addf %92, %46 : vector<4x8x8xf32>
    %cst_30 = arith.constant dense<0xFF800000> : vector<4x8xf32>
    %94 = vector.multi_reduction <maximumf>, %93, %cst_30 [2] : vector<4x8x8xf32> to vector<4x8xf32>
    %95 = vector.shape_cast %94 : vector<4x8xf32> to vector<4x8x1xf32>
    %96 = vector.broadcast %95 : vector<4x8x1xf32> to vector<4x8x8xf32>
    %97 = arith.subf %93, %96 : vector<4x8x8xf32>
    %98 = math.exp %97 : vector<4x8x8xf32>
    %cst_31 = arith.constant dense<0.000000e+00> : vector<4x8xf32>
    %99 = vector.multi_reduction <add>, %98, %cst_31 [2] : vector<4x8x8xf32> to vector<4x8xf32>
    %100 = vector.shape_cast %99 : vector<4x8xf32> to vector<4x8x1xf32>
    %101 = tpu.reciprocal %100 {approx = true} : vector<4x8x1xf32> -> vector<4x8x1xf32>
    %102 = vector.broadcast %101 : vector<4x8x1xf32> to vector<4x8x8xf32>
    %103 = arith.mulf %98, %102 : vector<4x8x8xf32>
    %cst_32 = arith.constant dense<0.000000e+00> : vector<4x8x8xf32>
    %104 = tpu.matmul %103, %89, %cst_32 {dimension_numbers = #tpu.dot_dimension_numbers<[2], [1], [1], [2], [0, 0, 0, 1, 1, 2], [0], [0]>} : vector<4x8x8xf32>, vector<4x8x8xf32>, vector<4x8x8xf32> -> vector<4x8x8xf32>
    %105 = arith.truncf %104 : vector<4x8x8xf32> to vector<4x8x8xbf16>
    %c0_33 = arith.constant 0 : index
    %c0_34 = arith.constant 0 : index
    %c0_35 = arith.constant 0 : index
    %c0_36 = arith.constant 0 : index
    %106 = vector.load %arg6[%c0_33, %c0_34, %c0_35, %c0_36] : memref<4x4x8x32xbf16, #tpu.memory_space<vmem>>, vector<1x4x8x32xbf16>
    %107 = vector.shape_cast %106 : vector<1x4x8x32xbf16> to vector<4x8x32xbf16>
    %cst_37 = arith.constant dense<0.000000e+00> : vector<4x8x32xf32>
    %108 = tpu.matmul %105, %107, %cst_37 {dimension_numbers = #tpu.dot_dimension_numbers<[2], [1], [1], [2], [0, 0, 0, 1, 1, 2], [0], [0]>} : vector<4x8x8xbf16>, vector<4x8x32xbf16>, vector<4x8x32xf32> -> vector<4x8x32xf32>
    %cst_38 = arith.constant dense<0.000000e+00> : vector<8x32xf32>
    %109 = vector.multi_reduction <add>, %108, %cst_38 [0] : vector<4x8x32xf32> to vector<8x32xf32>
    %110 = vector.broadcast %50 : vector<1x32xf32> to vector<8x32xf32>
    %111 = arith.addf %109, %110 : vector<8x32xf32>
    %112 = arith.addf %111, %36 : vector<8x32xf32>
    %cst_39 = arith.constant dense<0.000000e+00> : vector<8xf32>
    %113 = vector.multi_reduction <add>, %112, %cst_39 [1] : vector<8x32xf32> to vector<8xf32>
    %114 = vector.shape_cast %113 : vector<8xf32> to vector<8x1xf32>
    %cst_40 = arith.constant 3.200000e+01 : f32
    %115 = vector.broadcast %cst_40 : f32 to vector<8x1xf32>
    %116 = arith.divf %114, %115 : vector<8x1xf32>
    %117 = vector.broadcast %116 : vector<8x1xf32> to vector<8x32xf32>
    %118 = arith.subf %112, %117 : vector<8x32xf32>
    %119 = arith.mulf %118, %118 : vector<8x32xf32>
    %cst_41 = arith.constant dense<0.000000e+00> : vector<8xf32>
    %120 = vector.multi_reduction <add>, %119, %cst_41 [1] : vector<8x32xf32> to vector<8xf32>
    %121 = vector.shape_cast %120 : vector<8xf32> to vector<8x1xf32>
    %cst_42 = arith.constant 3.200000e+01 : f32
    %122 = vector.broadcast %cst_42 : f32 to vector<8x1xf32>
    %123 = arith.divf %121, %122 : vector<8x1xf32>
    %124 = vector.broadcast %116 : vector<8x1xf32> to vector<8x32xf32>
    %125 = arith.subf %112, %124 : vector<8x32xf32>
    %cst_43 = arith.constant 9.99999974E-6 : f32
    %126 = vector.broadcast %cst_43 : f32 to vector<8x1xf32>
    %127 = arith.addf %123, %126 : vector<8x1xf32>
    %128 = math.rsqrt %127 : vector<8x1xf32>
    %129 = vector.broadcast %128 : vector<8x1xf32> to vector<8x32xf32>
    %130 = arith.mulf %125, %129 : vector<8x32xf32>
    %131 = vector.broadcast %51 : vector<1x32xf32> to vector<8x32xf32>
    %132 = arith.mulf %130, %131 : vector<8x32xf32>
    %133 = vector.broadcast %52 : vector<1x32xf32> to vector<8x32xf32>
    %134 = arith.addf %132, %133 : vector<8x32xf32>
    %135 = arith.truncf %134 : vector<8x32xf32> to vector<8x32xbf16>
    %c0_44 = arith.constant 0 : index
    %c0_45 = arith.constant 0 : index
    %c0_46 = arith.constant 0 : index
    %136 = vector.load %arg7[%c0_44, %c0_45, %c0_46] : memref<4x32x64xbf16, #tpu.memory_space<vmem>>, vector<1x32x64xbf16>
    %137 = vector.shape_cast %136 : vector<1x32x64xbf16> to vector<32x64xbf16>
    %cst_47 = arith.constant dense<0.000000e+00> : vector<8x64xf32>
    %138 = tpu.matmul %135, %137, %cst_47 {dimension_numbers = #tpu.dot_dimension_numbers<[1], [0], [0], [1], [0, 0, 1, 1], [], []>} : vector<8x32xbf16>, vector<32x64xbf16>, vector<8x64xf32> -> vector<8x64xf32>
    %139 = vector.broadcast %53 : vector<1x64xf32> to vector<8x64xf32>
    %140 = arith.addf %138, %139 : vector<8x64xf32>
    %cst_48 = arith.constant 5.000000e-01 : f32
    %141 = vector.broadcast %cst_48 : f32 to vector<8x64xf32>
    %142 = arith.mulf %141, %140 : vector<8x64xf32>
    %cst_49 = arith.constant 4.471500e-02 : f32
    %143 = vector.broadcast %cst_49 : f32 to vector<8x64xf32>
    %144 = arith.mulf %143, %140 : vector<8x64xf32>
    %145 = arith.mulf %144, %140 : vector<8x64xf32>
    %146 = arith.mulf %145, %140 : vector<8x64xf32>
    %147 = arith.addf %140, %146 : vector<8x64xf32>
    %cst_50 = arith.constant 0.797884583 : f32
    %148 = vector.broadcast %cst_50 : f32 to vector<8x64xf32>
    %149 = arith.mulf %148, %147 : vector<8x64xf32>
    %150 = math.tanh %149 : vector<8x64xf32>
    %cst_51 = arith.constant 1.000000e+00 : f32
    %151 = vector.broadcast %cst_51 : f32 to vector<8x64xf32>
    %152 = arith.addf %151, %150 : vector<8x64xf32>
    %153 = arith.mulf %142, %152 : vector<8x64xf32>
    %154 = arith.truncf %153 : vector<8x64xf32> to vector<8x64xbf16>
    %c0_52 = arith.constant 0 : index
    %c0_53 = arith.constant 0 : index
    %c0_54 = arith.constant 0 : index
    %155 = vector.load %arg8[%c0_52, %c0_53, %c0_54] : memref<4x64x32xbf16, #tpu.memory_space<vmem>>, vector<1x64x32xbf16>
    %156 = vector.shape_cast %155 : vector<1x64x32xbf16> to vector<64x32xbf16>
    %cst_55 = arith.constant dense<0.000000e+00> : vector<8x32xf32>
    %157 = tpu.matmul %154, %156, %cst_55 {dimension_numbers = #tpu.dot_dimension_numbers<[1], [0], [0], [1], [0, 0, 1, 1], [], []>} : vector<8x64xbf16>, vector<64x32xbf16>, vector<8x32xf32> -> vector<8x32xf32>
    %158 = vector.broadcast %54 : vector<1x32xf32> to vector<8x32xf32>
    %159 = arith.addf %157, %158 : vector<8x32xf32>
    %160 = arith.addf %159, %134 : vector<8x32xf32>
    %cst_56 = arith.constant dense<0.000000e+00> : vector<8xf32>
    %161 = vector.multi_reduction <add>, %160, %cst_56 [1] : vector<8x32xf32> to vector<8xf32>
    %162 = vector.shape_cast %161 : vector<8xf32> to vector<8x1xf32>
    %cst_57 = arith.constant 3.200000e+01 : f32
    %163 = vector.broadcast %cst_57 : f32 to vector<8x1xf32>
    %164 = arith.divf %162, %163 : vector<8x1xf32>
    %165 = vector.broadcast %164 : vector<8x1xf32> to vector<8x32xf32>
    %166 = arith.subf %160, %165 : vector<8x32xf32>
    %167 = arith.mulf %166, %166 : vector<8x32xf32>
    %cst_58 = arith.constant dense<0.000000e+00> : vector<8xf32>
    %168 = vector.multi_reduction <add>, %167, %cst_58 [1] : vector<8x32xf32> to vector<8xf32>
    %169 = vector.shape_cast %168 : vector<8xf32> to vector<8x1xf32>
    %cst_59 = arith.constant 3.200000e+01 : f32
    %170 = vector.broadcast %cst_59 : f32 to vector<8x1xf32>
    %171 = arith.divf %169, %170 : vector<8x1xf32>
    %172 = vector.broadcast %164 : vector<8x1xf32> to vector<8x32xf32>
    %173 = arith.subf %160, %172 : vector<8x32xf32>
    %cst_60 = arith.constant 9.99999974E-6 : f32
    %174 = vector.broadcast %cst_60 : f32 to vector<8x1xf32>
    %175 = arith.addf %171, %174 : vector<8x1xf32>
    %176 = math.rsqrt %175 : vector<8x1xf32>
    %177 = vector.broadcast %176 : vector<8x1xf32> to vector<8x32xf32>
    %178 = arith.mulf %173, %177 : vector<8x32xf32>
    %179 = vector.broadcast %55 : vector<1x32xf32> to vector<8x32xf32>
    %180 = arith.mulf %178, %179 : vector<8x32xf32>
    %181 = vector.broadcast %56 : vector<1x32xf32> to vector<8x32xf32>
    %182 = arith.addf %180, %181 : vector<8x32xf32>
    %c0_61 = arith.constant 0 : index
    %c0_62 = arith.constant 0 : index
    %c0_63 = arith.constant 0 : index
    %183 = vector.load %arg14[%c0_61, %c0_62, %c0_63] : memref<1x8x128xf32, #tpu.memory_space<vmem>>, vector<1x8x32xf32>
    %184 = vector.shape_cast %183 : vector<1x8x32xf32> to vector<8x32xf32>
    %185 = vector.shape_cast %182 : vector<8x32xf32> to vector<1x8x32xf32>
    tpu.vector_store %arg14[%c0_61, %c0_62, %c0_63], %185 {strides = array<i32>} : memref<1x8x128xf32, #tpu.memory_space<vmem>>, vector<1x8x32xf32>,
    %c1_64 = arith.constant 1 : index
    %c0_65 = arith.constant 0 : index
    %c0_66 = arith.constant 0 : index
    %186 = vector.load %arg9[%c1_64, %c0_65, %c0_66] : memref<4x8x96xf32, #tpu.memory_space<vmem>>, vector<1x8x96xf32>
    %187 = vector.shape_cast %186 : vector<1x8x96xf32> to vector<8x96xf32>
    %188 = vector.extract_strided_slice %187 {offsets = [0, 0], sizes = [1, 96], strides = [1, 1]} : vector<8x96xf32> to vector<1x96xf32>
    %189 = vector.extract_strided_slice %187 {offsets = [1, 0], sizes = [1, 32], strides = [1, 1]} : vector<8x96xf32> to vector<1x32xf32>
    %190 = vector.extract_strided_slice %187 {offsets = [2, 0], sizes = [1, 32], strides = [1, 1]} : vector<8x96xf32> to vector<1x32xf32>
    %191 = vector.extract_strided_slice %187 {offsets = [3, 0], sizes = [1, 32], strides = [1, 1]} : vector<8x96xf32> to vector<1x32xf32>
    %192 = vector.extract_strided_slice %187 {offsets = [4, 0], sizes = [1, 64], strides = [1, 1]} : vector<8x96xf32> to vector<1x64xf32>
    %193 = vector.extract_strided_slice %187 {offsets = [5, 0], sizes = [1, 32], strides = [1, 1]} : vector<8x96xf32> to vector<1x32xf32>
    %194 = vector.extract_strided_slice %187 {offsets = [6, 0], sizes = [1, 32], strides = [1, 1]} : vector<8x96xf32> to vector<1x32xf32>
    %195 = vector.extract_strided_slice %187 {offsets = [7, 0], sizes = [1, 32], strides = [1, 1]} : vector<8x96xf32> to vector<1x32xf32>
    %196 = arith.truncf %182 : vector<8x32xf32> to vector<8x32xbf16>
    %c1_67 = arith.constant 1 : index
    %c0_68 = arith.constant 0 : index
    %c0_69 = arith.constant 0 : index
    %197 = vector.load %arg5[%c1_67, %c0_68, %c0_69] : memref<4x32x96xbf16, #tpu.memory_space<vmem>>, vector<1x32x96xbf16>
    %198 = vector.shape_cast %197 : vector<1x32x96xbf16> to vector<32x96xbf16>
    %cst_70 = arith.constant dense<0.000000e+00> : vector<8x96xf32>
    %199 = tpu.matmul %196, %198, %cst_70 {dimension_numbers = #tpu.dot_dimension_numbers<[1], [0], [0], [1], [0, 0, 1, 1], [], []>} : vector<8x32xbf16>, vector<32x96xbf16>, vector<8x96xf32> -> vector<8x96xf32>
    %200 = vector.broadcast %188 : vector<1x96xf32> to vector<8x96xf32>
    %201 = arith.addf %199, %200 : vector<8x96xf32>
    %202 = vector.extract_strided_slice %201 {offsets = [0, 0], sizes = [8, 8], strides = [1, 1]} : vector<8x96xf32> to vector<8x8xf32>
    %203 = vector.extract_strided_slice %201 {offsets = [0, 8], sizes = [8, 8], strides = [1, 1]} : vector<8x96xf32> to vector<8x8xf32>
    %204 = vector.extract_strided_slice %201 {offsets = [0, 16], sizes = [8, 8], strides = [1, 1]} : vector<8x96xf32> to vector<8x8xf32>
    %205 = vector.extract_strided_slice %201 {offsets = [0, 24], sizes = [8, 8], strides = [1, 1]} : vector<8x96xf32> to vector<8x8xf32>
    %206 = vector.shape_cast %202 : vector<8x8xf32> to vector<1x8x8xf32>
    %207 = vector.shape_cast %203 : vector<8x8xf32> to vector<1x8x8xf32>
    %208 = vector.shape_cast %204 : vector<8x8xf32> to vector<1x8x8xf32>
    %209 = vector.shape_cast %205 : vector<8x8xf32> to vector<1x8x8xf32>
    %210 = tpu.concatenate %206, %207, %208, %209 in 0 : vector<1x8x8xf32>, vector<1x8x8xf32>, vector<1x8x8xf32>, vector<1x8x8xf32> -> vector<4x8x8xf32>
    %211 = vector.extract_strided_slice %201 {offsets = [0, 32], sizes = [8, 8], strides = [1, 1]} : vector<8x96xf32> to vector<8x8xf32>
    %212 = vector.extract_strided_slice %201 {offsets = [0, 40], sizes = [8, 8], strides = [1, 1]} : vector<8x96xf32> to vector<8x8xf32>
    %213 = vector.extract_strided_slice %201 {offsets = [0, 48], sizes = [8, 8], strides = [1, 1]} : vector<8x96xf32> to vector<8x8xf32>
    %214 = vector.extract_strided_slice %201 {offsets = [0, 56], sizes = [8, 8], strides = [1, 1]} : vector<8x96xf32> to vector<8x8xf32>
    %215 = vector.shape_cast %211 : vector<8x8xf32> to vector<1x8x8xf32>
    %216 = vector.shape_cast %212 : vector<8x8xf32> to vector<1x8x8xf32>
    %217 = vector.shape_cast %213 : vector<8x8xf32> to vector<1x8x8xf32>
    %218 = vector.shape_cast %214 : vector<8x8xf32> to vector<1x8x8xf32>
    %219 = tpu.concatenate %215, %216, %217, %218 in 0 : vector<1x8x8xf32>, vector<1x8x8xf32>, vector<1x8x8xf32>, vector<1x8x8xf32> -> vector<4x8x8xf32>
    %220 = vector.extract_strided_slice %201 {offsets = [0, 64], sizes = [8, 8], strides = [1, 1]} : vector<8x96xf32> to vector<8x8xf32>
    %221 = vector.extract_strided_slice %201 {offsets = [0, 72], sizes = [8, 8], strides = [1, 1]} : vector<8x96xf32> to vector<8x8xf32>
    %222 = vector.extract_strided_slice %201 {offsets = [0, 80], sizes = [8, 8], strides = [1, 1]} : vector<8x96xf32> to vector<8x8xf32>
    %223 = vector.extract_strided_slice %201 {offsets = [0, 88], sizes = [8, 8], strides = [1, 1]} : vector<8x96xf32> to vector<8x8xf32>
    %224 = vector.shape_cast %220 : vector<8x8xf32> to vector<1x8x8xf32>
    %225 = vector.shape_cast %221 : vector<8x8xf32> to vector<1x8x8xf32>
    %226 = vector.shape_cast %222 : vector<8x8xf32> to vector<1x8x8xf32>
    %227 = vector.shape_cast %223 : vector<8x8xf32> to vector<1x8x8xf32>
    %228 = tpu.concatenate %224, %225, %226, %227 in 0 : vector<1x8x8xf32>, vector<1x8x8xf32>, vector<1x8x8xf32>, vector<1x8x8xf32> -> vector<4x8x8xf32>
    %cst_71 = arith.constant dense<0.000000e+00> : vector<4x8x8xf32>
    %229 = tpu.matmul %210, %219, %cst_71 {dimension_numbers = #tpu.dot_dimension_numbers<[2], [2], [1], [1], [0, 0, 0, 1, 1, 1], [0], [0]>} : vector<4x8x8xf32>, vector<4x8x8xf32>, vector<4x8x8xf32> -> vector<4x8x8xf32>
    %cst_72 = arith.constant 0.353553385 : f32
    %230 = vector.broadcast %cst_72 : f32 to vector<4x8x8xf32>
    %231 = arith.mulf %229, %230 : vector<4x8x8xf32>
    %232 = arith.addf %231, %46 : vector<4x8x8xf32>
    %cst_73 = arith.constant dense<0xFF800000> : vector<4x8xf32>
    %233 = vector.multi_reduction <maximumf>, %232, %cst_73 [2] : vector<4x8x8xf32> to vector<4x8xf32>
    %234 = vector.shape_cast %233 : vector<4x8xf32> to vector<4x8x1xf32>
    %235 = vector.broadcast %234 : vector<4x8x1xf32> to vector<4x8x8xf32>
    %236 = arith.subf %232, %235 : vector<4x8x8xf32>
    %237 = math.exp %236 : vector<4x8x8xf32>
    %cst_74 = arith.constant dense<0.000000e+00> : vector<4x8xf32>
    %238 = vector.multi_reduction <add>, %237, %cst_74 [2] : vector<4x8x8xf32> to vector<4x8xf32>
    %239 = vector.shape_cast %238 : vector<4x8xf32> to vector<4x8x1xf32>
    %240 = tpu.reciprocal %239 {approx = true} : vector<4x8x1xf32> -> vector<4x8x1xf32>
    %241 = vector.broadcast %240 : vector<4x8x1xf32> to vector<4x8x8xf32>
    %242 = arith.mulf %237, %241 : vector<4x8x8xf32>
    %cst_75 = arith.constant dense<0.000000e+00> : vector<4x8x8xf32>
    %243 = tpu.matmul %242, %228, %cst_75 {dimension_numbers = #tpu.dot_dimension_numbers<[2], [1], [1], [2], [0, 0, 0, 1, 1, 2], [0], [0]>} : vector<4x8x8xf32>, vector<4x8x8xf32>, vector<4x8x8xf32> -> vector<4x8x8xf32>
    %244 = arith.truncf %243 : vector<4x8x8xf32> to vector<4x8x8xbf16>
    %c1_76 = arith.constant 1 : index
    %c0_77 = arith.constant 0 : index
    %c0_78 = arith.constant 0 : index
    %c0_79 = arith.constant 0 : index
    %245 = vector.load %arg6[%c1_76, %c0_77, %c0_78, %c0_79] : memref<4x4x8x32xbf16, #tpu.memory_space<vmem>>, vector<1x4x8x32xbf16>
    %246 = vector.shape_cast %245 : vector<1x4x8x32xbf16> to vector<4x8x32xbf16>
    %cst_80 = arith.constant dense<0.000000e+00> : vector<4x8x32xf32>
    %247 = tpu.matmul %244, %246, %cst_80 {dimension_numbers = #tpu.dot_dimension_numbers<[2], [1], [1], [2], [0, 0, 0, 1, 1, 2], [0], [0]>} : vector<4x8x8xbf16>, vector<4x8x32xbf16>, vector<4x8x32xf32> -> vector<4x8x32xf32>
    %cst_81 = arith.constant dense<0.000000e+00> : vector<8x32xf32>
    %248 = vector.multi_reduction <add>, %247, %cst_81 [0] : vector<4x8x32xf32> to vector<8x32xf32>
    %249 = vector.broadcast %189 : vector<1x32xf32> to vector<8x32xf32>
    %250 = arith.addf %248, %249 : vector<8x32xf32>
    %251 = arith.addf %250, %182 : vector<8x32xf32>
    %cst_82 = arith.constant dense<0.000000e+00> : vector<8xf32>
    %252 = vector.multi_reduction <add>, %251, %cst_82 [1] : vector<8x32xf32> to vector<8xf32>
    %253 = vector.shape_cast %252 : vector<8xf32> to vector<8x1xf32>
    %cst_83 = arith.constant 3.200000e+01 : f32
    %254 = vector.broadcast %cst_83 : f32 to vector<8x1xf32>
    %255 = arith.divf %253, %254 : vector<8x1xf32>
    %256 = vector.broadcast %255 : vector<8x1xf32> to vector<8x32xf32>
    %257 = arith.subf %251, %256 : vector<8x32xf32>
    %258 = arith.mulf %257, %257 : vector<8x32xf32>
    %cst_84 = arith.constant dense<0.000000e+00> : vector<8xf32>
    %259 = vector.multi_reduction <add>, %258, %cst_84 [1] : vector<8x32xf32> to vector<8xf32>
    %260 = vector.shape_cast %259 : vector<8xf32> to vector<8x1xf32>
    %cst_85 = arith.constant 3.200000e+01 : f32
    %261 = vector.broadcast %cst_85 : f32 to vector<8x1xf32>
    %262 = arith.divf %260, %261 : vector<8x1xf32>
    %263 = vector.broadcast %255 : vector<8x1xf32> to vector<8x32xf32>
    %264 = arith.subf %251, %263 : vector<8x32xf32>
    %cst_86 = arith.constant 9.99999974E-6 : f32
    %265 = vector.broadcast %cst_86 : f32 to vector<8x1xf32>
    %266 = arith.addf %262, %265 : vector<8x1xf32>
    %267 = math.rsqrt %266 : vector<8x1xf32>
    %268 = vector.broadcast %267 : vector<8x1xf32> to vector<8x32xf32>
    %269 = arith.mulf %264, %268 : vector<8x32xf32>
    %270 = vector.broadcast %190 : vector<1x32xf32> to vector<8x32xf32>
    %271 = arith.mulf %269, %270 : vector<8x32xf32>
    %272 = vector.broadcast %191 : vector<1x32xf32> to vector<8x32xf32>
    %273 = arith.addf %271, %272 : vector<8x32xf32>
    %274 = arith.truncf %273 : vector<8x32xf32> to vector<8x32xbf16>
    %c1_87 = arith.constant 1 : index
    %c0_88 = arith.constant 0 : index
    %c0_89 = arith.constant 0 : index
    %275 = vector.load %arg7[%c1_87, %c0_88, %c0_89] : memref<4x32x64xbf16, #tpu.memory_space<vmem>>, vector<1x32x64xbf16>
    %276 = vector.shape_cast %275 : vector<1x32x64xbf16> to vector<32x64xbf16>
    %cst_90 = arith.constant dense<0.000000e+00> : vector<8x64xf32>
    %277 = tpu.matmul %274, %276, %cst_90 {dimension_numbers = #tpu.dot_dimension_numbers<[1], [0], [0], [1], [0, 0, 1, 1], [], []>} : vector<8x32xbf16>, vector<32x64xbf16>, vector<8x64xf32> -> vector<8x64xf32>
    %278 = vector.broadcast %192 : vector<1x64xf32> to vector<8x64xf32>
    %279 = arith.addf %277, %278 : vector<8x64xf32>
    %cst_91 = arith.constant 5.000000e-01 : f32
    %280 = vector.broadcast %cst_91 : f32 to vector<8x64xf32>
    %281 = arith.mulf %280, %279 : vector<8x64xf32>
    %cst_92 = arith.constant 4.471500e-02 : f32
    %282 = vector.broadcast %cst_92 : f32 to vector<8x64xf32>
    %283 = arith.mulf %282, %279 : vector<8x64xf32>
    %284 = arith.mulf %283, %279 : vector<8x64xf32>
    %285 = arith.mulf %284, %279 : vector<8x64xf32>
    %286 = arith.addf %279, %285 : vector<8x64xf32>
    %cst_93 = arith.constant 0.797884583 : f32
    %287 = vector.broadcast %cst_93 : f32 to vector<8x64xf32>
    %288 = arith.mulf %287, %286 : vector<8x64xf32>
    %289 = math.tanh %288 : vector<8x64xf32>
    %cst_94 = arith.constant 1.000000e+00 : f32
    %290 = vector.broadcast %cst_94 : f32 to vector<8x64xf32>
    %291 = arith.addf %290, %289 : vector<8x64xf32>
    %292 = arith.mulf %281, %291 : vector<8x64xf32>
    %293 = arith.truncf %292 : vector<8x64xf32> to vector<8x64xbf16>
    %c1_95 = arith.constant 1 : index
    %c0_96 = arith.constant 0 : index
    %c0_97 = arith.constant 0 : index
    %294 = vector.load %arg8[%c1_95, %c0_96, %c0_97] : memref<4x64x32xbf16, #tpu.memory_space<vmem>>, vector<1x64x32xbf16>
    %295 = vector.shape_cast %294 : vector<1x64x32xbf16> to vector<64x32xbf16>
    %cst_98 = arith.constant dense<0.000000e+00> : vector<8x32xf32>
    %296 = tpu.matmul %293, %295, %cst_98 {dimension_numbers = #tpu.dot_dimension_numbers<[1], [0], [0], [1], [0, 0, 1, 1], [], []>} : vector<8x64xbf16>, vector<64x32xbf16>, vector<8x32xf32> -> vector<8x32xf32>
    %297 = vector.broadcast %193 : vector<1x32xf32> to vector<8x32xf32>
    %298 = arith.addf %296, %297 : vector<8x32xf32>
    %299 = arith.addf %298, %273 : vector<8x32xf32>
    %cst_99 = arith.constant dense<0.000000e+00> : vector<8xf32>
    %300 = vector.multi_reduction <add>, %299, %cst_99 [1] : vector<8x32xf32> to vector<8xf32>
    %301 = vector.shape_cast %300 : vector<8xf32> to vector<8x1xf32>
    %cst_100 = arith.constant 3.200000e+01 : f32
    %302 = vector.broadcast %cst_100 : f32 to vector<8x1xf32>
    %303 = arith.divf %301, %302 : vector<8x1xf32>
    %304 = vector.broadcast %303 : vector<8x1xf32> to vector<8x32xf32>
    %305 = arith.subf %299, %304 : vector<8x32xf32>
    %306 = arith.mulf %305, %305 : vector<8x32xf32>
    %cst_101 = arith.constant dense<0.000000e+00> : vector<8xf32>
    %307 = vector.multi_reduction <add>, %306, %cst_101 [1] : vector<8x32xf32> to vector<8xf32>
    %308 = vector.shape_cast %307 : vector<8xf32> to vector<8x1xf32>
    %cst_102 = arith.constant 3.200000e+01 : f32
    %309 = vector.broadcast %cst_102 : f32 to vector<8x1xf32>
    %310 = arith.divf %308, %309 : vector<8x1xf32>
    %311 = vector.broadcast %303 : vector<8x1xf32> to vector<8x32xf32>
    %312 = arith.subf %299, %311 : vector<8x32xf32>
    %cst_103 = arith.constant 9.99999974E-6 : f32
    %313 = vector.broadcast %cst_103 : f32 to vector<8x1xf32>
    %314 = arith.addf %310, %313 : vector<8x1xf32>
    %315 = math.rsqrt %314 : vector<8x1xf32>
    %316 = vector.broadcast %315 : vector<8x1xf32> to vector<8x32xf32>
    %317 = arith.mulf %312, %316 : vector<8x32xf32>
    %318 = vector.broadcast %194 : vector<1x32xf32> to vector<8x32xf32>
    %319 = arith.mulf %317, %318 : vector<8x32xf32>
    %320 = vector.broadcast %195 : vector<1x32xf32> to vector<8x32xf32>
    %321 = arith.addf %319, %320 : vector<8x32xf32>
    %c0_104 = arith.constant 0 : index
    %c0_105 = arith.constant 0 : index
    %c32 = arith.constant 32 : index
    %322 = vector.load %arg14[%c0_104, %c0_105, %c32] : memref<1x8x128xf32, #tpu.memory_space<vmem>>, vector<1x8x32xf32>
    %323 = vector.shape_cast %322 : vector<1x8x32xf32> to vector<8x32xf32>
    %324 = vector.shape_cast %321 : vector<8x32xf32> to vector<1x8x32xf32>
    tpu.vector_store %arg14[%c0_104, %c0_105, %c32], %324 {strides = array<i32>} : memref<1x8x128xf32, #tpu.memory_space<vmem>>, vector<1x8x32xf32>,
    %c2 = arith.constant 2 : index
    %c0_106 = arith.constant 0 : index
    %c0_107 = arith.constant 0 : index
    %325 = vector.load %arg9[%c2, %c0_106, %c0_107] : memref<4x8x96xf32, #tpu.memory_space<vmem>>, vector<1x8x96xf32>
    %326 = vector.shape_cast %325 : vector<1x8x96xf32> to vector<8x96xf32>
    %327 = vector.extract_strided_slice %326 {offsets = [0, 0], sizes = [1, 96], strides = [1, 1]} : vector<8x96xf32> to vector<1x96xf32>
    %328 = vector.extract_strided_slice %326 {offsets = [1, 0], sizes = [1, 32], strides = [1, 1]} : vector<8x96xf32> to vector<1x32xf32>
    %329 = vector.extract_strided_slice %326 {offsets = [2, 0], sizes = [1, 32], strides = [1, 1]} : vector<8x96xf32> to vector<1x32xf32>
    %330 = vector.extract_strided_slice %326 {offsets = [3, 0], sizes = [1, 32], strides = [1, 1]} : vector<8x96xf32> to vector<1x32xf32>
    %331 = vector.extract_strided_slice %326 {offsets = [4, 0], sizes = [1, 64], strides = [1, 1]} : vector<8x96xf32> to vector<1x64xf32>
    %332 = vector.extract_strided_slice %326 {offsets = [5, 0], sizes = [1, 32], strides = [1, 1]} : vector<8x96xf32> to vector<1x32xf32>
    %333 = vector.extract_strided_slice %326 {offsets = [6, 0], sizes = [1, 32], strides = [1, 1]} : vector<8x96xf32> to vector<1x32xf32>
    %334 = vector.extract_strided_slice %326 {offsets = [7, 0], sizes = [1, 32], strides = [1, 1]} : vector<8x96xf32> to vector<1x32xf32>
    %335 = arith.truncf %321 : vector<8x32xf32> to vector<8x32xbf16>
    %c2_108 = arith.constant 2 : index
    %c0_109 = arith.constant 0 : index
    %c0_110 = arith.constant 0 : index
    %336 = vector.load %arg5[%c2_108, %c0_109, %c0_110] : memref<4x32x96xbf16, #tpu.memory_space<vmem>>, vector<1x32x96xbf16>
    %337 = vector.shape_cast %336 : vector<1x32x96xbf16> to vector<32x96xbf16>
    %cst_111 = arith.constant dense<0.000000e+00> : vector<8x96xf32>
    %338 = tpu.matmul %335, %337, %cst_111 {dimension_numbers = #tpu.dot_dimension_numbers<[1], [0], [0], [1], [0, 0, 1, 1], [], []>} : vector<8x32xbf16>, vector<32x96xbf16>, vector<8x96xf32> -> vector<8x96xf32>
    %339 = vector.broadcast %327 : vector<1x96xf32> to vector<8x96xf32>
    %340 = arith.addf %338, %339 : vector<8x96xf32>
    %341 = vector.extract_strided_slice %340 {offsets = [0, 0], sizes = [8, 8], strides = [1, 1]} : vector<8x96xf32> to vector<8x8xf32>
    %342 = vector.extract_strided_slice %340 {offsets = [0, 8], sizes = [8, 8], strides = [1, 1]} : vector<8x96xf32> to vector<8x8xf32>
    %343 = vector.extract_strided_slice %340 {offsets = [0, 16], sizes = [8, 8], strides = [1, 1]} : vector<8x96xf32> to vector<8x8xf32>
    %344 = vector.extract_strided_slice %340 {offsets = [0, 24], sizes = [8, 8], strides = [1, 1]} : vector<8x96xf32> to vector<8x8xf32>
    %345 = vector.shape_cast %341 : vector<8x8xf32> to vector<1x8x8xf32>
    %346 = vector.shape_cast %342 : vector<8x8xf32> to vector<1x8x8xf32>
    %347 = vector.shape_cast %343 : vector<8x8xf32> to vector<1x8x8xf32>
    %348 = vector.shape_cast %344 : vector<8x8xf32> to vector<1x8x8xf32>
    %349 = tpu.concatenate %345, %346, %347, %348 in 0 : vector<1x8x8xf32>, vector<1x8x8xf32>, vector<1x8x8xf32>, vector<1x8x8xf32> -> vector<4x8x8xf32>
    %350 = vector.extract_strided_slice %340 {offsets = [0, 32], sizes = [8, 8], strides = [1, 1]} : vector<8x96xf32> to vector<8x8xf32>
    %351 = vector.extract_strided_slice %340 {offsets = [0, 40], sizes = [8, 8], strides = [1, 1]} : vector<8x96xf32> to vector<8x8xf32>
    %352 = vector.extract_strided_slice %340 {offsets = [0, 48], sizes = [8, 8], strides = [1, 1]} : vector<8x96xf32> to vector<8x8xf32>
    %353 = vector.extract_strided_slice %340 {offsets = [0, 56], sizes = [8, 8], strides = [1, 1]} : vector<8x96xf32> to vector<8x8xf32>
    %354 = vector.shape_cast %350 : vector<8x8xf32> to vector<1x8x8xf32>
    %355 = vector.shape_cast %351 : vector<8x8xf32> to vector<1x8x8xf32>
    %356 = vector.shape_cast %352 : vector<8x8xf32> to vector<1x8x8xf32>
    %357 = vector.shape_cast %353 : vector<8x8xf32> to vector<1x8x8xf32>
    %358 = tpu.concatenate %354, %355, %356, %357 in 0 : vector<1x8x8xf32>, vector<1x8x8xf32>, vector<1x8x8xf32>, vector<1x8x8xf32> -> vector<4x8x8xf32>
    %359 = vector.extract_strided_slice %340 {offsets = [0, 64], sizes = [8, 8], strides = [1, 1]} : vector<8x96xf32> to vector<8x8xf32>
    %360 = vector.extract_strided_slice %340 {offsets = [0, 72], sizes = [8, 8], strides = [1, 1]} : vector<8x96xf32> to vector<8x8xf32>
    %361 = vector.extract_strided_slice %340 {offsets = [0, 80], sizes = [8, 8], strides = [1, 1]} : vector<8x96xf32> to vector<8x8xf32>
    %362 = vector.extract_strided_slice %340 {offsets = [0, 88], sizes = [8, 8], strides = [1, 1]} : vector<8x96xf32> to vector<8x8xf32>
    %363 = vector.shape_cast %359 : vector<8x8xf32> to vector<1x8x8xf32>
    %364 = vector.shape_cast %360 : vector<8x8xf32> to vector<1x8x8xf32>
    %365 = vector.shape_cast %361 : vector<8x8xf32> to vector<1x8x8xf32>
    %366 = vector.shape_cast %362 : vector<8x8xf32> to vector<1x8x8xf32>
    %367 = tpu.concatenate %363, %364, %365, %366 in 0 : vector<1x8x8xf32>, vector<1x8x8xf32>, vector<1x8x8xf32>, vector<1x8x8xf32> -> vector<4x8x8xf32>
    %cst_112 = arith.constant dense<0.000000e+00> : vector<4x8x8xf32>
    %368 = tpu.matmul %349, %358, %cst_112 {dimension_numbers = #tpu.dot_dimension_numbers<[2], [2], [1], [1], [0, 0, 0, 1, 1, 1], [0], [0]>} : vector<4x8x8xf32>, vector<4x8x8xf32>, vector<4x8x8xf32> -> vector<4x8x8xf32>
    %cst_113 = arith.constant 0.353553385 : f32
    %369 = vector.broadcast %cst_113 : f32 to vector<4x8x8xf32>
    %370 = arith.mulf %368, %369 : vector<4x8x8xf32>
    %371 = arith.addf %370, %46 : vector<4x8x8xf32>
    %cst_114 = arith.constant dense<0xFF800000> : vector<4x8xf32>
    %372 = vector.multi_reduction <maximumf>, %371, %cst_114 [2] : vector<4x8x8xf32> to vector<4x8xf32>
    %373 = vector.shape_cast %372 : vector<4x8xf32> to vector<4x8x1xf32>
    %374 = vector.broadcast %373 : vector<4x8x1xf32> to vector<4x8x8xf32>
    %375 = arith.subf %371, %374 : vector<4x8x8xf32>
    %376 = math.exp %375 : vector<4x8x8xf32>
    %cst_115 = arith.constant dense<0.000000e+00> : vector<4x8xf32>
    %377 = vector.multi_reduction <add>, %376, %cst_115 [2] : vector<4x8x8xf32> to vector<4x8xf32>
    %378 = vector.shape_cast %377 : vector<4x8xf32> to vector<4x8x1xf32>
    %379 = tpu.reciprocal %378 {approx = true} : vector<4x8x1xf32> -> vector<4x8x1xf32>
    %380 = vector.broadcast %379 : vector<4x8x1xf32> to vector<4x8x8xf32>
    %381 = arith.mulf %376, %380 : vector<4x8x8xf32>
    %cst_116 = arith.constant dense<0.000000e+00> : vector<4x8x8xf32>
    %382 = tpu.matmul %381, %367, %cst_116 {dimension_numbers = #tpu.dot_dimension_numbers<[2], [1], [1], [2], [0, 0, 0, 1, 1, 2], [0], [0]>} : vector<4x8x8xf32>, vector<4x8x8xf32>, vector<4x8x8xf32> -> vector<4x8x8xf32>
    %383 = arith.truncf %382 : vector<4x8x8xf32> to vector<4x8x8xbf16>
    %c2_117 = arith.constant 2 : index
    %c0_118 = arith.constant 0 : index
    %c0_119 = arith.constant 0 : index
    %c0_120 = arith.constant 0 : index
    %384 = vector.load %arg6[%c2_117, %c0_118, %c0_119, %c0_120] : memref<4x4x8x32xbf16, #tpu.memory_space<vmem>>, vector<1x4x8x32xbf16>
    %385 = vector.shape_cast %384 : vector<1x4x8x32xbf16> to vector<4x8x32xbf16>
    %cst_121 = arith.constant dense<0.000000e+00> : vector<4x8x32xf32>
    %386 = tpu.matmul %383, %385, %cst_121 {dimension_numbers = #tpu.dot_dimension_numbers<[2], [1], [1], [2], [0, 0, 0, 1, 1, 2], [0], [0]>} : vector<4x8x8xbf16>, vector<4x8x32xbf16>, vector<4x8x32xf32> -> vector<4x8x32xf32>
    %cst_122 = arith.constant dense<0.000000e+00> : vector<8x32xf32>
    %387 = vector.multi_reduction <add>, %386, %cst_122 [0] : vector<4x8x32xf32> to vector<8x32xf32>
    %388 = vector.broadcast %328 : vector<1x32xf32> to vector<8x32xf32>
    %389 = arith.addf %387, %388 : vector<8x32xf32>
    %390 = arith.addf %389, %321 : vector<8x32xf32>
    %cst_123 = arith.constant dense<0.000000e+00> : vector<8xf32>
    %391 = vector.multi_reduction <add>, %390, %cst_123 [1] : vector<8x32xf32> to vector<8xf32>
    %392 = vector.shape_cast %391 : vector<8xf32> to vector<8x1xf32>
    %cst_124 = arith.constant 3.200000e+01 : f32
    %393 = vector.broadcast %cst_124 : f32 to vector<8x1xf32>
    %394 = arith.divf %392, %393 : vector<8x1xf32>
    %395 = vector.broadcast %394 : vector<8x1xf32> to vector<8x32xf32>
    %396 = arith.subf %390, %395 : vector<8x32xf32>
    %397 = arith.mulf %396, %396 : vector<8x32xf32>
    %cst_125 = arith.constant dense<0.000000e+00> : vector<8xf32>
    %398 = vector.multi_reduction <add>, %397, %cst_125 [1] : vector<8x32xf32> to vector<8xf32>
    %399 = vector.shape_cast %398 : vector<8xf32> to vector<8x1xf32>
    %cst_126 = arith.constant 3.200000e+01 : f32
    %400 = vector.broadcast %cst_126 : f32 to vector<8x1xf32>
    %401 = arith.divf %399, %400 : vector<8x1xf32>
    %402 = vector.broadcast %394 : vector<8x1xf32> to vector<8x32xf32>
    %403 = arith.subf %390, %402 : vector<8x32xf32>
    %cst_127 = arith.constant 9.99999974E-6 : f32
    %404 = vector.broadcast %cst_127 : f32 to vector<8x1xf32>
    %405 = arith.addf %401, %404 : vector<8x1xf32>
    %406 = math.rsqrt %405 : vector<8x1xf32>
    %407 = vector.broadcast %406 : vector<8x1xf32> to vector<8x32xf32>
    %408 = arith.mulf %403, %407 : vector<8x32xf32>
    %409 = vector.broadcast %329 : vector<1x32xf32> to vector<8x32xf32>
    %410 = arith.mulf %408, %409 : vector<8x32xf32>
    %411 = vector.broadcast %330 : vector<1x32xf32> to vector<8x32xf32>
    %412 = arith.addf %410, %411 : vector<8x32xf32>
    %413 = arith.truncf %412 : vector<8x32xf32> to vector<8x32xbf16>
    %c2_128 = arith.constant 2 : index
    %c0_129 = arith.constant 0 : index
    %c0_130 = arith.constant 0 : index
    %414 = vector.load %arg7[%c2_128, %c0_129, %c0_130] : memref<4x32x64xbf16, #tpu.memory_space<vmem>>, vector<1x32x64xbf16>
    %415 = vector.shape_cast %414 : vector<1x32x64xbf16> to vector<32x64xbf16>
    %cst_131 = arith.constant dense<0.000000e+00> : vector<8x64xf32>
    %416 = tpu.matmul %413, %415, %cst_131 {dimension_numbers = #tpu.dot_dimension_numbers<[1], [0], [0], [1], [0, 0, 1, 1], [], []>} : vector<8x32xbf16>, vector<32x64xbf16>, vector<8x64xf32> -> vector<8x64xf32>
    %417 = vector.broadcast %331 : vector<1x64xf32> to vector<8x64xf32>
    %418 = arith.addf %416, %417 : vector<8x64xf32>
    %cst_132 = arith.constant 5.000000e-01 : f32
    %419 = vector.broadcast %cst_132 : f32 to vector<8x64xf32>
    %420 = arith.mulf %419, %418 : vector<8x64xf32>
    %cst_133 = arith.constant 4.471500e-02 : f32
    %421 = vector.broadcast %cst_133 : f32 to vector<8x64xf32>
    %422 = arith.mulf %421, %418 : vector<8x64xf32>
    %423 = arith.mulf %422, %418 : vector<8x64xf32>
    %424 = arith.mulf %423, %418 : vector<8x64xf32>
    %425 = arith.addf %418, %424 : vector<8x64xf32>
    %cst_134 = arith.constant 0.797884583 : f32
    %426 = vector.broadcast %cst_134 : f32 to vector<8x64xf32>
    %427 = arith.mulf %426, %425 : vector<8x64xf32>
    %428 = math.tanh %427 : vector<8x64xf32>
    %cst_135 = arith.constant 1.000000e+00 : f32
    %429 = vector.broadcast %cst_135 : f32 to vector<8x64xf32>
    %430 = arith.addf %429, %428 : vector<8x64xf32>
    %431 = arith.mulf %420, %430 : vector<8x64xf32>
    %432 = arith.truncf %431 : vector<8x64xf32> to vector<8x64xbf16>
    %c2_136 = arith.constant 2 : index
    %c0_137 = arith.constant 0 : index
    %c0_138 = arith.constant 0 : index
    %433 = vector.load %arg8[%c2_136, %c0_137, %c0_138] : memref<4x64x32xbf16, #tpu.memory_space<vmem>>, vector<1x64x32xbf16>
    %434 = vector.shape_cast %433 : vector<1x64x32xbf16> to vector<64x32xbf16>
    %cst_139 = arith.constant dense<0.000000e+00> : vector<8x32xf32>
    %435 = tpu.matmul %432, %434, %cst_139 {dimension_numbers = #tpu.dot_dimension_numbers<[1], [0], [0], [1], [0, 0, 1, 1], [], []>} : vector<8x64xbf16>, vector<64x32xbf16>, vector<8x32xf32> -> vector<8x32xf32>
    %436 = vector.broadcast %332 : vector<1x32xf32> to vector<8x32xf32>
    %437 = arith.addf %435, %436 : vector<8x32xf32>
    %438 = arith.addf %437, %412 : vector<8x32xf32>
    %cst_140 = arith.constant dense<0.000000e+00> : vector<8xf32>
    %439 = vector.multi_reduction <add>, %438, %cst_140 [1] : vector<8x32xf32> to vector<8xf32>
    %440 = vector.shape_cast %439 : vector<8xf32> to vector<8x1xf32>
    %cst_141 = arith.constant 3.200000e+01 : f32
    %441 = vector.broadcast %cst_141 : f32 to vector<8x1xf32>
    %442 = arith.divf %440, %441 : vector<8x1xf32>
    %443 = vector.broadcast %442 : vector<8x1xf32> to vector<8x32xf32>
    %444 = arith.subf %438, %443 : vector<8x32xf32>
    %445 = arith.mulf %444, %444 : vector<8x32xf32>
    %cst_142 = arith.constant dense<0.000000e+00> : vector<8xf32>
    %446 = vector.multi_reduction <add>, %445, %cst_142 [1] : vector<8x32xf32> to vector<8xf32>
    %447 = vector.shape_cast %446 : vector<8xf32> to vector<8x1xf32>
    %cst_143 = arith.constant 3.200000e+01 : f32
    %448 = vector.broadcast %cst_143 : f32 to vector<8x1xf32>
    %449 = arith.divf %447, %448 : vector<8x1xf32>
    %450 = vector.broadcast %442 : vector<8x1xf32> to vector<8x32xf32>
    %451 = arith.subf %438, %450 : vector<8x32xf32>
    %cst_144 = arith.constant 9.99999974E-6 : f32
    %452 = vector.broadcast %cst_144 : f32 to vector<8x1xf32>
    %453 = arith.addf %449, %452 : vector<8x1xf32>
    %454 = math.rsqrt %453 : vector<8x1xf32>
    %455 = vector.broadcast %454 : vector<8x1xf32> to vector<8x32xf32>
    %456 = arith.mulf %451, %455 : vector<8x32xf32>
    %457 = vector.broadcast %333 : vector<1x32xf32> to vector<8x32xf32>
    %458 = arith.mulf %456, %457 : vector<8x32xf32>
    %459 = vector.broadcast %334 : vector<1x32xf32> to vector<8x32xf32>
    %460 = arith.addf %458, %459 : vector<8x32xf32>
    %c0_145 = arith.constant 0 : index
    %c0_146 = arith.constant 0 : index
    %c64 = arith.constant 64 : index
    %461 = vector.load %arg14[%c0_145, %c0_146, %c64] : memref<1x8x128xf32, #tpu.memory_space<vmem>>, vector<1x8x32xf32>
    %462 = vector.shape_cast %461 : vector<1x8x32xf32> to vector<8x32xf32>
    %463 = vector.shape_cast %460 : vector<8x32xf32> to vector<1x8x32xf32>
    tpu.vector_store %arg14[%c0_145, %c0_146, %c64], %463 {strides = array<i32>} : memref<1x8x128xf32, #tpu.memory_space<vmem>>, vector<1x8x32xf32>,
    %c3 = arith.constant 3 : index
    %c0_147 = arith.constant 0 : index
    %c0_148 = arith.constant 0 : index
    %464 = vector.load %arg9[%c3, %c0_147, %c0_148] : memref<4x8x96xf32, #tpu.memory_space<vmem>>, vector<1x8x96xf32>
    %465 = vector.shape_cast %464 : vector<1x8x96xf32> to vector<8x96xf32>
    %466 = vector.extract_strided_slice %465 {offsets = [0, 0], sizes = [1, 96], strides = [1, 1]} : vector<8x96xf32> to vector<1x96xf32>
    %467 = vector.extract_strided_slice %465 {offsets = [1, 0], sizes = [1, 32], strides = [1, 1]} : vector<8x96xf32> to vector<1x32xf32>
    %468 = vector.extract_strided_slice %465 {offsets = [2, 0], sizes = [1, 32], strides = [1, 1]} : vector<8x96xf32> to vector<1x32xf32>
    %469 = vector.extract_strided_slice %465 {offsets = [3, 0], sizes = [1, 32], strides = [1, 1]} : vector<8x96xf32> to vector<1x32xf32>
    %470 = vector.extract_strided_slice %465 {offsets = [4, 0], sizes = [1, 64], strides = [1, 1]} : vector<8x96xf32> to vector<1x64xf32>
    %471 = vector.extract_strided_slice %465 {offsets = [5, 0], sizes = [1, 32], strides = [1, 1]} : vector<8x96xf32> to vector<1x32xf32>
    %472 = vector.extract_strided_slice %465 {offsets = [6, 0], sizes = [1, 32], strides = [1, 1]} : vector<8x96xf32> to vector<1x32xf32>
    %473 = vector.extract_strided_slice %465 {offsets = [7, 0], sizes = [1, 32], strides = [1, 1]} : vector<8x96xf32> to vector<1x32xf32>
    %474 = arith.truncf %460 : vector<8x32xf32> to vector<8x32xbf16>
    %c3_149 = arith.constant 3 : index
    %c0_150 = arith.constant 0 : index
    %c0_151 = arith.constant 0 : index
    %475 = vector.load %arg5[%c3_149, %c0_150, %c0_151] : memref<4x32x96xbf16, #tpu.memory_space<vmem>>, vector<1x32x96xbf16>
    %476 = vector.shape_cast %475 : vector<1x32x96xbf16> to vector<32x96xbf16>
    %cst_152 = arith.constant dense<0.000000e+00> : vector<8x96xf32>
    %477 = tpu.matmul %474, %476, %cst_152 {dimension_numbers = #tpu.dot_dimension_numbers<[1], [0], [0], [1], [0, 0, 1, 1], [], []>} : vector<8x32xbf16>, vector<32x96xbf16>, vector<8x96xf32> -> vector<8x96xf32>
    %478 = vector.broadcast %466 : vector<1x96xf32> to vector<8x96xf32>
    %479 = arith.addf %477, %478 : vector<8x96xf32>
    %480 = vector.extract_strided_slice %479 {offsets = [0, 0], sizes = [8, 8], strides = [1, 1]} : vector<8x96xf32> to vector<8x8xf32>
    %481 = vector.extract_strided_slice %479 {offsets = [0, 8], sizes = [8, 8], strides = [1, 1]} : vector<8x96xf32> to vector<8x8xf32>
    %482 = vector.extract_strided_slice %479 {offsets = [0, 16], sizes = [8, 8], strides = [1, 1]} : vector<8x96xf32> to vector<8x8xf32>
    %483 = vector.extract_strided_slice %479 {offsets = [0, 24], sizes = [8, 8], strides = [1, 1]} : vector<8x96xf32> to vector<8x8xf32>
    %484 = vector.shape_cast %480 : vector<8x8xf32> to vector<1x8x8xf32>
    %485 = vector.shape_cast %481 : vector<8x8xf32> to vector<1x8x8xf32>
    %486 = vector.shape_cast %482 : vector<8x8xf32> to vector<1x8x8xf32>
    %487 = vector.shape_cast %483 : vector<8x8xf32> to vector<1x8x8xf32>
    %488 = tpu.concatenate %484, %485, %486, %487 in 0 : vector<1x8x8xf32>, vector<1x8x8xf32>, vector<1x8x8xf32>, vector<1x8x8xf32> -> vector<4x8x8xf32>
    %489 = vector.extract_strided_slice %479 {offsets = [0, 32], sizes = [8, 8], strides = [1, 1]} : vector<8x96xf32> to vector<8x8xf32>
    %490 = vector.extract_strided_slice %479 {offsets = [0, 40], sizes = [8, 8], strides = [1, 1]} : vector<8x96xf32> to vector<8x8xf32>
    %491 = vector.extract_strided_slice %479 {offsets = [0, 48], sizes = [8, 8], strides = [1, 1]} : vector<8x96xf32> to vector<8x8xf32>
    %492 = vector.extract_strided_slice %479 {offsets = [0, 56], sizes = [8, 8], strides = [1, 1]} : vector<8x96xf32> to vector<8x8xf32>
    %493 = vector.shape_cast %489 : vector<8x8xf32> to vector<1x8x8xf32>
    %494 = vector.shape_cast %490 : vector<8x8xf32> to vector<1x8x8xf32>
    %495 = vector.shape_cast %491 : vector<8x8xf32> to vector<1x8x8xf32>
    %496 = vector.shape_cast %492 : vector<8x8xf32> to vector<1x8x8xf32>
    %497 = tpu.concatenate %493, %494, %495, %496 in 0 : vector<1x8x8xf32>, vector<1x8x8xf32>, vector<1x8x8xf32>, vector<1x8x8xf32> -> vector<4x8x8xf32>
    %498 = vector.extract_strided_slice %479 {offsets = [0, 64], sizes = [8, 8], strides = [1, 1]} : vector<8x96xf32> to vector<8x8xf32>
    %499 = vector.extract_strided_slice %479 {offsets = [0, 72], sizes = [8, 8], strides = [1, 1]} : vector<8x96xf32> to vector<8x8xf32>
    %500 = vector.extract_strided_slice %479 {offsets = [0, 80], sizes = [8, 8], strides = [1, 1]} : vector<8x96xf32> to vector<8x8xf32>
    %501 = vector.extract_strided_slice %479 {offsets = [0, 88], sizes = [8, 8], strides = [1, 1]} : vector<8x96xf32> to vector<8x8xf32>
    %502 = vector.shape_cast %498 : vector<8x8xf32> to vector<1x8x8xf32>
    %503 = vector.shape_cast %499 : vector<8x8xf32> to vector<1x8x8xf32>
    %504 = vector.shape_cast %500 : vector<8x8xf32> to vector<1x8x8xf32>
    %505 = vector.shape_cast %501 : vector<8x8xf32> to vector<1x8x8xf32>
    %506 = tpu.concatenate %502, %503, %504, %505 in 0 : vector<1x8x8xf32>, vector<1x8x8xf32>, vector<1x8x8xf32>, vector<1x8x8xf32> -> vector<4x8x8xf32>
    %cst_153 = arith.constant dense<0.000000e+00> : vector<4x8x8xf32>
    %507 = tpu.matmul %488, %497, %cst_153 {dimension_numbers = #tpu.dot_dimension_numbers<[2], [2], [1], [1], [0, 0, 0, 1, 1, 1], [0], [0]>} : vector<4x8x8xf32>, vector<4x8x8xf32>, vector<4x8x8xf32> -> vector<4x8x8xf32>
    %cst_154 = arith.constant 0.353553385 : f32
    %508 = vector.broadcast %cst_154 : f32 to vector<4x8x8xf32>
    %509 = arith.mulf %507, %508 : vector<4x8x8xf32>
    %510 = arith.addf %509, %46 : vector<4x8x8xf32>
    %cst_155 = arith.constant dense<0xFF800000> : vector<4x8xf32>
    %511 = vector.multi_reduction <maximumf>, %510, %cst_155 [2] : vector<4x8x8xf32> to vector<4x8xf32>
    %512 = vector.shape_cast %511 : vector<4x8xf32> to vector<4x8x1xf32>
    %513 = vector.broadcast %512 : vector<4x8x1xf32> to vector<4x8x8xf32>
    %514 = arith.subf %510, %513 : vector<4x8x8xf32>
    %515 = math.exp %514 : vector<4x8x8xf32>
    %cst_156 = arith.constant dense<0.000000e+00> : vector<4x8xf32>
    %516 = vector.multi_reduction <add>, %515, %cst_156 [2] : vector<4x8x8xf32> to vector<4x8xf32>
    %517 = vector.shape_cast %516 : vector<4x8xf32> to vector<4x8x1xf32>
    %518 = tpu.reciprocal %517 {approx = true} : vector<4x8x1xf32> -> vector<4x8x1xf32>
    %519 = vector.broadcast %518 : vector<4x8x1xf32> to vector<4x8x8xf32>
    %520 = arith.mulf %515, %519 : vector<4x8x8xf32>
    %cst_157 = arith.constant dense<0.000000e+00> : vector<4x8x8xf32>
    %521 = tpu.matmul %520, %506, %cst_157 {dimension_numbers = #tpu.dot_dimension_numbers<[2], [1], [1], [2], [0, 0, 0, 1, 1, 2], [0], [0]>} : vector<4x8x8xf32>, vector<4x8x8xf32>, vector<4x8x8xf32> -> vector<4x8x8xf32>
    %522 = arith.truncf %521 : vector<4x8x8xf32> to vector<4x8x8xbf16>
    %c3_158 = arith.constant 3 : index
    %c0_159 = arith.constant 0 : index
    %c0_160 = arith.constant 0 : index
    %c0_161 = arith.constant 0 : index
    %523 = vector.load %arg6[%c3_158, %c0_159, %c0_160, %c0_161] : memref<4x4x8x32xbf16, #tpu.memory_space<vmem>>, vector<1x4x8x32xbf16>
    %524 = vector.shape_cast %523 : vector<1x4x8x32xbf16> to vector<4x8x32xbf16>
    %cst_162 = arith.constant dense<0.000000e+00> : vector<4x8x32xf32>
    %525 = tpu.matmul %522, %524, %cst_162 {dimension_numbers = #tpu.dot_dimension_numbers<[2], [1], [1], [2], [0, 0, 0, 1, 1, 2], [0], [0]>} : vector<4x8x8xbf16>, vector<4x8x32xbf16>, vector<4x8x32xf32> -> vector<4x8x32xf32>
    %cst_163 = arith.constant dense<0.000000e+00> : vector<8x32xf32>
    %526 = vector.multi_reduction <add>, %525, %cst_163 [0] : vector<4x8x32xf32> to vector<8x32xf32>
    %527 = vector.broadcast %467 : vector<1x32xf32> to vector<8x32xf32>
    %528 = arith.addf %526, %527 : vector<8x32xf32>
    %529 = arith.addf %528, %460 : vector<8x32xf32>
    %cst_164 = arith.constant dense<0.000000e+00> : vector<8xf32>
    %530 = vector.multi_reduction <add>, %529, %cst_164 [1] : vector<8x32xf32> to vector<8xf32>
    %531 = vector.shape_cast %530 : vector<8xf32> to vector<8x1xf32>
    %cst_165 = arith.constant 3.200000e+01 : f32
    %532 = vector.broadcast %cst_165 : f32 to vector<8x1xf32>
    %533 = arith.divf %531, %532 : vector<8x1xf32>
    %534 = vector.broadcast %533 : vector<8x1xf32> to vector<8x32xf32>
    %535 = arith.subf %529, %534 : vector<8x32xf32>
    %536 = arith.mulf %535, %535 : vector<8x32xf32>
    %cst_166 = arith.constant dense<0.000000e+00> : vector<8xf32>
    %537 = vector.multi_reduction <add>, %536, %cst_166 [1] : vector<8x32xf32> to vector<8xf32>
    %538 = vector.shape_cast %537 : vector<8xf32> to vector<8x1xf32>
    %cst_167 = arith.constant 3.200000e+01 : f32
    %539 = vector.broadcast %cst_167 : f32 to vector<8x1xf32>
    %540 = arith.divf %538, %539 : vector<8x1xf32>
    %541 = vector.broadcast %533 : vector<8x1xf32> to vector<8x32xf32>
    %542 = arith.subf %529, %541 : vector<8x32xf32>
    %cst_168 = arith.constant 9.99999974E-6 : f32
    %543 = vector.broadcast %cst_168 : f32 to vector<8x1xf32>
    %544 = arith.addf %540, %543 : vector<8x1xf32>
    %545 = math.rsqrt %544 : vector<8x1xf32>
    %546 = vector.broadcast %545 : vector<8x1xf32> to vector<8x32xf32>
    %547 = arith.mulf %542, %546 : vector<8x32xf32>
    %548 = vector.broadcast %468 : vector<1x32xf32> to vector<8x32xf32>
    %549 = arith.mulf %547, %548 : vector<8x32xf32>
    %550 = vector.broadcast %469 : vector<1x32xf32> to vector<8x32xf32>
    %551 = arith.addf %549, %550 : vector<8x32xf32>
    %552 = arith.truncf %551 : vector<8x32xf32> to vector<8x32xbf16>
    %c3_169 = arith.constant 3 : index
    %c0_170 = arith.constant 0 : index
    %c0_171 = arith.constant 0 : index
    %553 = vector.load %arg7[%c3_169, %c0_170, %c0_171] : memref<4x32x64xbf16, #tpu.memory_space<vmem>>, vector<1x32x64xbf16>
    %554 = vector.shape_cast %553 : vector<1x32x64xbf16> to vector<32x64xbf16>
    %cst_172 = arith.constant dense<0.000000e+00> : vector<8x64xf32>
    %555 = tpu.matmul %552, %554, %cst_172 {dimension_numbers = #tpu.dot_dimension_numbers<[1], [0], [0], [1], [0, 0, 1, 1], [], []>} : vector<8x32xbf16>, vector<32x64xbf16>, vector<8x64xf32> -> vector<8x64xf32>
    %556 = vector.broadcast %470 : vector<1x64xf32> to vector<8x64xf32>
    %557 = arith.addf %555, %556 : vector<8x64xf32>
    %cst_173 = arith.constant 5.000000e-01 : f32
    %558 = vector.broadcast %cst_173 : f32 to vector<8x64xf32>
    %559 = arith.mulf %558, %557 : vector<8x64xf32>
    %cst_174 = arith.constant 4.471500e-02 : f32
    %560 = vector.broadcast %cst_174 : f32 to vector<8x64xf32>
    %561 = arith.mulf %560, %557 : vector<8x64xf32>
    %562 = arith.mulf %561, %557 : vector<8x64xf32>
    %563 = arith.mulf %562, %557 : vector<8x64xf32>
    %564 = arith.addf %557, %563 : vector<8x64xf32>
    %cst_175 = arith.constant 0.797884583 : f32
    %565 = vector.broadcast %cst_175 : f32 to vector<8x64xf32>
    %566 = arith.mulf %565, %564 : vector<8x64xf32>
    %567 = math.tanh %566 : vector<8x64xf32>
    %cst_176 = arith.constant 1.000000e+00 : f32
    %568 = vector.broadcast %cst_176 : f32 to vector<8x64xf32>
    %569 = arith.addf %568, %567 : vector<8x64xf32>
    %570 = arith.mulf %559, %569 : vector<8x64xf32>
    %571 = arith.truncf %570 : vector<8x64xf32> to vector<8x64xbf16>
    %c3_177 = arith.constant 3 : index
    %c0_178 = arith.constant 0 : index
    %c0_179 = arith.constant 0 : index
    %572 = vector.load %arg8[%c3_177, %c0_178, %c0_179] : memref<4x64x32xbf16, #tpu.memory_space<vmem>>, vector<1x64x32xbf16>
    %573 = vector.shape_cast %572 : vector<1x64x32xbf16> to vector<64x32xbf16>
    %cst_180 = arith.constant dense<0.000000e+00> : vector<8x32xf32>
    %574 = tpu.matmul %571, %573, %cst_180 {dimension_numbers = #tpu.dot_dimension_numbers<[1], [0], [0], [1], [0, 0, 1, 1], [], []>} : vector<8x64xbf16>, vector<64x32xbf16>, vector<8x32xf32> -> vector<8x32xf32>
    %575 = vector.broadcast %471 : vector<1x32xf32> to vector<8x32xf32>
    %576 = arith.addf %574, %575 : vector<8x32xf32>
    %577 = arith.addf %576, %551 : vector<8x32xf32>
    %cst_181 = arith.constant dense<0.000000e+00> : vector<8xf32>
    %578 = vector.multi_reduction <add>, %577, %cst_181 [1] : vector<8x32xf32> to vector<8xf32>
    %579 = vector.shape_cast %578 : vector<8xf32> to vector<8x1xf32>
    %cst_182 = arith.constant 3.200000e+01 : f32
    %580 = vector.broadcast %cst_182 : f32 to vector<8x1xf32>
    %581 = arith.divf %579, %580 : vector<8x1xf32>
    %582 = vector.broadcast %581 : vector<8x1xf32> to vector<8x32xf32>
    %583 = arith.subf %577, %582 : vector<8x32xf32>
    %584 = arith.mulf %583, %583 : vector<8x32xf32>
    %cst_183 = arith.constant dense<0.000000e+00> : vector<8xf32>
    %585 = vector.multi_reduction <add>, %584, %cst_183 [1] : vector<8x32xf32> to vector<8xf32>
    %586 = vector.shape_cast %585 : vector<8xf32> to vector<8x1xf32>
    %cst_184 = arith.constant 3.200000e+01 : f32
    %587 = vector.broadcast %cst_184 : f32 to vector<8x1xf32>
    %588 = arith.divf %586, %587 : vector<8x1xf32>
    %589 = vector.broadcast %581 : vector<8x1xf32> to vector<8x32xf32>
    %590 = arith.subf %577, %589 : vector<8x32xf32>
    %cst_185 = arith.constant 9.99999974E-6 : f32
    %591 = vector.broadcast %cst_185 : f32 to vector<8x1xf32>
    %592 = arith.addf %588, %591 : vector<8x1xf32>
    %593 = math.rsqrt %592 : vector<8x1xf32>
    %594 = vector.broadcast %593 : vector<8x1xf32> to vector<8x32xf32>
    %595 = arith.mulf %590, %594 : vector<8x32xf32>
    %596 = vector.broadcast %472 : vector<1x32xf32> to vector<8x32xf32>
    %597 = arith.mulf %595, %596 : vector<8x32xf32>
    %598 = vector.broadcast %473 : vector<1x32xf32> to vector<8x32xf32>
    %599 = arith.addf %597, %598 : vector<8x32xf32>
    %c0_186 = arith.constant 0 : index
    %c0_187 = arith.constant 0 : index
    %c96 = arith.constant 96 : index
    %600 = vector.load %arg14[%c0_186, %c0_187, %c96] : memref<1x8x128xf32, #tpu.memory_space<vmem>>, vector<1x8x32xf32>
    %601 = vector.shape_cast %600 : vector<1x8x32xf32> to vector<8x32xf32>
    %602 = vector.shape_cast %599 : vector<8x32xf32> to vector<1x8x32xf32>
    tpu.vector_store %arg14[%c0_186, %c0_187, %c96], %602 {strides = array<i32>} : memref<1x8x128xf32, #tpu.memory_space<vmem>>, vector<1x8x32xf32>,
    %603 = vector.extract_strided_slice %599 {offsets = [0, 0], sizes = [1, 32], strides = [1, 1]} : vector<8x32xf32> to vector<1x32xf32>
    %604 = arith.truncf %603 : vector<1x32xf32> to vector<1x32xbf16>
    %c0_188 = arith.constant 0 : index
    %c0_189 = arith.constant 0 : index
    %605 = vector.load %arg10[%c0_188, %c0_189] : memref<32x32xbf16, #tpu.memory_space<vmem>>, vector<32x32xbf16>
    %cst_190 = arith.constant dense<0.000000e+00> : vector<1x32xf32>
    %606 = tpu.matmul %604, %605, %cst_190 {dimension_numbers = #tpu.dot_dimension_numbers<[1], [0], [0], [1], [0, 0, 1, 1], [], []>} : vector<1x32xbf16>, vector<32x32xbf16>, vector<1x32xf32> -> vector<1x32xf32>
    %c2_191 = arith.constant 2 : index
    %c0_192 = arith.constant 0 : index
    %607 = vector.load %arg12[%c2_191, %c0_192] : memref<4x128xf32, #tpu.memory_space<vmem>>, vector<1x32xf32>
    %608 = arith.addf %606, %607 : vector<1x32xf32>
    %609 = math.tanh %608 : vector<1x32xf32>
    %610 = arith.truncf %609 : vector<1x32xf32> to vector<1x32xbf16>
    %c0_193 = arith.constant 0 : index
    %c0_194 = arith.constant 0 : index
    %611 = vector.load %arg11[%c0_193, %c0_194] : memref<32x128xbf16, #tpu.memory_space<vmem>>, vector<32x128xbf16>
    %cst_195 = arith.constant dense<0.000000e+00> : vector<1x128xf32>
    %612 = tpu.matmul %610, %611, %cst_195 {dimension_numbers = #tpu.dot_dimension_numbers<[1], [0], [0], [1], [0, 0, 1, 1], [], []>} : vector<1x32xbf16>, vector<32x128xbf16>, vector<1x128xf32> -> vector<1x128xf32>
    %c3_196 = arith.constant 3 : index
    %c0_197 = arith.constant 0 : index
    %613 = vector.load %arg12[%c3_196, %c0_197] : memref<4x128xf32, #tpu.memory_space<vmem>>, vector<1x128xf32>
    %614 = arith.addf %612, %613 : vector<1x128xf32>
    %c0_198 = arith.constant 0 : index
    %c0_199 = arith.constant 0 : index
    %c0_200 = arith.constant 0 : index
    %615 = vector.load %arg13[%c0_198, %c0_199, %c0_200] : memref<1x1x128xf32, #tpu.memory_space<vmem>>, vector<1x1x128xf32>
    %616 = vector.shape_cast %615 : vector<1x1x128xf32> to vector<1x128xf32>
    %617 = vector.shape_cast %614 : vector<1x128xf32> to vector<1x1x128xf32>
    tpu.vector_store %arg13[%c0_198, %c0_199, %c0_200], %617 {strides = array<i32>} : memref<1x1x128xf32, #tpu.memory_space<vmem>>, vector<1x1x128xf32>,
    return
  }
  func.func @transform_0(%arg0: i32) -> (i32, i32, i32) {
    %c0_i32 = arith.constant 0 : i32
    %c0_i32_0 = arith.constant 0 : i32
    %c0_i32_1 = arith.constant 0 : i32
    return %arg0, %c0_i32, %c0_i32_0 : i32, i32, i32
  }
  func.func @transform_1(%arg0: i32) -> (i32, i32, i32) {
    %c0_i32 = arith.constant 0 : i32
    %c0_i32_0 = arith.constant 0 : i32
    %c0_i32_1 = arith.constant 0 : i32
    return %arg0, %c0_i32, %c0_i32_0 : i32, i32, i32
  }
  func.func @transform_2(%arg0: i32) -> (i32, i32) {
    %c0_i32 = arith.constant 0 : i32
    %c0_i32_0 = arith.constant 0 : i32
    %c0_i32_1 = arith.constant 0 : i32
    return %c0_i32, %c0_i32_0 : i32, i32
  }
  func.func @transform_3(%arg0: i32) -> (i32, i32) {
    %c0_i32 = arith.constant 0 : i32
    %c0_i32_0 = arith.constant 0 : i32
    %c0_i32_1 = arith.constant 0 : i32
    return %c0_i32, %c0_i32_0 : i32, i32
  }
  func.func @transform_4(%arg0: i32) -> (i32, i32, i32) {
    %c0_i32 = arith.constant 0 : i32
    %c0_i32_0 = arith.constant 0 : i32
    %c0_i32_1 = arith.constant 0 : i32
    %c0_i32_2 = arith.constant 0 : i32
    return %c0_i32, %c0_i32_0, %c0_i32_1 : i32, i32, i32
  }
  func.func @transform_5(%arg0: i32) -> (i32, i32, i32, i32) {
    %c0_i32 = arith.constant 0 : i32
    %c0_i32_0 = arith.constant 0 : i32
    %c0_i32_1 = arith.constant 0 : i32
    %c0_i32_2 = arith.constant 0 : i32
    %c0_i32_3 = arith.constant 0 : i32
    return %c0_i32, %c0_i32_0, %c0_i32_1, %c0_i32_2 : i32, i32, i32, i32
  }
  func.func @transform_6(%arg0: i32) -> (i32, i32, i32) {
    %c0_i32 = arith.constant 0 : i32
    %c0_i32_0 = arith.constant 0 : i32
    %c0_i32_1 = arith.constant 0 : i32
    %c0_i32_2 = arith.constant 0 : i32
    return %c0_i32, %c0_i32_0, %c0_i32_1 : i32, i32, i32
  }
  func.func @transform_7(%arg0: i32) -> (i32, i32, i32) {
    %c0_i32 = arith.constant 0 : i32
    %c0_i32_0 = arith.constant 0 : i32
    %c0_i32_1 = arith.constant 0 : i32
    %c0_i32_2 = arith.constant 0 : i32
    return %c0_i32, %c0_i32_0, %c0_i32_1 : i32, i32, i32
  }
  func.func @transform_8(%arg0: i32) -> (i32, i32, i32) {
    %c0_i32 = arith.constant 0 : i32
    %c0_i32_0 = arith.constant 0 : i32
    %c0_i32_1 = arith.constant 0 : i32
    %c0_i32_2 = arith.constant 0 : i32
    return %c0_i32, %c0_i32_0, %c0_i32_1 : i32, i32, i32
  }
  func.func @transform_9(%arg0: i32) -> (i32, i32) {
    %c0_i32 = arith.constant 0 : i32
    %c0_i32_0 = arith.constant 0 : i32
    %c0_i32_1 = arith.constant 0 : i32
    return %c0_i32, %c0_i32_0 : i32, i32
  }
  func.func @transform_10(%arg0: i32) -> (i32, i32) {
    %c0_i32 = arith.constant 0 : i32
    %c0_i32_0 = arith.constant 0 : i32
    %c0_i32_1 = arith.constant 0 : i32
    return %c0_i32, %c0_i32_0 : i32, i32
  }
  func.func @transform_11(%arg0: i32) -> (i32, i32) {
    %c0_i32 = arith.constant 0 : i32
    %c0_i32_0 = arith.constant 0 : i32
    %c0_i32_1 = arith.constant 0 : i32
    return %c0_i32, %c0_i32_0 : i32, i32
  }
  func.func @transform_12(%arg0: i32) -> (i32, i32, i32) {
    %c0_i32 = arith.constant 0 : i32
    %c0_i32_0 = arith.constant 0 : i32
    %c0_i32_1 = arith.constant 0 : i32
    return %arg0, %c0_i32, %c0_i32_0 : i32, i32, i32
  }
  func.func @transform_13(%arg0: i32) -> (i32, i32, i32) {
    %c0_i32 = arith.constant 0 : i32
    %c0_i32_0 = arith.constant 0 : i32
    %c0_i32_1 = arith.constant 0 : i32
    return %arg0, %c0_i32, %c0_i32_0 : i32, i32, i32
  }
}

</mosaic_0001>

<llo_original>
// kernel: e2e_bertweet_forward.1
$region0: #{e2e_bertweet_forward.1}
  #allocation0 [shape = 'u32[]', space=smem, size = 0x4, offset = 0x4, fixed_abs, tag = 'smem constant byte address 0x4 - core index']
  #allocation1 [shape = 'u32[144,128]{1,0:T(1,128)}', space=vmem, size = 0x12000, scoped, tag = 'internal scratch']
  %s0 = inlined_call_operand.vmem [shape: s32[2,8,1], index: 0, kind: input, shape index: {}]
  %s1 = inlined_call_operand.vmem [shape: s32[2,1,8], index: 1, kind: input, shape index: {}]
  %s2 = inlined_call_operand.vmem [shape: bf16[128,32], index: 2, kind: input, shape index: {}]
  %s3 = inlined_call_operand.vmem [shape: f32[16,32], index: 3, kind: input, shape index: {}]
  %s4 = inlined_call_operand.vmem [shape: bf16[4,32,96], index: 4, kind: input, shape index: {}]
  %s5 = inlined_call_operand.vmem [shape: bf16[4,4,8,32], index: 5, kind: input, shape index: {}]
  %s6 = inlined_call_operand.vmem [shape: bf16[4,32,64], index: 6, kind: input, shape index: {}]
  %s7 = inlined_call_operand.vmem [shape: bf16[4,64,32], index: 7, kind: input, shape index: {}]
  %s8 = inlined_call_operand.vmem [shape: f32[4,8,96], index: 8, kind: input, shape index: {}]
  %s9 = inlined_call_operand.vmem [shape: bf16[32,32], index: 9, kind: input, shape index: {}]
  %s10 = inlined_call_operand.hbm [shape: bf16[32,128], index: 10, kind: input, shape index: {}]
  %s11 = inlined_call_operand.vmem [shape: f32[4,128], index: 11, kind: input, shape index: {}]
  %s12 = inlined_call_operand.hbm [shape: f32[2,1,128], index: 12, kind: output, shape index: {0}]
  %s13 = inlined_call_operand.hbm [shape: f32[2,8,128], index: 13, kind: output, shape index: {1}]
  %14 = xla_tuple %s12, %s13
  %s15 = sld [smem:[#allocation0]]
  $region93: #{e2e_bertweet_forward.1} parent=0
    _
  %s17 = ssub.s32 1, %s15
  %s18 = scalar_select 0, %s17, %s15
  $region1: #{e2e_bertweet_forward.1} parent=0
    #allocation2 [shape = 'u8[8192]{0}', space=vmem, size = 0x2000, scoped, tag = 'input window, operand 10, single buffered']
    #allocation3 [shape = 's32[2]{0}', space=sflag, size = 0x8, scoped, tag = 'scoped memory for e2e_bertweet_forward.1']
    #allocation4 [shape = 's32[2]{0}', space=sflag, size = 0x8, scoped, tag = 'scoped memory for e2e_bertweet_forward.1']
    #allocation5 [shape = 'u8[1024]{0}', space=vmem, size = 0x400, scoped, tag = 'output window, operand 0']
    #allocation6 [shape = 'u8[8192]{0}', space=vmem, size = 0x2000, scoped, tag = 'output window, operand 1']
    #allocation7 [shape = 's32[2]{0}', space=sflag, size = 0x8, scoped, tag = 'scoped memory for e2e_bertweet_forward.1']
    %19 = vsyncpa [#allocation3], 0
    %20 = vsyncpa [#allocation4], 0
    %s21 = scalar_lea.sflag [#allocation4], 1
    %22 = vsyncpa %s21, 0
    %23 = vsyncpa [#allocation7], 0
    %s24 = scalar_lea.sflag [#allocation7], 1
    %25 = vsyncpa %s24, 0
    loop: start=0, step=1, limit=4
    $region2: #{e2e_bertweet_forward.1} parent=1 // loop_pre_header
      _
    $region3: #{e2e_bertweet_forward.1} parent=1 // loop_header
      %s27 = sphi 0, %s31
      %p28 = scmp.ge.s32.totalorder %s27, 4
      %s37 = sphi 0, %s39
      %s40 = sphi 0, %s37
      %s41 = sphi 0, %s40
      %s57 = sphi 0, %s41
      %s63 = sphi 0, %s65
      %s66 = sphi 0, %s63
      %s67 = sphi 0, %s66
      %s83 = sphi 0, %s67
      %s87 = sphi 0, %s87
      %s89 = sphi 0, %s87
      %s90 = sphi 0, %s89
      %s104 = sphi 0, %s90
      %s108 = sphi 0, %s108
      %s110 = sphi 0, %s108
      %s111 = sphi 0, %s110
      %s125 = sphi 0, %s111
      %s129 = sphi 0, %s129
      %s131 = sphi 0, %s129
      %s132 = sphi 0, %s131
      %s146 = sphi 0, %s132
      %s150 = sphi 0, %s150
      %s152 = sphi 0, %s150
      %s153 = sphi 0, %s152
      %s167 = sphi 0, %s153
      %s171 = sphi 0, %s171
      %s173 = sphi 0, %s171
      %s174 = sphi 0, %s173
      %s188 = sphi 0, %s174
      %s192 = sphi 0, %s192
      %s194 = sphi 0, %s192
      %s195 = sphi 0, %s194
      %s209 = sphi 0, %s195
      %s213 = sphi 0, %s213
      %s215 = sphi 0, %s213
      %s216 = sphi 0, %s215
      %s230 = sphi 0, %s216
      %s234 = sphi 0, %s234
      %s236 = sphi 0, %s234
      %s237 = sphi 0, %s236
      %s251 = sphi 0, %s237
      %s255 = sphi 0, %s255
      %s257 = sphi 0, %s255
      %s258 = sphi 0, %s257
      %s272 = sphi 0, %s258
      %s276 = sphi 0, %s276
      %s278 = sphi 0, %s276
      %s279 = sphi 0, %s278
      %s293 = sphi 0, %s279
      %s299 = sphi 0, %s301
      %s302 = sphi 0, %s299
      %s303 = sphi 0, %s302
      %s319 = sphi 0, %s303
      %s325 = sphi 0, %s327
      %s328 = sphi 0, %s325
      %s329 = sphi 0, %s328
      %s345 = sphi 0, %s329
    $region4: #{e2e_bertweet_forward.1} parent=1 // loop_header_branch
      %30 = sbr.rel (%p28) target = $region8
    $region5: #{e2e_bertweet_forward.1} parent=1 // loop_body
      %s32 = ssub.s32 %s27, 1
      %s33 = ssub.s32 %s27, 2
      %s34 = sadd.s32 %s27, 1
      %s35 = ssub.s32 %s27, %s34
      %p36 = scmp.eq.s32.totalorder %s35, 0
      %s38 = sadd.s32 %s37, 1
      %s39 = scalar_select %p36, %s37, %s38
      %p42 = pneg %p36
      %p43 = scmp.eq.s32.totalorder %s27, 1
      %p44 = por %p42, %p43
      %p45 = scmp.ne.s32.totalorder %s37, %s40
      %p46 = scmp.eq.s32.totalorder %s27, 0
      %p47 = por %p45, %p46
      %p48 = scmp.ne.s32.totalorder %s37, %s40
      %p49 = scmp.eq.s32.totalorder %s32, 1
      %p50 = por %p48, %p49
      %p51 = scmp.ne.s32.totalorder %s40, %s41
      %p52 = scmp.eq.s32.totalorder %s32, 0
      %p53 = por %p51, %p52
      %p54 = scmp.ne.s32.totalorder %s40, %s41
      %p55 = scmp.eq.s32.totalorder %s33, 1
      %p56 = por %p54, %p55
      %p58 = scmp.ne.s32.totalorder %s41, %s57
      %p59 = scmp.eq.s32.totalorder %s33, 0
      %p60 = por %p58, %p59
      %s61 = ssub.s32 %s27, %s34
      %p62 = scmp.eq.s32.totalorder %s61, 0
      %s64 = sadd.s32 %s63, 1
      %s65 = scalar_select %p62, %s63, %s64
      %p68 = pneg %p62
      %p69 = scmp.eq.s32.totalorder %s27, 1
      %p70 = por %p68, %p69
      %p71 = scmp.ne.s32.totalorder %s63, %s66
      %p72 = scmp.eq.s32.totalorder %s27, 0
      %p73 = por %p71, %p72
      %p74 = scmp.ne.s32.totalorder %s63, %s66
      %p75 = scmp.eq.s32.totalorder %s32, 1
      %p76 = por %p74, %p75
      %p77 = scmp.ne.s32.totalorder %s66, %s67
      %p78 = scmp.eq.s32.totalorder %s32, 0
      %p79 = por %p77, %p78
      %p80 = scmp.ne.s32.totalorder %s66, %s67
      %p81 = scmp.eq.s32.totalorder %s33, 1
      %p82 = por %p80, %p81
      %p84 = scmp.ne.s32.totalorder %s67, %s83
      %p85 = scmp.eq.s32.totalorder %s33, 0
      %p86 = por %p84, %p85
      %s88 = sadd.s32 %s87, 1
      %p91 = scmp.eq.s32.totalorder %s27, 1
      %p92 = scmp.ne.s32.totalorder %s87, %s89
      %p93 = scmp.eq.s32.totalorder %s27, 0
      %p94 = por %p92, %p93
      %p95 = scmp.ne.s32.totalorder %s87, %s89
      %p96 = scmp.eq.s32.totalorder %s32, 1
      %p97 = por %p95, %p96
      %p98 = scmp.ne.s32.totalorder %s89, %s90
      %p99 = scmp.eq.s32.totalorder %s32, 0
      %p100 = por %p98, %p99
      %p101 = scmp.ne.s32.totalorder %s89, %s90
      %p102 = scmp.eq.s32.totalorder %s33, 1
      %p103 = por %p101, %p102
      %p105 = scmp.ne.s32.totalorder %s90, %s104
      %p106 = scmp.eq.s32.totalorder %s33, 0
      %p107 = por %p105, %p106
      %s109 = sadd.s32 %s108, 1
      %p112 = scmp.eq.s32.totalorder %s27, 1
      %p113 = scmp.ne.s32.totalorder %s108, %s110
      %p114 = scmp.eq.s32.totalorder %s27, 0
      %p115 = por %p113, %p114
      %p116 = scmp.ne.s32.totalorder %s108, %s110
      %p117 = scmp.eq.s32.totalorder %s32, 1
      %p118 = por %p116, %p117
      %p119 = scmp.ne.s32.totalorder %s110, %s111
      %p120 = scmp.eq.s32.totalorder %s32, 0
      %p121 = por %p119, %p120
      %p122 = scmp.ne.s32.totalorder %s110, %s111
      %p123 = scmp.eq.s32.totalorder %s33, 1
      %p124 = por %p122, %p123
      %p126 = scmp.ne.s32.totalorder %s111, %s125
      %p127 = scmp.eq.s32.totalorder %s33, 0
      %p128 = por %p126, %p127
      %s130 = sadd.s32 %s129, 1
      %p133 = scmp.eq.s32.totalorder %s27, 1
      %p134 = scmp.ne.s32.totalorder %s129, %s131
      %p135 = scmp.eq.s32.totalorder %s27, 0
      %p136 = por %p134, %p135
      %p137 = scmp.ne.s32.totalorder %s129, %s131
      %p138 = scmp.eq.s32.totalorder %s32, 1
      %p139 = por %p137, %p138
      %p140 = scmp.ne.s32.totalorder %s131, %s132
      %p141 = scmp.eq.s32.totalorder %s32, 0
      %p142 = por %p140, %p141
      %p143 = scmp.ne.s32.totalorder %s131, %s132
      %p144 = scmp.eq.s32.totalorder %s33, 1
      %p145 = por %p143, %p144
      %p147 = scmp.ne.s32.totalorder %s132, %s146
      %p148 = scmp.eq.s32.totalorder %s33, 0
      %p149 = por %p147, %p148
      %s151 = sadd.s32 %s150, 1
      %p154 = scmp.eq.s32.totalorder %s27, 1
      %p155 = scmp.ne.s32.totalorder %s150, %s152
      %p156 = scmp.eq.s32.totalorder %s27, 0
      %p157 = por %p155, %p156
      %p158 = scmp.ne.s32.totalorder %s150, %s152
      %p159 = scmp.eq.s32.totalorder %s32, 1
      %p160 = por %p158, %p159
      %p161 = scmp.ne.s32.totalorder %s152, %s153
      %p162 = scmp.eq.s32.totalorder %s32, 0
      %p163 = por %p161, %p162
      %p164 = scmp.ne.s32.totalorder %s152, %s153
      %p165 = scmp.eq.s32.totalorder %s33, 1
      %p166 = por %p164, %p165
      %p168 = scmp.ne.s32.totalorder %s153, %s167
      %p169 = scmp.eq.s32.totalorder %s33, 0
      %p170 = por %p168, %p169
      %s172 = sadd.s32 %s171, 1
      %p175 = scmp.eq.s32.totalorder %s27, 1
      %p176 = scmp.ne.s32.totalorder %s171, %s173
      %p177 = scmp.eq.s32.totalorder %s27, 0
      %p178 = por %p176, %p177
      %p179 = scmp.ne.s32.totalorder %s171, %s173
      %p180 = scmp.eq.s32.totalorder %s32, 1
      %p181 = por %p179, %p180
      %p182 = scmp.ne.s32.totalorder %s173, %s174
      %p183 = scmp.eq.s32.totalorder %s32, 0
      %p184 = por %p182, %p183
      %p185 = scmp.ne.s32.totalorder %s173, %s174
      %p186 = scmp.eq.s32.totalorder %s33, 1
      %p187 = por %p185, %p186
      %p189 = scmp.ne.s32.totalorder %s174, %s188
      %p190 = scmp.eq.s32.totalorder %s33, 0
      %p191 = por %p189, %p190
      %s193 = sadd.s32 %s192, 1
      %p196 = scmp.eq.s32.totalorder %s27, 1
      %p197 = scmp.ne.s32.totalorder %s192, %s194
      %p198 = scmp.eq.s32.totalorder %s27, 0
      %p199 = por %p197, %p198
      %p200 = scmp.ne.s32.totalorder %s192, %s194
      %p201 = scmp.eq.s32.totalorder %s32, 1
      %p202 = por %p200, %p201
      %p203 = scmp.ne.s32.totalorder %s194, %s195
      %p204 = scmp.eq.s32.totalorder %s32, 0
      %p205 = por %p203, %p204
      %p206 = scmp.ne.s32.totalorder %s194, %s195
      %p207 = scmp.eq.s32.totalorder %s33, 1
      %p208 = por %p206, %p207
      %p210 = scmp.ne.s32.totalorder %s195, %s209
      %p211 = scmp.eq.s32.totalorder %s33, 0
      %p212 = por %p210, %p211
      %s214 = sadd.s32 %s213, 1
      %p217 = scmp.eq.s32.totalorder %s27, 1
      %p218 = scmp.ne.s32.totalorder %s213, %s215
      %p219 = scmp.eq.s32.totalorder %s27, 0
      %p220 = por %p218, %p219
      %p221 = scmp.ne.s32.totalorder %s213, %s215
      %p222 = scmp.eq.s32.totalorder %s32, 1
      %p223 = por %p221, %p222
      %p224 = scmp.ne.s32.totalorder %s215, %s216
      %p225 = scmp.eq.s32.totalorder %s32, 0
      %p226 = por %p224, %p225
      %p227 = scmp.ne.s32.totalorder %s215, %s216
      %p228 = scmp.eq.s32.totalorder %s33, 1
      %p229 = por %p227, %p228
      %p231 = scmp.ne.s32.totalorder %s216, %s230
      %p232 = scmp.eq.s32.totalorder %s33, 0
      %p233 = por %p231, %p232
      %s235 = sadd.s32 %s234, 1
      %p238 = scmp.eq.s32.totalorder %s27, 1
      %p239 = scmp.ne.s32.totalorder %s234, %s236
      %p240 = scmp.eq.s32.totalorder %s27, 0
      %p241 = por %p239, %p240
      %p242 = scmp.ne.s32.totalorder %s234, %s236
      %p243 = scmp.eq.s32.totalorder %s32, 1
      %p244 = por %p242, %p243
      %p245 = scmp.ne.s32.totalorder %s236, %s237
      %p246 = scmp.eq.s32.totalorder %s32, 0
      %p247 = por %p245, %p246
      %p248 = scmp.ne.s32.totalorder %s236, %s237
      %p249 = scmp.eq.s32.totalorder %s33, 1
      %p250 = por %p248, %p249
      %p252 = scmp.ne.s32.totalorder %s237, %s251
      %p253 = scmp.eq.s32.totalorder %s33, 0
      %p254 = por %p252, %p253
      %s256 = sadd.s32 %s255, 1
      %p259 = scmp.eq.s32.totalorder %s27, 1
      %p260 = scmp.ne.s32.totalorder %s255, %s257
      %p261 = scmp.eq.s32.totalorder %s27, 0
      %p262 = por %p260, %p261
      %p263 = scmp.ne.s32.totalorder %s255, %s257
      %p264 = scmp.eq.s32.totalorder %s32, 1
      %p265 = por %p263, %p264
      %p266 = scmp.ne.s32.totalorder %s257, %s258
      %p267 = scmp.eq.s32.totalorder %s32, 0
      %p268 = por %p266, %p267
      %p269 = scmp.ne.s32.totalorder %s257, %s258
      %p270 = scmp.eq.s32.totalorder %s33, 1
      %p271 = por %p269, %p270
      %p273 = scmp.ne.s32.totalorder %s258, %s272
      %p274 = scmp.eq.s32.totalorder %s33, 0
      %p275 = por %p273, %p274
      %s277 = sadd.s32 %s276, 1
      %p280 = scmp.eq.s32.totalorder %s27, 1
      %p281 = scmp.ne.s32.totalorder %s276, %s278
      %p282 = scmp.eq.s32.totalorder %s27, 0
      %p283 = por %p281, %p282
      %p284 = scmp.ne.s32.totalorder %s276, %s278
      %p285 = scmp.eq.s32.totalorder %s32, 1
      %p286 = por %p284, %p285
      %p287 = scmp.ne.s32.totalorder %s278, %s279
      %p288 = scmp.eq.s32.totalorder %s32, 0
      %p289 = por %p287, %p288
      %p290 = scmp.ne.s32.totalorder %s278, %s279
      %p291 = scmp.eq.s32.totalorder %s33, 1
      %p292 = por %p290, %p291
      %p294 = scmp.ne.s32.totalorder %s279, %s293
      %p295 = scmp.eq.s32.totalorder %s33, 0
      %p296 = por %p294, %p295
      %s297 = ssub.s32 %s27, %s34
      %p298 = scmp.eq.s32.totalorder %s297, 0
      %s300 = sadd.s32 %s299, 1
      %s301 = scalar_select %p298, %s299, %s300
      %p304 = pneg %p298
      %p305 = scmp.eq.s32.totalorder %s27, 1
      %p306 = por %p304, %p305
      %p307 = scmp.ne.s32.totalorder %s299, %s302
      %p308 = scmp.eq.s32.totalorder %s27, 0
      %p309 = por %p307, %p308
      %p310 = scmp.ne.s32.totalorder %s299, %s302
      %p311 = scmp.eq.s32.totalorder %s32, 1
      %p312 = por %p310, %p311
      %p313 = scmp.ne.s32.totalorder %s302, %s303
      %p314 = scmp.eq.s32.totalorder %s32, 0
      %p315 = por %p313, %p314
      %p316 = scmp.ne.s32.totalorder %s302, %s303
      %p317 = scmp.eq.s32.totalorder %s33, 1
      %p318 = por %p316, %p317
      %p320 = scmp.ne.s32.totalorder %s303, %s319
      %p321 = scmp.eq.s32.totalorder %s33, 0
      %p322 = por %p320, %p321
      %s323 = ssub.s32 %s27, %s34
      %p324 = scmp.eq.s32.totalorder %s323, 0
      %s326 = sadd.s32 %s325, 1
      %s327 = scalar_select %p324, %s325, %s326
      %p330 = pneg %p324
      %p331 = scmp.eq.s32.totalorder %s27, 1
      %p332 = por %p330, %p331
      %p333 = scmp.ne.s32.totalorder %s325, %s328
      %p334 = scmp.eq.s32.totalorder %s27, 0
      %p335 = por %p333, %p334
      %p336 = scmp.ne.s32.totalorder %s325, %s328
      %p337 = scmp.eq.s32.totalorder %s32, 1
      %p338 = por %p336, %p337
      %p339 = scmp.ne.s32.totalorder %s328, %s329
      %p340 = scmp.eq.s32.totalorder %s32, 0
      %p341 = por %p339, %p340
      %p342 = scmp.ne.s32.totalorder %s328, %s329
      %p343 = scmp.eq.s32.totalorder %s33, 1
      %p344 = por %p342, %p343
      %p346 = scmp.ne.s32.totalorder %s329, %s345
      %p347 = scmp.eq.s32.totalorder %s33, 0
      %p348 = por %p346, %p347
      %p349 = scmp.le.s32.totalorder 1, %s27
      %p350 = scmp.lt.s32.totalorder %s27, 3
      %p351 = pnand %p349, %p350
      %p352 = pneg %p351
      // Predicated region
      $region9: #{e2e_bertweet_forward.1} parent=5 // pred_check
        _
      $region10: #{e2e_bertweet_forward.1} parent=5 // pred_check_branch
        %354 = sbr.rel (%p351) target = $region12
      $region11: #{e2e_bertweet_forward.1} parent=5 // pred_region
        %s355 = ssub.s32 %s27, 1
        // Predicated region
        $region13: #{e2e_bertweet_forward.1} parent=11 // pred_check
          %p356 = pneg %p100
        $region14: #{e2e_bertweet_forward.1} parent=11 // pred_check_branch
          %358 = sbr.rel (%p356) target = $region16
        $region15: #{e2e_bertweet_forward.1} parent=11 // pred_region
          _
        $region16: #{e2e_bertweet_forward.1} parent=11 // pred_fallthru
          _
        // Predicated region
        $region17: #{e2e_bertweet_forward.1} parent=11 // pred_check
          %p359 = pneg %p121
        $region18: #{e2e_bertweet_forward.1} parent=11 // pred_check_branch
          %361 = sbr.rel (%p359) target = $region20
        $region19: #{e2e_bertweet_forward.1} parent=11 // pred_region
          _
        $region20: #{e2e_bertweet_forward.1} parent=11 // pred_fallthru
          _
        // Predicated region
        $region21: #{e2e_bertweet_forward.1} parent=11 // pred_check
          %p362 = pneg %p142
        $region22: #{e2e_bertweet_forward.1} parent=11 // pred_check_branch
          %364 = sbr.rel (%p362) target = $region24
        $region23: #{e2e_bertweet_forward.1} parent=11 // pred_region
          _
        $region24: #{e2e_bertweet_forward.1} parent=11 // pred_fallthru
          _
        // Predicated region
        $region25: #{e2e_bertweet_forward.1} parent=11 // pred_check
          %p365 = pneg %p163
        $region26: #{e2e_bertweet_forward.1} parent=11 // pred_check_branch
          %367 = sbr.rel (%p365) target = $region28
        $region27: #{e2e_bertweet_forward.1} parent=11 // pred_region
          _
        $region28: #{e2e_bertweet_forward.1} parent=11 // pred_fallthru
          _
        // Predicated region
        $region29: #{e2e_bertweet_forward.1} parent=11 // pred_check
          %p368 = pneg %p184
        $region30: #{e2e_bertweet_forward.1} parent=11 // pred_check_branch
          %370 = sbr.rel (%p368) target = $region32
        $region31: #{e2e_bertweet_forward.1} parent=11 // pred_region
          _
        $region32: #{e2e_bertweet_forward.1} parent=11 // pred_fallthru
          _
        // Predicated region
        $region33: #{e2e_bertweet_forward.1} parent=11 // pred_check
          %p371 = pneg %p205
        $region34: #{e2e_bertweet_forward.1} parent=11 // pred_check_branch
          %373 = sbr.rel (%p371) target = $region36
        $region35: #{e2e_bertweet_forward.1} parent=11 // pred_region
          _
        $region36: #{e2e_bertweet_forward.1} parent=11 // pred_fallthru
          _
        // Predicated region
        $region37: #{e2e_bertweet_forward.1} parent=11 // pred_check
          %p374 = pneg %p226
        $region38: #{e2e_bertweet_forward.1} parent=11 // pred_check_branch
          %376 = sbr.rel (%p374) target = $region40
        $region39: #{e2e_bertweet_forward.1} parent=11 // pred_region
          _
        $region40: #{e2e_bertweet_forward.1} parent=11 // pred_fallthru
          _
        // Predicated region
        $region41: #{e2e_bertweet_forward.1} parent=11 // pred_check
          %p377 = pneg %p247
        $region42: #{e2e_bertweet_forward.1} parent=11 // pred_check_branch
          %379 = sbr.rel (%p377) target = $region44
        $region43: #{e2e_bertweet_forward.1} parent=11 // pred_region
          _
        $region44: #{e2e_bertweet_forward.1} parent=11 // pred_fallthru
          _
        // Predicated region
        $region45: #{e2e_bertweet_forward.1} parent=11 // pred_check
          %p380 = pneg %p268
        $region46: #{e2e_bertweet_forward.1} parent=11 // pred_check_branch
          %382 = sbr.rel (%p380) target = $region48
        $region47: #{e2e_bertweet_forward.1} parent=11 // pred_region
          %s384 = ssub.s32 256, 256
          %385 = vsyncadd [#allocation3], %s384
          %s386 = sshll.u32 [#allocation2], 4
          %s387 = int_to_ptr.vmem [resolvable:$true] %s386
          %392 = dma.hbm_to_vmem [thread:$0]  %s10, 256, %s387, [#allocation3], 64, 64, 4
        $region48: #{e2e_bertweet_forward.1} parent=11 // pred_fallthru
          _
        // Predicated region
        $region49: #{e2e_bertweet_forward.1} parent=11 // pred_check
          %p393 = pneg %p289
        $region50: #{e2e_bertweet_forward.1} parent=11 // pred_check_branch
          %395 = sbr.rel (%p393) target = $region52
        $region51: #{e2e_bertweet_forward.1} parent=11 // pred_region
          _
        $region52: #{e2e_bertweet_forward.1} parent=11 // pred_fallthru
          _
      $region12: #{e2e_bertweet_forward.1} parent=5 // pred_fallthru
        _
      %p396 = scmp.lt.s32.totalorder %s27, 2
      // Predicated region
      $region53: #{e2e_bertweet_forward.1} parent=5 // pred_check
        %p397 = pneg %p396
      $region54: #{e2e_bertweet_forward.1} parent=5 // pred_check_branch
        %399 = sbr.rel (%p397) target = $region56
      $region55: #{e2e_bertweet_forward.1} parent=5 // pred_region
        // Predicated region
        $region57: #{e2e_bertweet_forward.1} parent=55 // pred_check
          %p400 = pneg %p47
        $region58: #{e2e_bertweet_forward.1} parent=55 // pred_check_branch
          %402 = sbr.rel (%p400) target = $region60
        $region59: #{e2e_bertweet_forward.1} parent=55 // pred_region
          %p403 = scmp.lt.s32.totalorder %s27, 1
          %s404 = scalar_select %p403, %s27, 1
          %s405 = smul.addr %s404, 8
          %s406 = scalar_lea.vmem %s0, %s405
        $region60: #{e2e_bertweet_forward.1} parent=55 // pred_fallthru
          _
        // Predicated region
        $region61: #{e2e_bertweet_forward.1} parent=55 // pred_check
          %p407 = pneg %p73
        $region62: #{e2e_bertweet_forward.1} parent=55 // pred_check_branch
          %409 = sbr.rel (%p407) target = $region64
        $region63: #{e2e_bertweet_forward.1} parent=55 // pred_region
          %p410 = scmp.lt.s32.totalorder %s27, 1
          %s411 = scalar_select %p410, %s27, 1
          %s412 = scalar_lea.vmem %s1, %s411
        $region64: #{e2e_bertweet_forward.1} parent=55 // pred_fallthru
          _
      $region56: #{e2e_bertweet_forward.1} parent=5 // pred_fallthru
        _
      %p413 = scmp.le.s32.totalorder 1, %s27
      %p414 = scmp.lt.s32.totalorder %s27, 3
      %p415 = pnand %p413, %p414
      %p416 = pneg %p415
      // Predicated region
      $region65: #{e2e_bertweet_forward.1} parent=5 // pred_check
        _
      $region66: #{e2e_bertweet_forward.1} parent=5 // pred_check_branch
        %418 = sbr.rel (%p415) target = $region68
      $region67: #{e2e_bertweet_forward.1} parent=5 // pred_region
        %s419 = ssub.s32 %s27, 1
        // Predicated region
        $region69: #{e2e_bertweet_forward.1} parent=67 // pred_check
          %p420 = pneg %p268
        $region70: #{e2e_bertweet_forward.1} parent=67 // pred_check_branch
          %422 = sbr.rel (%p420) target = $region72
        $region71: #{e2e_bertweet_forward.1} parent=67 // pred_region
          %423 = dma.done [#allocation3], 256
        $region72: #{e2e_bertweet_forward.1} parent=67 // pred_fallthru
          _
        %p424 = scmp.lt.s32.totalorder %s32, 1
        %s425 = scalar_select %p424, %s32, 1
        %s426 = smul.addr %s425, 8
        %s427 = scalar_lea.vmem %s0, %s426
        %p428 = pneg %p53
        %p429 = pneg %p50
        %p430 = scmp.lt.s32.totalorder %s32, 1
        %s431 = scalar_select %p430, %s32, 1
        %s432 = scalar_lea.vmem %s1, %s431
        %p433 = pneg %p79
        %p434 = pneg %p76
        %p435 = pneg %p100
        %p436 = pneg %p97
        %p437 = pneg %p121
        %p438 = pneg %p118
        %p439 = pneg %p142
        %p440 = pneg %p139
        %p441 = pneg %p163
        %p442 = pneg %p160
        %p443 = pneg %p184
        %p444 = pneg %p181
        %p445 = pneg %p205
        %p446 = pneg %p202
        %p447 = pneg %p226
        %p448 = pneg %p223
        %p449 = pneg %p247
        %p450 = pneg %p244
        %p451 = pneg %p268
        %p452 = pneg %p265
        %p453 = pneg %p289
        %p454 = pneg %p286
        %p455 = pneg %p315
        %p456 = pneg %p312
        %s457 = sand.u32 %s302, 1
        %s458 = scalar_lea.sflag [#allocation4], %s457
        %s459 = sand.u32 %s302, 1
        %s460 = scalar_lea.vmem [#allocation5], %s459
        %p461 = pneg %p341
        %p462 = pneg %p338
        %s463 = sand.u32 %s328, 1
        %s464 = scalar_lea.sflag [#allocation7], %s463
        %s465 = sand.u32 %s328, 1
        %s466 = smul.addr %s465, 8
        %s467 = scalar_lea.vmem [#allocation6], %s466
        %p468 = scmp.lt.s32.totalorder %s32, 1
        %s469 = scalar_select %p468, %s32, 1
        %s470 = smul.addr %s469, 8
        %s471 = scalar_lea.vmem %s0, %s470
        %p472 = scmp.lt.s32.totalorder %s32, 1
        %s473 = scalar_select %p472, %s32, 1
        %s474 = scalar_lea.vmem %s1, %s473
        %v476 = vld [vmem:[%s471] sm:$0xff]
        %v477 = vlaneseq
        %v478 = vand.u32 %v477, 127
        %479 = vset.pattern.permute.xlu0 0
        %480 = vperm.xlu0 %479, %v476
        %v481 = vpop.permute.xlu0 %480
        %vm482 = vcmp.eq.s32.totalorder %v481, %v478
        %v483 = vsel %vm482, 1.0, 0.0
        %v484 = vpack.c.bf16 %v483, %v483
        %v485 = vld [vmem:[%s2] sm:$0xf]
        %v486 = vld [vmem:[%s2 + $0x4] sm:$0xf]
        %v487 = vld [vmem:[%s2 + $0x8] sm:$0xf]
        %v488 = vld [vmem:[%s2 + $0xc] sm:$0xf]
        %v489 = vld [vmem:[%s2 + $0x10] sm:$0xf]
        %v490 = vld [vmem:[%s2 + $0x14] sm:$0xf]
        %v491 = vld [vmem:[%s2 + $0x18] sm:$0xf]
        %v492 = vld [vmem:[%s2 + $0x1c] sm:$0xf]
        %v493 = vld [vmem:[%s2 + $0x20] sm:$0xf]
        %v494 = vld [vmem:[%s2 + $0x24] sm:$0xf]
        %v495 = vld [vmem:[%s2 + $0x28] sm:$0xf]
        %v496 = vld [vmem:[%s2 + $0x2c] sm:$0xf]
        %v497 = vld [vmem:[%s2 + $0x30] sm:$0xf]
        %v498 = vld [vmem:[%s2 + $0x34] sm:$0xf]
        %v499 = vld [vmem:[%s2 + $0x38] sm:$0xf]
        %v500 = vld [vmem:[%s2 + $0x3c] sm:$0xf]
        %v501 = vld [vmem:[%s3] sm:$0xff]
        %v518 = vunpack.c.l.b16 %v485
        %v519 = vunpack.c.l.b16 %v486
        %v520 = vunpack.c.l.b16 %v487
        %v521 = vunpack.c.l.b16 %v488
        %v522 = vunpack.c.l.b16 %v489
        %v523 = vunpack.c.l.b16 %v490
        %v524 = vunpack.c.l.b16 %v491
        %v525 = vunpack.c.l.b16 %v492
        %v526 = vunpack.c.l.b16 %v493
        %v527 = vunpack.c.l.b16 %v494
        %v528 = vunpack.c.l.b16 %v495
        %v529 = vunpack.c.l.b16 %v496
        %v530 = vunpack.c.l.b16 %v497
        %v531 = vunpack.c.l.b16 %v498
        %v532 = vunpack.c.l.b16 %v499
        %v533 = vunpack.c.l.b16 %v500
        %v534 = vpack.c.b16 %v519, %v518
        %v535 = vpack.c.b16 %v521, %v520
        %v536 = vpack.c.b16 %v523, %v522
        %v537 = vpack.c.b16 %v525, %v524
        %v538 = vpack.c.b16 %v527, %v526
        %v539 = vpack.c.b16 %v529, %v528
        %v540 = vpack.c.b16 %v531, %v530
        %v541 = vpack.c.b16 %v533, %v532
        %550 = vmatprep.subr.bf16.mxu0 0
        %551 = vmatpush1.bf16.msra.mxu0 %v534
        %552 = vmatprep.subr.bf16.mxu0 0
        %553 = vmatpush1.bf16.msra.mxu0 %v535
        %554 = vmatprep.subr.bf16.mxu0 0
        %555 = vmatpush1.bf16.msra.mxu0 %v536
        %556 = vmatprep.subr.bf16.mxu0 0
        %557 = vmatpush1.bf16.msra.mxu0 %v537
        %558 = vmatprep.subr.bf16.mxu0 0
        %559 = vmatpush1.bf16.msra.mxu0 %v538
        %560 = vmatprep.subr.bf16.mxu0 0
        %561 = vmatpush1.bf16.msra.mxu0 %v539
        %562 = vmatprep.subr.bf16.mxu0 0
        %563 = vmatpush1.bf16.msra.mxu0 %v540
        %564 = vmatprep.subr.bf16.mxu0 0
        %565 = vmatpush1.bf16.msra.mxu0 %v541
        %566 = vmatprep.subr.bf16.mxu0 0
        %567 = vmatpush1.bf16.msra.mxu0 0
        %568 = vmatprep.subr.bf16.mxu0 0
        %569 = vmatpush1.bf16.msra.mxu0 0
        %570 = vmatprep.subr.bf16.mxu0 0
        %571 = vmatpush1.bf16.msra.mxu0 0
        %572 = vmatprep.subr.bf16.mxu0 0
        %573 = vmatpush1.bf16.msra.mxu0 0
        %574 = vmatprep.subr.bf16.mxu0 0
        %575 = vmatpush1.bf16.msra.mxu0 0
        %576 = vmatprep.subr.bf16.mxu0 0
        %577 = vmatpush1.bf16.msra.mxu0 0
        %578 = vmatprep.subr.bf16.mxu0 0
        %579 = vmatpush1.bf16.msra.mxu0 0
        %580 = vmatprep.subr.bf16.mxu0 0
        %581 = vmatpush1.bf16.msra.mxu0 0
        %582 = vmatprep.mubr.bf16.mxu0 0
        %583 = vmatmul.mubr.bf16.gmra.mrb[0].mxu0 %v484
        %v584 = vpop.f32.mrb[0].mxu0
        %v585 = vadd.f32 %v501, %v584
        %v586 = vpop.f32.mrb[0].mxu0
        %v587 = vpop.f32.mrb[0].mxu0
        %v588 = vpop.f32.mrb[0].mxu0
        %589 = vdwg.mxu0
        %v590 = vld [vmem:[%s11] sm:$0x1]
        %v591 = vld [vmem:[%s11 + $0x1] sm:$0x1]
        %vm592 = vcmask 261120
        %v593 = vsel %vm592, %v585, 0.0
        %594 = vadd.xlane.f32.xlu0 %v593
        %v595 = vpop.xlane.xlu0 %594
        %v596 = vrcp.pop 32.0
        %v597 = vmul.f32 %v595, %v596
        %v598 = vsub.f32 %v585, %v597
        %v599 = vmul.f32 %v598, %v598
        %v600 = vsel %vm592, %v599, 0.0
        %601 = vadd.xlane.f32.xlu0 %v600
        %v602 = vpop.xlane.xlu0 %601
        %v603 = vmul.f32 %v602, %v596
        %v604 = vadd.f32 %v603, 1e-05
        %v605 = vrsqrt.pop %v604
        %v606 = vmul.f32 %v598, %v605
        %v607 = vlaneseq
        %v608 = vshrl.u32 %v607, 7
        %v609 = vsub.s32 0, %v608
        %v610 = vrot.slane %v590, %v609
        %v611 = vmul.f32 %v606, %v610
        %v612 = vlaneseq
        %v613 = vshrl.u32 %v612, 7
        %v614 = vsub.s32 0, %v613
        %v615 = vrot.slane %v591, %v614
        %v616 = vadd.f32 %v611, %v615
        %v617 = vld [vmem:[%s474] sm:$0x1]
        %v618 = vcvt.s32.f32 %v617
        %v619 = vsub.f32 1.0, %v618
        %v620 = vmul.f32 %v619, -1e+09
        %v622 = vlaneseq
        %v623 = vshrl.u32 %v622, 7
        %v624 = vsub.s32 0, %v623
        %v625 = vrot.slane %v620, %v624
        %v627 = vld [vmem:[%s8] sm:$0xff]
        %v628 = vpack.c.bf16 %v616, %v616
        %v629 = vld [vmem:[%s4] sm:$0xf]
        %v630 = vld [vmem:[%s4 + $0x4] sm:$0xf]
        %v631 = vld [vmem:[%s4 + $0x8] sm:$0xf]
        %v632 = vld [vmem:[%s4 + $0xc] sm:$0xf]
        %v633 = vlaneseq
        %v634 = vshrl.u32 %v633, 7
        %v635 = vsub.s32 0, %v634
        %v636 = vrot.slane %v627, %v635
        %v641 = vunpack.c.l.b16 %v629
        %v642 = vunpack.c.l.b16 %v630
        %v643 = vunpack.c.l.b16 %v631
        %v644 = vunpack.c.l.b16 %v632
        %v645 = vpack.c.b16 %v642, %v641
        %v646 = vpack.c.b16 %v644, %v643
        %v650 = vsel %vm592, %v628, 0
        %652 = vmatprep.subr.bf16.mxu0 0
        %653 = vmatpush1.bf16.msra.mxu0 %v645
        %654 = vmatprep.subr.bf16.mxu0 0
        %655 = vmatpush1.bf16.msra.mxu0 %v646
        %656 = vmatprep.subr.bf16.mxu0 0
        %657 = vmatpush1.bf16.msra.mxu0 0
        %658 = vmatprep.subr.bf16.mxu0 0
        %659 = vmatpush1.bf16.msra.mxu0 0
        %660 = vmatprep.subr.bf16.mxu0 0
        %661 = vmatpush1.bf16.msra.mxu0 0
        %662 = vmatprep.subr.bf16.mxu0 0
        %663 = vmatpush1.bf16.msra.mxu0 0
        %664 = vmatprep.subr.bf16.mxu0 0
        %665 = vmatpush1.bf16.msra.mxu0 0
        %666 = vmatprep.subr.bf16.mxu0 0
        %667 = vmatpush1.bf16.msra.mxu0 0
        %668 = vmatprep.subr.bf16.mxu0 0
        %669 = vmatpush1.bf16.msra.mxu0 0
        %670 = vmatprep.subr.bf16.mxu0 0
        %671 = vmatpush1.bf16.msra.mxu0 0
        %672 = vmatprep.subr.bf16.mxu0 0
        %673 = vmatpush1.bf16.msra.mxu0 0
        %674 = vmatprep.subr.bf16.mxu0 0
        %675 = vmatpush1.bf16.msra.mxu0 0
        %676 = vmatprep.subr.bf16.mxu0 0
        %677 = vmatpush1.bf16.msra.mxu0 0
        %678 = vmatprep.subr.bf16.mxu0 0
        %679 = vmatpush1.bf16.msra.mxu0 0
        %680 = vmatprep.subr.bf16.mxu0 0
        %681 = vmatpush1.bf16.msra.mxu0 0
        %682 = vmatprep.subr.bf16.mxu0 0
        %683 = vmatpush1.bf16.msra.mxu0 0
        %684 = vmatprep.mubr.bf16.mxu0 0
        %685 = vmatmul.mubr.bf16.gmra.mrb[0].mxu0 %v650
        %v686 = vpop.f32.mrb[0].mxu0
        %v687 = vadd.f32 %v636, %v686
        %v688 = vpop.f32.mrb[0].mxu0
        %v689 = vpop.f32.mrb[0].mxu0
        %v690 = vpop.f32.mrb[0].mxu0
        %691 = vdwg.mxu0
        %693 = vrot.lane.b32.xlu0 %v687, 120
        %v694 = vpop.permute.xlu0 %693
        %695 = vrot.lane.b32.xlu0 %v687, 112
        %v696 = vpop.permute.xlu0 %695
        %697 = vrot.lane.b32.xlu0 %v687, 104
        %v698 = vpop.permute.xlu0 %697
        %699 = vrot.lane.b32.xlu0 %v687, 96
        %v700 = vpop.permute.xlu0 %699
        %vm701 = vcmask 64512
        %v702 = vsel %vm701, %v687, 0
        %v704 = vsel %vm701, %v700, 0
        %706 = vmatprep.subr.mxu0 0.0
        %707 = vmatpush1.xpose.msra.mxu0 %v704
        %708 = vmatprep.subr.mxu0 0.0
        %709 = vmatpush1.xpose.msra.mxu0 0.0
        %710 = vmatprep.subr.mxu0 0.0
        %711 = vmatpush1.xpose.msra.mxu0 0.0
        %712 = vmatprep.subr.mxu0 0.0
        %713 = vmatpush1.xpose.msra.mxu0 0.0
        %714 = vmatprep.subr.mxu0 0.0
        %715 = vmatpush1.xpose.msra.mxu0 0.0
        %716 = vmatprep.subr.mxu0 0.0
        %717 = vmatpush1.xpose.msra.mxu0 0.0
        %718 = vmatprep.subr.mxu0 0.0
        %719 = vmatpush1.xpose.msra.mxu0 0.0
        %720 = vmatprep.subr.mxu0 0.0
        %721 = vmatpush1.xpose.msra.mxu0 0.0
        %722 = vmatprep.subr.mxu0 0.0
        %723 = vmatpush1.xpose.msra.mxu0 0.0
        %724 = vmatprep.subr.mxu0 0.0
        %725 = vmatpush1.xpose.msra.mxu0 0.0
        %726 = vmatprep.subr.mxu0 0.0
        %727 = vmatpush1.xpose.msra.mxu0 0.0
        %728 = vmatprep.subr.mxu0 0.0
        %729 = vmatpush1.xpose.msra.mxu0 0.0
        %730 = vmatprep.subr.mxu0 0.0
        %731 = vmatpush1.xpose.msra.mxu0 0.0
        %732 = vmatprep.subr.mxu0 0.0
        %733 = vmatpush1.xpose.msra.mxu0 0.0
        %734 = vmatprep.subr.mxu0 0.0
        %735 = vmatpush1.xpose.msra.mxu0 0.0
        %736 = vmatprep.subr.mxu0 0.0
        %737 = vmatpush1.xpose.msra.mxu0 0.0
        %738 = vmatprep.subr.mxu0 0.0
        %739 = vmatpush1.xpose.msra.mxu0 0.0
        %740 = vmatprep.subr.mxu0 0.0
        %741 = vmatpush1.xpose.msra.mxu0 0.0
        %742 = vmatprep.subr.mxu0 0.0
        %743 = vmatpush1.xpose.msra.mxu0 0.0
        %744 = vmatprep.subr.mxu0 0.0
        %745 = vmatpush1.xpose.msra.mxu0 0.0
        %746 = vmatprep.subr.mxu0 0.0
        %747 = vmatpush1.xpose.msra.mxu0 0.0
        %748 = vmatprep.subr.mxu0 0.0
        %749 = vmatpush1.xpose.msra.mxu0 0.0
        %750 = vmatprep.subr.mxu0 0.0
        %751 = vmatpush1.xpose.msra.mxu0 0.0
        %752 = vmatprep.subr.mxu0 0.0
        %753 = vmatpush1.xpose.msra.mxu0 0.0
        %754 = vmatprep.subr.mxu0 0.0
        %755 = vmatpush1.xpose.msra.mxu0 0.0
        %756 = vmatprep.subr.mxu0 0.0
        %757 = vmatpush1.xpose.msra.mxu0 0.0
        %758 = vmatprep.subr.mxu0 0.0
        %759 = vmatpush1.xpose.msra.mxu0 0.0
        %760 = vmatprep.subr.mxu0 0.0
        %761 = vmatpush1.xpose.msra.mxu0 0.0
        %762 = vmatprep.subr.mxu0 0.0
        %763 = vmatpush1.xpose.msra.mxu0 0.0
        %764 = vmatprep.subr.mxu0 0.0
        %765 = vmatpush1.xpose.msra.mxu0 0.0
        %766 = vmatprep.subr.mxu0 0.0
        %767 = vmatpush1.xpose.msra.mxu0 0.0
        %768 = vmatprep.subr.mxu0 0.0
        %769 = vmatpush1.xpose.msra.mxu0 0.0
        %770 = vmatprep.mubr.f32.mxu0 0.0
        %771 = vmatmul.mubr.f32.gmra.mrb[0].mxu0 %v702
        %v772 = vpop.f32.mrb[0].mxu0
        %v773 = vadd.f32 0.0, %v772
        %v774 = vpop.f32.mrb[0].mxu0
        %775 = vdwg.mxu0
        %776 = vrot.lane.b32.xlu0 %v694, 96
        %v777 = vpop.permute.xlu0 %776
        %v778 = vsel %vm701, %v694, 0
        %v780 = vsel %vm701, %v777, 0
        %782 = vmatprep.subr.mxu0 0.0
        %783 = vmatpush1.xpose.msra.mxu0 %v780
        %784 = vmatprep.subr.mxu0 0.0
        %785 = vmatpush1.xpose.msra.mxu0 0.0
        %786 = vmatprep.subr.mxu0 0.0
        %787 = vmatpush1.xpose.msra.mxu0 0.0
        %788 = vmatprep.subr.mxu0 0.0
        %789 = vmatpush1.xpose.msra.mxu0 0.0
        %790 = vmatprep.subr.mxu0 0.0
        %791 = vmatpush1.xpose.msra.mxu0 0.0
        %792 = vmatprep.subr.mxu0 0.0
        %793 = vmatpush1.xpose.msra.mxu0 0.0
        %794 = vmatprep.subr.mxu0 0.0
        %795 = vmatpush1.xpose.msra.mxu0 0.0
        %796 = vmatprep.subr.mxu0 0.0
        %797 = vmatpush1.xpose.msra.mxu0 0.0
        %798 = vmatprep.subr.mxu0 0.0
        %799 = vmatpush1.xpose.msra.mxu0 0.0
        %800 = vmatprep.subr.mxu0 0.0
        %801 = vmatpush1.xpose.msra.mxu0 0.0
        %802 = vmatprep.subr.mxu0 0.0
        %803 = vmatpush1.xpose.msra.mxu0 0.0
        %804 = vmatprep.subr.mxu0 0.0
        %805 = vmatpush1.xpose.msra.mxu0 0.0
        %806 = vmatprep.subr.mxu0 0.0
        %807 = vmatpush1.xpose.msra.mxu0 0.0
        %808 = vmatprep.subr.mxu0 0.0
        %809 = vmatpush1.xpose.msra.mxu0 0.0
        %810 = vmatprep.subr.mxu0 0.0
        %811 = vmatpush1.xpose.msra.mxu0 0.0
        %812 = vmatprep.subr.mxu0 0.0
        %813 = vmatpush1.xpose.msra.mxu0 0.0
        %814 = vmatprep.subr.mxu0 0.0
        %815 = vmatpush1.xpose.msra.mxu0 0.0
        %816 = vmatprep.subr.mxu0 0.0
        %817 = vmatpush1.xpose.msra.mxu0 0.0
        %818 = vmatprep.subr.mxu0 0.0
        %819 = vmatpush1.xpose.msra.mxu0 0.0
        %820 = vmatprep.subr.mxu0 0.0
        %821 = vmatpush1.xpose.msra.mxu0 0.0
        %822 = vmatprep.subr.mxu0 0.0
        %823 = vmatpush1.xpose.msra.mxu0 0.0
        %824 = vmatprep.subr.mxu0 0.0
        %825 = vmatpush1.xpose.msra.mxu0 0.0
        %826 = vmatprep.subr.mxu0 0.0
        %827 = vmatpush1.xpose.msra.mxu0 0.0
        %828 = vmatprep.subr.mxu0 0.0
        %829 = vmatpush1.xpose.msra.mxu0 0.0
        %830 = vmatprep.subr.mxu0 0.0
        %831 = vmatpush1.xpose.msra.mxu0 0.0
        %832 = vmatprep.subr.mxu0 0.0
        %833 = vmatpush1.xpose.msra.mxu0 0.0
        %834 = vmatprep.subr.mxu0 0.0
        %835 = vmatpush1.xpose.msra.mxu0 0.0
        %836 = vmatprep.subr.mxu0 0.0
        %837 = vmatpush1.xpose.msra.mxu0 0.0
        %838 = vmatprep.subr.mxu0 0.0
        %839 = vmatpush1.xpose.msra.mxu0 0.0
        %840 = vmatprep.subr.mxu0 0.0
        %841 = vmatpush1.xpose.msra.mxu0 0.0
        %842 = vmatprep.subr.mxu0 0.0
        %843 = vmatpush1.xpose.msra.mxu0 0.0
        %844 = vmatprep.subr.mxu0 0.0
        %845 = vmatpush1.xpose.msra.mxu0 0.0
        %846 = vmatprep.mubr.f32.mxu0 0.0
        %847 = vmatmul.mubr.f32.gmra.mrb[0].mxu0 %v778
        %v848 = vpop.f32.mrb[0].mxu0
        %v849 = vadd.f32 0.0, %v848
        %v850 = vpop.f32.mrb[0].mxu0
        %851 = vdwg.mxu0
        %852 = vrot.lane.b32.xlu0 %v696, 96
        %v853 = vpop.permute.xlu0 %852
        %v854 = vsel %vm701, %v696, 0
        %v856 = vsel %vm701, %v853, 0
        %858 = vmatprep.subr.mxu0 0.0
        %859 = vmatpush1.xpose.msra.mxu0 %v856
        %860 = vmatprep.subr.mxu0 0.0
        %861 = vmatpush1.xpose.msra.mxu0 0.0
        %862 = vmatprep.subr.mxu0 0.0
        %863 = vmatpush1.xpose.msra.mxu0 0.0
        %864 = vmatprep.subr.mxu0 0.0
        %865 = vmatpush1.xpose.msra.mxu0 0.0
        %866 = vmatprep.subr.mxu0 0.0
        %867 = vmatpush1.xpose.msra.mxu0 0.0
        %868 = vmatprep.subr.mxu0 0.0
        %869 = vmatpush1.xpose.msra.mxu0 0.0
        %870 = vmatprep.subr.mxu0 0.0
        %871 = vmatpush1.xpose.msra.mxu0 0.0
        %872 = vmatprep.subr.mxu0 0.0
        %873 = vmatpush1.xpose.msra.mxu0 0.0
        %874 = vmatprep.subr.mxu0 0.0
        %875 = vmatpush1.xpose.msra.mxu0 0.0
        %876 = vmatprep.subr.mxu0 0.0
        %877 = vmatpush1.xpose.msra.mxu0 0.0
        %878 = vmatprep.subr.mxu0 0.0
        %879 = vmatpush1.xpose.msra.mxu0 0.0
        %880 = vmatprep.subr.mxu0 0.0
        %881 = vmatpush1.xpose.msra.mxu0 0.0
        %882 = vmatprep.subr.mxu0 0.0
        %883 = vmatpush1.xpose.msra.mxu0 0.0
        %884 = vmatprep.subr.mxu0 0.0
        %885 = vmatpush1.xpose.msra.mxu0 0.0
        %886 = vmatprep.subr.mxu0 0.0
        %887 = vmatpush1.xpose.msra.mxu0 0.0
        %888 = vmatprep.subr.mxu0 0.0
        %889 = vmatpush1.xpose.msra.mxu0 0.0
        %890 = vmatprep.subr.mxu0 0.0
        %891 = vmatpush1.xpose.msra.mxu0 0.0
        %892 = vmatprep.subr.mxu0 0.0
        %893 = vmatpush1.xpose.msra.mxu0 0.0
        %894 = vmatprep.subr.mxu0 0.0
        %895 = vmatpush1.xpose.msra.mxu0 0.0
        %896 = vmatprep.subr.mxu0 0.0
        %897 = vmatpush1.xpose.msra.mxu0 0.0
        %898 = vmatprep.subr.mxu0 0.0
        %899 = vmatpush1.xpose.msra.mxu0 0.0
        %900 = vmatprep.subr.mxu0 0.0
        %901 = vmatpush1.xpose.msra.mxu0 0.0
        %902 = vmatprep.subr.mxu0 0.0
        %903 = vmatpush1.xpose.msra.mxu0 0.0
        %904 = vmatprep.subr.mxu0 0.0
        %905 = vmatpush1.xpose.msra.mxu0 0.0
        %906 = vmatprep.subr.mxu0 0.0
        %907 = vmatpush1.xpose.msra.mxu0 0.0
        %908 = vmatprep.subr.mxu0 0.0
        %909 = vmatpush1.xpose.msra.mxu0 0.0
        %910 = vmatprep.subr.mxu0 0.0
        %911 = vmatpush1.xpose.msra.mxu0 0.0
        %912 = vmatprep.subr.mxu0 0.0
        %913 = vmatpush1.xpose.msra.mxu0 0.0
        %914 = vmatprep.subr.mxu0 0.0
        %915 = vmatpush1.xpose.msra.mxu0 0.0
        %916 = vmatprep.subr.mxu0 0.0
        %917 = vmatpush1.xpose.msra.mxu0 0.0
        %918 = vmatprep.subr.mxu0 0.0
        %919 = vmatpush1.xpose.msra.mxu0 0.0
        %920 = vmatprep.subr.mxu0 0.0
        %921 = vmatpush1.xpose.msra.mxu0 0.0
        %922 = vmatprep.mubr.f32.mxu0 0.0
        %923 = vmatmul.mubr.f32.gmra.mrb[0].mxu0 %v854
        %v924 = vpop.f32.mrb[0].mxu0
        %v925 = vadd.f32 0.0, %v924
        %v926 = vpop.f32.mrb[0].mxu0
        %927 = vdwg.mxu0
        %928 = vrot.lane.b32.xlu0 %v698, 96
        %v929 = vpop.permute.xlu0 %928
        %v930 = vsel %vm701, %v698, 0
        %v932 = vsel %vm701, %v929, 0
        %934 = vmatprep.subr.mxu0 0.0
        %935 = vmatpush1.xpose.msra.mxu0 %v932
        %936 = vmatprep.subr.mxu0 0.0
        %937 = vmatpush1.xpose.msra.mxu0 0.0
        %938 = vmatprep.subr.mxu0 0.0
        %939 = vmatpush1.xpose.msra.mxu0 0.0
        %940 = vmatprep.subr.mxu0 0.0
        %941 = vmatpush1.xpose.msra.mxu0 0.0
        %942 = vmatprep.subr.mxu0 0.0
        %943 = vmatpush1.xpose.msra.mxu0 0.0
        %944 = vmatprep.subr.mxu0 0.0
        %945 = vmatpush1.xpose.msra.mxu0 0.0
        %946 = vmatprep.subr.mxu0 0.0
        %947 = vmatpush1.xpose.msra.mxu0 0.0
        %948 = vmatprep.subr.mxu0 0.0
        %949 = vmatpush1.xpose.msra.mxu0 0.0
        %950 = vmatprep.subr.mxu0 0.0
        %951 = vmatpush1.xpose.msra.mxu0 0.0
        %952 = vmatprep.subr.mxu0 0.0
        %953 = vmatpush1.xpose.msra.mxu0 0.0
        %954 = vmatprep.subr.mxu0 0.0
        %955 = vmatpush1.xpose.msra.mxu0 0.0
        %956 = vmatprep.subr.mxu0 0.0
        %957 = vmatpush1.xpose.msra.mxu0 0.0
        %958 = vmatprep.subr.mxu0 0.0
        %959 = vmatpush1.xpose.msra.mxu0 0.0
        %960 = vmatprep.subr.mxu0 0.0
        %961 = vmatpush1.xpose.msra.mxu0 0.0
        %962 = vmatprep.subr.mxu0 0.0
        %963 = vmatpush1.xpose.msra.mxu0 0.0
        %964 = vmatprep.subr.mxu0 0.0
        %965 = vmatpush1.xpose.msra.mxu0 0.0
        %966 = vmatprep.subr.mxu0 0.0
        %967 = vmatpush1.xpose.msra.mxu0 0.0
        %968 = vmatprep.subr.mxu0 0.0
        %969 = vmatpush1.xpose.msra.mxu0 0.0
        %970 = vmatprep.subr.mxu0 0.0
        %971 = vmatpush1.xpose.msra.mxu0 0.0
        %972 = vmatprep.subr.mxu0 0.0
        %973 = vmatpush1.xpose.msra.mxu0 0.0
        %974 = vmatprep.subr.mxu0 0.0
        %975 = vmatpush1.xpose.msra.mxu0 0.0
        %976 = vmatprep.subr.mxu0 0.0
        %977 = vmatpush1.xpose.msra.mxu0 0.0
        %978 = vmatprep.subr.mxu0 0.0
        %979 = vmatpush1.xpose.msra.mxu0 0.0
        %980 = vmatprep.subr.mxu0 0.0
        %981 = vmatpush1.xpose.msra.mxu0 0.0
        %982 = vmatprep.subr.mxu0 0.0
        %983 = vmatpush1.xpose.msra.mxu0 0.0
        %984 = vmatprep.subr.mxu0 0.0
        %985 = vmatpush1.xpose.msra.mxu0 0.0
        %986 = vmatprep.subr.mxu0 0.0
        %987 = vmatpush1.xpose.msra.mxu0 0.0
        %988 = vmatprep.subr.mxu0 0.0
        %989 = vmatpush1.xpose.msra.mxu0 0.0
        %990 = vmatprep.subr.mxu0 0.0
        %991 = vmatpush1.xpose.msra.mxu0 0.0
        %992 = vmatprep.subr.mxu0 0.0
        %993 = vmatpush1.xpose.msra.mxu0 0.0
        %994 = vmatprep.subr.mxu0 0.0
        %995 = vmatpush1.xpose.msra.mxu0 0.0
        %996 = vmatprep.subr.mxu0 0.0
        %997 = vmatpush1.xpose.msra.mxu0 0.0
        %998 = vmatprep.mubr.f32.mxu0 0.0
        %999 = vmatmul.mubr.f32.gmra.mrb[0].mxu0 %v930
        %v1000 = vpop.f32.mrb[0].mxu0
        %v1001 = vadd.f32 0.0, %v1000
        %v1002 = vpop.f32.mrb[0].mxu0
        %1003 = vdwg.mxu0
        %v1004 = vmul.f32 %v773, 0.35355338
        %v1005 = vmul.f32 %v849, 0.35355338
        %v1006 = vmul.f32 %v925, 0.35355338
        %v1007 = vmul.f32 %v1001, 0.35355338
        %v1008 = vadd.f32 %v1004, %v625
        %v1009 = vadd.f32 %v1005, %v625
        %v1010 = vadd.f32 %v1006, %v625
        %v1011 = vadd.f32 %v1007, %v625
        %v1012 = vsel %vm701, %v1008, -inf
        %1013 = vmax.xlane.f32.xlu0 %v1012
        %v1014 = vpop.xlane.xlu0 %1013
        %v1015 = vsel %vm701, %v1009, -inf
        %1016 = vmax.xlane.f32.xlu0 %v1015
        %v1017 = vpop.xlane.xlu0 %1016
        %v1018 = vsel %vm701, %v1010, -inf
        %1019 = vmax.xlane.f32.xlu0 %v1018
        %v1020 = vpop.xlane.xlu0 %1019
        %v1021 = vsel %vm701, %v1011, -inf
        %1022 = vmax.xlane.f32.xlu0 %v1021
        %v1023 = vpop.xlane.xlu0 %1022
        %v1024 = vsub.f32 %v1008, %v1014
        %v1025 = vsub.f32 %v1009, %v1017
        %v1026 = vsub.f32 %v1010, %v1020
        %v1027 = vsub.f32 %v1011, %v1023
        %v1028 = vmul.f32 %v1024, 1.442695
        %v1029 = vpow.pop %v1028
        %v1030 = vmul.f32 %v1025, 1.442695
        %v1031 = vpow.pop %v1030
        %v1032 = vmul.f32 %v1026, 1.442695
        %v1033 = vpow.pop %v1032
        %v1034 = vmul.f32 %v1027, 1.442695
        %v1035 = vpow.pop %v1034
        %v1036 = vsel %vm701, %v1029, 0.0
        %1037 = vadd.xlane.f32.xlu0 %v1036
        %v1038 = vpop.xlane.xlu0 %1037
        %v1039 = vsel %vm701, %v1031, 0.0
        %1040 = vadd.xlane.f32.xlu0 %v1039
        %v1041 = vpop.xlane.xlu0 %1040
        %v1042 = vsel %vm701, %v1033, 0.0
        %1043 = vadd.xlane.f32.xlu0 %v1042
        %v1044 = vpop.xlane.xlu0 %1043
        %v1045 = vsel %vm701, %v1035, 0.0
        %1046 = vadd.xlane.f32.xlu0 %v1045
        %v1047 = vpop.xlane.xlu0 %1046
        %v1048 = vrcp.pop %v1038
        %v1049 = vrcp.pop %v1041
        %v1050 = vrcp.pop %v1044
        %v1051 = vrcp.pop %v1047
        %v1052 = vmul.f32 %v1029, %v1048
        %v1053 = vmul.f32 %v1031, %v1049
        %v1054 = vmul.f32 %v1033, %v1050
        %v1055 = vmul.f32 %v1035, %v1051
        %1056 = vrot.lane.b32.xlu0 %v687, 64
        %v1057 = vpop.permute.xlu0 %1056
        %v1060 = vsel %vm701, %v1052, 0
        %1062 = vmatprep.subr.mxu0 0.0
        %1063 = vmatpush1.msra.mxu0 %v1057
        %1064 = vmatprep.subr.mxu0 0.0
        %1065 = vmatpush1.msra.mxu0 0.0
        %1066 = vmatprep.subr.mxu0 0.0
        %1067 = vmatpush1.msra.mxu0 0.0
        %1068 = vmatprep.subr.mxu0 0.0
        %1069 = vmatpush1.msra.mxu0 0.0
        %1070 = vmatprep.subr.mxu0 0.0
        %1071 = vmatpush1.msra.mxu0 0.0
        %1072 = vmatprep.subr.mxu0 0.0
        %1073 = vmatpush1.msra.mxu0 0.0
        %1074 = vmatprep.subr.mxu0 0.0
        %1075 = vmatpush1.msra.mxu0 0.0
        %1076 = vmatprep.subr.mxu0 0.0
        %1077 = vmatpush1.msra.mxu0 0.0
        %1078 = vmatprep.subr.mxu0 0.0
        %1079 = vmatpush1.msra.mxu0 0.0
        %1080 = vmatprep.subr.mxu0 0.0
        %1081 = vmatpush1.msra.mxu0 0.0
        %1082 = vmatprep.subr.mxu0 0.0
        %1083 = vmatpush1.msra.mxu0 0.0
        %1084 = vmatprep.subr.mxu0 0.0
        %1085 = vmatpush1.msra.mxu0 0.0
        %1086 = vmatprep.subr.mxu0 0.0
        %1087 = vmatpush1.msra.mxu0 0.0
        %1088 = vmatprep.subr.mxu0 0.0
        %1089 = vmatpush1.msra.mxu0 0.0
        %1090 = vmatprep.subr.mxu0 0.0
        %1091 = vmatpush1.msra.mxu0 0.0
        %1092 = vmatprep.subr.mxu0 0.0
        %1093 = vmatpush1.msra.mxu0 0.0
        %1094 = vmatprep.subr.mxu0 0.0
        %1095 = vmatpush1.msra.mxu0 0.0
        %1096 = vmatprep.subr.mxu0 0.0
        %1097 = vmatpush1.msra.mxu0 0.0
        %1098 = vmatprep.subr.mxu0 0.0
        %1099 = vmatpush1.msra.mxu0 0.0
        %1100 = vmatprep.subr.mxu0 0.0
        %1101 = vmatpush1.msra.mxu0 0.0
        %1102 = vmatprep.subr.mxu0 0.0
        %1103 = vmatpush1.msra.mxu0 0.0
        %1104 = vmatprep.subr.mxu0 0.0
        %1105 = vmatpush1.msra.mxu0 0.0
        %1106 = vmatprep.subr.mxu0 0.0
        %1107 = vmatpush1.msra.mxu0 0.0
        %1108 = vmatprep.subr.mxu0 0.0
        %1109 = vmatpush1.msra.mxu0 0.0
        %1110 = vmatprep.subr.mxu0 0.0
        %1111 = vmatpush1.msra.mxu0 0.0
        %1112 = vmatprep.subr.mxu0 0.0
        %1113 = vmatpush1.msra.mxu0 0.0
        %1114 = vmatprep.subr.mxu0 0.0
        %1115 = vmatpush1.msra.mxu0 0.0
        %1116 = vmatprep.subr.mxu0 0.0
        %1117 = vmatpush1.msra.mxu0 0.0
        %1118 = vmatprep.subr.mxu0 0.0
        %1119 = vmatpush1.msra.mxu0 0.0
        %1120 = vmatprep.subr.mxu0 0.0
        %1121 = vmatpush1.msra.mxu0 0.0
        %1122 = vmatprep.subr.mxu0 0.0
        %1123 = vmatpush1.msra.mxu0 0.0
        %1124 = vmatprep.subr.mxu0 0.0
        %1125 = vmatpush1.msra.mxu0 0.0
        %1126 = vmatprep.mubr.f32.mxu0 0.0
        %1127 = vmatmul.mubr.f32.gmra.mrb[0].mxu0 %v1060
        %v1128 = vpop.f32.mrb[0].mxu0
        %v1129 = vadd.f32 0.0, %v1128
        %v1130 = vpop.f32.mrb[0].mxu0
        %1131 = vdwg.mxu0
        %1132 = vrot.lane.b32.xlu0 %v694, 64
        %v1133 = vpop.permute.xlu0 %1132
        %v1136 = vsel %vm701, %v1053, 0
        %1138 = vmatprep.subr.mxu0 0.0
        %1139 = vmatpush1.msra.mxu0 %v1133
        %1140 = vmatprep.subr.mxu0 0.0
        %1141 = vmatpush1.msra.mxu0 0.0
        %1142 = vmatprep.subr.mxu0 0.0
        %1143 = vmatpush1.msra.mxu0 0.0
        %1144 = vmatprep.subr.mxu0 0.0
        %1145 = vmatpush1.msra.mxu0 0.0
        %1146 = vmatprep.subr.mxu0 0.0
        %1147 = vmatpush1.msra.mxu0 0.0
        %1148 = vmatprep.subr.mxu0 0.0
        %1149 = vmatpush1.msra.mxu0 0.0
        %1150 = vmatprep.subr.mxu0 0.0
        %1151 = vmatpush1.msra.mxu0 0.0
        %1152 = vmatprep.subr.mxu0 0.0
        %1153 = vmatpush1.msra.mxu0 0.0
        %1154 = vmatprep.subr.mxu0 0.0
        %1155 = vmatpush1.msra.mxu0 0.0
        %1156 = vmatprep.subr.mxu0 0.0
        %1157 = vmatpush1.msra.mxu0 0.0
        %1158 = vmatprep.subr.mxu0 0.0
        %1159 = vmatpush1.msra.mxu0 0.0
        %1160 = vmatprep.subr.mxu0 0.0
        %1161 = vmatpush1.msra.mxu0 0.0
        %1162 = vmatprep.subr.mxu0 0.0
        %1163 = vmatpush1.msra.mxu0 0.0
        %1164 = vmatprep.subr.mxu0 0.0
        %1165 = vmatpush1.msra.mxu0 0.0
        %1166 = vmatprep.subr.mxu0 0.0
        %1167 = vmatpush1.msra.mxu0 0.0
        %1168 = vmatprep.subr.mxu0 0.0
        %1169 = vmatpush1.msra.mxu0 0.0
        %1170 = vmatprep.subr.mxu0 0.0
        %1171 = vmatpush1.msra.mxu0 0.0
        %1172 = vmatprep.subr.mxu0 0.0
        %1173 = vmatpush1.msra.mxu0 0.0
        %1174 = vmatprep.subr.mxu0 0.0
        %1175 = vmatpush1.msra.mxu0 0.0
        %1176 = vmatprep.subr.mxu0 0.0
        %1177 = vmatpush1.msra.mxu0 0.0
        %1178 = vmatprep.subr.mxu0 0.0
        %1179 = vmatpush1.msra.mxu0 0.0
        %1180 = vmatprep.subr.mxu0 0.0
        %1181 = vmatpush1.msra.mxu0 0.0
        %1182 = vmatprep.subr.mxu0 0.0
        %1183 = vmatpush1.msra.mxu0 0.0
        %1184 = vmatprep.subr.mxu0 0.0
        %1185 = vmatpush1.msra.mxu0 0.0
        %1186 = vmatprep.subr.mxu0 0.0
        %1187 = vmatpush1.msra.mxu0 0.0
        %1188 = vmatprep.subr.mxu0 0.0
        %1189 = vmatpush1.msra.mxu0 0.0
        %1190 = vmatprep.subr.mxu0 0.0
        %1191 = vmatpush1.msra.mxu0 0.0
        %1192 = vmatprep.subr.mxu0 0.0
        %1193 = vmatpush1.msra.mxu0 0.0
        %1194 = vmatprep.subr.mxu0 0.0
        %1195 = vmatpush1.msra.mxu0 0.0
        %1196 = vmatprep.subr.mxu0 0.0
        %1197 = vmatpush1.msra.mxu0 0.0
        %1198 = vmatprep.subr.mxu0 0.0
        %1199 = vmatpush1.msra.mxu0 0.0
        %1200 = vmatprep.subr.mxu0 0.0
        %1201 = vmatpush1.msra.mxu0 0.0
        %1202 = vmatprep.mubr.f32.mxu0 0.0
        %1203 = vmatmul.mubr.f32.gmra.mrb[0].mxu0 %v1136
        %v1204 = vpop.f32.mrb[0].mxu0
        %v1205 = vadd.f32 0.0, %v1204
        %v1206 = vpop.f32.mrb[0].mxu0
        %1207 = vdwg.mxu0
        %1208 = vrot.lane.b32.xlu0 %v696, 64
        %v1209 = vpop.permute.xlu0 %1208
        %v1212 = vsel %vm701, %v1054, 0
        %1214 = vmatprep.subr.mxu0 0.0
        %1215 = vmatpush1.msra.mxu0 %v1209
        %1216 = vmatprep.subr.mxu0 0.0
        %1217 = vmatpush1.msra.mxu0 0.0
        %1218 = vmatprep.subr.mxu0 0.0
        %1219 = vmatpush1.msra.mxu0 0.0
        %1220 = vmatprep.subr.mxu0 0.0
        %1221 = vmatpush1.msra.mxu0 0.0
        %1222 = vmatprep.subr.mxu0 0.0
        %1223 = vmatpush1.msra.mxu0 0.0
        %1224 = vmatprep.subr.mxu0 0.0
        %1225 = vmatpush1.msra.mxu0 0.0
        %1226 = vmatprep.subr.mxu0 0.0
        %1227 = vmatpush1.msra.mxu0 0.0
        %1228 = vmatprep.subr.mxu0 0.0
        %1229 = vmatpush1.msra.mxu0 0.0
        %1230 = vmatprep.subr.mxu0 0.0
        %1231 = vmatpush1.msra.mxu0 0.0
        %1232 = vmatprep.subr.mxu0 0.0
        %1233 = vmatpush1.msra.mxu0 0.0
        %1234 = vmatprep.subr.mxu0 0.0
        %1235 = vmatpush1.msra.mxu0 0.0
        %1236 = vmatprep.subr.mxu0 0.0
        %1237 = vmatpush1.msra.mxu0 0.0
        %1238 = vmatprep.subr.mxu0 0.0
        %1239 = vmatpush1.msra.mxu0 0.0
        %1240 = vmatprep.subr.mxu0 0.0
        %1241 = vmatpush1.msra.mxu0 0.0
        %1242 = vmatprep.subr.mxu0 0.0
        %1243 = vmatpush1.msra.mxu0 0.0
        %1244 = vmatprep.subr.mxu0 0.0
        %1245 = vmatpush1.msra.mxu0 0.0
        %1246 = vmatprep.subr.mxu0 0.0
        %1247 = vmatpush1.msra.mxu0 0.0
        %1248 = vmatprep.subr.mxu0 0.0
        %1249 = vmatpush1.msra.mxu0 0.0
        %1250 = vmatprep.subr.mxu0 0.0
        %1251 = vmatpush1.msra.mxu0 0.0
        %1252 = vmatprep.subr.mxu0 0.0
        %1253 = vmatpush1.msra.mxu0 0.0
        %1254 = vmatprep.subr.mxu0 0.0
        %1255 = vmatpush1.msra.mxu0 0.0
        %1256 = vmatprep.subr.mxu0 0.0
        %1257 = vmatpush1.msra.mxu0 0.0
        %1258 = vmatprep.subr.mxu0 0.0
        %1259 = vmatpush1.msra.mxu0 0.0
        %1260 = vmatprep.subr.mxu0 0.0
        %1261 = vmatpush1.msra.mxu0 0.0
        %1262 = vmatprep.subr.mxu0 0.0
        %1263 = vmatpush1.msra.mxu0 0.0
        %1264 = vmatprep.subr.mxu0 0.0
        %1265 = vmatpush1.msra.mxu0 0.0
        %1266 = vmatprep.subr.mxu0 0.0
        %1267 = vmatpush1.msra.mxu0 0.0
        %1268 = vmatprep.subr.mxu0 0.0
        %1269 = vmatpush1.msra.mxu0 0.0
        %1270 = vmatprep.subr.mxu0 0.0
        %1271 = vmatpush1.msra.mxu0 0.0
        %1272 = vmatprep.subr.mxu0 0.0
        %1273 = vmatpush1.msra.mxu0 0.0
        %1274 = vmatprep.subr.mxu0 0.0
        %1275 = vmatpush1.msra.mxu0 0.0
        %1276 = vmatprep.subr.mxu0 0.0
        %1277 = vmatpush1.msra.mxu0 0.0
        %1278 = vmatprep.mubr.f32.mxu0 0.0
        %1279 = vmatmul.mubr.f32.gmra.mrb[0].mxu0 %v1212
        %v1280 = vpop.f32.mrb[0].mxu0
        %v1281 = vadd.f32 0.0, %v1280
        %v1282 = vpop.f32.mrb[0].mxu0
        %1283 = vdwg.mxu0
        %1284 = vrot.lane.b32.xlu0 %v698, 64
        %v1285 = vpop.permute.xlu0 %1284
        %v1288 = vsel %vm701, %v1055, 0
        %1290 = vmatprep.subr.mxu0 0.0
        %1291 = vmatpush1.msra.mxu0 %v1285
        %1292 = vmatprep.subr.mxu0 0.0
        %1293 = vmatpush1.msra.mxu0 0.0
        %1294 = vmatprep.subr.mxu0 0.0
        %1295 = vmatpush1.msra.mxu0 0.0
        %1296 = vmatprep.subr.mxu0 0.0
        %1297 = vmatpush1.msra.mxu0 0.0
        %1298 = vmatprep.subr.mxu0 0.0
        %1299 = vmatpush1.msra.mxu0 0.0
        %1300 = vmatprep.subr.mxu0 0.0
        %1301 = vmatpush1.msra.mxu0 0.0
        %1302 = vmatprep.subr.mxu0 0.0
        %1303 = vmatpush1.msra.mxu0 0.0
        %1304 = vmatprep.subr.mxu0 0.0
        %1305 = vmatpush1.msra.mxu0 0.0
        %1306 = vmatprep.subr.mxu0 0.0
        %1307 = vmatpush1.msra.mxu0 0.0
        %1308 = vmatprep.subr.mxu0 0.0
        %1309 = vmatpush1.msra.mxu0 0.0
        %1310 = vmatprep.subr.mxu0 0.0
        %1311 = vmatpush1.msra.mxu0 0.0
        %1312 = vmatprep.subr.mxu0 0.0
        %1313 = vmatpush1.msra.mxu0 0.0
        %1314 = vmatprep.subr.mxu0 0.0
        %1315 = vmatpush1.msra.mxu0 0.0
        %1316 = vmatprep.subr.mxu0 0.0
        %1317 = vmatpush1.msra.mxu0 0.0
        %1318 = vmatprep.subr.mxu0 0.0
        %1319 = vmatpush1.msra.mxu0 0.0
        %1320 = vmatprep.subr.mxu0 0.0
        %1321 = vmatpush1.msra.mxu0 0.0
        %1322 = vmatprep.subr.mxu0 0.0
        %1323 = vmatpush1.msra.mxu0 0.0
        %1324 = vmatprep.subr.mxu0 0.0
        %1325 = vmatpush1.msra.mxu0 0.0
        %1326 = vmatprep.subr.mxu0 0.0
        %1327 = vmatpush1.msra.mxu0 0.0
        %1328 = vmatprep.subr.mxu0 0.0
        %1329 = vmatpush1.msra.mxu0 0.0
        %1330 = vmatprep.subr.mxu0 0.0
        %1331 = vmatpush1.msra.mxu0 0.0
        %1332 = vmatprep.subr.mxu0 0.0
        %1333 = vmatpush1.msra.mxu0 0.0
        %1334 = vmatprep.subr.mxu0 0.0
        %1335 = vmatpush1.msra.mxu0 0.0
        %1336 = vmatprep.subr.mxu0 0.0
        %1337 = vmatpush1.msra.mxu0 0.0
        %1338 = vmatprep.subr.mxu0 0.0
        %1339 = vmatpush1.msra.mxu0 0.0
        %1340 = vmatprep.subr.mxu0 0.0
        %1341 = vmatpush1.msra.mxu0 0.0
        %1342 = vmatprep.subr.mxu0 0.0
        %1343 = vmatpush1.msra.mxu0 0.0
        %1344 = vmatprep.subr.mxu0 0.0
        %1345 = vmatpush1.msra.mxu0 0.0
        %1346 = vmatprep.subr.mxu0 0.0
        %1347 = vmatpush1.msra.mxu0 0.0
        %1348 = vmatprep.subr.mxu0 0.0
        %1349 = vmatpush1.msra.mxu0 0.0
        %1350 = vmatprep.subr.mxu0 0.0
        %1351 = vmatpush1.msra.mxu0 0.0
        %1352 = vmatprep.subr.mxu0 0.0
        %1353 = vmatpush1.msra.mxu0 0.0
        %1354 = vmatprep.mubr.f32.mxu0 0.0
        %1355 = vmatmul.mubr.f32.gmra.mrb[0].mxu0 %v1288
        %v1356 = vpop.f32.mrb[0].mxu0
        %v1357 = vadd.f32 0.0, %v1356
        %v1358 = vpop.f32.mrb[0].mxu0
        %1359 = vdwg.mxu0
        %v1360 = vpack.c.bf16 %v1129, %v1129
        %v1361 = vpack.c.bf16 %v1205, %v1205
        %v1362 = vpack.c.bf16 %v1281, %v1281
        %v1363 = vpack.c.bf16 %v1357, %v1357
        %v1364 = vld [vmem:[%s5] sm:$0xf]
        %v1365 = vld [vmem:[%s5 + $0x4] sm:$0xf]
        %v1366 = vld [vmem:[%s5 + $0x8] sm:$0xf]
        %v1367 = vld [vmem:[%s5 + $0xc] sm:$0xf]
        %v1369 = vsel %vm701, %v1360, 0
        %vm1371 = vcmask 1043456
        %v1373 = vsel %vm1371, %v1364, 0
        %1375 = vmatprep.subr.bf16.mxu0 0
        %1376 = vmatpush1.bf16.msra.mxu0 %v1373
        %1377 = vmatprep.subr.bf16.mxu0 0
        %1378 = vmatpush1.bf16.msra.mxu0 0
        %1379 = vmatprep.subr.bf16.mxu0 0
        %1380 = vmatpush1.bf16.msra.mxu0 0
        %1381 = vmatprep.subr.bf16.mxu0 0
        %1382 = vmatpush1.bf16.msra.mxu0 0
        %1383 = vmatprep.subr.bf16.mxu0 0
        %1384 = vmatpush1.bf16.msra.mxu0 0
        %1385 = vmatprep.subr.bf16.mxu0 0
        %1386 = vmatpush1.bf16.msra.mxu0 0
        %1387 = vmatprep.subr.bf16.mxu0 0
        %1388 = vmatpush1.bf16.msra.mxu0 0
        %1389 = vmatprep.subr.bf16.mxu0 0
        %1390 = vmatpush1.bf16.msra.mxu0 0
        %1391 = vmatprep.subr.bf16.mxu0 0
        %1392 = vmatpush1.bf16.msra.mxu0 0
        %1393 = vmatprep.subr.bf16.mxu0 0
        %1394 = vmatpush1.bf16.msra.mxu0 0
        %1395 = vmatprep.subr.bf16.mxu0 0
        %1396 = vmatpush1.bf16.msra.mxu0 0
        %1397 = vmatprep.subr.bf16.mxu0 0
        %1398 = vmatpush1.bf16.msra.mxu0 0
        %1399 = vmatprep.subr.bf16.mxu0 0
        %1400 = vmatpush1.bf16.msra.mxu0 0
        %1401 = vmatprep.subr.bf16.mxu0 0
        %1402 = vmatpush1.bf16.msra.mxu0 0
        %1403 = vmatprep.subr.bf16.mxu0 0
        %1404 = vmatpush1.bf16.msra.mxu0 0
        %1405 = vmatprep.subr.bf16.mxu0 0
        %1406 = vmatpush1.bf16.msra.mxu0 0
        %1407 = vmatprep.mubr.bf16.mxu0 0
        %1408 = vmatmul.mubr.bf16.gmra.mrb[0].mxu0 %v1369
        %v1409 = vpop.f32.mrb[0].mxu0
        %v1410 = vadd.f32 0.0, %v1409
        %v1411 = vpop.f32.mrb[0].mxu0
        %v1412 = vpop.f32.mrb[0].mxu0
        %v1413 = vpop.f32.mrb[0].mxu0
        %1414 = vdwg.mxu0
        %v1416 = vsel %vm701, %v1361, 0
        %v1419 = vsel %vm1371, %v1365, 0
        %1421 = vmatprep.subr.bf16.mxu0 0
        %1422 = vmatpush1.bf16.msra.mxu0 %v1419
        %1423 = vmatprep.subr.bf16.mxu0 0
        %1424 = vmatpush1.bf16.msra.mxu0 0
        %1425 = vmatprep.subr.bf16.mxu0 0
        %1426 = vmatpush1.bf16.msra.mxu0 0
        %1427 = vmatprep.subr.bf16.mxu0 0
        %1428 = vmatpush1.bf16.msra.mxu0 0
        %1429 = vmatprep.subr.bf16.mxu0 0
        %1430 = vmatpush1.bf16.msra.mxu0 0
        %1431 = vmatprep.subr.bf16.mxu0 0
        %1432 = vmatpush1.bf16.msra.mxu0 0
        %1433 = vmatprep.subr.bf16.mxu0 0
        %1434 = vmatpush1.bf16.msra.mxu0 0
        %1435 = vmatprep.subr.bf16.mxu0 0
        %1436 = vmatpush1.bf16.msra.mxu0 0
        %1437 = vmatprep.subr.bf16.mxu0 0
        %1438 = vmatpush1.bf16.msra.mxu0 0
        %1439 = vmatprep.subr.bf16.mxu0 0
        %1440 = vmatpush1.bf16.msra.mxu0 0
        %1441 = vmatprep.subr.bf16.mxu0 0
        %1442 = vmatpush1.bf16.msra.mxu0 0
        %1443 = vmatprep.subr.bf16.mxu0 0
        %1444 = vmatpush1.bf16.msra.mxu0 0
        %1445 = vmatprep.subr.bf16.mxu0 0
        %1446 = vmatpush1.bf16.msra.mxu0 0
        %1447 = vmatprep.subr.bf16.mxu0 0
        %1448 = vmatpush1.bf16.msra.mxu0 0
        %1449 = vmatprep.subr.bf16.mxu0 0
        %1450 = vmatpush1.bf16.msra.mxu0 0
        %1451 = vmatprep.subr.bf16.mxu0 0
        %1452 = vmatpush1.bf16.msra.mxu0 0
        %1453 = vmatprep.mubr.bf16.mxu0 0
        %1454 = vmatmul.mubr.bf16.gmra.mrb[0].mxu0 %v1416
        %v1455 = vpop.f32.mrb[0].mxu0
        %v1456 = vadd.f32 0.0, %v1455
        %v1457 = vpop.f32.mrb[0].mxu0
        %v1458 = vpop.f32.mrb[0].mxu0
        %v1459 = vpop.f32.mrb[0].mxu0
        %1460 = vdwg.mxu0
        %v1462 = vsel %vm701, %v1362, 0
        %v1465 = vsel %vm1371, %v1366, 0
        %1467 = vmatprep.subr.bf16.mxu0 0
        %1468 = vmatpush1.bf16.msra.mxu0 %v1465
        %1469 = vmatprep.subr.bf16.mxu0 0
        %1470 = vmatpush1.bf16.msra.mxu0 0
        %1471 = vmatprep.subr.bf16.mxu0 0
        %1472 = vmatpush1.bf16.msra.mxu0 0
        %1473 = vmatprep.subr.bf16.mxu0 0
        %1474 = vmatpush1.bf16.msra.mxu0 0
        %1475 = vmatprep.subr.bf16.mxu0 0
        %1476 = vmatpush1.bf16.msra.mxu0 0
        %1477 = vmatprep.subr.bf16.mxu0 0
        %1478 = vmatpush1.bf16.msra.mxu0 0
        %1479 = vmatprep.subr.bf16.mxu0 0
        %1480 = vmatpush1.bf16.msra.mxu0 0
        %1481 = vmatprep.subr.bf16.mxu0 0
        %1482 = vmatpush1.bf16.msra.mxu0 0
        %1483 = vmatprep.subr.bf16.mxu0 0
        %1484 = vmatpush1.bf16.msra.mxu0 0
        %1485 = vmatprep.subr.bf16.mxu0 0
        %1486 = vmatpush1.bf16.msra.mxu0 0
        %1487 = vmatprep.subr.bf16.mxu0 0
        %1488 = vmatpush1.bf16.msra.mxu0 0
        %1489 = vmatprep.subr.bf16.mxu0 0
        %1490 = vmatpush1.bf16.msra.mxu0 0
        %1491 = vmatprep.subr.bf16.mxu0 0
        %1492 = vmatpush1.bf16.msra.mxu0 0
        %1493 = vmatprep.subr.bf16.mxu0 0
        %1494 = vmatpush1.bf16.msra.mxu0 0
        %1495 = vmatprep.subr.bf16.mxu0 0
        %1496 = vmatpush1.bf16.msra.mxu0 0
        %1497 = vmatprep.subr.bf16.mxu0 0
        %1498 = vmatpush1.bf16.msra.mxu0 0
        %1499 = vmatprep.mubr.bf16.mxu0 0
        %1500 = vmatmul.mubr.bf16.gmra.mrb[0].mxu0 %v1462
        %v1501 = vpop.f32.mrb[0].mxu0
        %v1502 = vadd.f32 0.0, %v1501
        %v1503 = vpop.f32.mrb[0].mxu0
        %v1504 = vpop.f32.mrb[0].mxu0
        %v1505 = vpop.f32.mrb[0].mxu0
        %1506 = vdwg.mxu0
        %v1508 = vsel %vm701, %v1363, 0
        %v1511 = vsel %vm1371, %v1367, 0
        %1513 = vmatprep.subr.bf16.mxu0 0
        %1514 = vmatpush1.bf16.msra.mxu0 %v1511
        %1515 = vmatprep.subr.bf16.mxu0 0
        %1516 = vmatpush1.bf16.msra.mxu0 0
        %1517 = vmatprep.subr.bf16.mxu0 0
        %1518 = vmatpush1.bf16.msra.mxu0 0
        %1519 = vmatprep.subr.bf16.mxu0 0
        %1520 = vmatpush1.bf16.msra.mxu0 0
        %1521 = vmatprep.subr.bf16.mxu0 0
        %1522 = vmatpush1.bf16.msra.mxu0 0
        %1523 = vmatprep.subr.bf16.mxu0 0
        %1524 = vmatpush1.bf16.msra.mxu0 0
        %1525 = vmatprep.subr.bf16.mxu0 0
        %1526 = vmatpush1.bf16.msra.mxu0 0
        %1527 = vmatprep.subr.bf16.mxu0 0
        %1528 = vmatpush1.bf16.msra.mxu0 0
        %1529 = vmatprep.subr.bf16.mxu0 0
        %1530 = vmatpush1.bf16.msra.mxu0 0
        %1531 = vmatprep.subr.bf16.mxu0 0
        %1532 = vmatpush1.bf16.msra.mxu0 0
        %1533 = vmatprep.subr.bf16.mxu0 0
        %1534 = vmatpush1.bf16.msra.mxu0 0
        %1535 = vmatprep.subr.bf16.mxu0 0
        %1536 = vmatpush1.bf16.msra.mxu0 0
        %1537 = vmatprep.subr.bf16.mxu0 0
        %1538 = vmatpush1.bf16.msra.mxu0 0
        %1539 = vmatprep.subr.bf16.mxu0 0
        %1540 = vmatpush1.bf16.msra.mxu0 0
        %1541 = vmatprep.subr.bf16.mxu0 0
        %1542 = vmatpush1.bf16.msra.mxu0 0
        %1543 = vmatprep.subr.bf16.mxu0 0
        %1544 = vmatpush1.bf16.msra.mxu0 0
        %1545 = vmatprep.mubr.bf16.mxu0 0
        %1546 = vmatmul.mubr.bf16.gmra.mrb[0].mxu0 %v1508
        %v1547 = vpop.f32.mrb[0].mxu0
        %v1548 = vadd.f32 0.0, %v1547
        %v1549 = vpop.f32.mrb[0].mxu0
        %v1550 = vpop.f32.mrb[0].mxu0
        %v1551 = vpop.f32.mrb[0].mxu0
        %1552 = vdwg.mxu0
        %v1553 = vsel %vm592, %v1410, 0.0
        %v1554 = vsel %vm592, %v1456, 0.0
        %v1555 = vadd.f32 %v1553, %v1554
        %v1556 = vsel %vm592, %v1502, 0.0
        %v1557 = vadd.f32 %v1555, %v1556
        %v1558 = vsel %vm592, %v1548, 0.0
        %v1559 = vadd.f32 %v1557, %v1558
        %v1560 = vlaneseq
        %v1561 = vshrl.u32 %v1560, 7
        %v1562 = vsub.s32 1, %v1561
        %v1563 = vrot.slane %v627, %v1562
        %v1564 = vadd.f32 %v1559, %v1563
        %v1565 = vadd.f32 %v1564, %v616
        %v1566 = vsel %vm592, %v1565, 0.0
        %1567 = vadd.xlane.f32.xlu0 %v1566
        %v1568 = vpop.xlane.xlu0 %1567
        %v1569 = vmul.f32 %v1568, %v596
        %v1570 = vsub.f32 %v1565, %v1569
        %v1571 = vmul.f32 %v1570, %v1570
        %v1572 = vsel %vm592, %v1571, 0.0
        %1573 = vadd.xlane.f32.xlu0 %v1572
        %v1574 = vpop.xlane.xlu0 %1573
        %v1575 = vmul.f32 %v1574, %v596
        %v1576 = vadd.f32 %v1575, 1e-05
        %v1577 = vrsqrt.pop %v1576
        %v1578 = vmul.f32 %v1570, %v1577
        %v1579 = vlaneseq
        %v1580 = vshrl.u32 %v1579, 7
        %v1581 = vsub.s32 2, %v1580
        %v1582 = vrot.slane %v627, %v1581
        %v1583 = vmul.f32 %v1578, %v1582
        %v1584 = vlaneseq
        %v1585 = vshrl.u32 %v1584, 7
        %v1586 = vsub.s32 3, %v1585
        %v1587 = vrot.slane %v627, %v1586
        %v1588 = vadd.f32 %v1583, %v1587
        %v1589 = vpack.c.bf16 %v1588, %v1588
        %v1590 = vld [vmem:[%s6] sm:$0xf]
        %v1591 = vld [vmem:[%s6 + $0x4] sm:$0xf]
        %v1592 = vld [vmem:[%s6 + $0x8] sm:$0xf]
        %v1593 = vld [vmem:[%s6 + $0xc] sm:$0xf]
        %v1594 = vlaneseq
        %v1595 = vshrl.u32 %v1594, 7
        %v1596 = vsub.s32 4, %v1595
        %v1597 = vrot.slane %v627, %v1596
        %v1602 = vunpack.c.l.b16 %v1590
        %v1603 = vunpack.c.l.b16 %v1591
        %v1604 = vunpack.c.l.b16 %v1592
        %v1605 = vunpack.c.l.b16 %v1593
        %v1606 = vpack.c.b16 %v1603, %v1602
        %v1607 = vpack.c.b16 %v1605, %v1604
        %v1611 = vsel %vm592, %v1589, 0
        %1613 = vmatprep.subr.bf16.mxu0 0
        %1614 = vmatpush1.bf16.msra.mxu0 %v1606
        %1615 = vmatprep.subr.bf16.mxu0 0
        %1616 = vmatpush1.bf16.msra.mxu0 %v1607
        %1617 = vmatprep.subr.bf16.mxu0 0
        %1618 = vmatpush1.bf16.msra.mxu0 0
        %1619 = vmatprep.subr.bf16.mxu0 0
        %1620 = vmatpush1.bf16.msra.mxu0 0
        %1621 = vmatprep.subr.bf16.mxu0 0
        %1622 = vmatpush1.bf16.msra.mxu0 0
        %1623 = vmatprep.subr.bf16.mxu0 0
        %1624 = vmatpush1.bf16.msra.mxu0 0
        %1625 = vmatprep.subr.bf16.mxu0 0
        %1626 = vmatpush1.bf16.msra.mxu0 0
        %1627 = vmatprep.subr.bf16.mxu0 0
        %1628 = vmatpush1.bf16.msra.mxu0 0
        %1629 = vmatprep.subr.bf16.mxu0 0
        %1630 = vmatpush1.bf16.msra.mxu0 0
        %1631 = vmatprep.subr.bf16.mxu0 0
        %1632 = vmatpush1.bf16.msra.mxu0 0
        %1633 = vmatprep.subr.bf16.mxu0 0
        %1634 = vmatpush1.bf16.msra.mxu0 0
        %1635 = vmatprep.subr.bf16.mxu0 0
        %1636 = vmatpush1.bf16.msra.mxu0 0
        %1637 = vmatprep.subr.bf16.mxu0 0
        %1638 = vmatpush1.bf16.msra.mxu0 0
        %1639 = vmatprep.subr.bf16.mxu0 0
        %1640 = vmatpush1.bf16.msra.mxu0 0
        %1641 = vmatprep.subr.bf16.mxu0 0
        %1642 = vmatpush1.bf16.msra.mxu0 0
        %1643 = vmatprep.subr.bf16.mxu0 0
        %1644 = vmatpush1.bf16.msra.mxu0 0
        %1645 = vmatprep.mubr.bf16.mxu0 0
        %1646 = vmatmul.mubr.bf16.gmra.mrb[0].mxu0 %v1611
        %v1647 = vpop.f32.mrb[0].mxu0
        %v1648 = vadd.f32 %v1597, %v1647
        %v1649 = vpop.f32.mrb[0].mxu0
        %v1650 = vpop.f32.mrb[0].mxu0
        %v1651 = vpop.f32.mrb[0].mxu0
        %1652 = vdwg.mxu0
        %v1653 = vmul.f32 %v1648, 0.5
        %v1654 = vmul.f32 %v1648, 0.044715
        %v1655 = vmul.f32 %v1654, %v1648
        %v1656 = vmul.f32 %v1655, %v1648
        %v1657 = vadd.f32 %v1648, %v1656
        %v1658 = vmul.f32 %v1657, 0.7978846
        %v1659 = vtanh.pop %v1658
        %v1660 = vadd.f32 %v1659, 1.0
        %v1661 = vmul.f32 %v1653, %v1660
        %v1662 = vpack.c.bf16 %v1661, %v1661
        %v1663 = vld [vmem:[%s7] sm:$0xf]
        %v1664 = vld [vmem:[%s7 + $0x4] sm:$0xf]
        %v1665 = vld [vmem:[%s7 + $0x8] sm:$0xf]
        %v1666 = vld [vmem:[%s7 + $0xc] sm:$0xf]
        %v1667 = vld [vmem:[%s7 + $0x10] sm:$0xf]
        %v1668 = vld [vmem:[%s7 + $0x14] sm:$0xf]
        %v1669 = vld [vmem:[%s7 + $0x18] sm:$0xf]
        %v1670 = vld [vmem:[%s7 + $0x1c] sm:$0xf]
        %v1671 = vlaneseq
        %v1672 = vshrl.u32 %v1671, 7
        %v1673 = vsub.s32 5, %v1672
        %v1674 = vrot.slane %v627, %v1673
        %v1683 = vunpack.c.l.b16 %v1663
        %v1684 = vunpack.c.l.b16 %v1664
        %v1685 = vunpack.c.l.b16 %v1665
        %v1686 = vunpack.c.l.b16 %v1666
        %v1687 = vunpack.c.l.b16 %v1667
        %v1688 = vunpack.c.l.b16 %v1668
        %v1689 = vunpack.c.l.b16 %v1669
        %v1690 = vunpack.c.l.b16 %v1670
        %v1691 = vpack.c.b16 %v1684, %v1683
        %v1692 = vpack.c.b16 %v1686, %v1685
        %v1693 = vpack.c.b16 %v1688, %v1687
        %v1694 = vpack.c.b16 %v1690, %v1689
        %vm1699 = vcmask 523264
        %v1701 = vsel %vm1699, %v1662, 0
        %1703 = vmatprep.subr.bf16.mxu0 0
        %1704 = vmatpush1.bf16.msra.mxu0 %v1691
        %1705 = vmatprep.subr.bf16.mxu0 0
        %1706 = vmatpush1.bf16.msra.mxu0 %v1692
        %1707 = vmatprep.subr.bf16.mxu0 0
        %1708 = vmatpush1.bf16.msra.mxu0 %v1693
        %1709 = vmatprep.subr.bf16.mxu0 0
        %1710 = vmatpush1.bf16.msra.mxu0 %v1694
        %1711 = vmatprep.subr.bf16.mxu0 0
        %1712 = vmatpush1.bf16.msra.mxu0 0
        %1713 = vmatprep.subr.bf16.mxu0 0
        %1714 = vmatpush1.bf16.msra.mxu0 0
        %1715 = vmatprep.subr.bf16.mxu0 0
        %1716 = vmatpush1.bf16.msra.mxu0 0
        %1717 = vmatprep.subr.bf16.mxu0 0
        %1718 = vmatpush1.bf16.msra.mxu0 0
        %1719 = vmatprep.subr.bf16.mxu0 0
        %1720 = vmatpush1.bf16.msra.mxu0 0
        %1721 = vmatprep.subr.bf16.mxu0 0
        %1722 = vmatpush1.bf16.msra.mxu0 0
        %1723 = vmatprep.subr.bf16.mxu0 0
        %1724 = vmatpush1.bf16.msra.mxu0 0
        %1725 = vmatprep.subr.bf16.mxu0 0
        %1726 = vmatpush1.bf16.msra.mxu0 0
        %1727 = vmatprep.subr.bf16.mxu0 0
        %1728 = vmatpush1.bf16.msra.mxu0 0
        %1729 = vmatprep.subr.bf16.mxu0 0
        %1730 = vmatpush1.bf16.msra.mxu0 0
        %1731 = vmatprep.subr.bf16.mxu0 0
        %1732 = vmatpush1.bf16.msra.mxu0 0
        %1733 = vmatprep.subr.bf16.mxu0 0
        %1734 = vmatpush1.bf16.msra.mxu0 0
        %1735 = vmatprep.mubr.bf16.mxu0 0
        %1736 = vmatmul.mubr.bf16.gmra.mrb[0].mxu0 %v1701
        %v1737 = vpop.f32.mrb[0].mxu0
        %v1738 = vadd.f32 %v1674, %v1737
        %v1739 = vpop.f32.mrb[0].mxu0
        %v1740 = vpop.f32.mrb[0].mxu0
        %v1741 = vpop.f32.mrb[0].mxu0
        %1742 = vdwg.mxu0
        %v1743 = vadd.f32 %v1738, %v1588
        %v1744 = vsel %vm592, %v1743, 0.0
        %1745 = vadd.xlane.f32.xlu0 %v1744
        %v1746 = vpop.xlane.xlu0 %1745
        %v1747 = vmul.f32 %v1746, %v596
        %v1748 = vsub.f32 %v1743, %v1747
        %v1749 = vmul.f32 %v1748, %v1748
        %v1750 = vsel %vm592, %v1749, 0.0
        %1751 = vadd.xlane.f32.xlu0 %v1750
        %v1752 = vpop.xlane.xlu0 %1751
        %v1753 = vmul.f32 %v1752, %v596
        %v1754 = vadd.f32 %v1753, 1e-05
        %v1755 = vrsqrt.pop %v1754
        %v1756 = vmul.f32 %v1748, %v1755
        %v1757 = vlaneseq
        %v1758 = vshrl.u32 %v1757, 7
        %v1759 = vsub.s32 6, %v1758
        %v1760 = vrot.slane %v627, %v1759
        %v1761 = vmul.f32 %v1756, %v1760
        %v1762 = vlaneseq
        %v1763 = vshrl.u32 %v1762, 7
        %v1764 = vsub.s32 7, %v1763
        %v1765 = vrot.slane %v627, %v1764
        %v1766 = vadd.f32 %v1761, %v1765
        %1767 = vst.msk [vmem:[%s467] sm:$0xff] %vm592, %v1766
        %s1768 = scalar_lea.vmem %s8, 8
        %v1769 = vld [vmem:[%s1768] sm:$0xff]
        %v1770 = vpack.c.bf16 %v1766, %v1766
        %s1771 = scalar_lea.vmem %s4, 16
        %v1772 = vld [vmem:[%s1771] sm:$0xf]
        %v1773 = vld [vmem:[%s1771 + $0x4] sm:$0xf]
        %v1774 = vld [vmem:[%s1771 + $0x8] sm:$0xf]
        %v1775 = vld [vmem:[%s1771 + $0xc] sm:$0xf]
        %v1776 = vlaneseq
        %v1777 = vshrl.u32 %v1776, 7
        %v1778 = vsub.s32 0, %v1777
        %v1779 = vrot.slane %v1769, %v1778
        %v1784 = vunpack.c.l.b16 %v1772
        %v1785 = vunpack.c.l.b16 %v1773
        %v1786 = vunpack.c.l.b16 %v1774
        %v1787 = vunpack.c.l.b16 %v1775
        %v1788 = vpack.c.b16 %v1785, %v1784
        %v1789 = vpack.c.b16 %v1787, %v1786
        %v1793 = vsel %vm592, %v1770, 0
        %1795 = vmatprep.subr.bf16.mxu0 0
        %1796 = vmatpush1.bf16.msra.mxu0 %v1788
        %1797 = vmatprep.subr.bf16.mxu0 0
        %1798 = vmatpush1.bf16.msra.mxu0 %v1789
        %1799 = vmatprep.subr.bf16.mxu0 0
        %1800 = vmatpush1.bf16.msra.mxu0 0
        %1801 = vmatprep.subr.bf16.mxu0 0
        %1802 = vmatpush1.bf16.msra.mxu0 0
        %1803 = vmatprep.subr.bf16.mxu0 0
        %1804 = vmatpush1.bf16.msra.mxu0 0
        %1805 = vmatprep.subr.bf16.mxu0 0
        %1806 = vmatpush1.bf16.msra.mxu0 0
        %1807 = vmatprep.subr.bf16.mxu0 0
        %1808 = vmatpush1.bf16.msra.mxu0 0
        %1809 = vmatprep.subr.bf16.mxu0 0
        %1810 = vmatpush1.bf16.msra.mxu0 0
        %1811 = vmatprep.subr.bf16.mxu0 0
        %1812 = vmatpush1.bf16.msra.mxu0 0
        %1813 = vmatprep.subr.bf16.mxu0 0
        %1814 = vmatpush1.bf16.msra.mxu0 0
        %1815 = vmatprep.subr.bf16.mxu0 0
        %1816 = vmatpush1.bf16.msra.mxu0 0
        %1817 = vmatprep.subr.bf16.mxu0 0
        %1818 = vmatpush1.bf16.msra.mxu0 0
        %1819 = vmatprep.subr.bf16.mxu0 0
        %1820 = vmatpush1.bf16.msra.mxu0 0
        %1821 = vmatprep.subr.bf16.mxu0 0
        %1822 = vmatpush1.bf16.msra.mxu0 0
        %1823 = vmatprep.subr.bf16.mxu0 0
        %1824 = vmatpush1.bf16.msra.mxu0 0
        %1825 = vmatprep.subr.bf16.mxu0 0
        %1826 = vmatpush1.bf16.msra.mxu0 0
        %1827 = vmatprep.mubr.bf16.mxu0 0
        %1828 = vmatmul.mubr.bf16.gmra.mrb[0].mxu0 %v1793
        %v1829 = vpop.f32.mrb[0].mxu0
        %v1830 = vadd.f32 %v1779, %v1829
        %v1831 = vpop.f32.mrb[0].mxu0
        %v1832 = vpop.f32.mrb[0].mxu0
        %v1833 = vpop.f32.mrb[0].mxu0
        %1834 = vdwg.mxu0
        %1836 = vrot.lane.b32.xlu0 %v1830, 120
        %v1837 = vpop.permute.xlu0 %1836
        %1838 = vrot.lane.b32.xlu0 %v1830, 112
        %v1839 = vpop.permute.xlu0 %1838
        %1840 = vrot.lane.b32.xlu0 %v1830, 104
        %v1841 = vpop.permute.xlu0 %1840
        %1842 = vrot.lane.b32.xlu0 %v1830, 96
        %v1843 = vpop.permute.xlu0 %1842
        %v1844 = vsel %vm701, %v1830, 0
        %v1846 = vsel %vm701, %v1843, 0
        %1848 = vmatprep.subr.mxu0 0.0
        %1849 = vmatpush1.xpose.msra.mxu0 %v1846
        %1850 = vmatprep.subr.mxu0 0.0
        %1851 = vmatpush1.xpose.msra.mxu0 0.0
        %1852 = vmatprep.subr.mxu0 0.0
        %1853 = vmatpush1.xpose.msra.mxu0 0.0
        %1854 = vmatprep.subr.mxu0 0.0
        %1855 = vmatpush1.xpose.msra.mxu0 0.0
        %1856 = vmatprep.subr.mxu0 0.0
        %1857 = vmatpush1.xpose.msra.mxu0 0.0
        %1858 = vmatprep.subr.mxu0 0.0
        %1859 = vmatpush1.xpose.msra.mxu0 0.0
        %1860 = vmatprep.subr.mxu0 0.0
        %1861 = vmatpush1.xpose.msra.mxu0 0.0
        %1862 = vmatprep.subr.mxu0 0.0
        %1863 = vmatpush1.xpose.msra.mxu0 0.0
        %1864 = vmatprep.subr.mxu0 0.0
        %1865 = vmatpush1.xpose.msra.mxu0 0.0
        %1866 = vmatprep.subr.mxu0 0.0
        %1867 = vmatpush1.xpose.msra.mxu0 0.0
        %1868 = vmatprep.subr.mxu0 0.0
        %1869 = vmatpush1.xpose.msra.mxu0 0.0
        %1870 = vmatprep.subr.mxu0 0.0
        %1871 = vmatpush1.xpose.msra.mxu0 0.0
        %1872 = vmatprep.subr.mxu0 0.0
        %1873 = vmatpush1.xpose.msra.mxu0 0.0
        %1874 = vmatprep.subr.mxu0 0.0
        %1875 = vmatpush1.xpose.msra.mxu0 0.0
        %1876 = vmatprep.subr.mxu0 0.0
        %1877 = vmatpush1.xpose.msra.mxu0 0.0
        %1878 = vmatprep.subr.mxu0 0.0
        %1879 = vmatpush1.xpose.msra.mxu0 0.0
        %1880 = vmatprep.subr.mxu0 0.0
        %1881 = vmatpush1.xpose.msra.mxu0 0.0
        %1882 = vmatprep.subr.mxu0 0.0
        %1883 = vmatpush1.xpose.msra.mxu0 0.0
        %1884 = vmatprep.subr.mxu0 0.0
        %1885 = vmatpush1.xpose.msra.mxu0 0.0
        %1886 = vmatprep.subr.mxu0 0.0
        %1887 = vmatpush1.xpose.msra.mxu0 0.0
        %1888 = vmatprep.subr.mxu0 0.0
        %1889 = vmatpush1.xpose.msra.mxu0 0.0
        %1890 = vmatprep.subr.mxu0 0.0
        %1891 = vmatpush1.xpose.msra.mxu0 0.0
        %1892 = vmatprep.subr.mxu0 0.0
        %1893 = vmatpush1.xpose.msra.mxu0 0.0
        %1894 = vmatprep.subr.mxu0 0.0
        %1895 = vmatpush1.xpose.msra.mxu0 0.0
        %1896 = vmatprep.subr.mxu0 0.0
        %1897 = vmatpush1.xpose.msra.mxu0 0.0
        %1898 = vmatprep.subr.mxu0 0.0
        %1899 = vmatpush1.xpose.msra.mxu0 0.0
        %1900 = vmatprep.subr.mxu0 0.0
        %1901 = vmatpush1.xpose.msra.mxu0 0.0
        %1902 = vmatprep.subr.mxu0 0.0
        %1903 = vmatpush1.xpose.msra.mxu0 0.0
        %1904 = vmatprep.subr.mxu0 0.0
        %1905 = vmatpush1.xpose.msra.mxu0 0.0
        %1906 = vmatprep.subr.mxu0 0.0
        %1907 = vmatpush1.xpose.msra.mxu0 0.0
        %1908 = vmatprep.subr.mxu0 0.0
        %1909 = vmatpush1.xpose.msra.mxu0 0.0
        %1910 = vmatprep.subr.mxu0 0.0
        %1911 = vmatpush1.xpose.msra.mxu0 0.0
        %1912 = vmatprep.mubr.f32.mxu0 0.0
        %1913 = vmatmul.mubr.f32.gmra.mrb[0].mxu0 %v1844
        %v1914 = vpop.f32.mrb[0].mxu0
        %v1915 = vadd.f32 0.0, %v1914
        %v1916 = vpop.f32.mrb[0].mxu0
        %1917 = vdwg.mxu0
        %1918 = vrot.lane.b32.xlu0 %v1837, 96
        %v1919 = vpop.permute.xlu0 %1918
        %v1920 = vsel %vm701, %v1837, 0
        %v1922 = vsel %vm701, %v1919, 0
        %1924 = vmatprep.subr.mxu0 0.0
        %1925 = vmatpush1.xpose.msra.mxu0 %v1922
        %1926 = vmatprep.subr.mxu0 0.0
        %1927 = vmatpush1.xpose.msra.mxu0 0.0
        %1928 = vmatprep.subr.mxu0 0.0
        %1929 = vmatpush1.xpose.msra.mxu0 0.0
        %1930 = vmatprep.subr.mxu0 0.0
        %1931 = vmatpush1.xpose.msra.mxu0 0.0
        %1932 = vmatprep.subr.mxu0 0.0
        %1933 = vmatpush1.xpose.msra.mxu0 0.0
        %1934 = vmatprep.subr.mxu0 0.0
        %1935 = vmatpush1.xpose.msra.mxu0 0.0
        %1936 = vmatprep.subr.mxu0 0.0
        %1937 = vmatpush1.xpose.msra.mxu0 0.0
        %1938 = vmatprep.subr.mxu0 0.0
        %1939 = vmatpush1.xpose.msra.mxu0 0.0
        %1940 = vmatprep.subr.mxu0 0.0
        %1941 = vmatpush1.xpose.msra.mxu0 0.0
        %1942 = vmatprep.subr.mxu0 0.0
        %1943 = vmatpush1.xpose.msra.mxu0 0.0
        %1944 = vmatprep.subr.mxu0 0.0
        %1945 = vmatpush1.xpose.msra.mxu0 0.0
        %1946 = vmatprep.subr.mxu0 0.0
        %1947 = vmatpush1.xpose.msra.mxu0 0.0
        %1948 = vmatprep.subr.mxu0 0.0
        %1949 = vmatpush1.xpose.msra.mxu0 0.0
        %1950 = vmatprep.subr.mxu0 0.0
        %1951 = vmatpush1.xpose.msra.mxu0 0.0
        %1952 = vmatprep.subr.mxu0 0.0
        %1953 = vmatpush1.xpose.msra.mxu0 0.0
        %1954 = vmatprep.subr.mxu0 0.0
        %1955 = vmatpush1.xpose.msra.mxu0 0.0
        %1956 = vmatprep.subr.mxu0 0.0
        %1957 = vmatpush1.xpose.msra.mxu0 0.0
        %1958 = vmatprep.subr.mxu0 0.0
        %1959 = vmatpush1.xpose.msra.mxu0 0.0
        %1960 = vmatprep.subr.mxu0 0.0
        %1961 = vmatpush1.xpose.msra.mxu0 0.0
        %1962 = vmatprep.subr.mxu0 0.0
        %1963 = vmatpush1.xpose.msra.mxu0 0.0
        %1964 = vmatprep.subr.mxu0 0.0
        %1965 = vmatpush1.xpose.msra.mxu0 0.0
        %1966 = vmatprep.subr.mxu0 0.0
        %1967 = vmatpush1.xpose.msra.mxu0 0.0
        %1968 = vmatprep.subr.mxu0 0.0
        %1969 = vmatpush1.xpose.msra.mxu0 0.0
        %1970 = vmatprep.subr.mxu0 0.0
        %1971 = vmatpush1.xpose.msra.mxu0 0.0
        %1972 = vmatprep.subr.mxu0 0.0
        %1973 = vmatpush1.xpose.msra.mxu0 0.0
        %1974 = vmatprep.subr.mxu0 0.0
        %1975 = vmatpush1.xpose.msra.mxu0 0.0
        %1976 = vmatprep.subr.mxu0 0.0
        %1977 = vmatpush1.xpose.msra.mxu0 0.0
        %1978 = vmatprep.subr.mxu0 0.0
        %1979 = vmatpush1.xpose.msra.mxu0 0.0
        %1980 = vmatprep.subr.mxu0 0.0
        %1981 = vmatpush1.xpose.msra.mxu0 0.0
        %1982 = vmatprep.subr.mxu0 0.0
        %1983 = vmatpush1.xpose.msra.mxu0 0.0
        %1984 = vmatprep.subr.mxu0 0.0
        %1985 = vmatpush1.xpose.msra.mxu0 0.0
        %1986 = vmatprep.subr.mxu0 0.0
        %1987 = vmatpush1.xpose.msra.mxu0 0.0
        %1988 = vmatprep.mubr.f32.mxu0 0.0
        %1989 = vmatmul.mubr.f32.gmra.mrb[0].mxu0 %v1920
        %v1990 = vpop.f32.mrb[0].mxu0
        %v1991 = vadd.f32 0.0, %v1990
        %v1992 = vpop.f32.mrb[0].mxu0
        %1993 = vdwg.mxu0
        %1994 = vrot.lane.b32.xlu0 %v1839, 96
        %v1995 = vpop.permute.xlu0 %1994
        %v1996 = vsel %vm701, %v1839, 0
        %v1998 = vsel %vm701, %v1995, 0
        %2000 = vmatprep.subr.mxu0 0.0
        %2001 = vmatpush1.xpose.msra.mxu0 %v1998
        %2002 = vmatprep.subr.mxu0 0.0
        %2003 = vmatpush1.xpose.msra.mxu0 0.0
        %2004 = vmatprep.subr.mxu0 0.0
        %2005 = vmatpush1.xpose.msra.mxu0 0.0
        %2006 = vmatprep.subr.mxu0 0.0
        %2007 = vmatpush1.xpose.msra.mxu0 0.0
        %2008 = vmatprep.subr.mxu0 0.0
        %2009 = vmatpush1.xpose.msra.mxu0 0.0
        %2010 = vmatprep.subr.mxu0 0.0
        %2011 = vmatpush1.xpose.msra.mxu0 0.0
        %2012 = vmatprep.subr.mxu0 0.0
        %2013 = vmatpush1.xpose.msra.mxu0 0.0
        %2014 = vmatprep.subr.mxu0 0.0
        %2015 = vmatpush1.xpose.msra.mxu0 0.0
        %2016 = vmatprep.subr.mxu0 0.0
        %2017 = vmatpush1.xpose.msra.mxu0 0.0
        %2018 = vmatprep.subr.mxu0 0.0
        %2019 = vmatpush1.xpose.msra.mxu0 0.0
        %2020 = vmatprep.subr.mxu0 0.0
        %2021 = vmatpush1.xpose.msra.mxu0 0.0
        %2022 = vmatprep.subr.mxu0 0.0
        %2023 = vmatpush1.xpose.msra.mxu0 0.0
        %2024 = vmatprep.subr.mxu0 0.0
        %2025 = vmatpush1.xpose.msra.mxu0 0.0
        %2026 = vmatprep.subr.mxu0 0.0
        %2027 = vmatpush1.xpose.msra.mxu0 0.0
        %2028 = vmatprep.subr.mxu0 0.0
        %2029 = vmatpush1.xpose.msra.mxu0 0.0
        %2030 = vmatprep.subr.mxu0 0.0
        %2031 = vmatpush1.xpose.msra.mxu0 0.0
        %2032 = vmatprep.subr.mxu0 0.0
        %2033 = vmatpush1.xpose.msra.mxu0 0.0
        %2034 = vmatprep.subr.mxu0 0.0
        %2035 = vmatpush1.xpose.msra.mxu0 0.0
        %2036 = vmatprep.subr.mxu0 0.0
        %2037 = vmatpush1.xpose.msra.mxu0 0.0
        %2038 = vmatprep.subr.mxu0 0.0
        %2039 = vmatpush1.xpose.msra.mxu0 0.0
        %2040 = vmatprep.subr.mxu0 0.0
        %2041 = vmatpush1.xpose.msra.mxu0 0.0
        %2042 = vmatprep.subr.mxu0 0.0
        %2043 = vmatpush1.xpose.msra.mxu0 0.0
        %2044 = vmatprep.subr.mxu0 0.0
        %2045 = vmatpush1.xpose.msra.mxu0 0.0
        %2046 = vmatprep.subr.mxu0 0.0
        %2047 = vmatpush1.xpose.msra.mxu0 0.0
        %2048 = vmatprep.subr.mxu0 0.0
        %2049 = vmatpush1.xpose.msra.mxu0 0.0
        %2050 = vmatprep.subr.mxu0 0.0
        %2051 = vmatpush1.xpose.msra.mxu0 0.0
        %2052 = vmatprep.subr.mxu0 0.0
        %2053 = vmatpush1.xpose.msra.mxu0 0.0
        %2054 = vmatprep.subr.mxu0 0.0
        %2055 = vmatpush1.xpose.msra.mxu0 0.0
        %2056 = vmatprep.subr.mxu0 0.0
        %2057 = vmatpush1.xpose.msra.mxu0 0.0
        %2058 = vmatprep.subr.mxu0 0.0
        %2059 = vmatpush1.xpose.msra.mxu0 0.0
        %2060 = vmatprep.subr.mxu0 0.0
        %2061 = vmatpush1.xpose.msra.mxu0 0.0
        %2062 = vmatprep.subr.mxu0 0.0
        %2063 = vmatpush1.xpose.msra.mxu0 0.0
        %2064 = vmatprep.mubr.f32.mxu0 0.0
        %2065 = vmatmul.mubr.f32.gmra.mrb[0].mxu0 %v1996
        %v2066 = vpop.f32.mrb[0].mxu0
        %v2067 = vadd.f32 0.0, %v2066
        %v2068 = vpop.f32.mrb[0].mxu0
        %2069 = vdwg.mxu0
        %2070 = vrot.lane.b32.xlu0 %v1841, 96
        %v2071 = vpop.permute.xlu0 %2070
        %v2072 = vsel %vm701, %v1841, 0
        %v2074 = vsel %vm701, %v2071, 0
        %2076 = vmatprep.subr.mxu0 0.0
        %2077 = vmatpush1.xpose.msra.mxu0 %v2074
        %2078 = vmatprep.subr.mxu0 0.0
        %2079 = vmatpush1.xpose.msra.mxu0 0.0
        %2080 = vmatprep.subr.mxu0 0.0
        %2081 = vmatpush1.xpose.msra.mxu0 0.0
        %2082 = vmatprep.subr.mxu0 0.0
        %2083 = vmatpush1.xpose.msra.mxu0 0.0
        %2084 = vmatprep.subr.mxu0 0.0
        %2085 = vmatpush1.xpose.msra.mxu0 0.0
        %2086 = vmatprep.subr.mxu0 0.0
        %2087 = vmatpush1.xpose.msra.mxu0 0.0
        %2088 = vmatprep.subr.mxu0 0.0
        %2089 = vmatpush1.xpose.msra.mxu0 0.0
        %2090 = vmatprep.subr.mxu0 0.0
        %2091 = vmatpush1.xpose.msra.mxu0 0.0
        %2092 = vmatprep.subr.mxu0 0.0
        %2093 = vmatpush1.xpose.msra.mxu0 0.0
        %2094 = vmatprep.subr.mxu0 0.0
        %2095 = vmatpush1.xpose.msra.mxu0 0.0
        %2096 = vmatprep.subr.mxu0 0.0
        %2097 = vmatpush1.xpose.msra.mxu0 0.0
        %2098 = vmatprep.subr.mxu0 0.0
        %2099 = vmatpush1.xpose.msra.mxu0 0.0
        %2100 = vmatprep.subr.mxu0 0.0
        %2101 = vmatpush1.xpose.msra.mxu0 0.0
        %2102 = vmatprep.subr.mxu0 0.0
        %2103 = vmatpush1.xpose.msra.mxu0 0.0
        %2104 = vmatprep.subr.mxu0 0.0
        %2105 = vmatpush1.xpose.msra.mxu0 0.0
        %2106 = vmatprep.subr.mxu0 0.0
        %2107 = vmatpush1.xpose.msra.mxu0 0.0
        %2108 = vmatprep.subr.mxu0 0.0
        %2109 = vmatpush1.xpose.msra.mxu0 0.0
        %2110 = vmatprep.subr.mxu0 0.0
        %2111 = vmatpush1.xpose.msra.mxu0 0.0
        %2112 = vmatprep.subr.mxu0 0.0
        %2113 = vmatpush1.xpose.msra.mxu0 0.0
        %2114 = vmatprep.subr.mxu0 0.0
        %2115 = vmatpush1.xpose.msra.mxu0 0.0
        %2116 = vmatprep.subr.mxu0 0.0
        %2117 = vmatpush1.xpose.msra.mxu0 0.0
        %2118 = vmatprep.subr.mxu0 0.0
        %2119 = vmatpush1.xpose.msra.mxu0 0.0
        %2120 = vmatprep.subr.mxu0 0.0
        %2121 = vmatpush1.xpose.msra.mxu0 0.0
        %2122 = vmatprep.subr.mxu0 0.0
        %2123 = vmatpush1.xpose.msra.mxu0 0.0
        %2124 = vmatprep.subr.mxu0 0.0
        %2125 = vmatpush1.xpose.msra.mxu0 0.0
        %2126 = vmatprep.subr.mxu0 0.0
        %2127 = vmatpush1.xpose.msra.mxu0 0.0
        %2128 = vmatprep.subr.mxu0 0.0
        %2129 = vmatpush1.xpose.msra.mxu0 0.0
        %2130 = vmatprep.subr.mxu0 0.0
        %2131 = vmatpush1.xpose.msra.mxu0 0.0
        %2132 = vmatprep.subr.mxu0 0.0
        %2133 = vmatpush1.xpose.msra.mxu0 0.0
        %2134 = vmatprep.subr.mxu0 0.0
        %2135 = vmatpush1.xpose.msra.mxu0 0.0
        %2136 = vmatprep.subr.mxu0 0.0
        %2137 = vmatpush1.xpose.msra.mxu0 0.0
        %2138 = vmatprep.subr.mxu0 0.0
        %2139 = vmatpush1.xpose.msra.mxu0 0.0
        %2140 = vmatprep.mubr.f32.mxu0 0.0
        %2141 = vmatmul.mubr.f32.gmra.mrb[0].mxu0 %v2072
        %v2142 = vpop.f32.mrb[0].mxu0
        %v2143 = vadd.f32 0.0, %v2142
        %v2144 = vpop.f32.mrb[0].mxu0
        %2145 = vdwg.mxu0
        %v2146 = vmul.f32 %v1915, 0.35355338
        %v2147 = vmul.f32 %v1991, 0.35355338
        %v2148 = vmul.f32 %v2067, 0.35355338
        %v2149 = vmul.f32 %v2143, 0.35355338
        %v2150 = vadd.f32 %v2146, %v625
        %v2151 = vadd.f32 %v2147, %v625
        %v2152 = vadd.f32 %v2148, %v625
        %v2153 = vadd.f32 %v2149, %v625
        %v2154 = vsel %vm701, %v2150, -inf
        %2155 = vmax.xlane.f32.xlu0 %v2154
        %v2156 = vpop.xlane.xlu0 %2155
        %v2157 = vsel %vm701, %v2151, -inf
        %2158 = vmax.xlane.f32.xlu0 %v2157
        %v2159 = vpop.xlane.xlu0 %2158
        %v2160 = vsel %vm701, %v2152, -inf
        %2161 = vmax.xlane.f32.xlu0 %v2160
        %v2162 = vpop.xlane.xlu0 %2161
        %v2163 = vsel %vm701, %v2153, -inf
        %2164 = vmax.xlane.f32.xlu0 %v2163
        %v2165 = vpop.xlane.xlu0 %2164
        %v2166 = vsub.f32 %v2150, %v2156
        %v2167 = vsub.f32 %v2151, %v2159
        %v2168 = vsub.f32 %v2152, %v2162
        %v2169 = vsub.f32 %v2153, %v2165
        %v2170 = vmul.f32 %v2166, 1.442695
        %v2171 = vpow.pop %v2170
        %v2172 = vmul.f32 %v2167, 1.442695
        %v2173 = vpow.pop %v2172
        %v2174 = vmul.f32 %v2168, 1.442695
        %v2175 = vpow.pop %v2174
        %v2176 = vmul.f32 %v2169, 1.442695
        %v2177 = vpow.pop %v2176
        %v2178 = vsel %vm701, %v2171, 0.0
        %2179 = vadd.xlane.f32.xlu0 %v2178
        %v2180 = vpop.xlane.xlu0 %2179
        %v2181 = vsel %vm701, %v2173, 0.0
        %2182 = vadd.xlane.f32.xlu0 %v2181
        %v2183 = vpop.xlane.xlu0 %2182
        %v2184 = vsel %vm701, %v2175, 0.0
        %2185 = vadd.xlane.f32.xlu0 %v2184
        %v2186 = vpop.xlane.xlu0 %2185
        %v2187 = vsel %vm701, %v2177, 0.0
        %2188 = vadd.xlane.f32.xlu0 %v2187
        %v2189 = vpop.xlane.xlu0 %2188
        %v2190 = vrcp.pop %v2180
        %v2191 = vrcp.pop %v2183
        %v2192 = vrcp.pop %v2186
        %v2193 = vrcp.pop %v2189
        %v2194 = vmul.f32 %v2171, %v2190
        %v2195 = vmul.f32 %v2173, %v2191
        %v2196 = vmul.f32 %v2175, %v2192
        %v2197 = vmul.f32 %v2177, %v2193
        %2198 = vrot.lane.b32.xlu0 %v1830, 64
        %v2199 = vpop.permute.xlu0 %2198
        %v2202 = vsel %vm701, %v2194, 0
        %2204 = vmatprep.subr.mxu0 0.0
        %2205 = vmatpush1.msra.mxu0 %v2199
        %2206 = vmatprep.subr.mxu0 0.0
        %2207 = vmatpush1.msra.mxu0 0.0
        %2208 = vmatprep.subr.mxu0 0.0
        %2209 = vmatpush1.msra.mxu0 0.0
        %2210 = vmatprep.subr.mxu0 0.0
        %2211 = vmatpush1.msra.mxu0 0.0
        %2212 = vmatprep.subr.mxu0 0.0
        %2213 = vmatpush1.msra.mxu0 0.0
        %2214 = vmatprep.subr.mxu0 0.0
        %2215 = vmatpush1.msra.mxu0 0.0
        %2216 = vmatprep.subr.mxu0 0.0
        %2217 = vmatpush1.msra.mxu0 0.0
        %2218 = vmatprep.subr.mxu0 0.0
        %2219 = vmatpush1.msra.mxu0 0.0
        %2220 = vmatprep.subr.mxu0 0.0
        %2221 = vmatpush1.msra.mxu0 0.0
        %2222 = vmatprep.subr.mxu0 0.0
        %2223 = vmatpush1.msra.mxu0 0.0
        %2224 = vmatprep.subr.mxu0 0.0
        %2225 = vmatpush1.msra.mxu0 0.0
        %2226 = vmatprep.subr.mxu0 0.0
        %2227 = vmatpush1.msra.mxu0 0.0
        %2228 = vmatprep.subr.mxu0 0.0
        %2229 = vmatpush1.msra.mxu0 0.0
        %2230 = vmatprep.subr.mxu0 0.0
        %2231 = vmatpush1.msra.mxu0 0.0
        %2232 = vmatprep.subr.mxu0 0.0
        %2233 = vmatpush1.msra.mxu0 0.0
        %2234 = vmatprep.subr.mxu0 0.0
        %2235 = vmatpush1.msra.mxu0 0.0
        %2236 = vmatprep.subr.mxu0 0.0
        %2237 = vmatpush1.msra.mxu0 0.0
        %2238 = vmatprep.subr.mxu0 0.0
        %2239 = vmatpush1.msra.mxu0 0.0
        %2240 = vmatprep.subr.mxu0 0.0
        %2241 = vmatpush1.msra.mxu0 0.0
        %2242 = vmatprep.subr.mxu0 0.0
        %2243 = vmatpush1.msra.mxu0 0.0
        %2244 = vmatprep.subr.mxu0 0.0
        %2245 = vmatpush1.msra.mxu0 0.0
        %2246 = vmatprep.subr.mxu0 0.0
        %2247 = vmatpush1.msra.mxu0 0.0
        %2248 = vmatprep.subr.mxu0 0.0
        %2249 = vmatpush1.msra.mxu0 0.0
        %2250 = vmatprep.subr.mxu0 0.0
        %2251 = vmatpush1.msra.mxu0 0.0
        %2252 = vmatprep.subr.mxu0 0.0
        %2253 = vmatpush1.msra.mxu0 0.0
        %2254 = vmatprep.subr.mxu0 0.0
        %2255 = vmatpush1.msra.mxu0 0.0
        %2256 = vmatprep.subr.mxu0 0.0
        %2257 = vmatpush1.msra.mxu0 0.0
        %2258 = vmatprep.subr.mxu0 0.0
        %2259 = vmatpush1.msra.mxu0 0.0
        %2260 = vmatprep.subr.mxu0 0.0
        %2261 = vmatpush1.msra.mxu0 0.0
        %2262 = vmatprep.subr.mxu0 0.0
        %2263 = vmatpush1.msra.mxu0 0.0
        %2264 = vmatprep.subr.mxu0 0.0
        %2265 = vmatpush1.msra.mxu0 0.0
        %2266 = vmatprep.subr.mxu0 0.0
        %2267 = vmatpush1.msra.mxu0 0.0
        %2268 = vmatprep.mubr.f32.mxu0 0.0
        %2269 = vmatmul.mubr.f32.gmra.mrb[0].mxu0 %v2202
        %v2270 = vpop.f32.mrb[0].mxu0
        %v2271 = vadd.f32 0.0, %v2270
        %v2272 = vpop.f32.mrb[0].mxu0
        %2273 = vdwg.mxu0
        %2274 = vrot.lane.b32.xlu0 %v1837, 64
        %v2275 = vpop.permute.xlu0 %2274
        %v2278 = vsel %vm701, %v2195, 0
        %2280 = vmatprep.subr.mxu0 0.0
        %2281 = vmatpush1.msra.mxu0 %v2275
        %2282 = vmatprep.subr.mxu0 0.0
        %2283 = vmatpush1.msra.mxu0 0.0
        %2284 = vmatprep.subr.mxu0 0.0
        %2285 = vmatpush1.msra.mxu0 0.0
        %2286 = vmatprep.subr.mxu0 0.0
        %2287 = vmatpush1.msra.mxu0 0.0
        %2288 = vmatprep.subr.mxu0 0.0
        %2289 = vmatpush1.msra.mxu0 0.0
        %2290 = vmatprep.subr.mxu0 0.0
        %2291 = vmatpush1.msra.mxu0 0.0
        %2292 = vmatprep.subr.mxu0 0.0
        %2293 = vmatpush1.msra.mxu0 0.0
        %2294 = vmatprep.subr.mxu0 0.0
        %2295 = vmatpush1.msra.mxu0 0.0
        %2296 = vmatprep.subr.mxu0 0.0
        %2297 = vmatpush1.msra.mxu0 0.0
        %2298 = vmatprep.subr.mxu0 0.0
        %2299 = vmatpush1.msra.mxu0 0.0
        %2300 = vmatprep.subr.mxu0 0.0
        %2301 = vmatpush1.msra.mxu0 0.0
        %2302 = vmatprep.subr.mxu0 0.0
        %2303 = vmatpush1.msra.mxu0 0.0
        %2304 = vmatprep.subr.mxu0 0.0
        %2305 = vmatpush1.msra.mxu0 0.0
        %2306 = vmatprep.subr.mxu0 0.0
        %2307 = vmatpush1.msra.mxu0 0.0
        %2308 = vmatprep.subr.mxu0 0.0
        %2309 = vmatpush1.msra.mxu0 0.0
        %2310 = vmatprep.subr.mxu0 0.0
        %2311 = vmatpush1.msra.mxu0 0.0
        %2312 = vmatprep.subr.mxu0 0.0
        %2313 = vmatpush1.msra.mxu0 0.0
        %2314 = vmatprep.subr.mxu0 0.0
        %2315 = vmatpush1.msra.mxu0 0.0
        %2316 = vmatprep.subr.mxu0 0.0
        %2317 = vmatpush1.msra.mxu0 0.0
        %2318 = vmatprep.subr.mxu0 0.0
        %2319 = vmatpush1.msra.mxu0 0.0
        %2320 = vmatprep.subr.mxu0 0.0
        %2321 = vmatpush1.msra.mxu0 0.0
        %2322 = vmatprep.subr.mxu0 0.0
        %2323 = vmatpush1.msra.mxu0 0.0
        %2324 = vmatprep.subr.mxu0 0.0
        %2325 = vmatpush1.msra.mxu0 0.0
        %2326 = vmatprep.subr.mxu0 0.0
        %2327 = vmatpush1.msra.mxu0 0.0
        %2328 = vmatprep.subr.mxu0 0.0
        %2329 = vmatpush1.msra.mxu0 0.0
        %2330 = vmatprep.subr.mxu0 0.0
        %2331 = vmatpush1.msra.mxu0 0.0
        %2332 = vmatprep.subr.mxu0 0.0
        %2333 = vmatpush1.msra.mxu0 0.0
        %2334 = vmatprep.subr.mxu0 0.0
        %2335 = vmatpush1.msra.mxu0 0.0
        %2336 = vmatprep.subr.mxu0 0.0
        %2337 = vmatpush1.msra.mxu0 0.0
        %2338 = vmatprep.subr.mxu0 0.0
        %2339 = vmatpush1.msra.mxu0 0.0
        %2340 = vmatprep.subr.mxu0 0.0
        %2341 = vmatpush1.msra.mxu0 0.0
        %2342 = vmatprep.subr.mxu0 0.0
        %2343 = vmatpush1.msra.mxu0 0.0
        %2344 = vmatprep.mubr.f32.mxu0 0.0
        %2345 = vmatmul.mubr.f32.gmra.mrb[0].mxu0 %v2278
        %v2346 = vpop.f32.mrb[0].mxu0
        %v2347 = vadd.f32 0.0, %v2346
        %v2348 = vpop.f32.mrb[0].mxu0
        %2349 = vdwg.mxu0
        %2350 = vrot.lane.b32.xlu0 %v1839, 64
        %v2351 = vpop.permute.xlu0 %2350
        %v2354 = vsel %vm701, %v2196, 0
        %2356 = vmatprep.subr.mxu0 0.0
        %2357 = vmatpush1.msra.mxu0 %v2351
        %2358 = vmatprep.subr.mxu0 0.0
        %2359 = vmatpush1.msra.mxu0 0.0
        %2360 = vmatprep.subr.mxu0 0.0
        %2361 = vmatpush1.msra.mxu0 0.0
        %2362 = vmatprep.subr.mxu0 0.0
        %2363 = vmatpush1.msra.mxu0 0.0
        %2364 = vmatprep.subr.mxu0 0.0
        %2365 = vmatpush1.msra.mxu0 0.0
        %2366 = vmatprep.subr.mxu0 0.0
        %2367 = vmatpush1.msra.mxu0 0.0
        %2368 = vmatprep.subr.mxu0 0.0
        %2369 = vmatpush1.msra.mxu0 0.0
        %2370 = vmatprep.subr.mxu0 0.0
        %2371 = vmatpush1.msra.mxu0 0.0
        %2372 = vmatprep.subr.mxu0 0.0
        %2373 = vmatpush1.msra.mxu0 0.0
        %2374 = vmatprep.subr.mxu0 0.0
        %2375 = vmatpush1.msra.mxu0 0.0
        %2376 = vmatprep.subr.mxu0 0.0
        %2377 = vmatpush1.msra.mxu0 0.0
        %2378 = vmatprep.subr.mxu0 0.0
        %2379 = vmatpush1.msra.mxu0 0.0
        %2380 = vmatprep.subr.mxu0 0.0
        %2381 = vmatpush1.msra.mxu0 0.0
        %2382 = vmatprep.subr.mxu0 0.0
        %2383 = vmatpush1.msra.mxu0 0.0
        %2384 = vmatprep.subr.mxu0 0.0
        %2385 = vmatpush1.msra.mxu0 0.0
        %2386 = vmatprep.subr.mxu0 0.0
        %2387 = vmatpush1.msra.mxu0 0.0
        %2388 = vmatprep.subr.mxu0 0.0
        %2389 = vmatpush1.msra.mxu0 0.0
        %2390 = vmatprep.subr.mxu0 0.0
        %2391 = vmatpush1.msra.mxu0 0.0
        %2392 = vmatprep.subr.mxu0 0.0
        %2393 = vmatpush1.msra.mxu0 0.0
        %2394 = vmatprep.subr.mxu0 0.0
        %2395 = vmatpush1.msra.mxu0 0.0
        %2396 = vmatprep.subr.mxu0 0.0
        %2397 = vmatpush1.msra.mxu0 0.0
        %2398 = vmatprep.subr.mxu0 0.0
        %2399 = vmatpush1.msra.mxu0 0.0
        %2400 = vmatprep.subr.mxu0 0.0
        %2401 = vmatpush1.msra.mxu0 0.0
        %2402 = vmatprep.subr.mxu0 0.0
        %2403 = vmatpush1.msra.mxu0 0.0
        %2404 = vmatprep.subr.mxu0 0.0
        %2405 = vmatpush1.msra.mxu0 0.0
        %2406 = vmatprep.subr.mxu0 0.0
        %2407 = vmatpush1.msra.mxu0 0.0
        %2408 = vmatprep.subr.mxu0 0.0
        %2409 = vmatpush1.msra.mxu0 0.0
        %2410 = vmatprep.subr.mxu0 0.0
        %2411 = vmatpush1.msra.mxu0 0.0
        %2412 = vmatprep.subr.mxu0 0.0
        %2413 = vmatpush1.msra.mxu0 0.0
        %2414 = vmatprep.subr.mxu0 0.0
        %2415 = vmatpush1.msra.mxu0 0.0
        %2416 = vmatprep.subr.mxu0 0.0
        %2417 = vmatpush1.msra.mxu0 0.0
        %2418 = vmatprep.subr.mxu0 0.0
        %2419 = vmatpush1.msra.mxu0 0.0
        %2420 = vmatprep.mubr.f32.mxu0 0.0
        %2421 = vmatmul.mubr.f32.gmra.mrb[0].mxu0 %v2354
        %v2422 = vpop.f32.mrb[0].mxu0
        %v2423 = vadd.f32 0.0, %v2422
        %v2424 = vpop.f32.mrb[0].mxu0
        %2425 = vdwg.mxu0
        %2426 = vrot.lane.b32.xlu0 %v1841, 64
        %v2427 = vpop.permute.xlu0 %2426
        %v2430 = vsel %vm701, %v2197, 0
        %2432 = vmatprep.subr.mxu0 0.0
        %2433 = vmatpush1.msra.mxu0 %v2427
        %2434 = vmatprep.subr.mxu0 0.0
        %2435 = vmatpush1.msra.mxu0 0.0
        %2436 = vmatprep.subr.mxu0 0.0
        %2437 = vmatpush1.msra.mxu0 0.0
        %2438 = vmatprep.subr.mxu0 0.0
        %2439 = vmatpush1.msra.mxu0 0.0
        %2440 = vmatprep.subr.mxu0 0.0
        %2441 = vmatpush1.msra.mxu0 0.0
        %2442 = vmatprep.subr.mxu0 0.0
        %2443 = vmatpush1.msra.mxu0 0.0
        %2444 = vmatprep.subr.mxu0 0.0
        %2445 = vmatpush1.msra.mxu0 0.0
        %2446 = vmatprep.subr.mxu0 0.0
        %2447 = vmatpush1.msra.mxu0 0.0
        %2448 = vmatprep.subr.mxu0 0.0
        %2449 = vmatpush1.msra.mxu0 0.0
        %2450 = vmatprep.subr.mxu0 0.0
        %2451 = vmatpush1.msra.mxu0 0.0
        %2452 = vmatprep.subr.mxu0 0.0
        %2453 = vmatpush1.msra.mxu0 0.0
        %2454 = vmatprep.subr.mxu0 0.0
        %2455 = vmatpush1.msra.mxu0 0.0
        %2456 = vmatprep.subr.mxu0 0.0
        %2457 = vmatpush1.msra.mxu0 0.0
        %2458 = vmatprep.subr.mxu0 0.0
        %2459 = vmatpush1.msra.mxu0 0.0
        %2460 = vmatprep.subr.mxu0 0.0
        %2461 = vmatpush1.msra.mxu0 0.0
        %2462 = vmatprep.subr.mxu0 0.0
        %2463 = vmatpush1.msra.mxu0 0.0
        %2464 = vmatprep.subr.mxu0 0.0
        %2465 = vmatpush1.msra.mxu0 0.0
        %2466 = vmatprep.subr.mxu0 0.0
        %2467 = vmatpush1.msra.mxu0 0.0
        %2468 = vmatprep.subr.mxu0 0.0
        %2469 = vmatpush1.msra.mxu0 0.0
        %2470 = vmatprep.subr.mxu0 0.0
        %2471 = vmatpush1.msra.mxu0 0.0
        %2472 = vmatprep.subr.mxu0 0.0
        %2473 = vmatpush1.msra.mxu0 0.0
        %2474 = vmatprep.subr.mxu0 0.0
        %2475 = vmatpush1.msra.mxu0 0.0
        %2476 = vmatprep.subr.mxu0 0.0
        %2477 = vmatpush1.msra.mxu0 0.0
        %2478 = vmatprep.subr.mxu0 0.0
        %2479 = vmatpush1.msra.mxu0 0.0
        %2480 = vmatprep.subr.mxu0 0.0
        %2481 = vmatpush1.msra.mxu0 0.0
        %2482 = vmatprep.subr.mxu0 0.0
        %2483 = vmatpush1.msra.mxu0 0.0
        %2484 = vmatprep.subr.mxu0 0.0
        %2485 = vmatpush1.msra.mxu0 0.0
        %2486 = vmatprep.subr.mxu0 0.0
        %2487 = vmatpush1.msra.mxu0 0.0
        %2488 = vmatprep.subr.mxu0 0.0
        %2489 = vmatpush1.msra.mxu0 0.0
        %2490 = vmatprep.subr.mxu0 0.0
        %2491 = vmatpush1.msra.mxu0 0.0
        %2492 = vmatprep.subr.mxu0 0.0
        %2493 = vmatpush1.msra.mxu0 0.0
        %2494 = vmatprep.subr.mxu0 0.0
        %2495 = vmatpush1.msra.mxu0 0.0
        %2496 = vmatprep.mubr.f32.mxu0 0.0
        %2497 = vmatmul.mubr.f32.gmra.mrb[0].mxu0 %v2430
        %v2498 = vpop.f32.mrb[0].mxu0
        %v2499 = vadd.f32 0.0, %v2498
        %v2500 = vpop.f32.mrb[0].mxu0
        %2501 = vdwg.mxu0
        %v2502 = vpack.c.bf16 %v2271, %v2271
        %v2503 = vpack.c.bf16 %v2347, %v2347
        %v2504 = vpack.c.bf16 %v2423, %v2423
        %v2505 = vpack.c.bf16 %v2499, %v2499
        %s2506 = scalar_lea.vmem %s5, 16
        %v2507 = vld [vmem:[%s2506] sm:$0xf]
        %v2508 = vld [vmem:[%s2506 + $0x4] sm:$0xf]
        %v2509 = vld [vmem:[%s2506 + $0x8] sm:$0xf]
        %v2510 = vld [vmem:[%s2506 + $0xc] sm:$0xf]
        %v2512 = vsel %vm701, %v2502, 0
        %v2515 = vsel %vm1371, %v2507, 0
        %2517 = vmatprep.subr.bf16.mxu0 0
        %2518 = vmatpush1.bf16.msra.mxu0 %v2515
        %2519 = vmatprep.subr.bf16.mxu0 0
        %2520 = vmatpush1.bf16.msra.mxu0 0
        %2521 = vmatprep.subr.bf16.mxu0 0
        %2522 = vmatpush1.bf16.msra.mxu0 0
        %2523 = vmatprep.subr.bf16.mxu0 0
        %2524 = vmatpush1.bf16.msra.mxu0 0
        %2525 = vmatprep.subr.bf16.mxu0 0
        %2526 = vmatpush1.bf16.msra.mxu0 0
        %2527 = vmatprep.subr.bf16.mxu0 0
        %2528 = vmatpush1.bf16.msra.mxu0 0
        %2529 = vmatprep.subr.bf16.mxu0 0
        %2530 = vmatpush1.bf16.msra.mxu0 0
        %2531 = vmatprep.subr.bf16.mxu0 0
        %2532 = vmatpush1.bf16.msra.mxu0 0
        %2533 = vmatprep.subr.bf16.mxu0 0
        %2534 = vmatpush1.bf16.msra.mxu0 0
        %2535 = vmatprep.subr.bf16.mxu0 0
        %2536 = vmatpush1.bf16.msra.mxu0 0
        %2537 = vmatprep.subr.bf16.mxu0 0
        %2538 = vmatpush1.bf16.msra.mxu0 0
        %2539 = vmatprep.subr.bf16.mxu0 0
        %2540 = vmatpush1.bf16.msra.mxu0 0
        %2541 = vmatprep.subr.bf16.mxu0 0
        %2542 = vmatpush1.bf16.msra.mxu0 0
        %2543 = vmatprep.subr.bf16.mxu0 0
        %2544 = vmatpush1.bf16.msra.mxu0 0
        %2545 = vmatprep.subr.bf16.mxu0 0
        %2546 = vmatpush1.bf16.msra.mxu0 0
        %2547 = vmatprep.subr.bf16.mxu0 0
        %2548 = vmatpush1.bf16.msra.mxu0 0
        %2549 = vmatprep.mubr.bf16.mxu0 0
        %2550 = vmatmul.mubr.bf16.gmra.mrb[0].mxu0 %v2512
        %v2551 = vpop.f32.mrb[0].mxu0
        %v2552 = vadd.f32 0.0, %v2551
        %v2553 = vpop.f32.mrb[0].mxu0
        %v2554 = vpop.f32.mrb[0].mxu0
        %v2555 = vpop.f32.mrb[0].mxu0
        %2556 = vdwg.mxu0
        %v2558 = vsel %vm701, %v2503, 0
        %v2561 = vsel %vm1371, %v2508, 0
        %2563 = vmatprep.subr.bf16.mxu0 0
        %2564 = vmatpush1.bf16.msra.mxu0 %v2561
        %2565 = vmatprep.subr.bf16.mxu0 0
        %2566 = vmatpush1.bf16.msra.mxu0 0
        %2567 = vmatprep.subr.bf16.mxu0 0
        %2568 = vmatpush1.bf16.msra.mxu0 0
        %2569 = vmatprep.subr.bf16.mxu0 0
        %2570 = vmatpush1.bf16.msra.mxu0 0
        %2571 = vmatprep.subr.bf16.mxu0 0
        %2572 = vmatpush1.bf16.msra.mxu0 0
        %2573 = vmatprep.subr.bf16.mxu0 0
        %2574 = vmatpush1.bf16.msra.mxu0 0
        %2575 = vmatprep.subr.bf16.mxu0 0
        %2576 = vmatpush1.bf16.msra.mxu0 0
        %2577 = vmatprep.subr.bf16.mxu0 0
        %2578 = vmatpush1.bf16.msra.mxu0 0
        %2579 = vmatprep.subr.bf16.mxu0 0
        %2580 = vmatpush1.bf16.msra.mxu0 0
        %2581 = vmatprep.subr.bf16.mxu0 0
        %2582 = vmatpush1.bf16.msra.mxu0 0
        %2583 = vmatprep.subr.bf16.mxu0 0
        %2584 = vmatpush1.bf16.msra.mxu0 0
        %2585 = vmatprep.subr.bf16.mxu0 0
        %2586 = vmatpush1.bf16.msra.mxu0 0
        %2587 = vmatprep.subr.bf16.mxu0 0
        %2588 = vmatpush1.bf16.msra.mxu0 0
        %2589 = vmatprep.subr.bf16.mxu0 0
        %2590 = vmatpush1.bf16.msra.mxu0 0
        %2591 = vmatprep.subr.bf16.mxu0 0
        %2592 = vmatpush1.bf16.msra.mxu0 0
        %2593 = vmatprep.subr.bf16.mxu0 0
        %2594 = vmatpush1.bf16.msra.mxu0 0
        %2595 = vmatprep.mubr.bf16.mxu0 0
        %2596 = vmatmul.mubr.bf16.gmra.mrb[0].mxu0 %v2558
        %v2597 = vpop.f32.mrb[0].mxu0
        %v2598 = vadd.f32 0.0, %v2597
        %v2599 = vpop.f32.mrb[0].mxu0
        %v2600 = vpop.f32.mrb[0].mxu0
        %v2601 = vpop.f32.mrb[0].mxu0
        %2602 = vdwg.mxu0
        %v2604 = vsel %vm701, %v2504, 0
        %v2607 = vsel %vm1371, %v2509, 0
        %2609 = vmatprep.subr.bf16.mxu0 0
        %2610 = vmatpush1.bf16.msra.mxu0 %v2607
        %2611 = vmatprep.subr.bf16.mxu0 0
        %2612 = vmatpush1.bf16.msra.mxu0 0
        %2613 = vmatprep.subr.bf16.mxu0 0
        %2614 = vmatpush1.bf16.msra.mxu0 0
        %2615 = vmatprep.subr.bf16.mxu0 0
        %2616 = vmatpush1.bf16.msra.mxu0 0
        %2617 = vmatprep.subr.bf16.mxu0 0
        %2618 = vmatpush1.bf16.msra.mxu0 0
        %2619 = vmatprep.subr.bf16.mxu0 0
        %2620 = vmatpush1.bf16.msra.mxu0 0
        %2621 = vmatprep.subr.bf16.mxu0 0
        %2622 = vmatpush1.bf16.msra.mxu0 0
        %2623 = vmatprep.subr.bf16.mxu0 0
        %2624 = vmatpush1.bf16.msra.mxu0 0
        %2625 = vmatprep.subr.bf16.mxu0 0
        %2626 = vmatpush1.bf16.msra.mxu0 0
        %2627 = vmatprep.subr.bf16.mxu0 0
        %2628 = vmatpush1.bf16.msra.mxu0 0
        %2629 = vmatprep.subr.bf16.mxu0 0
        %2630 = vmatpush1.bf16.msra.mxu0 0
        %2631 = vmatprep.subr.bf16.mxu0 0
        %2632 = vmatpush1.bf16.msra.mxu0 0
        %2633 = vmatprep.subr.bf16.mxu0 0
        %2634 = vmatpush1.bf16.msra.mxu0 0
        %2635 = vmatprep.subr.bf16.mxu0 0
        %2636 = vmatpush1.bf16.msra.mxu0 0
        %2637 = vmatprep.subr.bf16.mxu0 0
        %2638 = vmatpush1.bf16.msra.mxu0 0
        %2639 = vmatprep.subr.bf16.mxu0 0
        %2640 = vmatpush1.bf16.msra.mxu0 0
        %2641 = vmatprep.mubr.bf16.mxu0 0
        %2642 = vmatmul.mubr.bf16.gmra.mrb[0].mxu0 %v2604
        %v2643 = vpop.f32.mrb[0].mxu0
        %v2644 = vadd.f32 0.0, %v2643
        %v2645 = vpop.f32.mrb[0].mxu0
        %v2646 = vpop.f32.mrb[0].mxu0
        %v2647 = vpop.f32.mrb[0].mxu0
        %2648 = vdwg.mxu0
        %v2650 = vsel %vm701, %v2505, 0
        %v2653 = vsel %vm1371, %v2510, 0
        %2655 = vmatprep.subr.bf16.mxu0 0
        %2656 = vmatpush1.bf16.msra.mxu0 %v2653
        %2657 = vmatprep.subr.bf16.mxu0 0
        %2658 = vmatpush1.bf16.msra.mxu0 0
        %2659 = vmatprep.subr.bf16.mxu0 0
        %2660 = vmatpush1.bf16.msra.mxu0 0
        %2661 = vmatprep.subr.bf16.mxu0 0
        %2662 = vmatpush1.bf16.msra.mxu0 0
        %2663 = vmatprep.subr.bf16.mxu0 0
        %2664 = vmatpush1.bf16.msra.mxu0 0
        %2665 = vmatprep.subr.bf16.mxu0 0
        %2666 = vmatpush1.bf16.msra.mxu0 0
        %2667 = vmatprep.subr.bf16.mxu0 0
        %2668 = vmatpush1.bf16.msra.mxu0 0
        %2669 = vmatprep.subr.bf16.mxu0 0
        %2670 = vmatpush1.bf16.msra.mxu0 0
        %2671 = vmatprep.subr.bf16.mxu0 0
        %2672 = vmatpush1.bf16.msra.mxu0 0
        %2673 = vmatprep.subr.bf16.mxu0 0
        %2674 = vmatpush1.bf16.msra.mxu0 0
        %2675 = vmatprep.subr.bf16.mxu0 0
        %2676 = vmatpush1.bf16.msra.mxu0 0
        %2677 = vmatprep.subr.bf16.mxu0 0
        %2678 = vmatpush1.bf16.msra.mxu0 0
        %2679 = vmatprep.subr.bf16.mxu0 0
        %2680 = vmatpush1.bf16.msra.mxu0 0
        %2681 = vmatprep.subr.bf16.mxu0 0
        %2682 = vmatpush1.bf16.msra.mxu0 0
        %2683 = vmatprep.subr.bf16.mxu0 0
        %2684 = vmatpush1.bf16.msra.mxu0 0
        %2685 = vmatprep.subr.bf16.mxu0 0
        %2686 = vmatpush1.bf16.msra.mxu0 0
        %2687 = vmatprep.mubr.bf16.mxu0 0
        %2688 = vmatmul.mubr.bf16.gmra.mrb[0].mxu0 %v2650
        %v2689 = vpop.f32.mrb[0].mxu0
        %v2690 = vadd.f32 0.0, %v2689
        %v2691 = vpop.f32.mrb[0].mxu0
        %v2692 = vpop.f32.mrb[0].mxu0
        %v2693 = vpop.f32.mrb[0].mxu0
        %2694 = vdwg.mxu0
        %v2695 = vsel %vm592, %v2552, 0.0
        %v2696 = vsel %vm592, %v2598, 0.0
        %v2697 = vadd.f32 %v2695, %v2696
        %v2698 = vsel %vm592, %v2644, 0.0
        %v2699 = vadd.f32 %v2697, %v2698
        %v2700 = vsel %vm592, %v2690, 0.0
        %v2701 = vadd.f32 %v2699, %v2700
        %v2702 = vlaneseq
        %v2703 = vshrl.u32 %v2702, 7
        %v2704 = vsub.s32 1, %v2703
        %v2705 = vrot.slane %v1769, %v2704
        %v2706 = vadd.f32 %v2701, %v2705
        %v2707 = vadd.f32 %v2706, %v1766
        %v2708 = vsel %vm592, %v2707, 0.0
        %2709 = vadd.xlane.f32.xlu0 %v2708
        %v2710 = vpop.xlane.xlu0 %2709
        %v2711 = vmul.f32 %v2710, %v596
        %v2712 = vsub.f32 %v2707, %v2711
        %v2713 = vmul.f32 %v2712, %v2712
        %v2714 = vsel %vm592, %v2713, 0.0
        %2715 = vadd.xlane.f32.xlu0 %v2714
        %v2716 = vpop.xlane.xlu0 %2715
        %v2717 = vmul.f32 %v2716, %v596
        %v2718 = vadd.f32 %v2717, 1e-05
        %v2719 = vrsqrt.pop %v2718
        %v2720 = vmul.f32 %v2712, %v2719
        %v2721 = vlaneseq
        %v2722 = vshrl.u32 %v2721, 7
        %v2723 = vsub.s32 2, %v2722
        %v2724 = vrot.slane %v1769, %v2723
        %v2725 = vmul.f32 %v2720, %v2724
        %v2726 = vlaneseq
        %v2727 = vshrl.u32 %v2726, 7
        %v2728 = vsub.s32 3, %v2727
        %v2729 = vrot.slane %v1769, %v2728
        %v2730 = vadd.f32 %v2725, %v2729
        %v2731 = vpack.c.bf16 %v2730, %v2730
        %s2732 = scalar_lea.vmem %s6, 16
        %v2733 = vld [vmem:[%s2732] sm:$0xf]
        %v2734 = vld [vmem:[%s2732 + $0x4] sm:$0xf]
        %v2735 = vld [vmem:[%s2732 + $0x8] sm:$0xf]
        %v2736 = vld [vmem:[%s2732 + $0xc] sm:$0xf]
        %v2737 = vlaneseq
        %v2738 = vshrl.u32 %v2737, 7
        %v2739 = vsub.s32 4, %v2738
        %v2740 = vrot.slane %v1769, %v2739
        %v2745 = vunpack.c.l.b16 %v2733
        %v2746 = vunpack.c.l.b16 %v2734
        %v2747 = vunpack.c.l.b16 %v2735
        %v2748 = vunpack.c.l.b16 %v2736
        %v2749 = vpack.c.b16 %v2746, %v2745
        %v2750 = vpack.c.b16 %v2748, %v2747
        %v2754 = vsel %vm592, %v2731, 0
        %2756 = vmatprep.subr.bf16.mxu0 0
        %2757 = vmatpush1.bf16.msra.mxu0 %v2749
        %2758 = vmatprep.subr.bf16.mxu0 0
        %2759 = vmatpush1.bf16.msra.mxu0 %v2750
        %2760 = vmatprep.subr.bf16.mxu0 0
        %2761 = vmatpush1.bf16.msra.mxu0 0
        %2762 = vmatprep.subr.bf16.mxu0 0
        %2763 = vmatpush1.bf16.msra.mxu0 0
        %2764 = vmatprep.subr.bf16.mxu0 0
        %2765 = vmatpush1.bf16.msra.mxu0 0
        %2766 = vmatprep.subr.bf16.mxu0 0
        %2767 = vmatpush1.bf16.msra.mxu0 0
        %2768 = vmatprep.subr.bf16.mxu0 0
        %2769 = vmatpush1.bf16.msra.mxu0 0
        %2770 = vmatprep.subr.bf16.mxu0 0
        %2771 = vmatpush1.bf16.msra.mxu0 0
        %2772 = vmatprep.subr.bf16.mxu0 0
        %2773 = vmatpush1.bf16.msra.mxu0 0
        %2774 = vmatprep.subr.bf16.mxu0 0
        %2775 = vmatpush1.bf16.msra.mxu0 0
        %2776 = vmatprep.subr.bf16.mxu0 0
        %2777 = vmatpush1.bf16.msra.mxu0 0
        %2778 = vmatprep.subr.bf16.mxu0 0
        %2779 = vmatpush1.bf16.msra.mxu0 0
        %2780 = vmatprep.subr.bf16.mxu0 0
        %2781 = vmatpush1.bf16.msra.mxu0 0
        %2782 = vmatprep.subr.bf16.mxu0 0
        %2783 = vmatpush1.bf16.msra.mxu0 0
        %2784 = vmatprep.subr.bf16.mxu0 0
        %2785 = vmatpush1.bf16.msra.mxu0 0
        %2786 = vmatprep.subr.bf16.mxu0 0
        %2787 = vmatpush1.bf16.msra.mxu0 0
        %2788 = vmatprep.mubr.bf16.mxu0 0
        %2789 = vmatmul.mubr.bf16.gmra.mrb[0].mxu0 %v2754
        %v2790 = vpop.f32.mrb[0].mxu0
        %v2791 = vadd.f32 %v2740, %v2790
        %v2792 = vpop.f32.mrb[0].mxu0
        %v2793 = vpop.f32.mrb[0].mxu0
        %v2794 = vpop.f32.mrb[0].mxu0
        %2795 = vdwg.mxu0
        %v2796 = vmul.f32 %v2791, 0.5
        %v2797 = vmul.f32 %v2791, 0.044715
        %v2798 = vmul.f32 %v2797, %v2791
        %v2799 = vmul.f32 %v2798, %v2791
        %v2800 = vadd.f32 %v2791, %v2799
        %v2801 = vmul.f32 %v2800, 0.7978846
        %v2802 = vtanh.pop %v2801
        %v2803 = vadd.f32 %v2802, 1.0
        %v2804 = vmul.f32 %v2796, %v2803
        %v2805 = vpack.c.bf16 %v2804, %v2804
        %s2806 = scalar_lea.vmem %s7, 32
        %v2807 = vld [vmem:[%s2806] sm:$0xf]
        %v2808 = vld [vmem:[%s2806 + $0x4] sm:$0xf]
        %v2809 = vld [vmem:[%s2806 + $0x8] sm:$0xf]
        %v2810 = vld [vmem:[%s2806 + $0xc] sm:$0xf]
        %v2811 = vld [vmem:[%s2806 + $0x10] sm:$0xf]
        %v2812 = vld [vmem:[%s2806 + $0x14] sm:$0xf]
        %v2813 = vld [vmem:[%s2806 + $0x18] sm:$0xf]
        %v2814 = vld [vmem:[%s2806 + $0x1c] sm:$0xf]
        %v2815 = vlaneseq
        %v2816 = vshrl.u32 %v2815, 7
        %v2817 = vsub.s32 5, %v2816
        %v2818 = vrot.slane %v1769, %v2817
        %v2827 = vunpack.c.l.b16 %v2807
        %v2828 = vunpack.c.l.b16 %v2808
        %v2829 = vunpack.c.l.b16 %v2809
        %v2830 = vunpack.c.l.b16 %v2810
        %v2831 = vunpack.c.l.b16 %v2811
        %v2832 = vunpack.c.l.b16 %v2812
        %v2833 = vunpack.c.l.b16 %v2813
        %v2834 = vunpack.c.l.b16 %v2814
        %v2835 = vpack.c.b16 %v2828, %v2827
        %v2836 = vpack.c.b16 %v2830, %v2829
        %v2837 = vpack.c.b16 %v2832, %v2831
        %v2838 = vpack.c.b16 %v2834, %v2833
        %v2844 = vsel %vm1699, %v2805, 0
        %2846 = vmatprep.subr.bf16.mxu0 0
        %2847 = vmatpush1.bf16.msra.mxu0 %v2835
        %2848 = vmatprep.subr.bf16.mxu0 0
        %2849 = vmatpush1.bf16.msra.mxu0 %v2836
        %2850 = vmatprep.subr.bf16.mxu0 0
        %2851 = vmatpush1.bf16.msra.mxu0 %v2837
        %2852 = vmatprep.subr.bf16.mxu0 0
        %2853 = vmatpush1.bf16.msra.mxu0 %v2838
        %2854 = vmatprep.subr.bf16.mxu0 0
        %2855 = vmatpush1.bf16.msra.mxu0 0
        %2856 = vmatprep.subr.bf16.mxu0 0
        %2857 = vmatpush1.bf16.msra.mxu0 0
        %2858 = vmatprep.subr.bf16.mxu0 0
        %2859 = vmatpush1.bf16.msra.mxu0 0
        %2860 = vmatprep.subr.bf16.mxu0 0
        %2861 = vmatpush1.bf16.msra.mxu0 0
        %2862 = vmatprep.subr.bf16.mxu0 0
        %2863 = vmatpush1.bf16.msra.mxu0 0
        %2864 = vmatprep.subr.bf16.mxu0 0
        %2865 = vmatpush1.bf16.msra.mxu0 0
        %2866 = vmatprep.subr.bf16.mxu0 0
        %2867 = vmatpush1.bf16.msra.mxu0 0
        %2868 = vmatprep.subr.bf16.mxu0 0
        %2869 = vmatpush1.bf16.msra.mxu0 0
        %2870 = vmatprep.subr.bf16.mxu0 0
        %2871 = vmatpush1.bf16.msra.mxu0 0
        %2872 = vmatprep.subr.bf16.mxu0 0
        %2873 = vmatpush1.bf16.msra.mxu0 0
        %2874 = vmatprep.subr.bf16.mxu0 0
        %2875 = vmatpush1.bf16.msra.mxu0 0
        %2876 = vmatprep.subr.bf16.mxu0 0
        %2877 = vmatpush1.bf16.msra.mxu0 0
        %2878 = vmatprep.mubr.bf16.mxu0 0
        %2879 = vmatmul.mubr.bf16.gmra.mrb[0].mxu0 %v2844
        %v2880 = vpop.f32.mrb[0].mxu0
        %v2881 = vadd.f32 %v2818, %v2880
        %v2882 = vpop.f32.mrb[0].mxu0
        %v2883 = vpop.f32.mrb[0].mxu0
        %v2884 = vpop.f32.mrb[0].mxu0
        %2885 = vdwg.mxu0
        %v2886 = vadd.f32 %v2881, %v2730
        %v2887 = vsel %vm592, %v2886, 0.0
        %2888 = vadd.xlane.f32.xlu0 %v2887
        %v2889 = vpop.xlane.xlu0 %2888
        %v2890 = vmul.f32 %v2889, %v596
        %v2891 = vsub.f32 %v2886, %v2890
        %v2892 = vmul.f32 %v2891, %v2891
        %v2893 = vsel %vm592, %v2892, 0.0
        %2894 = vadd.xlane.f32.xlu0 %v2893
        %v2895 = vpop.xlane.xlu0 %2894
        %v2896 = vmul.f32 %v2895, %v596
        %v2897 = vadd.f32 %v2896, 1e-05
        %v2898 = vrsqrt.pop %v2897
        %v2899 = vmul.f32 %v2891, %v2898
        %v2900 = vlaneseq
        %v2901 = vshrl.u32 %v2900, 7
        %v2902 = vsub.s32 6, %v2901
        %v2903 = vrot.slane %v1769, %v2902
        %v2904 = vmul.f32 %v2899, %v2903
        %v2905 = vlaneseq
        %v2906 = vshrl.u32 %v2905, 7
        %v2907 = vsub.s32 7, %v2906
        %v2908 = vrot.slane %v1769, %v2907
        %v2909 = vadd.f32 %v2904, %v2908
        %2911 = vrot.lane.b32.xlu0 %v2909, 32
        %v2912 = vpop.permute.xlu0 %2911
        %vm2914 = vcmask 523520
        %2915 = vst.msk [vmem:[%s467] sm:$0xff] %vm2914, %v2912
        %s2916 = scalar_lea.vmem %s8, 16
        %v2917 = vld [vmem:[%s2916] sm:$0xff]
        %v2918 = vpack.c.bf16 %v2909, %v2909
        %s2919 = scalar_lea.vmem %s4, 32
        %v2920 = vld [vmem:[%s2919] sm:$0xf]
        %v2921 = vld [vmem:[%s2919 + $0x4] sm:$0xf]
        %v2922 = vld [vmem:[%s2919 + $0x8] sm:$0xf]
        %v2923 = vld [vmem:[%s2919 + $0xc] sm:$0xf]
        %v2924 = vlaneseq
        %v2925 = vshrl.u32 %v2924, 7
        %v2926 = vsub.s32 0, %v2925
        %v2927 = vrot.slane %v2917, %v2926
        %v2932 = vunpack.c.l.b16 %v2920
        %v2933 = vunpack.c.l.b16 %v2921
        %v2934 = vunpack.c.l.b16 %v2922
        %v2935 = vunpack.c.l.b16 %v2923
        %v2936 = vpack.c.b16 %v2933, %v2932
        %v2937 = vpack.c.b16 %v2935, %v2934
        %v2941 = vsel %vm592, %v2918, 0
        %2943 = vmatprep.subr.bf16.mxu0 0
        %2944 = vmatpush1.bf16.msra.mxu0 %v2936
        %2945 = vmatprep.subr.bf16.mxu0 0
        %2946 = vmatpush1.bf16.msra.mxu0 %v2937
        %2947 = vmatprep.subr.bf16.mxu0 0
        %2948 = vmatpush1.bf16.msra.mxu0 0
        %2949 = vmatprep.subr.bf16.mxu0 0
        %2950 = vmatpush1.bf16.msra.mxu0 0
        %2951 = vmatprep.subr.bf16.mxu0 0
        %2952 = vmatpush1.bf16.msra.mxu0 0
        %2953 = vmatprep.subr.bf16.mxu0 0
        %2954 = vmatpush1.bf16.msra.mxu0 0
        %2955 = vmatprep.subr.bf16.mxu0 0
        %2956 = vmatpush1.bf16.msra.mxu0 0
        %2957 = vmatprep.subr.bf16.mxu0 0
        %2958 = vmatpush1.bf16.msra.mxu0 0
        %2959 = vmatprep.subr.bf16.mxu0 0
        %2960 = vmatpush1.bf16.msra.mxu0 0
        %2961 = vmatprep.subr.bf16.mxu0 0
        %2962 = vmatpush1.bf16.msra.mxu0 0
        %2963 = vmatprep.subr.bf16.mxu0 0
        %2964 = vmatpush1.bf16.msra.mxu0 0
        %2965 = vmatprep.subr.bf16.mxu0 0
        %2966 = vmatpush1.bf16.msra.mxu0 0
        %2967 = vmatprep.subr.bf16.mxu0 0
        %2968 = vmatpush1.bf16.msra.mxu0 0
        %2969 = vmatprep.subr.bf16.mxu0 0
        %2970 = vmatpush1.bf16.msra.mxu0 0
        %2971 = vmatprep.subr.bf16.mxu0 0
        %2972 = vmatpush1.bf16.msra.mxu0 0
        %2973 = vmatprep.subr.bf16.mxu0 0
        %2974 = vmatpush1.bf16.msra.mxu0 0
        %2975 = vmatprep.mubr.bf16.mxu0 0
        %2976 = vmatmul.mubr.bf16.gmra.mrb[0].mxu0 %v2941
        %v2977 = vpop.f32.mrb[0].mxu0
        %v2978 = vadd.f32 %v2927, %v2977
        %v2979 = vpop.f32.mrb[0].mxu0
        %v2980 = vpop.f32.mrb[0].mxu0
        %v2981 = vpop.f32.mrb[0].mxu0
        %2982 = vdwg.mxu0
        %2984 = vrot.lane.b32.xlu0 %v2978, 120
        %v2985 = vpop.permute.xlu0 %2984
        %2986 = vrot.lane.b32.xlu0 %v2978, 112
        %v2987 = vpop.permute.xlu0 %2986
        %2988 = vrot.lane.b32.xlu0 %v2978, 104
        %v2989 = vpop.permute.xlu0 %2988
        %2990 = vrot.lane.b32.xlu0 %v2978, 96
        %v2991 = vpop.permute.xlu0 %2990
        %v2992 = vsel %vm701, %v2978, 0
        %v2994 = vsel %vm701, %v2991, 0
        %2996 = vmatprep.subr.mxu0 0.0
        %2997 = vmatpush1.xpose.msra.mxu0 %v2994
        %2998 = vmatprep.subr.mxu0 0.0
        %2999 = vmatpush1.xpose.msra.mxu0 0.0
        %3000 = vmatprep.subr.mxu0 0.0
        %3001 = vmatpush1.xpose.msra.mxu0 0.0
        %3002 = vmatprep.subr.mxu0 0.0
        %3003 = vmatpush1.xpose.msra.mxu0 0.0
        %3004 = vmatprep.subr.mxu0 0.0
        %3005 = vmatpush1.xpose.msra.mxu0 0.0
        %3006 = vmatprep.subr.mxu0 0.0
        %3007 = vmatpush1.xpose.msra.mxu0 0.0
        %3008 = vmatprep.subr.mxu0 0.0
        %3009 = vmatpush1.xpose.msra.mxu0 0.0
        %3010 = vmatprep.subr.mxu0 0.0
        %3011 = vmatpush1.xpose.msra.mxu0 0.0
        %3012 = vmatprep.subr.mxu0 0.0
        %3013 = vmatpush1.xpose.msra.mxu0 0.0
        %3014 = vmatprep.subr.mxu0 0.0
        %3015 = vmatpush1.xpose.msra.mxu0 0.0
        %3016 = vmatprep.subr.mxu0 0.0
        %3017 = vmatpush1.xpose.msra.mxu0 0.0
        %3018 = vmatprep.subr.mxu0 0.0
        %3019 = vmatpush1.xpose.msra.mxu0 0.0
        %3020 = vmatprep.subr.mxu0 0.0
        %3021 = vmatpush1.xpose.msra.mxu0 0.0
        %3022 = vmatprep.subr.mxu0 0.0
        %3023 = vmatpush1.xpose.msra.mxu0 0.0
        %3024 = vmatprep.subr.mxu0 0.0
        %3025 = vmatpush1.xpose.msra.mxu0 0.0
        %3026 = vmatprep.subr.mxu0 0.0
        %3027 = vmatpush1.xpose.msra.mxu0 0.0
        %3028 = vmatprep.subr.mxu0 0.0
        %3029 = vmatpush1.xpose.msra.mxu0 0.0
        %3030 = vmatprep.subr.mxu0 0.0
        %3031 = vmatpush1.xpose.msra.mxu0 0.0
        %3032 = vmatprep.subr.mxu0 0.0
        %3033 = vmatpush1.xpose.msra.mxu0 0.0
        %3034 = vmatprep.subr.mxu0 0.0
        %3035 = vmatpush1.xpose.msra.mxu0 0.0
        %3036 = vmatprep.subr.mxu0 0.0
        %3037 = vmatpush1.xpose.msra.mxu0 0.0
        %3038 = vmatprep.subr.mxu0 0.0
        %3039 = vmatpush1.xpose.msra.mxu0 0.0
        %3040 = vmatprep.subr.mxu0 0.0
        %3041 = vmatpush1.xpose.msra.mxu0 0.0
        %3042 = vmatprep.subr.mxu0 0.0
        %3043 = vmatpush1.xpose.msra.mxu0 0.0
        %3044 = vmatprep.subr.mxu0 0.0
        %3045 = vmatpush1.xpose.msra.mxu0 0.0
        %3046 = vmatprep.subr.mxu0 0.0
        %3047 = vmatpush1.xpose.msra.mxu0 0.0
        %3048 = vmatprep.subr.mxu0 0.0
        %3049 = vmatpush1.xpose.msra.mxu0 0.0
        %3050 = vmatprep.subr.mxu0 0.0
        %3051 = vmatpush1.xpose.msra.mxu0 0.0
        %3052 = vmatprep.subr.mxu0 0.0
        %3053 = vmatpush1.xpose.msra.mxu0 0.0
        %3054 = vmatprep.subr.mxu0 0.0
        %3055 = vmatpush1.xpose.msra.mxu0 0.0
        %3056 = vmatprep.subr.mxu0 0.0
        %3057 = vmatpush1.xpose.msra.mxu0 0.0
        %3058 = vmatprep.subr.mxu0 0.0
        %3059 = vmatpush1.xpose.msra.mxu0 0.0
        %3060 = vmatprep.mubr.f32.mxu0 0.0
        %3061 = vmatmul.mubr.f32.gmra.mrb[0].mxu0 %v2992
        %v3062 = vpop.f32.mrb[0].mxu0
        %v3063 = vadd.f32 0.0, %v3062
        %v3064 = vpop.f32.mrb[0].mxu0
        %3065 = vdwg.mxu0
        %3066 = vrot.lane.b32.xlu0 %v2985, 96
        %v3067 = vpop.permute.xlu0 %3066
        %v3068 = vsel %vm701, %v2985, 0
        %v3070 = vsel %vm701, %v3067, 0
        %3072 = vmatprep.subr.mxu0 0.0
        %3073 = vmatpush1.xpose.msra.mxu0 %v3070
        %3074 = vmatprep.subr.mxu0 0.0
        %3075 = vmatpush1.xpose.msra.mxu0 0.0
        %3076 = vmatprep.subr.mxu0 0.0
        %3077 = vmatpush1.xpose.msra.mxu0 0.0
        %3078 = vmatprep.subr.mxu0 0.0
        %3079 = vmatpush1.xpose.msra.mxu0 0.0
        %3080 = vmatprep.subr.mxu0 0.0
        %3081 = vmatpush1.xpose.msra.mxu0 0.0
        %3082 = vmatprep.subr.mxu0 0.0
        %3083 = vmatpush1.xpose.msra.mxu0 0.0
        %3084 = vmatprep.subr.mxu0 0.0
        %3085 = vmatpush1.xpose.msra.mxu0 0.0
        %3086 = vmatprep.subr.mxu0 0.0
        %3087 = vmatpush1.xpose.msra.mxu0 0.0
        %3088 = vmatprep.subr.mxu0 0.0
        %3089 = vmatpush1.xpose.msra.mxu0 0.0
        %3090 = vmatprep.subr.mxu0 0.0
        %3091 = vmatpush1.xpose.msra.mxu0 0.0
        %3092 = vmatprep.subr.mxu0 0.0
        %3093 = vmatpush1.xpose.msra.mxu0 0.0
        %3094 = vmatprep.subr.mxu0 0.0
        %3095 = vmatpush1.xpose.msra.mxu0 0.0
        %3096 = vmatprep.subr.mxu0 0.0
        %3097 = vmatpush1.xpose.msra.mxu0 0.0
        %3098 = vmatprep.subr.mxu0 0.0
        %3099 = vmatpush1.xpose.msra.mxu0 0.0
        %3100 = vmatprep.subr.mxu0 0.0
        %3101 = vmatpush1.xpose.msra.mxu0 0.0
        %3102 = vmatprep.subr.mxu0 0.0
        %3103 = vmatpush1.xpose.msra.mxu0 0.0
        %3104 = vmatprep.subr.mxu0 0.0
        %3105 = vmatpush1.xpose.msra.mxu0 0.0
        %3106 = vmatprep.subr.mxu0 0.0
        %3107 = vmatpush1.xpose.msra.mxu0 0.0
        %3108 = vmatprep.subr.mxu0 0.0
        %3109 = vmatpush1.xpose.msra.mxu0 0.0
        %3110 = vmatprep.subr.mxu0 0.0
        %3111 = vmatpush1.xpose.msra.mxu0 0.0
        %3112 = vmatprep.subr.mxu0 0.0
        %3113 = vmatpush1.xpose.msra.mxu0 0.0
        %3114 = vmatprep.subr.mxu0 0.0
        %3115 = vmatpush1.xpose.msra.mxu0 0.0
        %3116 = vmatprep.subr.mxu0 0.0
        %3117 = vmatpush1.xpose.msra.mxu0 0.0
        %3118 = vmatprep.subr.mxu0 0.0
        %3119 = vmatpush1.xpose.msra.mxu0 0.0
        %3120 = vmatprep.subr.mxu0 0.0
        %3121 = vmatpush1.xpose.msra.mxu0 0.0
        %3122 = vmatprep.subr.mxu0 0.0
        %3123 = vmatpush1.xpose.msra.mxu0 0.0
        %3124 = vmatprep.subr.mxu0 0.0
        %3125 = vmatpush1.xpose.msra.mxu0 0.0
        %3126 = vmatprep.subr.mxu0 0.0
        %3127 = vmatpush1.xpose.msra.mxu0 0.0
        %3128 = vmatprep.subr.mxu0 0.0
        %3129 = vmatpush1.xpose.msra.mxu0 0.0
        %3130 = vmatprep.subr.mxu0 0.0
        %3131 = vmatpush1.xpose.msra.mxu0 0.0
        %3132 = vmatprep.subr.mxu0 0.0
        %3133 = vmatpush1.xpose.msra.mxu0 0.0
        %3134 = vmatprep.subr.mxu0 0.0
        %3135 = vmatpush1.xpose.msra.mxu0 0.0
        %3136 = vmatprep.mubr.f32.mxu0 0.0
        %3137 = vmatmul.mubr.f32.gmra.mrb[0].mxu0 %v3068
        %v3138 = vpop.f32.mrb[0].mxu0
        %v3139 = vadd.f32 0.0, %v3138
        %v3140 = vpop.f32.mrb[0].mxu0
        %3141 = vdwg.mxu0
        %3142 = vrot.lane.b32.xlu0 %v2987, 96
        %v3143 = vpop.permute.xlu0 %3142
        %v3144 = vsel %vm701, %v2987, 0
        %v3146 = vsel %vm701, %v3143, 0
        %3148 = vmatprep.subr.mxu0 0.0
        %3149 = vmatpush1.xpose.msra.mxu0 %v3146
        %3150 = vmatprep.subr.mxu0 0.0
        %3151 = vmatpush1.xpose.msra.mxu0 0.0
        %3152 = vmatprep.subr.mxu0 0.0
        %3153 = vmatpush1.xpose.msra.mxu0 0.0
        %3154 = vmatprep.subr.mxu0 0.0
        %3155 = vmatpush1.xpose.msra.mxu0 0.0
        %3156 = vmatprep.subr.mxu0 0.0
        %3157 = vmatpush1.xpose.msra.mxu0 0.0
        %3158 = vmatprep.subr.mxu0 0.0
        %3159 = vmatpush1.xpose.msra.mxu0 0.0
        %3160 = vmatprep.subr.mxu0 0.0
        %3161 = vmatpush1.xpose.msra.mxu0 0.0
        %3162 = vmatprep.subr.mxu0 0.0
        %3163 = vmatpush1.xpose.msra.mxu0 0.0
        %3164 = vmatprep.subr.mxu0 0.0
        %3165 = vmatpush1.xpose.msra.mxu0 0.0
        %3166 = vmatprep.subr.mxu0 0.0
        %3167 = vmatpush1.xpose.msra.mxu0 0.0
        %3168 = vmatprep.subr.mxu0 0.0
        %3169 = vmatpush1.xpose.msra.mxu0 0.0
        %3170 = vmatprep.subr.mxu0 0.0
        %3171 = vmatpush1.xpose.msra.mxu0 0.0
        %3172 = vmatprep.subr.mxu0 0.0
        %3173 = vmatpush1.xpose.msra.mxu0 0.0
        %3174 = vmatprep.subr.mxu0 0.0
        %3175 = vmatpush1.xpose.msra.mxu0 0.0
        %3176 = vmatprep.subr.mxu0 0.0
        %3177 = vmatpush1.xpose.msra.mxu0 0.0
        %3178 = vmatprep.subr.mxu0 0.0
        %3179 = vmatpush1.xpose.msra.mxu0 0.0
        %3180 = vmatprep.subr.mxu0 0.0
        %3181 = vmatpush1.xpose.msra.mxu0 0.0
        %3182 = vmatprep.subr.mxu0 0.0
        %3183 = vmatpush1.xpose.msra.mxu0 0.0
        %3184 = vmatprep.subr.mxu0 0.0
        %3185 = vmatpush1.xpose.msra.mxu0 0.0
        %3186 = vmatprep.subr.mxu0 0.0
        %3187 = vmatpush1.xpose.msra.mxu0 0.0
        %3188 = vmatprep.subr.mxu0 0.0
        %3189 = vmatpush1.xpose.msra.mxu0 0.0
        %3190 = vmatprep.subr.mxu0 0.0
        %3191 = vmatpush1.xpose.msra.mxu0 0.0
        %3192 = vmatprep.subr.mxu0 0.0
        %3193 = vmatpush1.xpose.msra.mxu0 0.0
        %3194 = vmatprep.subr.mxu0 0.0
        %3195 = vmatpush1.xpose.msra.mxu0 0.0
        %3196 = vmatprep.subr.mxu0 0.0
        %3197 = vmatpush1.xpose.msra.mxu0 0.0
        %3198 = vmatprep.subr.mxu0 0.0
        %3199 = vmatpush1.xpose.msra.mxu0 0.0
        %3200 = vmatprep.subr.mxu0 0.0
        %3201 = vmatpush1.xpose.msra.mxu0 0.0
        %3202 = vmatprep.subr.mxu0 0.0
        %3203 = vmatpush1.xpose.msra.mxu0 0.0
        %3204 = vmatprep.subr.mxu0 0.0
        %3205 = vmatpush1.xpose.msra.mxu0 0.0
        %3206 = vmatprep.subr.mxu0 0.0
        %3207 = vmatpush1.xpose.msra.mxu0 0.0
        %3208 = vmatprep.subr.mxu0 0.0
        %3209 = vmatpush1.xpose.msra.mxu0 0.0
        %3210 = vmatprep.subr.mxu0 0.0
        %3211 = vmatpush1.xpose.msra.mxu0 0.0
        %3212 = vmatprep.mubr.f32.mxu0 0.0
        %3213 = vmatmul.mubr.f32.gmra.mrb[0].mxu0 %v3144
        %v3214 = vpop.f32.mrb[0].mxu0
        %v3215 = vadd.f32 0.0, %v3214
        %v3216 = vpop.f32.mrb[0].mxu0
        %3217 = vdwg.mxu0
        %3218 = vrot.lane.b32.xlu0 %v2989, 96
        %v3219 = vpop.permute.xlu0 %3218
        %v3220 = vsel %vm701, %v2989, 0
        %v3222 = vsel %vm701, %v3219, 0
        %3224 = vmatprep.subr.mxu0 0.0
        %3225 = vmatpush1.xpose.msra.mxu0 %v3222
        %3226 = vmatprep.subr.mxu0 0.0
        %3227 = vmatpush1.xpose.msra.mxu0 0.0
        %3228 = vmatprep.subr.mxu0 0.0
        %3229 = vmatpush1.xpose.msra.mxu0 0.0
        %3230 = vmatprep.subr.mxu0 0.0
        %3231 = vmatpush1.xpose.msra.mxu0 0.0
        %3232 = vmatprep.subr.mxu0 0.0
        %3233 = vmatpush1.xpose.msra.mxu0 0.0
        %3234 = vmatprep.subr.mxu0 0.0
        %3235 = vmatpush1.xpose.msra.mxu0 0.0
        %3236 = vmatprep.subr.mxu0 0.0
        %3237 = vmatpush1.xpose.msra.mxu0 0.0
        %3238 = vmatprep.subr.mxu0 0.0
        %3239 = vmatpush1.xpose.msra.mxu0 0.0
        %3240 = vmatprep.subr.mxu0 0.0
        %3241 = vmatpush1.xpose.msra.mxu0 0.0
        %3242 = vmatprep.subr.mxu0 0.0
        %3243 = vmatpush1.xpose.msra.mxu0 0.0
        %3244 = vmatprep.subr.mxu0 0.0
        %3245 = vmatpush1.xpose.msra.mxu0 0.0
        %3246 = vmatprep.subr.mxu0 0.0
        %3247 = vmatpush1.xpose.msra.mxu0 0.0
        %3248 = vmatprep.subr.mxu0 0.0
        %3249 = vmatpush1.xpose.msra.mxu0 0.0
        %3250 = vmatprep.subr.mxu0 0.0
        %3251 = vmatpush1.xpose.msra.mxu0 0.0
        %3252 = vmatprep.subr.mxu0 0.0
        %3253 = vmatpush1.xpose.msra.mxu0 0.0
        %3254 = vmatprep.subr.mxu0 0.0
        %3255 = vmatpush1.xpose.msra.mxu0 0.0
        %3256 = vmatprep.subr.mxu0 0.0
        %3257 = vmatpush1.xpose.msra.mxu0 0.0
        %3258 = vmatprep.subr.mxu0 0.0
        %3259 = vmatpush1.xpose.msra.mxu0 0.0
        %3260 = vmatprep.subr.mxu0 0.0
        %3261 = vmatpush1.xpose.msra.mxu0 0.0
        %3262 = vmatprep.subr.mxu0 0.0
        %3263 = vmatpush1.xpose.msra.mxu0 0.0
        %3264 = vmatprep.subr.mxu0 0.0
        %3265 = vmatpush1.xpose.msra.mxu0 0.0
        %3266 = vmatprep.subr.mxu0 0.0
        %3267 = vmatpush1.xpose.msra.mxu0 0.0
        %3268 = vmatprep.subr.mxu0 0.0
        %3269 = vmatpush1.xpose.msra.mxu0 0.0
        %3270 = vmatprep.subr.mxu0 0.0
        %3271 = vmatpush1.xpose.msra.mxu0 0.0
        %3272 = vmatprep.subr.mxu0 0.0
        %3273 = vmatpush1.xpose.msra.mxu0 0.0
        %3274 = vmatprep.subr.mxu0 0.0
        %3275 = vmatpush1.xpose.msra.mxu0 0.0
        %3276 = vmatprep.subr.mxu0 0.0
        %3277 = vmatpush1.xpose.msra.mxu0 0.0
        %3278 = vmatprep.subr.mxu0 0.0
        %3279 = vmatpush1.xpose.msra.mxu0 0.0
        %3280 = vmatprep.subr.mxu0 0.0
        %3281 = vmatpush1.xpose.msra.mxu0 0.0
        %3282 = vmatprep.subr.mxu0 0.0
        %3283 = vmatpush1.xpose.msra.mxu0 0.0
        %3284 = vmatprep.subr.mxu0 0.0
        %3285 = vmatpush1.xpose.msra.mxu0 0.0
        %3286 = vmatprep.subr.mxu0 0.0
        %3287 = vmatpush1.xpose.msra.mxu0 0.0
        %3288 = vmatprep.mubr.f32.mxu0 0.0
        %3289 = vmatmul.mubr.f32.gmra.mrb[0].mxu0 %v3220
        %v3290 = vpop.f32.mrb[0].mxu0
        %v3291 = vadd.f32 0.0, %v3290
        %v3292 = vpop.f32.mrb[0].mxu0
        %3293 = vdwg.mxu0
        %v3294 = vmul.f32 %v3063, 0.35355338
        %v3295 = vmul.f32 %v3139, 0.35355338
        %v3296 = vmul.f32 %v3215, 0.35355338
        %v3297 = vmul.f32 %v3291, 0.35355338
        %v3298 = vadd.f32 %v3294, %v625
        %v3299 = vadd.f32 %v3295, %v625
        %v3300 = vadd.f32 %v3296, %v625
        %v3301 = vadd.f32 %v3297, %v625
        %v3302 = vsel %vm701, %v3298, -inf
        %3303 = vmax.xlane.f32.xlu0 %v3302
        %v3304 = vpop.xlane.xlu0 %3303
        %v3305 = vsel %vm701, %v3299, -inf
        %3306 = vmax.xlane.f32.xlu0 %v3305
        %v3307 = vpop.xlane.xlu0 %3306
        %v3308 = vsel %vm701, %v3300, -inf
        %3309 = vmax.xlane.f32.xlu0 %v3308
        %v3310 = vpop.xlane.xlu0 %3309
        %v3311 = vsel %vm701, %v3301, -inf
        %3312 = vmax.xlane.f32.xlu0 %v3311
        %v3313 = vpop.xlane.xlu0 %3312
        %v3314 = vsub.f32 %v3298, %v3304
        %v3315 = vsub.f32 %v3299, %v3307
        %v3316 = vsub.f32 %v3300, %v3310
        %v3317 = vsub.f32 %v3301, %v3313
        %v3318 = vmul.f32 %v3314, 1.442695
        %v3319 = vpow.pop %v3318
        %v3320 = vmul.f32 %v3315, 1.442695
        %v3321 = vpow.pop %v3320
        %v3322 = vmul.f32 %v3316, 1.442695
        %v3323 = vpow.pop %v3322
        %v3324 = vmul.f32 %v3317, 1.442695
        %v3325 = vpow.pop %v3324
        %v3326 = vsel %vm701, %v3319, 0.0
        %3327 = vadd.xlane.f32.xlu0 %v3326
        %v3328 = vpop.xlane.xlu0 %3327
        %v3329 = vsel %vm701, %v3321, 0.0
        %3330 = vadd.xlane.f32.xlu0 %v3329
        %v3331 = vpop.xlane.xlu0 %3330
        %v3332 = vsel %vm701, %v3323, 0.0
        %3333 = vadd.xlane.f32.xlu0 %v3332
        %v3334 = vpop.xlane.xlu0 %3333
        %v3335 = vsel %vm701, %v3325, 0.0
        %3336 = vadd.xlane.f32.xlu0 %v3335
        %v3337 = vpop.xlane.xlu0 %3336
        %v3338 = vrcp.pop %v3328
        %v3339 = vrcp.pop %v3331
        %v3340 = vrcp.pop %v3334
        %v3341 = vrcp.pop %v3337
        %v3342 = vmul.f32 %v3319, %v3338
        %v3343 = vmul.f32 %v3321, %v3339
        %v3344 = vmul.f32 %v3323, %v3340
        %v3345 = vmul.f32 %v3325, %v3341
        %3346 = vrot.lane.b32.xlu0 %v2978, 64
        %v3347 = vpop.permute.xlu0 %3346
        %v3350 = vsel %vm701, %v3342, 0
        %3352 = vmatprep.subr.mxu0 0.0
        %3353 = vmatpush1.msra.mxu0 %v3347
        %3354 = vmatprep.subr.mxu0 0.0
        %3355 = vmatpush1.msra.mxu0 0.0
        %3356 = vmatprep.subr.mxu0 0.0
        %3357 = vmatpush1.msra.mxu0 0.0
        %3358 = vmatprep.subr.mxu0 0.0
        %3359 = vmatpush1.msra.mxu0 0.0
        %3360 = vmatprep.subr.mxu0 0.0
        %3361 = vmatpush1.msra.mxu0 0.0
        %3362 = vmatprep.subr.mxu0 0.0
        %3363 = vmatpush1.msra.mxu0 0.0
        %3364 = vmatprep.subr.mxu0 0.0
        %3365 = vmatpush1.msra.mxu0 0.0
        %3366 = vmatprep.subr.mxu0 0.0
        %3367 = vmatpush1.msra.mxu0 0.0
        %3368 = vmatprep.subr.mxu0 0.0
        %3369 = vmatpush1.msra.mxu0 0.0
        %3370 = vmatprep.subr.mxu0 0.0
        %3371 = vmatpush1.msra.mxu0 0.0
        %3372 = vmatprep.subr.mxu0 0.0
        %3373 = vmatpush1.msra.mxu0 0.0
        %3374 = vmatprep.subr.mxu0 0.0
        %3375 = vmatpush1.msra.mxu0 0.0
        %3376 = vmatprep.subr.mxu0 0.0
        %3377 = vmatpush1.msra.mxu0 0.0
        %3378 = vmatprep.subr.mxu0 0.0
        %3379 = vmatpush1.msra.mxu0 0.0
        %3380 = vmatprep.subr.mxu0 0.0
        %3381 = vmatpush1.msra.mxu0 0.0
        %3382 = vmatprep.subr.mxu0 0.0
        %3383 = vmatpush1.msra.mxu0 0.0
        %3384 = vmatprep.subr.mxu0 0.0
        %3385 = vmatpush1.msra.mxu0 0.0
        %3386 = vmatprep.subr.mxu0 0.0
        %3387 = vmatpush1.msra.mxu0 0.0
        %3388 = vmatprep.subr.mxu0 0.0
        %3389 = vmatpush1.msra.mxu0 0.0
        %3390 = vmatprep.subr.mxu0 0.0
        %3391 = vmatpush1.msra.mxu0 0.0
        %3392 = vmatprep.subr.mxu0 0.0
        %3393 = vmatpush1.msra.mxu0 0.0
        %3394 = vmatprep.subr.mxu0 0.0
        %3395 = vmatpush1.msra.mxu0 0.0
        %3396 = vmatprep.subr.mxu0 0.0
        %3397 = vmatpush1.msra.mxu0 0.0
        %3398 = vmatprep.subr.mxu0 0.0
        %3399 = vmatpush1.msra.mxu0 0.0
        %3400 = vmatprep.subr.mxu0 0.0
        %3401 = vmatpush1.msra.mxu0 0.0
        %3402 = vmatprep.subr.mxu0 0.0
        %3403 = vmatpush1.msra.mxu0 0.0
        %3404 = vmatprep.subr.mxu0 0.0
        %3405 = vmatpush1.msra.mxu0 0.0
        %3406 = vmatprep.subr.mxu0 0.0
        %3407 = vmatpush1.msra.mxu0 0.0
        %3408 = vmatprep.subr.mxu0 0.0
        %3409 = vmatpush1.msra.mxu0 0.0
        %3410 = vmatprep.subr.mxu0 0.0
        %3411 = vmatpush1.msra.mxu0 0.0
        %3412 = vmatprep.subr.mxu0 0.0
        %3413 = vmatpush1.msra.mxu0 0.0
        %3414 = vmatprep.subr.mxu0 0.0
        %3415 = vmatpush1.msra.mxu0 0.0
        %3416 = vmatprep.mubr.f32.mxu0 0.0
        %3417 = vmatmul.mubr.f32.gmra.mrb[0].mxu0 %v3350
        %v3418 = vpop.f32.mrb[0].mxu0
        %v3419 = vadd.f32 0.0, %v3418
        %v3420 = vpop.f32.mrb[0].mxu0
        %3421 = vdwg.mxu0
        %3422 = vrot.lane.b32.xlu0 %v2985, 64
        %v3423 = vpop.permute.xlu0 %3422
        %v3426 = vsel %vm701, %v3343, 0
        %3428 = vmatprep.subr.mxu0 0.0
        %3429 = vmatpush1.msra.mxu0 %v3423
        %3430 = vmatprep.subr.mxu0 0.0
        %3431 = vmatpush1.msra.mxu0 0.0
        %3432 = vmatprep.subr.mxu0 0.0
        %3433 = vmatpush1.msra.mxu0 0.0
        %3434 = vmatprep.subr.mxu0 0.0
        %3435 = vmatpush1.msra.mxu0 0.0
        %3436 = vmatprep.subr.mxu0 0.0
        %3437 = vmatpush1.msra.mxu0 0.0
        %3438 = vmatprep.subr.mxu0 0.0
        %3439 = vmatpush1.msra.mxu0 0.0
        %3440 = vmatprep.subr.mxu0 0.0
        %3441 = vmatpush1.msra.mxu0 0.0
        %3442 = vmatprep.subr.mxu0 0.0
        %3443 = vmatpush1.msra.mxu0 0.0
        %3444 = vmatprep.subr.mxu0 0.0
        %3445 = vmatpush1.msra.mxu0 0.0
        %3446 = vmatprep.subr.mxu0 0.0
        %3447 = vmatpush1.msra.mxu0 0.0
        %3448 = vmatprep.subr.mxu0 0.0
        %3449 = vmatpush1.msra.mxu0 0.0
        %3450 = vmatprep.subr.mxu0 0.0
        %3451 = vmatpush1.msra.mxu0 0.0
        %3452 = vmatprep.subr.mxu0 0.0
        %3453 = vmatpush1.msra.mxu0 0.0
        %3454 = vmatprep.subr.mxu0 0.0
        %3455 = vmatpush1.msra.mxu0 0.0
        %3456 = vmatprep.subr.mxu0 0.0
        %3457 = vmatpush1.msra.mxu0 0.0
        %3458 = vmatprep.subr.mxu0 0.0
        %3459 = vmatpush1.msra.mxu0 0.0
        %3460 = vmatprep.subr.mxu0 0.0
        %3461 = vmatpush1.msra.mxu0 0.0
        %3462 = vmatprep.subr.mxu0 0.0
        %3463 = vmatpush1.msra.mxu0 0.0
        %3464 = vmatprep.subr.mxu0 0.0
        %3465 = vmatpush1.msra.mxu0 0.0
        %3466 = vmatprep.subr.mxu0 0.0
        %3467 = vmatpush1.msra.mxu0 0.0
        %3468 = vmatprep.subr.mxu0 0.0
        %3469 = vmatpush1.msra.mxu0 0.0
        %3470 = vmatprep.subr.mxu0 0.0
        %3471 = vmatpush1.msra.mxu0 0.0
        %3472 = vmatprep.subr.mxu0 0.0
        %3473 = vmatpush1.msra.mxu0 0.0
        %3474 = vmatprep.subr.mxu0 0.0
        %3475 = vmatpush1.msra.mxu0 0.0
        %3476 = vmatprep.subr.mxu0 0.0
        %3477 = vmatpush1.msra.mxu0 0.0
        %3478 = vmatprep.subr.mxu0 0.0
        %3479 = vmatpush1.msra.mxu0 0.0
        %3480 = vmatprep.subr.mxu0 0.0
        %3481 = vmatpush1.msra.mxu0 0.0
        %3482 = vmatprep.subr.mxu0 0.0
        %3483 = vmatpush1.msra.mxu0 0.0
        %3484 = vmatprep.subr.mxu0 0.0
        %3485 = vmatpush1.msra.mxu0 0.0
        %3486 = vmatprep.subr.mxu0 0.0
        %3487 = vmatpush1.msra.mxu0 0.0
        %3488 = vmatprep.subr.mxu0 0.0
        %3489 = vmatpush1.msra.mxu0 0.0
        %3490 = vmatprep.subr.mxu0 0.0
        %3491 = vmatpush1.msra.mxu0 0.0
        %3492 = vmatprep.mubr.f32.mxu0 0.0
        %3493 = vmatmul.mubr.f32.gmra.mrb[0].mxu0 %v3426
        %v3494 = vpop.f32.mrb[0].mxu0
        %v3495 = vadd.f32 0.0, %v3494
        %v3496 = vpop.f32.mrb[0].mxu0
        %3497 = vdwg.mxu0
        %3498 = vrot.lane.b32.xlu0 %v2987, 64
        %v3499 = vpop.permute.xlu0 %3498
        %v3502 = vsel %vm701, %v3344, 0
        %3504 = vmatprep.subr.mxu0 0.0
        %3505 = vmatpush1.msra.mxu0 %v3499
        %3506 = vmatprep.subr.mxu0 0.0
        %3507 = vmatpush1.msra.mxu0 0.0
        %3508 = vmatprep.subr.mxu0 0.0
        %3509 = vmatpush1.msra.mxu0 0.0
        %3510 = vmatprep.subr.mxu0 0.0
        %3511 = vmatpush1.msra.mxu0 0.0
        %3512 = vmatprep.subr.mxu0 0.0
        %3513 = vmatpush1.msra.mxu0 0.0
        %3514 = vmatprep.subr.mxu0 0.0
        %3515 = vmatpush1.msra.mxu0 0.0
        %3516 = vmatprep.subr.mxu0 0.0
        %3517 = vmatpush1.msra.mxu0 0.0
        %3518 = vmatprep.subr.mxu0 0.0
        %3519 = vmatpush1.msra.mxu0 0.0
        %3520 = vmatprep.subr.mxu0 0.0
        %3521 = vmatpush1.msra.mxu0 0.0
        %3522 = vmatprep.subr.mxu0 0.0
        %3523 = vmatpush1.msra.mxu0 0.0
        %3524 = vmatprep.subr.mxu0 0.0
        %3525 = vmatpush1.msra.mxu0 0.0
        %3526 = vmatprep.subr.mxu0 0.0
        %3527 = vmatpush1.msra.mxu0 0.0
        %3528 = vmatprep.subr.mxu0 0.0
        %3529 = vmatpush1.msra.mxu0 0.0
        %3530 = vmatprep.subr.mxu0 0.0
        %3531 = vmatpush1.msra.mxu0 0.0
        %3532 = vmatprep.subr.mxu0 0.0
        %3533 = vmatpush1.msra.mxu0 0.0
        %3534 = vmatprep.subr.mxu0 0.0
        %3535 = vmatpush1.msra.mxu0 0.0
        %3536 = vmatprep.subr.mxu0 0.0
        %3537 = vmatpush1.msra.mxu0 0.0
        %3538 = vmatprep.subr.mxu0 0.0
        %3539 = vmatpush1.msra.mxu0 0.0
        %3540 = vmatprep.subr.mxu0 0.0
        %3541 = vmatpush1.msra.mxu0 0.0
        %3542 = vmatprep.subr.mxu0 0.0
        %3543 = vmatpush1.msra.mxu0 0.0
        %3544 = vmatprep.subr.mxu0 0.0
        %3545 = vmatpush1.msra.mxu0 0.0
        %3546 = vmatprep.subr.mxu0 0.0
        %3547 = vmatpush1.msra.mxu0 0.0
        %3548 = vmatprep.subr.mxu0 0.0
        %3549 = vmatpush1.msra.mxu0 0.0
        %3550 = vmatprep.subr.mxu0 0.0
        %3551 = vmatpush1.msra.mxu0 0.0
        %3552 = vmatprep.subr.mxu0 0.0
        %3553 = vmatpush1.msra.mxu0 0.0
        %3554 = vmatprep.subr.mxu0 0.0
        %3555 = vmatpush1.msra.mxu0 0.0
        %3556 = vmatprep.subr.mxu0 0.0
        %3557 = vmatpush1.msra.mxu0 0.0
        %3558 = vmatprep.subr.mxu0 0.0
        %3559 = vmatpush1.msra.mxu0 0.0
        %3560 = vmatprep.subr.mxu0 0.0
        %3561 = vmatpush1.msra.mxu0 0.0
        %3562 = vmatprep.subr.mxu0 0.0
        %3563 = vmatpush1.msra.mxu0 0.0
        %3564 = vmatprep.subr.mxu0 0.0
        %3565 = vmatpush1.msra.mxu0 0.0
        %3566 = vmatprep.subr.mxu0 0.0
        %3567 = vmatpush1.msra.mxu0 0.0
        %3568 = vmatprep.mubr.f32.mxu0 0.0
        %3569 = vmatmul.mubr.f32.gmra.mrb[0].mxu0 %v3502
        %v3570 = vpop.f32.mrb[0].mxu0
        %v3571 = vadd.f32 0.0, %v3570
        %v3572 = vpop.f32.mrb[0].mxu0
        %3573 = vdwg.mxu0
        %3574 = vrot.lane.b32.xlu0 %v2989, 64
        %v3575 = vpop.permute.xlu0 %3574
        %v3578 = vsel %vm701, %v3345, 0
        %3580 = vmatprep.subr.mxu0 0.0
        %3581 = vmatpush1.msra.mxu0 %v3575
        %3582 = vmatprep.subr.mxu0 0.0
        %3583 = vmatpush1.msra.mxu0 0.0
        %3584 = vmatprep.subr.mxu0 0.0
        %3585 = vmatpush1.msra.mxu0 0.0
        %3586 = vmatprep.subr.mxu0 0.0
        %3587 = vmatpush1.msra.mxu0 0.0
        %3588 = vmatprep.subr.mxu0 0.0
        %3589 = vmatpush1.msra.mxu0 0.0
        %3590 = vmatprep.subr.mxu0 0.0
        %3591 = vmatpush1.msra.mxu0 0.0
        %3592 = vmatprep.subr.mxu0 0.0
        %3593 = vmatpush1.msra.mxu0 0.0
        %3594 = vmatprep.subr.mxu0 0.0
        %3595 = vmatpush1.msra.mxu0 0.0
        %3596 = vmatprep.subr.mxu0 0.0
        %3597 = vmatpush1.msra.mxu0 0.0
        %3598 = vmatprep.subr.mxu0 0.0
        %3599 = vmatpush1.msra.mxu0 0.0
        %3600 = vmatprep.subr.mxu0 0.0
        %3601 = vmatpush1.msra.mxu0 0.0
        %3602 = vmatprep.subr.mxu0 0.0
        %3603 = vmatpush1.msra.mxu0 0.0
        %3604 = vmatprep.subr.mxu0 0.0
        %3605 = vmatpush1.msra.mxu0 0.0
        %3606 = vmatprep.subr.mxu0 0.0
        %3607 = vmatpush1.msra.mxu0 0.0
        %3608 = vmatprep.subr.mxu0 0.0
        %3609 = vmatpush1.msra.mxu0 0.0
        %3610 = vmatprep.subr.mxu0 0.0
        %3611 = vmatpush1.msra.mxu0 0.0
        %3612 = vmatprep.subr.mxu0 0.0
        %3613 = vmatpush1.msra.mxu0 0.0
        %3614 = vmatprep.subr.mxu0 0.0
        %3615 = vmatpush1.msra.mxu0 0.0
        %3616 = vmatprep.subr.mxu0 0.0
        %3617 = vmatpush1.msra.mxu0 0.0
        %3618 = vmatprep.subr.mxu0 0.0
        %3619 = vmatpush1.msra.mxu0 0.0
        %3620 = vmatprep.subr.mxu0 0.0
        %3621 = vmatpush1.msra.mxu0 0.0
        %3622 = vmatprep.subr.mxu0 0.0
        %3623 = vmatpush1.msra.mxu0 0.0
        %3624 = vmatprep.subr.mxu0 0.0
        %3625 = vmatpush1.msra.mxu0 0.0
        %3626 = vmatprep.subr.mxu0 0.0
        %3627 = vmatpush1.msra.mxu0 0.0
        %3628 = vmatprep.subr.mxu0 0.0
        %3629 = vmatpush1.msra.mxu0 0.0
        %3630 = vmatprep.subr.mxu0 0.0
        %3631 = vmatpush1.msra.mxu0 0.0
        %3632 = vmatprep.subr.mxu0 0.0
        %3633 = vmatpush1.msra.mxu0 0.0
        %3634 = vmatprep.subr.mxu0 0.0
        %3635 = vmatpush1.msra.mxu0 0.0
        %3636 = vmatprep.subr.mxu0 0.0
        %3637 = vmatpush1.msra.mxu0 0.0
        %3638 = vmatprep.subr.mxu0 0.0
        %3639 = vmatpush1.msra.mxu0 0.0
        %3640 = vmatprep.subr.mxu0 0.0
        %3641 = vmatpush1.msra.mxu0 0.0
        %3642 = vmatprep.subr.mxu0 0.0
        %3643 = vmatpush1.msra.mxu0 0.0
        %3644 = vmatprep.mubr.f32.mxu0 0.0
        %3645 = vmatmul.mubr.f32.gmra.mrb[0].mxu0 %v3578
        %v3646 = vpop.f32.mrb[0].mxu0
        %v3647 = vadd.f32 0.0, %v3646
        %v3648 = vpop.f32.mrb[0].mxu0
        %3649 = vdwg.mxu0
        %v3650 = vpack.c.bf16 %v3419, %v3419
        %v3651 = vpack.c.bf16 %v3495, %v3495
        %v3652 = vpack.c.bf16 %v3571, %v3571
        %v3653 = vpack.c.bf16 %v3647, %v3647
        %s3654 = scalar_lea.vmem %s5, 32
        %v3655 = vld [vmem:[%s3654] sm:$0xf]
        %v3656 = vld [vmem:[%s3654 + $0x4] sm:$0xf]
        %v3657 = vld [vmem:[%s3654 + $0x8] sm:$0xf]
        %v3658 = vld [vmem:[%s3654 + $0xc] sm:$0xf]
        %v3660 = vsel %vm701, %v3650, 0
        %v3663 = vsel %vm1371, %v3655, 0
        %3665 = vmatprep.subr.bf16.mxu0 0
        %3666 = vmatpush1.bf16.msra.mxu0 %v3663
        %3667 = vmatprep.subr.bf16.mxu0 0
        %3668 = vmatpush1.bf16.msra.mxu0 0
        %3669 = vmatprep.subr.bf16.mxu0 0
        %3670 = vmatpush1.bf16.msra.mxu0 0
        %3671 = vmatprep.subr.bf16.mxu0 0
        %3672 = vmatpush1.bf16.msra.mxu0 0
        %3673 = vmatprep.subr.bf16.mxu0 0
        %3674 = vmatpush1.bf16.msra.mxu0 0
        %3675 = vmatprep.subr.bf16.mxu0 0
        %3676 = vmatpush1.bf16.msra.mxu0 0
        %3677 = vmatprep.subr.bf16.mxu0 0
        %3678 = vmatpush1.bf16.msra.mxu0 0
        %3679 = vmatprep.subr.bf16.mxu0 0
        %3680 = vmatpush1.bf16.msra.mxu0 0
        %3681 = vmatprep.subr.bf16.mxu0 0
        %3682 = vmatpush1.bf16.msra.mxu0 0
        %3683 = vmatprep.subr.bf16.mxu0 0
        %3684 = vmatpush1.bf16.msra.mxu0 0
        %3685 = vmatprep.subr.bf16.mxu0 0
        %3686 = vmatpush1.bf16.msra.mxu0 0
        %3687 = vmatprep.subr.bf16.mxu0 0
        %3688 = vmatpush1.bf16.msra.mxu0 0
        %3689 = vmatprep.subr.bf16.mxu0 0
        %3690 = vmatpush1.bf16.msra.mxu0 0
        %3691 = vmatprep.subr.bf16.mxu0 0
        %3692 = vmatpush1.bf16.msra.mxu0 0
        %3693 = vmatprep.subr.bf16.mxu0 0
        %3694 = vmatpush1.bf16.msra.mxu0 0
        %3695 = vmatprep.subr.bf16.mxu0 0
        %3696 = vmatpush1.bf16.msra.mxu0 0
        %3697 = vmatprep.mubr.bf16.mxu0 0
        %3698 = vmatmul.mubr.bf16.gmra.mrb[0].mxu0 %v3660
        %v3699 = vpop.f32.mrb[0].mxu0
        %v3700 = vadd.f32 0.0, %v3699
        %v3701 = vpop.f32.mrb[0].mxu0
        %v3702 = vpop.f32.mrb[0].mxu0
        %v3703 = vpop.f32.mrb[0].mxu0
        %3704 = vdwg.mxu0
        %v3706 = vsel %vm701, %v3651, 0
        %v3709 = vsel %vm1371, %v3656, 0
        %3711 = vmatprep.subr.bf16.mxu0 0
        %3712 = vmatpush1.bf16.msra.mxu0 %v3709
        %3713 = vmatprep.subr.bf16.mxu0 0
        %3714 = vmatpush1.bf16.msra.mxu0 0
        %3715 = vmatprep.subr.bf16.mxu0 0
        %3716 = vmatpush1.bf16.msra.mxu0 0
        %3717 = vmatprep.subr.bf16.mxu0 0
        %3718 = vmatpush1.bf16.msra.mxu0 0
        %3719 = vmatprep.subr.bf16.mxu0 0
        %3720 = vmatpush1.bf16.msra.mxu0 0
        %3721 = vmatprep.subr.bf16.mxu0 0
        %3722 = vmatpush1.bf16.msra.mxu0 0
        %3723 = vmatprep.subr.bf16.mxu0 0
        %3724 = vmatpush1.bf16.msra.mxu0 0
        %3725 = vmatprep.subr.bf16.mxu0 0
        %3726 = vmatpush1.bf16.msra.mxu0 0
        %3727 = vmatprep.subr.bf16.mxu0 0
        %3728 = vmatpush1.bf16.msra.mxu0 0
        %3729 = vmatprep.subr.bf16.mxu0 0
        %3730 = vmatpush1.bf16.msra.mxu0 0
        %3731 = vmatprep.subr.bf16.mxu0 0
        %3732 = vmatpush1.bf16.msra.mxu0 0
        %3733 = vmatprep.subr.bf16.mxu0 0
        %3734 = vmatpush1.bf16.msra.mxu0 0
        %3735 = vmatprep.subr.bf16.mxu0 0
        %3736 = vmatpush1.bf16.msra.mxu0 0
        %3737 = vmatprep.subr.bf16.mxu0 0
        %3738 = vmatpush1.bf16.msra.mxu0 0
        %3739 = vmatprep.subr.bf16.mxu0 0
        %3740 = vmatpush1.bf16.msra.mxu0 0
        %3741 = vmatprep.subr.bf16.mxu0 0
        %3742 = vmatpush1.bf16.msra.mxu0 0
        %3743 = vmatprep.mubr.bf16.mxu0 0
        %3744 = vmatmul.mubr.bf16.gmra.mrb[0].mxu0 %v3706
        %v3745 = vpop.f32.mrb[0].mxu0
        %v3746 = vadd.f32 0.0, %v3745
        %v3747 = vpop.f32.mrb[0].mxu0
        %v3748 = vpop.f32.mrb[0].mxu0
        %v3749 = vpop.f32.mrb[0].mxu0
        %3750 = vdwg.mxu0
        %v3752 = vsel %vm701, %v3652, 0
        %v3755 = vsel %vm1371, %v3657, 0
        %3757 = vmatprep.subr.bf16.mxu0 0
        %3758 = vmatpush1.bf16.msra.mxu0 %v3755
        %3759 = vmatprep.subr.bf16.mxu0 0
        %3760 = vmatpush1.bf16.msra.mxu0 0
        %3761 = vmatprep.subr.bf16.mxu0 0
        %3762 = vmatpush1.bf16.msra.mxu0 0
        %3763 = vmatprep.subr.bf16.mxu0 0
        %3764 = vmatpush1.bf16.msra.mxu0 0
        %3765 = vmatprep.subr.bf16.mxu0 0
        %3766 = vmatpush1.bf16.msra.mxu0 0
        %3767 = vmatprep.subr.bf16.mxu0 0
        %3768 = vmatpush1.bf16.msra.mxu0 0
        %3769 = vmatprep.subr.bf16.mxu0 0
        %3770 = vmatpush1.bf16.msra.mxu0 0
        %3771 = vmatprep.subr.bf16.mxu0 0
        %3772 = vmatpush1.bf16.msra.mxu0 0
        %3773 = vmatprep.subr.bf16.mxu0 0
        %3774 = vmatpush1.bf16.msra.mxu0 0
        %3775 = vmatprep.subr.bf16.mxu0 0
        %3776 = vmatpush1.bf16.msra.mxu0 0
        %3777 = vmatprep.subr.bf16.mxu0 0
        %3778 = vmatpush1.bf16.msra.mxu0 0
        %3779 = vmatprep.subr.bf16.mxu0 0
        %3780 = vmatpush1.bf16.msra.mxu0 0
        %3781 = vmatprep.subr.bf16.mxu0 0
        %3782 = vmatpush1.bf16.msra.mxu0 0
        %3783 = vmatprep.subr.bf16.mxu0 0
        %3784 = vmatpush1.bf16.msra.mxu0 0
        %3785 = vmatprep.subr.bf16.mxu0 0
        %3786 = vmatpush1.bf16.msra.mxu0 0
        %3787 = vmatprep.subr.bf16.mxu0 0
        %3788 = vmatpush1.bf16.msra.mxu0 0
        %3789 = vmatprep.mubr.bf16.mxu0 0
        %3790 = vmatmul.mubr.bf16.gmra.mrb[0].mxu0 %v3752
        %v3791 = vpop.f32.mrb[0].mxu0
        %v3792 = vadd.f32 0.0, %v3791
        %v3793 = vpop.f32.mrb[0].mxu0
        %v3794 = vpop.f32.mrb[0].mxu0
        %v3795 = vpop.f32.mrb[0].mxu0
        %3796 = vdwg.mxu0
        %v3798 = vsel %vm701, %v3653, 0
        %v3801 = vsel %vm1371, %v3658, 0
        %3803 = vmatprep.subr.bf16.mxu0 0
        %3804 = vmatpush1.bf16.msra.mxu0 %v3801
        %3805 = vmatprep.subr.bf16.mxu0 0
        %3806 = vmatpush1.bf16.msra.mxu0 0
        %3807 = vmatprep.subr.bf16.mxu0 0
        %3808 = vmatpush1.bf16.msra.mxu0 0
        %3809 = vmatprep.subr.bf16.mxu0 0
        %3810 = vmatpush1.bf16.msra.mxu0 0
        %3811 = vmatprep.subr.bf16.mxu0 0
        %3812 = vmatpush1.bf16.msra.mxu0 0
        %3813 = vmatprep.subr.bf16.mxu0 0
        %3814 = vmatpush1.bf16.msra.mxu0 0
        %3815 = vmatprep.subr.bf16.mxu0 0
        %3816 = vmatpush1.bf16.msra.mxu0 0
        %3817 = vmatprep.subr.bf16.mxu0 0
        %3818 = vmatpush1.bf16.msra.mxu0 0
        %3819 = vmatprep.subr.bf16.mxu0 0
        %3820 = vmatpush1.bf16.msra.mxu0 0
        %3821 = vmatprep.subr.bf16.mxu0 0
        %3822 = vmatpush1.bf16.msra.mxu0 0
        %3823 = vmatprep.subr.bf16.mxu0 0
        %3824 = vmatpush1.bf16.msra.mxu0 0
        %3825 = vmatprep.subr.bf16.mxu0 0
        %3826 = vmatpush1.bf16.msra.mxu0 0
        %3827 = vmatprep.subr.bf16.mxu0 0
        %3828 = vmatpush1.bf16.msra.mxu0 0
        %3829 = vmatprep.subr.bf16.mxu0 0
        %3830 = vmatpush1.bf16.msra.mxu0 0
        %3831 = vmatprep.subr.bf16.mxu0 0
        %3832 = vmatpush1.bf16.msra.mxu0 0
        %3833 = vmatprep.subr.bf16.mxu0 0
        %3834 = vmatpush1.bf16.msra.mxu0 0
        %3835 = vmatprep.mubr.bf16.mxu0 0
        %3836 = vmatmul.mubr.bf16.gmra.mrb[0].mxu0 %v3798
        %v3837 = vpop.f32.mrb[0].mxu0
        %v3838 = vadd.f32 0.0, %v3837
        %v3839 = vpop.f32.mrb[0].mxu0
        %v3840 = vpop.f32.mrb[0].mxu0
        %v3841 = vpop.f32.mrb[0].mxu0
        %3842 = vdwg.mxu0
        %v3843 = vsel %vm592, %v3700, 0.0
        %v3844 = vsel %vm592, %v3746, 0.0
        %v3845 = vadd.f32 %v3843, %v3844
        %v3846 = vsel %vm592, %v3792, 0.0
        %v3847 = vadd.f32 %v3845, %v3846
        %v3848 = vsel %vm592, %v3838, 0.0
        %v3849 = vadd.f32 %v3847, %v3848
        %v3850 = vlaneseq
        %v3851 = vshrl.u32 %v3850, 7
        %v3852 = vsub.s32 1, %v3851
        %v3853 = vrot.slane %v2917, %v3852
        %v3854 = vadd.f32 %v3849, %v3853
        %v3855 = vadd.f32 %v3854, %v2909
        %v3856 = vsel %vm592, %v3855, 0.0
        %3857 = vadd.xlane.f32.xlu0 %v3856
        %v3858 = vpop.xlane.xlu0 %3857
        %v3859 = vmul.f32 %v3858, %v596
        %v3860 = vsub.f32 %v3855, %v3859
        %v3861 = vmul.f32 %v3860, %v3860
        %v3862 = vsel %vm592, %v3861, 0.0
        %3863 = vadd.xlane.f32.xlu0 %v3862
        %v3864 = vpop.xlane.xlu0 %3863
        %v3865 = vmul.f32 %v3864, %v596
        %v3866 = vadd.f32 %v3865, 1e-05
        %v3867 = vrsqrt.pop %v3866
        %v3868 = vmul.f32 %v3860, %v3867
        %v3869 = vlaneseq
        %v3870 = vshrl.u32 %v3869, 7
        %v3871 = vsub.s32 2, %v3870
        %v3872 = vrot.slane %v2917, %v3871
        %v3873 = vmul.f32 %v3868, %v3872
        %v3874 = vlaneseq
        %v3875 = vshrl.u32 %v3874, 7
        %v3876 = vsub.s32 3, %v3875
        %v3877 = vrot.slane %v2917, %v3876
        %v3878 = vadd.f32 %v3873, %v3877
        %v3879 = vpack.c.bf16 %v3878, %v3878
        %s3880 = scalar_lea.vmem %s6, 32
        %v3881 = vld [vmem:[%s3880] sm:$0xf]
        %v3882 = vld [vmem:[%s3880 + $0x4] sm:$0xf]
        %v3883 = vld [vmem:[%s3880 + $0x8] sm:$0xf]
        %v3884 = vld [vmem:[%s3880 + $0xc] sm:$0xf]
        %v3885 = vlaneseq
        %v3886 = vshrl.u32 %v3885, 7
        %v3887 = vsub.s32 4, %v3886
        %v3888 = vrot.slane %v2917, %v3887
        %v3893 = vunpack.c.l.b16 %v3881
        %v3894 = vunpack.c.l.b16 %v3882
        %v3895 = vunpack.c.l.b16 %v3883
        %v3896 = vunpack.c.l.b16 %v3884
        %v3897 = vpack.c.b16 %v3894, %v3893
        %v3898 = vpack.c.b16 %v3896, %v3895
        %v3902 = vsel %vm592, %v3879, 0
        %3904 = vmatprep.subr.bf16.mxu0 0
        %3905 = vmatpush1.bf16.msra.mxu0 %v3897
        %3906 = vmatprep.subr.bf16.mxu0 0
        %3907 = vmatpush1.bf16.msra.mxu0 %v3898
        %3908 = vmatprep.subr.bf16.mxu0 0
        %3909 = vmatpush1.bf16.msra.mxu0 0
        %3910 = vmatprep.subr.bf16.mxu0 0
        %3911 = vmatpush1.bf16.msra.mxu0 0
        %3912 = vmatprep.subr.bf16.mxu0 0
        %3913 = vmatpush1.bf16.msra.mxu0 0
        %3914 = vmatprep.subr.bf16.mxu0 0
        %3915 = vmatpush1.bf16.msra.mxu0 0
        %3916 = vmatprep.subr.bf16.mxu0 0
        %3917 = vmatpush1.bf16.msra.mxu0 0
        %3918 = vmatprep.subr.bf16.mxu0 0
        %3919 = vmatpush1.bf16.msra.mxu0 0
        %3920 = vmatprep.subr.bf16.mxu0 0
        %3921 = vmatpush1.bf16.msra.mxu0 0
        %3922 = vmatprep.subr.bf16.mxu0 0
        %3923 = vmatpush1.bf16.msra.mxu0 0
        %3924 = vmatprep.subr.bf16.mxu0 0
        %3925 = vmatpush1.bf16.msra.mxu0 0
        %3926 = vmatprep.subr.bf16.mxu0 0
        %3927 = vmatpush1.bf16.msra.mxu0 0
        %3928 = vmatprep.subr.bf16.mxu0 0
        %3929 = vmatpush1.bf16.msra.mxu0 0
        %3930 = vmatprep.subr.bf16.mxu0 0
        %3931 = vmatpush1.bf16.msra.mxu0 0
        %3932 = vmatprep.subr.bf16.mxu0 0
        %3933 = vmatpush1.bf16.msra.mxu0 0
        %3934 = vmatprep.subr.bf16.mxu0 0
        %3935 = vmatpush1.bf16.msra.mxu0 0
        %3936 = vmatprep.mubr.bf16.mxu0 0
        %3937 = vmatmul.mubr.bf16.gmra.mrb[0].mxu0 %v3902
        %v3938 = vpop.f32.mrb[0].mxu0
        %v3939 = vadd.f32 %v3888, %v3938
        %v3940 = vpop.f32.mrb[0].mxu0
        %v3941 = vpop.f32.mrb[0].mxu0
        %v3942 = vpop.f32.mrb[0].mxu0
        %3943 = vdwg.mxu0
        %v3944 = vmul.f32 %v3939, 0.5
        %v3945 = vmul.f32 %v3939, 0.044715
        %v3946 = vmul.f32 %v3945, %v3939
        %v3947 = vmul.f32 %v3946, %v3939
        %v3948 = vadd.f32 %v3939, %v3947
        %v3949 = vmul.f32 %v3948, 0.7978846
        %v3950 = vtanh.pop %v3949
        %v3951 = vadd.f32 %v3950, 1.0
        %v3952 = vmul.f32 %v3944, %v3951
        %v3953 = vpack.c.bf16 %v3952, %v3952
        %s3954 = scalar_lea.vmem %s7, 64
        %v3955 = vld [vmem:[%s3954] sm:$0xf]
        %v3956 = vld [vmem:[%s3954 + $0x4] sm:$0xf]
        %v3957 = vld [vmem:[%s3954 + $0x8] sm:$0xf]
        %v3958 = vld [vmem:[%s3954 + $0xc] sm:$0xf]
        %v3959 = vld [vmem:[%s3954 + $0x10] sm:$0xf]
        %v3960 = vld [vmem:[%s3954 + $0x14] sm:$0xf]
        %v3961 = vld [vmem:[%s3954 + $0x18] sm:$0xf]
        %v3962 = vld [vmem:[%s3954 + $0x1c] sm:$0xf]
        %v3963 = vlaneseq
        %v3964 = vshrl.u32 %v3963, 7
        %v3965 = vsub.s32 5, %v3964
        %v3966 = vrot.slane %v2917, %v3965
        %v3975 = vunpack.c.l.b16 %v3955
        %v3976 = vunpack.c.l.b16 %v3956
        %v3977 = vunpack.c.l.b16 %v3957
        %v3978 = vunpack.c.l.b16 %v3958
        %v3979 = vunpack.c.l.b16 %v3959
        %v3980 = vunpack.c.l.b16 %v3960
        %v3981 = vunpack.c.l.b16 %v3961
        %v3982 = vunpack.c.l.b16 %v3962
        %v3983 = vpack.c.b16 %v3976, %v3975
        %v3984 = vpack.c.b16 %v3978, %v3977
        %v3985 = vpack.c.b16 %v3980, %v3979
        %v3986 = vpack.c.b16 %v3982, %v3981
        %v3992 = vsel %vm1699, %v3953, 0
        %3994 = vmatprep.subr.bf16.mxu0 0
        %3995 = vmatpush1.bf16.msra.mxu0 %v3983
        %3996 = vmatprep.subr.bf16.mxu0 0
        %3997 = vmatpush1.bf16.msra.mxu0 %v3984
        %3998 = vmatprep.subr.bf16.mxu0 0
        %3999 = vmatpush1.bf16.msra.mxu0 %v3985
        %4000 = vmatprep.subr.bf16.mxu0 0
        %4001 = vmatpush1.bf16.msra.mxu0 %v3986
        %4002 = vmatprep.subr.bf16.mxu0 0
        %4003 = vmatpush1.bf16.msra.mxu0 0
        %4004 = vmatprep.subr.bf16.mxu0 0
        %4005 = vmatpush1.bf16.msra.mxu0 0
        %4006 = vmatprep.subr.bf16.mxu0 0
        %4007 = vmatpush1.bf16.msra.mxu0 0
        %4008 = vmatprep.subr.bf16.mxu0 0
        %4009 = vmatpush1.bf16.msra.mxu0 0
        %4010 = vmatprep.subr.bf16.mxu0 0
        %4011 = vmatpush1.bf16.msra.mxu0 0
        %4012 = vmatprep.subr.bf16.mxu0 0
        %4013 = vmatpush1.bf16.msra.mxu0 0
        %4014 = vmatprep.subr.bf16.mxu0 0
        %4015 = vmatpush1.bf16.msra.mxu0 0
        %4016 = vmatprep.subr.bf16.mxu0 0
        %4017 = vmatpush1.bf16.msra.mxu0 0
        %4018 = vmatprep.subr.bf16.mxu0 0
        %4019 = vmatpush1.bf16.msra.mxu0 0
        %4020 = vmatprep.subr.bf16.mxu0 0
        %4021 = vmatpush1.bf16.msra.mxu0 0
        %4022 = vmatprep.subr.bf16.mxu0 0
        %4023 = vmatpush1.bf16.msra.mxu0 0
        %4024 = vmatprep.subr.bf16.mxu0 0
        %4025 = vmatpush1.bf16.msra.mxu0 0
        %4026 = vmatprep.mubr.bf16.mxu0 0
        %4027 = vmatmul.mubr.bf16.gmra.mrb[0].mxu0 %v3992
        %v4028 = vpop.f32.mrb[0].mxu0
        %v4029 = vadd.f32 %v3966, %v4028
        %v4030 = vpop.f32.mrb[0].mxu0
        %v4031 = vpop.f32.mrb[0].mxu0
        %v4032 = vpop.f32.mrb[0].mxu0
        %4033 = vdwg.mxu0
        %v4034 = vadd.f32 %v4029, %v3878
        %v4035 = vsel %vm592, %v4034, 0.0
        %4036 = vadd.xlane.f32.xlu0 %v4035
        %v4037 = vpop.xlane.xlu0 %4036
        %v4038 = vmul.f32 %v4037, %v596
        %v4039 = vsub.f32 %v4034, %v4038
        %v4040 = vmul.f32 %v4039, %v4039
        %v4041 = vsel %vm592, %v4040, 0.0
        %4042 = vadd.xlane.f32.xlu0 %v4041
        %v4043 = vpop.xlane.xlu0 %4042
        %v4044 = vmul.f32 %v4043, %v596
        %v4045 = vadd.f32 %v4044, 1e-05
        %v4046 = vrsqrt.pop %v4045
        %v4047 = vmul.f32 %v4039, %v4046
        %v4048 = vlaneseq
        %v4049 = vshrl.u32 %v4048, 7
        %v4050 = vsub.s32 6, %v4049
        %v4051 = vrot.slane %v2917, %v4050
        %v4052 = vmul.f32 %v4047, %v4051
        %v4053 = vlaneseq
        %v4054 = vshrl.u32 %v4053, 7
        %v4055 = vsub.s32 7, %v4054
        %v4056 = vrot.slane %v2917, %v4055
        %v4057 = vadd.f32 %v4052, %v4056
        %4059 = vrot.lane.b32.xlu0 %v4057, 64
        %v4060 = vpop.permute.xlu0 %4059
        %vm4062 = vcmask 785920
        %4063 = vst.msk [vmem:[%s467] sm:$0xff] %vm4062, %v4060
        %s4064 = scalar_lea.vmem %s8, 24
        %v4065 = vld [vmem:[%s4064] sm:$0xff]
        %v4066 = vpack.c.bf16 %v4057, %v4057
        %s4067 = scalar_lea.vmem %s4, 48
        %v4068 = vld [vmem:[%s4067] sm:$0xf]
        %v4069 = vld [vmem:[%s4067 + $0x4] sm:$0xf]
        %v4070 = vld [vmem:[%s4067 + $0x8] sm:$0xf]
        %v4071 = vld [vmem:[%s4067 + $0xc] sm:$0xf]
        %v4072 = vlaneseq
        %v4073 = vshrl.u32 %v4072, 7
        %v4074 = vsub.s32 0, %v4073
        %v4075 = vrot.slane %v4065, %v4074
        %v4080 = vunpack.c.l.b16 %v4068
        %v4081 = vunpack.c.l.b16 %v4069
        %v4082 = vunpack.c.l.b16 %v4070
        %v4083 = vunpack.c.l.b16 %v4071
        %v4084 = vpack.c.b16 %v4081, %v4080
        %v4085 = vpack.c.b16 %v4083, %v4082
        %v4089 = vsel %vm592, %v4066, 0
        %4091 = vmatprep.subr.bf16.mxu0 0
        %4092 = vmatpush1.bf16.msra.mxu0 %v4084
        %4093 = vmatprep.subr.bf16.mxu0 0
        %4094 = vmatpush1.bf16.msra.mxu0 %v4085
        %4095 = vmatprep.subr.bf16.mxu0 0
        %4096 = vmatpush1.bf16.msra.mxu0 0
        %4097 = vmatprep.subr.bf16.mxu0 0
        %4098 = vmatpush1.bf16.msra.mxu0 0
        %4099 = vmatprep.subr.bf16.mxu0 0
        %4100 = vmatpush1.bf16.msra.mxu0 0
        %4101 = vmatprep.subr.bf16.mxu0 0
        %4102 = vmatpush1.bf16.msra.mxu0 0
        %4103 = vmatprep.subr.bf16.mxu0 0
        %4104 = vmatpush1.bf16.msra.mxu0 0
        %4105 = vmatprep.subr.bf16.mxu0 0
        %4106 = vmatpush1.bf16.msra.mxu0 0
        %4107 = vmatprep.subr.bf16.mxu0 0
        %4108 = vmatpush1.bf16.msra.mxu0 0
        %4109 = vmatprep.subr.bf16.mxu0 0
        %4110 = vmatpush1.bf16.msra.mxu0 0
        %4111 = vmatprep.subr.bf16.mxu0 0
        %4112 = vmatpush1.bf16.msra.mxu0 0
        %4113 = vmatprep.subr.bf16.mxu0 0
        %4114 = vmatpush1.bf16.msra.mxu0 0
        %4115 = vmatprep.subr.bf16.mxu0 0
        %4116 = vmatpush1.bf16.msra.mxu0 0
        %4117 = vmatprep.subr.bf16.mxu0 0
        %4118 = vmatpush1.bf16.msra.mxu0 0
        %4119 = vmatprep.subr.bf16.mxu0 0
        %4120 = vmatpush1.bf16.msra.mxu0 0
        %4121 = vmatprep.subr.bf16.mxu0 0
        %4122 = vmatpush1.bf16.msra.mxu0 0
        %4123 = vmatprep.mubr.bf16.mxu0 0
        %4124 = vmatmul.mubr.bf16.gmra.mrb[0].mxu0 %v4089
        %v4125 = vpop.f32.mrb[0].mxu0
        %v4126 = vadd.f32 %v4075, %v4125
        %v4127 = vpop.f32.mrb[0].mxu0
        %v4128 = vpop.f32.mrb[0].mxu0
        %v4129 = vpop.f32.mrb[0].mxu0
        %4130 = vdwg.mxu0
        %4132 = vrot.lane.b32.xlu0 %v4126, 120
        %v4133 = vpop.permute.xlu0 %4132
        %4134 = vrot.lane.b32.xlu0 %v4126, 112
        %v4135 = vpop.permute.xlu0 %4134
        %4136 = vrot.lane.b32.xlu0 %v4126, 104
        %v4137 = vpop.permute.xlu0 %4136
        %4138 = vrot.lane.b32.xlu0 %v4126, 96
        %v4139 = vpop.permute.xlu0 %4138
        %v4140 = vsel %vm701, %v4126, 0
        %v4142 = vsel %vm701, %v4139, 0
        %4144 = vmatprep.subr.mxu0 0.0
        %4145 = vmatpush1.xpose.msra.mxu0 %v4142
        %4146 = vmatprep.subr.mxu0 0.0
        %4147 = vmatpush1.xpose.msra.mxu0 0.0
        %4148 = vmatprep.subr.mxu0 0.0
        %4149 = vmatpush1.xpose.msra.mxu0 0.0
        %4150 = vmatprep.subr.mxu0 0.0
        %4151 = vmatpush1.xpose.msra.mxu0 0.0
        %4152 = vmatprep.subr.mxu0 0.0
        %4153 = vmatpush1.xpose.msra.mxu0 0.0
        %4154 = vmatprep.subr.mxu0 0.0
        %4155 = vmatpush1.xpose.msra.mxu0 0.0
        %4156 = vmatprep.subr.mxu0 0.0
        %4157 = vmatpush1.xpose.msra.mxu0 0.0
        %4158 = vmatprep.subr.mxu0 0.0
        %4159 = vmatpush1.xpose.msra.mxu0 0.0
        %4160 = vmatprep.subr.mxu0 0.0
        %4161 = vmatpush1.xpose.msra.mxu0 0.0
        %4162 = vmatprep.subr.mxu0 0.0
        %4163 = vmatpush1.xpose.msra.mxu0 0.0
        %4164 = vmatprep.subr.mxu0 0.0
        %4165 = vmatpush1.xpose.msra.mxu0 0.0
        %4166 = vmatprep.subr.mxu0 0.0
        %4167 = vmatpush1.xpose.msra.mxu0 0.0
        %4168 = vmatprep.subr.mxu0 0.0
        %4169 = vmatpush1.xpose.msra.mxu0 0.0
        %4170 = vmatprep.subr.mxu0 0.0
        %4171 = vmatpush1.xpose.msra.mxu0 0.0
        %4172 = vmatprep.subr.mxu0 0.0
        %4173 = vmatpush1.xpose.msra.mxu0 0.0
        %4174 = vmatprep.subr.mxu0 0.0
        %4175 = vmatpush1.xpose.msra.mxu0 0.0
        %4176 = vmatprep.subr.mxu0 0.0
        %4177 = vmatpush1.xpose.msra.mxu0 0.0
        %4178 = vmatprep.subr.mxu0 0.0
        %4179 = vmatpush1.xpose.msra.mxu0 0.0
        %4180 = vmatprep.subr.mxu0 0.0
        %4181 = vmatpush1.xpose.msra.mxu0 0.0
        %4182 = vmatprep.subr.mxu0 0.0
        %4183 = vmatpush1.xpose.msra.mxu0 0.0
        %4184 = vmatprep.subr.mxu0 0.0
        %4185 = vmatpush1.xpose.msra.mxu0 0.0
        %4186 = vmatprep.subr.mxu0 0.0
        %4187 = vmatpush1.xpose.msra.mxu0 0.0
        %4188 = vmatprep.subr.mxu0 0.0
        %4189 = vmatpush1.xpose.msra.mxu0 0.0
        %4190 = vmatprep.subr.mxu0 0.0
        %4191 = vmatpush1.xpose.msra.mxu0 0.0
        %4192 = vmatprep.subr.mxu0 0.0
        %4193 = vmatpush1.xpose.msra.mxu0 0.0
        %4194 = vmatprep.subr.mxu0 0.0
        %4195 = vmatpush1.xpose.msra.mxu0 0.0
        %4196 = vmatprep.subr.mxu0 0.0
        %4197 = vmatpush1.xpose.msra.mxu0 0.0
        %4198 = vmatprep.subr.mxu0 0.0
        %4199 = vmatpush1.xpose.msra.mxu0 0.0
        %4200 = vmatprep.subr.mxu0 0.0
        %4201 = vmatpush1.xpose.msra.mxu0 0.0
        %4202 = vmatprep.subr.mxu0 0.0
        %4203 = vmatpush1.xpose.msra.mxu0 0.0
        %4204 = vmatprep.subr.mxu0 0.0
        %4205 = vmatpush1.xpose.msra.mxu0 0.0
        %4206 = vmatprep.subr.mxu0 0.0
        %4207 = vmatpush1.xpose.msra.mxu0 0.0
        %4208 = vmatprep.mubr.f32.mxu0 0.0
        %4209 = vmatmul.mubr.f32.gmra.mrb[0].mxu0 %v4140
        %v4210 = vpop.f32.mrb[0].mxu0
        %v4211 = vadd.f32 0.0, %v4210
        %v4212 = vpop.f32.mrb[0].mxu0
        %4213 = vdwg.mxu0
        %4214 = vrot.lane.b32.xlu0 %v4133, 96
        %v4215 = vpop.permute.xlu0 %4214
        %v4216 = vsel %vm701, %v4133, 0
        %v4218 = vsel %vm701, %v4215, 0
        %4220 = vmatprep.subr.mxu0 0.0
        %4221 = vmatpush1.xpose.msra.mxu0 %v4218
        %4222 = vmatprep.subr.mxu0 0.0
        %4223 = vmatpush1.xpose.msra.mxu0 0.0
        %4224 = vmatprep.subr.mxu0 0.0
        %4225 = vmatpush1.xpose.msra.mxu0 0.0
        %4226 = vmatprep.subr.mxu0 0.0
        %4227 = vmatpush1.xpose.msra.mxu0 0.0
        %4228 = vmatprep.subr.mxu0 0.0
        %4229 = vmatpush1.xpose.msra.mxu0 0.0
        %4230 = vmatprep.subr.mxu0 0.0
        %4231 = vmatpush1.xpose.msra.mxu0 0.0
        %4232 = vmatprep.subr.mxu0 0.0
        %4233 = vmatpush1.xpose.msra.mxu0 0.0
        %4234 = vmatprep.subr.mxu0 0.0
        %4235 = vmatpush1.xpose.msra.mxu0 0.0
        %4236 = vmatprep.subr.mxu0 0.0
        %4237 = vmatpush1.xpose.msra.mxu0 0.0
        %4238 = vmatprep.subr.mxu0 0.0
        %4239 = vmatpush1.xpose.msra.mxu0 0.0
        %4240 = vmatprep.subr.mxu0 0.0
        %4241 = vmatpush1.xpose.msra.mxu0 0.0
        %4242 = vmatprep.subr.mxu0 0.0
        %4243 = vmatpush1.xpose.msra.mxu0 0.0
        %4244 = vmatprep.subr.mxu0 0.0
        %4245 = vmatpush1.xpose.msra.mxu0 0.0
        %4246 = vmatprep.subr.mxu0 0.0
        %4247 = vmatpush1.xpose.msra.mxu0 0.0
        %4248 = vmatprep.subr.mxu0 0.0
        %4249 = vmatpush1.xpose.msra.mxu0 0.0
        %4250 = vmatprep.subr.mxu0 0.0
        %4251 = vmatpush1.xpose.msra.mxu0 0.0
        %4252 = vmatprep.subr.mxu0 0.0
        %4253 = vmatpush1.xpose.msra.mxu0 0.0
        %4254 = vmatprep.subr.mxu0 0.0
        %4255 = vmatpush1.xpose.msra.mxu0 0.0
        %4256 = vmatprep.subr.mxu0 0.0
        %4257 = vmatpush1.xpose.msra.mxu0 0.0
        %4258 = vmatprep.subr.mxu0 0.0
        %4259 = vmatpush1.xpose.msra.mxu0 0.0
        %4260 = vmatprep.subr.mxu0 0.0
        %4261 = vmatpush1.xpose.msra.mxu0 0.0
        %4262 = vmatprep.subr.mxu0 0.0
        %4263 = vmatpush1.xpose.msra.mxu0 0.0
        %4264 = vmatprep.subr.mxu0 0.0
        %4265 = vmatpush1.xpose.msra.mxu0 0.0
        %4266 = vmatprep.subr.mxu0 0.0
        %4267 = vmatpush1.xpose.msra.mxu0 0.0
        %4268 = vmatprep.subr.mxu0 0.0
        %4269 = vmatpush1.xpose.msra.mxu0 0.0
        %4270 = vmatprep.subr.mxu0 0.0
        %4271 = vmatpush1.xpose.msra.mxu0 0.0
        %4272 = vmatprep.subr.mxu0 0.0
        %4273 = vmatpush1.xpose.msra.mxu0 0.0
        %4274 = vmatprep.subr.mxu0 0.0
        %4275 = vmatpush1.xpose.msra.mxu0 0.0
        %4276 = vmatprep.subr.mxu0 0.0
        %4277 = vmatpush1.xpose.msra.mxu0 0.0
        %4278 = vmatprep.subr.mxu0 0.0
        %4279 = vmatpush1.xpose.msra.mxu0 0.0
        %4280 = vmatprep.subr.mxu0 0.0
        %4281 = vmatpush1.xpose.msra.mxu0 0.0
        %4282 = vmatprep.subr.mxu0 0.0
        %4283 = vmatpush1.xpose.msra.mxu0 0.0
        %4284 = vmatprep.mubr.f32.mxu0 0.0
        %4285 = vmatmul.mubr.f32.gmra.mrb[0].mxu0 %v4216
        %v4286 = vpop.f32.mrb[0].mxu0
        %v4287 = vadd.f32 0.0, %v4286
        %v4288 = vpop.f32.mrb[0].mxu0
        %4289 = vdwg.mxu0
        %4290 = vrot.lane.b32.xlu0 %v4135, 96
        %v4291 = vpop.permute.xlu0 %4290
        %v4292 = vsel %vm701, %v4135, 0
        %v4294 = vsel %vm701, %v4291, 0
        %4296 = vmatprep.subr.mxu0 0.0
        %4297 = vmatpush1.xpose.msra.mxu0 %v4294
        %4298 = vmatprep.subr.mxu0 0.0
        %4299 = vmatpush1.xpose.msra.mxu0 0.0
        %4300 = vmatprep.subr.mxu0 0.0
        %4301 = vmatpush1.xpose.msra.mxu0 0.0
        %4302 = vmatprep.subr.mxu0 0.0
        %4303 = vmatpush1.xpose.msra.mxu0 0.0
        %4304 = vmatprep.subr.mxu0 0.0
        %4305 = vmatpush1.xpose.msra.mxu0 0.0
        %4306 = vmatprep.subr.mxu0 0.0
        %4307 = vmatpush1.xpose.msra.mxu0 0.0
        %4308 = vmatprep.subr.mxu0 0.0
        %4309 = vmatpush1.xpose.msra.mxu0 0.0
        %4310 = vmatprep.subr.mxu0 0.0
        %4311 = vmatpush1.xpose.msra.mxu0 0.0
        %4312 = vmatprep.subr.mxu0 0.0
        %4313 = vmatpush1.xpose.msra.mxu0 0.0
        %4314 = vmatprep.subr.mxu0 0.0
        %4315 = vmatpush1.xpose.msra.mxu0 0.0
        %4316 = vmatprep.subr.mxu0 0.0
        %4317 = vmatpush1.xpose.msra.mxu0 0.0
        %4318 = vmatprep.subr.mxu0 0.0
        %4319 = vmatpush1.xpose.msra.mxu0 0.0
        %4320 = vmatprep.subr.mxu0 0.0
        %4321 = vmatpush1.xpose.msra.mxu0 0.0
        %4322 = vmatprep.subr.mxu0 0.0
        %4323 = vmatpush1.xpose.msra.mxu0 0.0
        %4324 = vmatprep.subr.mxu0 0.0
        %4325 = vmatpush1.xpose.msra.mxu0 0.0
        %4326 = vmatprep.subr.mxu0 0.0
        %4327 = vmatpush1.xpose.msra.mxu0 0.0
        %4328 = vmatprep.subr.mxu0 0.0
        %4329 = vmatpush1.xpose.msra.mxu0 0.0
        %4330 = vmatprep.subr.mxu0 0.0
        %4331 = vmatpush1.xpose.msra.mxu0 0.0
        %4332 = vmatprep.subr.mxu0 0.0
        %4333 = vmatpush1.xpose.msra.mxu0 0.0
        %4334 = vmatprep.subr.mxu0 0.0
        %4335 = vmatpush1.xpose.msra.mxu0 0.0
        %4336 = vmatprep.subr.mxu0 0.0
        %4337 = vmatpush1.xpose.msra.mxu0 0.0
        %4338 = vmatprep.subr.mxu0 0.0
        %4339 = vmatpush1.xpose.msra.mxu0 0.0
        %4340 = vmatprep.subr.mxu0 0.0
        %4341 = vmatpush1.xpose.msra.mxu0 0.0
        %4342 = vmatprep.subr.mxu0 0.0
        %4343 = vmatpush1.xpose.msra.mxu0 0.0
        %4344 = vmatprep.subr.mxu0 0.0
        %4345 = vmatpush1.xpose.msra.mxu0 0.0
        %4346 = vmatprep.subr.mxu0 0.0
        %4347 = vmatpush1.xpose.msra.mxu0 0.0
        %4348 = vmatprep.subr.mxu0 0.0
        %4349 = vmatpush1.xpose.msra.mxu0 0.0
        %4350 = vmatprep.subr.mxu0 0.0
        %4351 = vmatpush1.xpose.msra.mxu0 0.0
        %4352 = vmatprep.subr.mxu0 0.0
        %4353 = vmatpush1.xpose.msra.mxu0 0.0
        %4354 = vmatprep.subr.mxu0 0.0
        %4355 = vmatpush1.xpose.msra.mxu0 0.0
        %4356 = vmatprep.subr.mxu0 0.0
        %4357 = vmatpush1.xpose.msra.mxu0 0.0
        %4358 = vmatprep.subr.mxu0 0.0
        %4359 = vmatpush1.xpose.msra.mxu0 0.0
        %4360 = vmatprep.mubr.f32.mxu0 0.0
        %4361 = vmatmul.mubr.f32.gmra.mrb[0].mxu0 %v4292
        %v4362 = vpop.f32.mrb[0].mxu0
        %v4363 = vadd.f32 0.0, %v4362
        %v4364 = vpop.f32.mrb[0].mxu0
        %4365 = vdwg.mxu0
        %4366 = vrot.lane.b32.xlu0 %v4137, 96
        %v4367 = vpop.permute.xlu0 %4366
        %v4368 = vsel %vm701, %v4137, 0
        %v4370 = vsel %vm701, %v4367, 0
        %4372 = vmatprep.subr.mxu0 0.0
        %4373 = vmatpush1.xpose.msra.mxu0 %v4370
        %4374 = vmatprep.subr.mxu0 0.0
        %4375 = vmatpush1.xpose.msra.mxu0 0.0
        %4376 = vmatprep.subr.mxu0 0.0
        %4377 = vmatpush1.xpose.msra.mxu0 0.0
        %4378 = vmatprep.subr.mxu0 0.0
        %4379 = vmatpush1.xpose.msra.mxu0 0.0
        %4380 = vmatprep.subr.mxu0 0.0
        %4381 = vmatpush1.xpose.msra.mxu0 0.0
        %4382 = vmatprep.subr.mxu0 0.0
        %4383 = vmatpush1.xpose.msra.mxu0 0.0
        %4384 = vmatprep.subr.mxu0 0.0
        %4385 = vmatpush1.xpose.msra.mxu0 0.0
        %4386 = vmatprep.subr.mxu0 0.0
        %4387 = vmatpush1.xpose.msra.mxu0 0.0
        %4388 = vmatprep.subr.mxu0 0.0
        %4389 = vmatpush1.xpose.msra.mxu0 0.0
        %4390 = vmatprep.subr.mxu0 0.0
        %4391 = vmatpush1.xpose.msra.mxu0 0.0
        %4392 = vmatprep.subr.mxu0 0.0
        %4393 = vmatpush1.xpose.msra.mxu0 0.0
        %4394 = vmatprep.subr.mxu0 0.0
        %4395 = vmatpush1.xpose.msra.mxu0 0.0
        %4396 = vmatprep.subr.mxu0 0.0
        %4397 = vmatpush1.xpose.msra.mxu0 0.0
        %4398 = vmatprep.subr.mxu0 0.0
        %4399 = vmatpush1.xpose.msra.mxu0 0.0
        %4400 = vmatprep.subr.mxu0 0.0
        %4401 = vmatpush1.xpose.msra.mxu0 0.0
        %4402 = vmatprep.subr.mxu0 0.0
        %4403 = vmatpush1.xpose.msra.mxu0 0.0
        %4404 = vmatprep.subr.mxu0 0.0
        %4405 = vmatpush1.xpose.msra.mxu0 0.0
        %4406 = vmatprep.subr.mxu0 0.0
        %4407 = vmatpush1.xpose.msra.mxu0 0.0
        %4408 = vmatprep.subr.mxu0 0.0
        %4409 = vmatpush1.xpose.msra.mxu0 0.0
        %4410 = vmatprep.subr.mxu0 0.0
        %4411 = vmatpush1.xpose.msra.mxu0 0.0
        %4412 = vmatprep.subr.mxu0 0.0
        %4413 = vmatpush1.xpose.msra.mxu0 0.0
        %4414 = vmatprep.subr.mxu0 0.0
        %4415 = vmatpush1.xpose.msra.mxu0 0.0
        %4416 = vmatprep.subr.mxu0 0.0
        %4417 = vmatpush1.xpose.msra.mxu0 0.0
        %4418 = vmatprep.subr.mxu0 0.0
        %4419 = vmatpush1.xpose.msra.mxu0 0.0
        %4420 = vmatprep.subr.mxu0 0.0
        %4421 = vmatpush1.xpose.msra.mxu0 0.0
        %4422 = vmatprep.subr.mxu0 0.0
        %4423 = vmatpush1.xpose.msra.mxu0 0.0
        %4424 = vmatprep.subr.mxu0 0.0
        %4425 = vmatpush1.xpose.msra.mxu0 0.0
        %4426 = vmatprep.subr.mxu0 0.0
        %4427 = vmatpush1.xpose.msra.mxu0 0.0
        %4428 = vmatprep.subr.mxu0 0.0
        %4429 = vmatpush1.xpose.msra.mxu0 0.0
        %4430 = vmatprep.subr.mxu0 0.0
        %4431 = vmatpush1.xpose.msra.mxu0 0.0
        %4432 = vmatprep.subr.mxu0 0.0
        %4433 = vmatpush1.xpose.msra.mxu0 0.0
        %4434 = vmatprep.subr.mxu0 0.0
        %4435 = vmatpush1.xpose.msra.mxu0 0.0
        %4436 = vmatprep.mubr.f32.mxu0 0.0
        %4437 = vmatmul.mubr.f32.gmra.mrb[0].mxu0 %v4368
        %v4438 = vpop.f32.mrb[0].mxu0
        %v4439 = vadd.f32 0.0, %v4438
        %v4440 = vpop.f32.mrb[0].mxu0
        %4441 = vdwg.mxu0
        %v4442 = vmul.f32 %v4211, 0.35355338
        %v4443 = vmul.f32 %v4287, 0.35355338
        %v4444 = vmul.f32 %v4363, 0.35355338
        %v4445 = vmul.f32 %v4439, 0.35355338
        %v4446 = vadd.f32 %v4442, %v625
        %v4447 = vadd.f32 %v4443, %v625
        %v4448 = vadd.f32 %v4444, %v625
        %v4449 = vadd.f32 %v4445, %v625
        %v4450 = vsel %vm701, %v4446, -inf
        %4451 = vmax.xlane.f32.xlu0 %v4450
        %v4452 = vpop.xlane.xlu0 %4451
        %v4453 = vsel %vm701, %v4447, -inf
        %4454 = vmax.xlane.f32.xlu0 %v4453
        %v4455 = vpop.xlane.xlu0 %4454
        %v4456 = vsel %vm701, %v4448, -inf
        %4457 = vmax.xlane.f32.xlu0 %v4456
        %v4458 = vpop.xlane.xlu0 %4457
        %v4459 = vsel %vm701, %v4449, -inf
        %4460 = vmax.xlane.f32.xlu0 %v4459
        %v4461 = vpop.xlane.xlu0 %4460
        %v4462 = vsub.f32 %v4446, %v4452
        %v4463 = vsub.f32 %v4447, %v4455
        %v4464 = vsub.f32 %v4448, %v4458
        %v4465 = vsub.f32 %v4449, %v4461
        %v4466 = vmul.f32 %v4462, 1.442695
        %v4467 = vpow.pop %v4466
        %v4468 = vmul.f32 %v4463, 1.442695
        %v4469 = vpow.pop %v4468
        %v4470 = vmul.f32 %v4464, 1.442695
        %v4471 = vpow.pop %v4470
        %v4472 = vmul.f32 %v4465, 1.442695
        %v4473 = vpow.pop %v4472
        %v4474 = vsel %vm701, %v4467, 0.0
        %4475 = vadd.xlane.f32.xlu0 %v4474
        %v4476 = vpop.xlane.xlu0 %4475
        %v4477 = vsel %vm701, %v4469, 0.0
        %4478 = vadd.xlane.f32.xlu0 %v4477
        %v4479 = vpop.xlane.xlu0 %4478
        %v4480 = vsel %vm701, %v4471, 0.0
        %4481 = vadd.xlane.f32.xlu0 %v4480
        %v4482 = vpop.xlane.xlu0 %4481
        %v4483 = vsel %vm701, %v4473, 0.0
        %4484 = vadd.xlane.f32.xlu0 %v4483
        %v4485 = vpop.xlane.xlu0 %4484
        %v4486 = vrcp.pop %v4476
        %v4487 = vrcp.pop %v4479
        %v4488 = vrcp.pop %v4482
        %v4489 = vrcp.pop %v4485
        %v4490 = vmul.f32 %v4467, %v4486
        %v4491 = vmul.f32 %v4469, %v4487
        %v4492 = vmul.f32 %v4471, %v4488
        %v4493 = vmul.f32 %v4473, %v4489
        %4494 = vrot.lane.b32.xlu0 %v4126, 64
        %v4495 = vpop.permute.xlu0 %4494
        %v4498 = vsel %vm701, %v4490, 0
        %4500 = vmatprep.subr.mxu0 0.0
        %4501 = vmatpush1.msra.mxu0 %v4495
        %4502 = vmatprep.subr.mxu0 0.0
        %4503 = vmatpush1.msra.mxu0 0.0
        %4504 = vmatprep.subr.mxu0 0.0
        %4505 = vmatpush1.msra.mxu0 0.0
        %4506 = vmatprep.subr.mxu0 0.0
        %4507 = vmatpush1.msra.mxu0 0.0
        %4508 = vmatprep.subr.mxu0 0.0
        %4509 = vmatpush1.msra.mxu0 0.0
        %4510 = vmatprep.subr.mxu0 0.0
        %4511 = vmatpush1.msra.mxu0 0.0
        %4512 = vmatprep.subr.mxu0 0.0
        %4513 = vmatpush1.msra.mxu0 0.0
        %4514 = vmatprep.subr.mxu0 0.0
        %4515 = vmatpush1.msra.mxu0 0.0
        %4516 = vmatprep.subr.mxu0 0.0
        %4517 = vmatpush1.msra.mxu0 0.0
        %4518 = vmatprep.subr.mxu0 0.0
        %4519 = vmatpush1.msra.mxu0 0.0
        %4520 = vmatprep.subr.mxu0 0.0
        %4521 = vmatpush1.msra.mxu0 0.0
        %4522 = vmatprep.subr.mxu0 0.0
        %4523 = vmatpush1.msra.mxu0 0.0
        %4524 = vmatprep.subr.mxu0 0.0
        %4525 = vmatpush1.msra.mxu0 0.0
        %4526 = vmatprep.subr.mxu0 0.0
        %4527 = vmatpush1.msra.mxu0 0.0
        %4528 = vmatprep.subr.mxu0 0.0
        %4529 = vmatpush1.msra.mxu0 0.0
        %4530 = vmatprep.subr.mxu0 0.0
        %4531 = vmatpush1.msra.mxu0 0.0
        %4532 = vmatprep.subr.mxu0 0.0
        %4533 = vmatpush1.msra.mxu0 0.0
        %4534 = vmatprep.subr.mxu0 0.0
        %4535 = vmatpush1.msra.mxu0 0.0
        %4536 = vmatprep.subr.mxu0 0.0
        %4537 = vmatpush1.msra.mxu0 0.0
        %4538 = vmatprep.subr.mxu0 0.0
        %4539 = vmatpush1.msra.mxu0 0.0
        %4540 = vmatprep.subr.mxu0 0.0
        %4541 = vmatpush1.msra.mxu0 0.0
        %4542 = vmatprep.subr.mxu0 0.0
        %4543 = vmatpush1.msra.mxu0 0.0
        %4544 = vmatprep.subr.mxu0 0.0
        %4545 = vmatpush1.msra.mxu0 0.0
        %4546 = vmatprep.subr.mxu0 0.0
        %4547 = vmatpush1.msra.mxu0 0.0
        %4548 = vmatprep.subr.mxu0 0.0
        %4549 = vmatpush1.msra.mxu0 0.0
        %4550 = vmatprep.subr.mxu0 0.0
        %4551 = vmatpush1.msra.mxu0 0.0
        %4552 = vmatprep.subr.mxu0 0.0
        %4553 = vmatpush1.msra.mxu0 0.0
        %4554 = vmatprep.subr.mxu0 0.0
        %4555 = vmatpush1.msra.mxu0 0.0
        %4556 = vmatprep.subr.mxu0 0.0
        %4557 = vmatpush1.msra.mxu0 0.0
        %4558 = vmatprep.subr.mxu0 0.0
        %4559 = vmatpush1.msra.mxu0 0.0
        %4560 = vmatprep.subr.mxu0 0.0
        %4561 = vmatpush1.msra.mxu0 0.0
        %4562 = vmatprep.subr.mxu0 0.0
        %4563 = vmatpush1.msra.mxu0 0.0
        %4564 = vmatprep.mubr.f32.mxu0 0.0
        %4565 = vmatmul.mubr.f32.gmra.mrb[0].mxu0 %v4498
        %v4566 = vpop.f32.mrb[0].mxu0
        %v4567 = vadd.f32 0.0, %v4566
        %v4568 = vpop.f32.mrb[0].mxu0
        %4569 = vdwg.mxu0
        %4570 = vrot.lane.b32.xlu0 %v4133, 64
        %v4571 = vpop.permute.xlu0 %4570
        %v4574 = vsel %vm701, %v4491, 0
        %4576 = vmatprep.subr.mxu0 0.0
        %4577 = vmatpush1.msra.mxu0 %v4571
        %4578 = vmatprep.subr.mxu0 0.0
        %4579 = vmatpush1.msra.mxu0 0.0
        %4580 = vmatprep.subr.mxu0 0.0
        %4581 = vmatpush1.msra.mxu0 0.0
        %4582 = vmatprep.subr.mxu0 0.0
        %4583 = vmatpush1.msra.mxu0 0.0
        %4584 = vmatprep.subr.mxu0 0.0
        %4585 = vmatpush1.msra.mxu0 0.0
        %4586 = vmatprep.subr.mxu0 0.0
        %4587 = vmatpush1.msra.mxu0 0.0
        %4588 = vmatprep.subr.mxu0 0.0
        %4589 = vmatpush1.msra.mxu0 0.0
        %4590 = vmatprep.subr.mxu0 0.0
        %4591 = vmatpush1.msra.mxu0 0.0
        %4592 = vmatprep.subr.mxu0 0.0
        %4593 = vmatpush1.msra.mxu0 0.0
        %4594 = vmatprep.subr.mxu0 0.0
        %4595 = vmatpush1.msra.mxu0 0.0
        %4596 = vmatprep.subr.mxu0 0.0
        %4597 = vmatpush1.msra.mxu0 0.0
        %4598 = vmatprep.subr.mxu0 0.0
        %4599 = vmatpush1.msra.mxu0 0.0
        %4600 = vmatprep.subr.mxu0 0.0
        %4601 = vmatpush1.msra.mxu0 0.0
        %4602 = vmatprep.subr.mxu0 0.0
        %4603 = vmatpush1.msra.mxu0 0.0
        %4604 = vmatprep.subr.mxu0 0.0
        %4605 = vmatpush1.msra.mxu0 0.0
        %4606 = vmatprep.subr.mxu0 0.0
        %4607 = vmatpush1.msra.mxu0 0.0
        %4608 = vmatprep.subr.mxu0 0.0
        %4609 = vmatpush1.msra.mxu0 0.0
        %4610 = vmatprep.subr.mxu0 0.0
        %4611 = vmatpush1.msra.mxu0 0.0
        %4612 = vmatprep.subr.mxu0 0.0
        %4613 = vmatpush1.msra.mxu0 0.0
        %4614 = vmatprep.subr.mxu0 0.0
        %4615 = vmatpush1.msra.mxu0 0.0
        %4616 = vmatprep.subr.mxu0 0.0
        %4617 = vmatpush1.msra.mxu0 0.0
        %4618 = vmatprep.subr.mxu0 0.0
        %4619 = vmatpush1.msra.mxu0 0.0
        %4620 = vmatprep.subr.mxu0 0.0
        %4621 = vmatpush1.msra.mxu0 0.0
        %4622 = vmatprep.subr.mxu0 0.0
        %4623 = vmatpush1.msra.mxu0 0.0
        %4624 = vmatprep.subr.mxu0 0.0
        %4625 = vmatpush1.msra.mxu0 0.0
        %4626 = vmatprep.subr.mxu0 0.0
        %4627 = vmatpush1.msra.mxu0 0.0
        %4628 = vmatprep.subr.mxu0 0.0
        %4629 = vmatpush1.msra.mxu0 0.0
        %4630 = vmatprep.subr.mxu0 0.0
        %4631 = vmatpush1.msra.mxu0 0.0
        %4632 = vmatprep.subr.mxu0 0.0
        %4633 = vmatpush1.msra.mxu0 0.0
        %4634 = vmatprep.subr.mxu0 0.0
        %4635 = vmatpush1.msra.mxu0 0.0
        %4636 = vmatprep.subr.mxu0 0.0
        %4637 = vmatpush1.msra.mxu0 0.0
        %4638 = vmatprep.subr.mxu0 0.0
        %4639 = vmatpush1.msra.mxu0 0.0
        %4640 = vmatprep.mubr.f32.mxu0 0.0
        %4641 = vmatmul.mubr.f32.gmra.mrb[0].mxu0 %v4574
        %v4642 = vpop.f32.mrb[0].mxu0
        %v4643 = vadd.f32 0.0, %v4642
        %v4644 = vpop.f32.mrb[0].mxu0
        %4645 = vdwg.mxu0
        %4646 = vrot.lane.b32.xlu0 %v4135, 64
        %v4647 = vpop.permute.xlu0 %4646
        %v4650 = vsel %vm701, %v4492, 0
        %4652 = vmatprep.subr.mxu0 0.0
        %4653 = vmatpush1.msra.mxu0 %v4647
        %4654 = vmatprep.subr.mxu0 0.0
        %4655 = vmatpush1.msra.mxu0 0.0
        %4656 = vmatprep.subr.mxu0 0.0
        %4657 = vmatpush1.msra.mxu0 0.0
        %4658 = vmatprep.subr.mxu0 0.0
        %4659 = vmatpush1.msra.mxu0 0.0
        %4660 = vmatprep.subr.mxu0 0.0
        %4661 = vmatpush1.msra.mxu0 0.0
        %4662 = vmatprep.subr.mxu0 0.0
        %4663 = vmatpush1.msra.mxu0 0.0
        %4664 = vmatprep.subr.mxu0 0.0
        %4665 = vmatpush1.msra.mxu0 0.0
        %4666 = vmatprep.subr.mxu0 0.0
        %4667 = vmatpush1.msra.mxu0 0.0
        %4668 = vmatprep.subr.mxu0 0.0
        %4669 = vmatpush1.msra.mxu0 0.0
        %4670 = vmatprep.subr.mxu0 0.0
        %4671 = vmatpush1.msra.mxu0 0.0
        %4672 = vmatprep.subr.mxu0 0.0
        %4673 = vmatpush1.msra.mxu0 0.0
        %4674 = vmatprep.subr.mxu0 0.0
        %4675 = vmatpush1.msra.mxu0 0.0
        %4676 = vmatprep.subr.mxu0 0.0
        %4677 = vmatpush1.msra.mxu0 0.0
        %4678 = vmatprep.subr.mxu0 0.0
        %4679 = vmatpush1.msra.mxu0 0.0
        %4680 = vmatprep.subr.mxu0 0.0
        %4681 = vmatpush1.msra.mxu0 0.0
        %4682 = vmatprep.subr.mxu0 0.0
        %4683 = vmatpush1.msra.mxu0 0.0
        %4684 = vmatprep.subr.mxu0 0.0
        %4685 = vmatpush1.msra.mxu0 0.0
        %4686 = vmatprep.subr.mxu0 0.0
        %4687 = vmatpush1.msra.mxu0 0.0
        %4688 = vmatprep.subr.mxu0 0.0
        %4689 = vmatpush1.msra.mxu0 0.0
        %4690 = vmatprep.subr.mxu0 0.0
        %4691 = vmatpush1.msra.mxu0 0.0
        %4692 = vmatprep.subr.mxu0 0.0
        %4693 = vmatpush1.msra.mxu0 0.0
        %4694 = vmatprep.subr.mxu0 0.0
        %4695 = vmatpush1.msra.mxu0 0.0
        %4696 = vmatprep.subr.mxu0 0.0
        %4697 = vmatpush1.msra.mxu0 0.0
        %4698 = vmatprep.subr.mxu0 0.0
        %4699 = vmatpush1.msra.mxu0 0.0
        %4700 = vmatprep.subr.mxu0 0.0
        %4701 = vmatpush1.msra.mxu0 0.0
        %4702 = vmatprep.subr.mxu0 0.0
        %4703 = vmatpush1.msra.mxu0 0.0
        %4704 = vmatprep.subr.mxu0 0.0
        %4705 = vmatpush1.msra.mxu0 0.0
        %4706 = vmatprep.subr.mxu0 0.0
        %4707 = vmatpush1.msra.mxu0 0.0
        %4708 = vmatprep.subr.mxu0 0.0
        %4709 = vmatpush1.msra.mxu0 0.0
        %4710 = vmatprep.subr.mxu0 0.0
        %4711 = vmatpush1.msra.mxu0 0.0
        %4712 = vmatprep.subr.mxu0 0.0
        %4713 = vmatpush1.msra.mxu0 0.0
        %4714 = vmatprep.subr.mxu0 0.0
        %4715 = vmatpush1.msra.mxu0 0.0
        %4716 = vmatprep.mubr.f32.mxu0 0.0
        %4717 = vmatmul.mubr.f32.gmra.mrb[0].mxu0 %v4650
        %v4718 = vpop.f32.mrb[0].mxu0
        %v4719 = vadd.f32 0.0, %v4718
        %v4720 = vpop.f32.mrb[0].mxu0
        %4721 = vdwg.mxu0
        %4722 = vrot.lane.b32.xlu0 %v4137, 64
        %v4723 = vpop.permute.xlu0 %4722
        %v4726 = vsel %vm701, %v4493, 0
        %4728 = vmatprep.subr.mxu0 0.0
        %4729 = vmatpush1.msra.mxu0 %v4723
        %4730 = vmatprep.subr.mxu0 0.0
        %4731 = vmatpush1.msra.mxu0 0.0
        %4732 = vmatprep.subr.mxu0 0.0
        %4733 = vmatpush1.msra.mxu0 0.0
        %4734 = vmatprep.subr.mxu0 0.0
        %4735 = vmatpush1.msra.mxu0 0.0
        %4736 = vmatprep.subr.mxu0 0.0
        %4737 = vmatpush1.msra.mxu0 0.0
        %4738 = vmatprep.subr.mxu0 0.0
        %4739 = vmatpush1.msra.mxu0 0.0
        %4740 = vmatprep.subr.mxu0 0.0
        %4741 = vmatpush1.msra.mxu0 0.0
        %4742 = vmatprep.subr.mxu0 0.0
        %4743 = vmatpush1.msra.mxu0 0.0
        %4744 = vmatprep.subr.mxu0 0.0
        %4745 = vmatpush1.msra.mxu0 0.0
        %4746 = vmatprep.subr.mxu0 0.0
        %4747 = vmatpush1.msra.mxu0 0.0
        %4748 = vmatprep.subr.mxu0 0.0
        %4749 = vmatpush1.msra.mxu0 0.0
        %4750 = vmatprep.subr.mxu0 0.0
        %4751 = vmatpush1.msra.mxu0 0.0
        %4752 = vmatprep.subr.mxu0 0.0
        %4753 = vmatpush1.msra.mxu0 0.0
        %4754 = vmatprep.subr.mxu0 0.0
        %4755 = vmatpush1.msra.mxu0 0.0
        %4756 = vmatprep.subr.mxu0 0.0
        %4757 = vmatpush1.msra.mxu0 0.0
        %4758 = vmatprep.subr.mxu0 0.0
        %4759 = vmatpush1.msra.mxu0 0.0
        %4760 = vmatprep.subr.mxu0 0.0
        %4761 = vmatpush1.msra.mxu0 0.0
        %4762 = vmatprep.subr.mxu0 0.0
        %4763 = vmatpush1.msra.mxu0 0.0
        %4764 = vmatprep.subr.mxu0 0.0
        %4765 = vmatpush1.msra.mxu0 0.0
        %4766 = vmatprep.subr.mxu0 0.0
        %4767 = vmatpush1.msra.mxu0 0.0
        %4768 = vmatprep.subr.mxu0 0.0
        %4769 = vmatpush1.msra.mxu0 0.0
        %4770 = vmatprep.subr.mxu0 0.0
        %4771 = vmatpush1.msra.mxu0 0.0
        %4772 = vmatprep.subr.mxu0 0.0
        %4773 = vmatpush1.msra.mxu0 0.0
        %4774 = vmatprep.subr.mxu0 0.0
        %4775 = vmatpush1.msra.mxu0 0.0
        %4776 = vmatprep.subr.mxu0 0.0
        %4777 = vmatpush1.msra.mxu0 0.0
        %4778 = vmatprep.subr.mxu0 0.0
        %4779 = vmatpush1.msra.mxu0 0.0
        %4780 = vmatprep.subr.mxu0 0.0
        %4781 = vmatpush1.msra.mxu0 0.0
        %4782 = vmatprep.subr.mxu0 0.0
        %4783 = vmatpush1.msra.mxu0 0.0
        %4784 = vmatprep.subr.mxu0 0.0
        %4785 = vmatpush1.msra.mxu0 0.0
        %4786 = vmatprep.subr.mxu0 0.0
        %4787 = vmatpush1.msra.mxu0 0.0
        %4788 = vmatprep.subr.mxu0 0.0
        %4789 = vmatpush1.msra.mxu0 0.0
        %4790 = vmatprep.subr.mxu0 0.0
        %4791 = vmatpush1.msra.mxu0 0.0
        %4792 = vmatprep.mubr.f32.mxu0 0.0
        %4793 = vmatmul.mubr.f32.gmra.mrb[0].mxu0 %v4726
        %v4794 = vpop.f32.mrb[0].mxu0
        %v4795 = vadd.f32 0.0, %v4794
        %v4796 = vpop.f32.mrb[0].mxu0
        %4797 = vdwg.mxu0
        %v4798 = vpack.c.bf16 %v4567, %v4567
        %v4799 = vpack.c.bf16 %v4643, %v4643
        %v4800 = vpack.c.bf16 %v4719, %v4719
        %v4801 = vpack.c.bf16 %v4795, %v4795
        %s4802 = scalar_lea.vmem %s5, 48
        %v4803 = vld [vmem:[%s4802] sm:$0xf]
        %v4804 = vld [vmem:[%s4802 + $0x4] sm:$0xf]
        %v4805 = vld [vmem:[%s4802 + $0x8] sm:$0xf]
        %v4806 = vld [vmem:[%s4802 + $0xc] sm:$0xf]
        %v4808 = vsel %vm701, %v4798, 0
        %v4811 = vsel %vm1371, %v4803, 0
        %4813 = vmatprep.subr.bf16.mxu0 0
        %4814 = vmatpush1.bf16.msra.mxu0 %v4811
        %4815 = vmatprep.subr.bf16.mxu0 0
        %4816 = vmatpush1.bf16.msra.mxu0 0
        %4817 = vmatprep.subr.bf16.mxu0 0
        %4818 = vmatpush1.bf16.msra.mxu0 0
        %4819 = vmatprep.subr.bf16.mxu0 0
        %4820 = vmatpush1.bf16.msra.mxu0 0
        %4821 = vmatprep.subr.bf16.mxu0 0
        %4822 = vmatpush1.bf16.msra.mxu0 0
        %4823 = vmatprep.subr.bf16.mxu0 0
        %4824 = vmatpush1.bf16.msra.mxu0 0
        %4825 = vmatprep.subr.bf16.mxu0 0
        %4826 = vmatpush1.bf16.msra.mxu0 0
        %4827 = vmatprep.subr.bf16.mxu0 0
        %4828 = vmatpush1.bf16.msra.mxu0 0
        %4829 = vmatprep.subr.bf16.mxu0 0
        %4830 = vmatpush1.bf16.msra.mxu0 0
        %4831 = vmatprep.subr.bf16.mxu0 0
        %4832 = vmatpush1.bf16.msra.mxu0 0
        %4833 = vmatprep.subr.bf16.mxu0 0
        %4834 = vmatpush1.bf16.msra.mxu0 0
        %4835 = vmatprep.subr.bf16.mxu0 0
        %4836 = vmatpush1.bf16.msra.mxu0 0
        %4837 = vmatprep.subr.bf16.mxu0 0
        %4838 = vmatpush1.bf16.msra.mxu0 0
        %4839 = vmatprep.subr.bf16.mxu0 0
        %4840 = vmatpush1.bf16.msra.mxu0 0
        %4841 = vmatprep.subr.bf16.mxu0 0
        %4842 = vmatpush1.bf16.msra.mxu0 0
        %4843 = vmatprep.subr.bf16.mxu0 0
        %4844 = vmatpush1.bf16.msra.mxu0 0
        %4845 = vmatprep.mubr.bf16.mxu0 0
        %4846 = vmatmul.mubr.bf16.gmra.mrb[0].mxu0 %v4808
        %v4847 = vpop.f32.mrb[0].mxu0
        %v4848 = vadd.f32 0.0, %v4847
        %v4849 = vpop.f32.mrb[0].mxu0
        %v4850 = vpop.f32.mrb[0].mxu0
        %v4851 = vpop.f32.mrb[0].mxu0
        %4852 = vdwg.mxu0
        %v4854 = vsel %vm701, %v4799, 0
        %v4857 = vsel %vm1371, %v4804, 0
        %4859 = vmatprep.subr.bf16.mxu0 0
        %4860 = vmatpush1.bf16.msra.mxu0 %v4857
        %4861 = vmatprep.subr.bf16.mxu0 0
        %4862 = vmatpush1.bf16.msra.mxu0 0
        %4863 = vmatprep.subr.bf16.mxu0 0
        %4864 = vmatpush1.bf16.msra.mxu0 0
        %4865 = vmatprep.subr.bf16.mxu0 0
        %4866 = vmatpush1.bf16.msra.mxu0 0
        %4867 = vmatprep.subr.bf16.mxu0 0
        %4868 = vmatpush1.bf16.msra.mxu0 0
        %4869 = vmatprep.subr.bf16.mxu0 0
        %4870 = vmatpush1.bf16.msra.mxu0 0
        %4871 = vmatprep.subr.bf16.mxu0 0
        %4872 = vmatpush1.bf16.msra.mxu0 0
        %4873 = vmatprep.subr.bf16.mxu0 0
        %4874 = vmatpush1.bf16.msra.mxu0 0
        %4875 = vmatprep.subr.bf16.mxu0 0
        %4876 = vmatpush1.bf16.msra.mxu0 0
        %4877 = vmatprep.subr.bf16.mxu0 0
        %4878 = vmatpush1.bf16.msra.mxu0 0
        %4879 = vmatprep.subr.bf16.mxu0 0
        %4880 = vmatpush1.bf16.msra.mxu0 0
        %4881 = vmatprep.subr.bf16.mxu0 0
        %4882 = vmatpush1.bf16.msra.mxu0 0
        %4883 = vmatprep.subr.bf16.mxu0 0
        %4884 = vmatpush1.bf16.msra.mxu0 0
        %4885 = vmatprep.subr.bf16.mxu0 0
        %4886 = vmatpush1.bf16.msra.mxu0 0
        %4887 = vmatprep.subr.bf16.mxu0 0
        %4888 = vmatpush1.bf16.msra.mxu0 0
        %4889 = vmatprep.subr.bf16.mxu0 0
        %4890 = vmatpush1.bf16.msra.mxu0 0
        %4891 = vmatprep.mubr.bf16.mxu0 0
        %4892 = vmatmul.mubr.bf16.gmra.mrb[0].mxu0 %v4854
        %v4893 = vpop.f32.mrb[0].mxu0
        %v4894 = vadd.f32 0.0, %v4893
        %v4895 = vpop.f32.mrb[0].mxu0
        %v4896 = vpop.f32.mrb[0].mxu0
        %v4897 = vpop.f32.mrb[0].mxu0
        %4898 = vdwg.mxu0
        %v4900 = vsel %vm701, %v4800, 0
        %v4903 = vsel %vm1371, %v4805, 0
        %4905 = vmatprep.subr.bf16.mxu0 0
        %4906 = vmatpush1.bf16.msra.mxu0 %v4903
        %4907 = vmatprep.subr.bf16.mxu0 0
        %4908 = vmatpush1.bf16.msra.mxu0 0
        %4909 = vmatprep.subr.bf16.mxu0 0
        %4910 = vmatpush1.bf16.msra.mxu0 0
        %4911 = vmatprep.subr.bf16.mxu0 0
        %4912 = vmatpush1.bf16.msra.mxu0 0
        %4913 = vmatprep.subr.bf16.mxu0 0
        %4914 = vmatpush1.bf16.msra.mxu0 0
        %4915 = vmatprep.subr.bf16.mxu0 0
        %4916 = vmatpush1.bf16.msra.mxu0 0
        %4917 = vmatprep.subr.bf16.mxu0 0
        %4918 = vmatpush1.bf16.msra.mxu0 0
        %4919 = vmatprep.subr.bf16.mxu0 0
        %4920 = vmatpush1.bf16.msra.mxu0 0
        %4921 = vmatprep.subr.bf16.mxu0 0
        %4922 = vmatpush1.bf16.msra.mxu0 0
        %4923 = vmatprep.subr.bf16.mxu0 0
        %4924 = vmatpush1.bf16.msra.mxu0 0
        %4925 = vmatprep.subr.bf16.mxu0 0
        %4926 = vmatpush1.bf16.msra.mxu0 0
        %4927 = vmatprep.subr.bf16.mxu0 0
        %4928 = vmatpush1.bf16.msra.mxu0 0
        %4929 = vmatprep.subr.bf16.mxu0 0
        %4930 = vmatpush1.bf16.msra.mxu0 0
        %4931 = vmatprep.subr.bf16.mxu0 0
        %4932 = vmatpush1.bf16.msra.mxu0 0
        %4933 = vmatprep.subr.bf16.mxu0 0
        %4934 = vmatpush1.bf16.msra.mxu0 0
        %4935 = vmatprep.subr.bf16.mxu0 0
        %4936 = vmatpush1.bf16.msra.mxu0 0
        %4937 = vmatprep.mubr.bf16.mxu0 0
        %4938 = vmatmul.mubr.bf16.gmra.mrb[0].mxu0 %v4900
        %v4939 = vpop.f32.mrb[0].mxu0
        %v4940 = vadd.f32 0.0, %v4939
        %v4941 = vpop.f32.mrb[0].mxu0
        %v4942 = vpop.f32.mrb[0].mxu0
        %v4943 = vpop.f32.mrb[0].mxu0
        %4944 = vdwg.mxu0
        %v4946 = vsel %vm701, %v4801, 0
        %v4949 = vsel %vm1371, %v4806, 0
        %4951 = vmatprep.subr.bf16.mxu0 0
        %4952 = vmatpush1.bf16.msra.mxu0 %v4949
        %4953 = vmatprep.subr.bf16.mxu0 0
        %4954 = vmatpush1.bf16.msra.mxu0 0
        %4955 = vmatprep.subr.bf16.mxu0 0
        %4956 = vmatpush1.bf16.msra.mxu0 0
        %4957 = vmatprep.subr.bf16.mxu0 0
        %4958 = vmatpush1.bf16.msra.mxu0 0
        %4959 = vmatprep.subr.bf16.mxu0 0
        %4960 = vmatpush1.bf16.msra.mxu0 0
        %4961 = vmatprep.subr.bf16.mxu0 0
        %4962 = vmatpush1.bf16.msra.mxu0 0
        %4963 = vmatprep.subr.bf16.mxu0 0
        %4964 = vmatpush1.bf16.msra.mxu0 0
        %4965 = vmatprep.subr.bf16.mxu0 0
        %4966 = vmatpush1.bf16.msra.mxu0 0
        %4967 = vmatprep.subr.bf16.mxu0 0
        %4968 = vmatpush1.bf16.msra.mxu0 0
        %4969 = vmatprep.subr.bf16.mxu0 0
        %4970 = vmatpush1.bf16.msra.mxu0 0
        %4971 = vmatprep.subr.bf16.mxu0 0
        %4972 = vmatpush1.bf16.msra.mxu0 0
        %4973 = vmatprep.subr.bf16.mxu0 0
        %4974 = vmatpush1.bf16.msra.mxu0 0
        %4975 = vmatprep.subr.bf16.mxu0 0
        %4976 = vmatpush1.bf16.msra.mxu0 0
        %4977 = vmatprep.subr.bf16.mxu0 0
        %4978 = vmatpush1.bf16.msra.mxu0 0
        %4979 = vmatprep.subr.bf16.mxu0 0
        %4980 = vmatpush1.bf16.msra.mxu0 0
        %4981 = vmatprep.subr.bf16.mxu0 0
        %4982 = vmatpush1.bf16.msra.mxu0 0
        %4983 = vmatprep.mubr.bf16.mxu0 0
        %4984 = vmatmul.mubr.bf16.gmra.mrb[0].mxu0 %v4946
        %v4985 = vpop.f32.mrb[0].mxu0
        %v4986 = vadd.f32 0.0, %v4985
        %v4987 = vpop.f32.mrb[0].mxu0
        %v4988 = vpop.f32.mrb[0].mxu0
        %v4989 = vpop.f32.mrb[0].mxu0
        %4990 = vdwg.mxu0
        %v4991 = vsel %vm592, %v4848, 0.0
        %v4992 = vsel %vm592, %v4894, 0.0
        %v4993 = vadd.f32 %v4991, %v4992
        %v4994 = vsel %vm592, %v4940, 0.0
        %v4995 = vadd.f32 %v4993, %v4994
        %v4996 = vsel %vm592, %v4986, 0.0
        %v4997 = vadd.f32 %v4995, %v4996
        %v4998 = vlaneseq
        %v4999 = vshrl.u32 %v4998, 7
        %v5000 = vsub.s32 1, %v4999
        %v5001 = vrot.slane %v4065, %v5000
        %v5002 = vadd.f32 %v4997, %v5001
        %v5003 = vadd.f32 %v5002, %v4057
        %v5004 = vsel %vm592, %v5003, 0.0
        %5005 = vadd.xlane.f32.xlu0 %v5004
        %v5006 = vpop.xlane.xlu0 %5005
        %v5007 = vmul.f32 %v5006, %v596
        %v5008 = vsub.f32 %v5003, %v5007
        %v5009 = vmul.f32 %v5008, %v5008
        %v5010 = vsel %vm592, %v5009, 0.0
        %5011 = vadd.xlane.f32.xlu0 %v5010
        %v5012 = vpop.xlane.xlu0 %5011
        %v5013 = vmul.f32 %v5012, %v596
        %v5014 = vadd.f32 %v5013, 1e-05
        %v5015 = vrsqrt.pop %v5014
        %v5016 = vmul.f32 %v5008, %v5015
        %v5017 = vlaneseq
        %v5018 = vshrl.u32 %v5017, 7
        %v5019 = vsub.s32 2, %v5018
        %v5020 = vrot.slane %v4065, %v5019
        %v5021 = vmul.f32 %v5016, %v5020
        %v5022 = vlaneseq
        %v5023 = vshrl.u32 %v5022, 7
        %v5024 = vsub.s32 3, %v5023
        %v5025 = vrot.slane %v4065, %v5024
        %v5026 = vadd.f32 %v5021, %v5025
        %v5027 = vpack.c.bf16 %v5026, %v5026
        %s5028 = scalar_lea.vmem %s6, 48
        %v5029 = vld [vmem:[%s5028] sm:$0xf]
        %v5030 = vld [vmem:[%s5028 + $0x4] sm:$0xf]
        %v5031 = vld [vmem:[%s5028 + $0x8] sm:$0xf]
        %v5032 = vld [vmem:[%s5028 + $0xc] sm:$0xf]
        %v5033 = vlaneseq
        %v5034 = vshrl.u32 %v5033, 7
        %v5035 = vsub.s32 4, %v5034
        %v5036 = vrot.slane %v4065, %v5035
        %v5041 = vunpack.c.l.b16 %v5029
        %v5042 = vunpack.c.l.b16 %v5030
        %v5043 = vunpack.c.l.b16 %v5031
        %v5044 = vunpack.c.l.b16 %v5032
        %v5045 = vpack.c.b16 %v5042, %v5041
        %v5046 = vpack.c.b16 %v5044, %v5043
        %v5050 = vsel %vm592, %v5027, 0
        %5052 = vmatprep.subr.bf16.mxu0 0
        %5053 = vmatpush1.bf16.msra.mxu0 %v5045
        %5054 = vmatprep.subr.bf16.mxu0 0
        %5055 = vmatpush1.bf16.msra.mxu0 %v5046
        %5056 = vmatprep.subr.bf16.mxu0 0
        %5057 = vmatpush1.bf16.msra.mxu0 0
        %5058 = vmatprep.subr.bf16.mxu0 0
        %5059 = vmatpush1.bf16.msra.mxu0 0
        %5060 = vmatprep.subr.bf16.mxu0 0
        %5061 = vmatpush1.bf16.msra.mxu0 0
        %5062 = vmatprep.subr.bf16.mxu0 0
        %5063 = vmatpush1.bf16.msra.mxu0 0
        %5064 = vmatprep.subr.bf16.mxu0 0
        %5065 = vmatpush1.bf16.msra.mxu0 0
        %5066 = vmatprep.subr.bf16.mxu0 0
        %5067 = vmatpush1.bf16.msra.mxu0 0
        %5068 = vmatprep.subr.bf16.mxu0 0
        %5069 = vmatpush1.bf16.msra.mxu0 0
        %5070 = vmatprep.subr.bf16.mxu0 0
        %5071 = vmatpush1.bf16.msra.mxu0 0
        %5072 = vmatprep.subr.bf16.mxu0 0
        %5073 = vmatpush1.bf16.msra.mxu0 0
        %5074 = vmatprep.subr.bf16.mxu0 0
        %5075 = vmatpush1.bf16.msra.mxu0 0
        %5076 = vmatprep.subr.bf16.mxu0 0
        %5077 = vmatpush1.bf16.msra.mxu0 0
        %5078 = vmatprep.subr.bf16.mxu0 0
        %5079 = vmatpush1.bf16.msra.mxu0 0
        %5080 = vmatprep.subr.bf16.mxu0 0
        %5081 = vmatpush1.bf16.msra.mxu0 0
        %5082 = vmatprep.subr.bf16.mxu0 0
        %5083 = vmatpush1.bf16.msra.mxu0 0
        %5084 = vmatprep.mubr.bf16.mxu0 0
        %5085 = vmatmul.mubr.bf16.gmra.mrb[0].mxu0 %v5050
        %v5086 = vpop.f32.mrb[0].mxu0
        %v5087 = vadd.f32 %v5036, %v5086
        %v5088 = vpop.f32.mrb[0].mxu0
        %v5089 = vpop.f32.mrb[0].mxu0
        %v5090 = vpop.f32.mrb[0].mxu0
        %5091 = vdwg.mxu0
        %v5092 = vmul.f32 %v5087, 0.5
        %v5093 = vmul.f32 %v5087, 0.044715
        %v5094 = vmul.f32 %v5093, %v5087
        %v5095 = vmul.f32 %v5094, %v5087
        %v5096 = vadd.f32 %v5087, %v5095
        %v5097 = vmul.f32 %v5096, 0.7978846
        %v5098 = vtanh.pop %v5097
        %v5099 = vadd.f32 %v5098, 1.0
        %v5100 = vmul.f32 %v5092, %v5099
        %v5101 = vpack.c.bf16 %v5100, %v5100
        %s5102 = scalar_lea.vmem %s7, 96
        %v5103 = vld [vmem:[%s5102] sm:$0xf]
        %v5104 = vld [vmem:[%s5102 + $0x4] sm:$0xf]
        %v5105 = vld [vmem:[%s5102 + $0x8] sm:$0xf]
        %v5106 = vld [vmem:[%s5102 + $0xc] sm:$0xf]
        %v5107 = vld [vmem:[%s5102 + $0x10] sm:$0xf]
        %v5108 = vld [vmem:[%s5102 + $0x14] sm:$0xf]
        %v5109 = vld [vmem:[%s5102 + $0x18] sm:$0xf]
        %v5110 = vld [vmem:[%s5102 + $0x1c] sm:$0xf]
        %v5111 = vlaneseq
        %v5112 = vshrl.u32 %v5111, 7
        %v5113 = vsub.s32 5, %v5112
        %v5114 = vrot.slane %v4065, %v5113
        %v5123 = vunpack.c.l.b16 %v5103
        %v5124 = vunpack.c.l.b16 %v5104
        %v5125 = vunpack.c.l.b16 %v5105
        %v5126 = vunpack.c.l.b16 %v5106
        %v5127 = vunpack.c.l.b16 %v5107
        %v5128 = vunpack.c.l.b16 %v5108
        %v5129 = vunpack.c.l.b16 %v5109
        %v5130 = vunpack.c.l.b16 %v5110
        %v5131 = vpack.c.b16 %v5124, %v5123
        %v5132 = vpack.c.b16 %v5126, %v5125
        %v5133 = vpack.c.b16 %v5128, %v5127
        %v5134 = vpack.c.b16 %v5130, %v5129
        %v5140 = vsel %vm1699, %v5101, 0
        %5142 = vmatprep.subr.bf16.mxu0 0
        %5143 = vmatpush1.bf16.msra.mxu0 %v5131
        %5144 = vmatprep.subr.bf16.mxu0 0
        %5145 = vmatpush1.bf16.msra.mxu0 %v5132
        %5146 = vmatprep.subr.bf16.mxu0 0
        %5147 = vmatpush1.bf16.msra.mxu0 %v5133
        %5148 = vmatprep.subr.bf16.mxu0 0
        %5149 = vmatpush1.bf16.msra.mxu0 %v5134
        %5150 = vmatprep.subr.bf16.mxu0 0
        %5151 = vmatpush1.bf16.msra.mxu0 0
        %5152 = vmatprep.subr.bf16.mxu0 0
        %5153 = vmatpush1.bf16.msra.mxu0 0
        %5154 = vmatprep.subr.bf16.mxu0 0
        %5155 = vmatpush1.bf16.msra.mxu0 0
        %5156 = vmatprep.subr.bf16.mxu0 0
        %5157 = vmatpush1.bf16.msra.mxu0 0
        %5158 = vmatprep.subr.bf16.mxu0 0
        %5159 = vmatpush1.bf16.msra.mxu0 0
        %5160 = vmatprep.subr.bf16.mxu0 0
        %5161 = vmatpush1.bf16.msra.mxu0 0
        %5162 = vmatprep.subr.bf16.mxu0 0
        %5163 = vmatpush1.bf16.msra.mxu0 0
        %5164 = vmatprep.subr.bf16.mxu0 0
        %5165 = vmatpush1.bf16.msra.mxu0 0
        %5166 = vmatprep.subr.bf16.mxu0 0
        %5167 = vmatpush1.bf16.msra.mxu0 0
        %5168 = vmatprep.subr.bf16.mxu0 0
        %5169 = vmatpush1.bf16.msra.mxu0 0
        %5170 = vmatprep.subr.bf16.mxu0 0
        %5171 = vmatpush1.bf16.msra.mxu0 0
        %5172 = vmatprep.subr.bf16.mxu0 0
        %5173 = vmatpush1.bf16.msra.mxu0 0
        %5174 = vmatprep.mubr.bf16.mxu0 0
        %5175 = vmatmul.mubr.bf16.gmra.mrb[0].mxu0 %v5140
        %v5176 = vpop.f32.mrb[0].mxu0
        %v5177 = vadd.f32 %v5114, %v5176
        %v5178 = vpop.f32.mrb[0].mxu0
        %v5179 = vpop.f32.mrb[0].mxu0
        %v5180 = vpop.f32.mrb[0].mxu0
        %5181 = vdwg.mxu0
        %v5182 = vadd.f32 %v5177, %v5026
        %v5183 = vsel %vm592, %v5182, 0.0
        %5184 = vadd.xlane.f32.xlu0 %v5183
        %v5185 = vpop.xlane.xlu0 %5184
        %v5186 = vmul.f32 %v5185, %v596
        %v5187 = vsub.f32 %v5182, %v5186
        %v5188 = vmul.f32 %v5187, %v5187
        %v5189 = vsel %vm592, %v5188, 0.0
        %5190 = vadd.xlane.f32.xlu0 %v5189
        %v5191 = vpop.xlane.xlu0 %5190
        %v5192 = vmul.f32 %v5191, %v596
        %v5193 = vadd.f32 %v5192, 1e-05
        %v5194 = vrsqrt.pop %v5193
        %v5195 = vmul.f32 %v5187, %v5194
        %v5196 = vlaneseq
        %v5197 = vshrl.u32 %v5196, 7
        %v5198 = vsub.s32 6, %v5197
        %v5199 = vrot.slane %v4065, %v5198
        %v5200 = vmul.f32 %v5195, %v5199
        %v5201 = vlaneseq
        %v5202 = vshrl.u32 %v5201, 7
        %v5203 = vsub.s32 7, %v5202
        %v5204 = vrot.slane %v4065, %v5203
        %v5205 = vadd.f32 %v5200, %v5204
        %5207 = vrot.lane.b32.xlu0 %v5205, 96
        %v5208 = vpop.permute.xlu0 %5207
        %vm5210 = vcmask 1048320
        %5211 = vst.msk [vmem:[%s467] sm:$0xff] %vm5210, %v5208
        %v5212 = vpack.c.bf16 %v5205, %v5205
        %v5213 = vld [vmem:[%s9] sm:$0xf]
        %v5214 = vld [vmem:[%s9 + $0x4] sm:$0xf]
        %v5215 = vld [vmem:[%s9 + $0x8] sm:$0xf]
        %v5216 = vld [vmem:[%s9 + $0xc] sm:$0xf]
        %v5217 = vld [vmem:[%s11 + $0x2] sm:$0x1]
        %v5222 = vunpack.c.l.b16 %v5213
        %v5223 = vunpack.c.l.b16 %v5214
        %v5224 = vunpack.c.l.b16 %v5215
        %v5225 = vunpack.c.l.b16 %v5216
        %v5226 = vpack.c.b16 %v5223, %v5222
        %v5227 = vpack.c.b16 %v5225, %v5224
        %v5231 = vsel %vm592, %v5212, 0
        %5233 = vmatprep.subr.bf16.mxu0 0
        %5234 = vmatpush1.bf16.msra.mxu0 %v5226
        %5235 = vmatprep.subr.bf16.mxu0 0
        %5236 = vmatpush1.bf16.msra.mxu0 %v5227
        %5237 = vmatprep.subr.bf16.mxu0 0
        %5238 = vmatpush1.bf16.msra.mxu0 0
        %5239 = vmatprep.subr.bf16.mxu0 0
        %5240 = vmatpush1.bf16.msra.mxu0 0
        %5241 = vmatprep.subr.bf16.mxu0 0
        %5242 = vmatpush1.bf16.msra.mxu0 0
        %5243 = vmatprep.subr.bf16.mxu0 0
        %5244 = vmatpush1.bf16.msra.mxu0 0
        %5245 = vmatprep.subr.bf16.mxu0 0
        %5246 = vmatpush1.bf16.msra.mxu0 0
        %5247 = vmatprep.subr.bf16.mxu0 0
        %5248 = vmatpush1.bf16.msra.mxu0 0
        %5249 = vmatprep.subr.bf16.mxu0 0
        %5250 = vmatpush1.bf16.msra.mxu0 0
        %5251 = vmatprep.subr.bf16.mxu0 0
        %5252 = vmatpush1.bf16.msra.mxu0 0
        %5253 = vmatprep.subr.bf16.mxu0 0
        %5254 = vmatpush1.bf16.msra.mxu0 0
        %5255 = vmatprep.subr.bf16.mxu0 0
        %5256 = vmatpush1.bf16.msra.mxu0 0
        %5257 = vmatprep.subr.bf16.mxu0 0
        %5258 = vmatpush1.bf16.msra.mxu0 0
        %5259 = vmatprep.subr.bf16.mxu0 0
        %5260 = vmatpush1.bf16.msra.mxu0 0
        %5261 = vmatprep.subr.bf16.mxu0 0
        %5262 = vmatpush1.bf16.msra.mxu0 0
        %5263 = vmatprep.subr.bf16.mxu0 0
        %5264 = vmatpush1.bf16.msra.mxu0 0
        %5265 = vmatprep.mubr.bf16.mxu0 0
        %5266 = vmatmul.mubr.bf16.gmra.mrb[0].mxu0 %v5231
        %v5267 = vpop.f32.mrb[0].mxu0
        %v5268 = vadd.f32 %v5217, %v5267
        %v5269 = vpop.f32.mrb[0].mxu0
        %v5270 = vpop.f32.mrb[0].mxu0
        %v5271 = vpop.f32.mrb[0].mxu0
        %5272 = vdwg.mxu0
        %v5273 = vtanh.pop %v5268
        %v5274 = vpack.c.bf16 %v5273, %v5273
        %v5275 = vld [vmem:[#allocation2] sm:$0xf]
        %v5276 = vld [vmem:[#allocation2 + $0x4] sm:$0xf]
        %v5277 = vld [vmem:[#allocation2 + $0x8] sm:$0xf]
        %v5278 = vld [vmem:[#allocation2 + $0xc] sm:$0xf]
        %v5279 = vld [vmem:[%s11 + $0x3] sm:$0x1]
        %v5284 = vunpack.c.l.b16 %v5275
        %v5285 = vunpack.c.l.b16 %v5276
        %v5286 = vunpack.c.l.b16 %v5277
        %v5287 = vunpack.c.l.b16 %v5278
        %v5288 = vpack.c.b16 %v5285, %v5284
        %v5289 = vpack.c.b16 %v5287, %v5286
        %v5293 = vsel %vm592, %v5274, 0
        %5295 = vmatprep.subr.bf16.mxu0 0
        %5296 = vmatpush1.bf16.msra.mxu0 %v5288
        %5297 = vmatprep.subr.bf16.mxu0 0
        %5298 = vmatpush1.bf16.msra.mxu0 %v5289
        %5299 = vmatprep.subr.bf16.mxu0 0
        %5300 = vmatpush1.bf16.msra.mxu0 0
        %5301 = vmatprep.subr.bf16.mxu0 0
        %5302 = vmatpush1.bf16.msra.mxu0 0
        %5303 = vmatprep.subr.bf16.mxu0 0
        %5304 = vmatpush1.bf16.msra.mxu0 0
        %5305 = vmatprep.subr.bf16.mxu0 0
        %5306 = vmatpush1.bf16.msra.mxu0 0
        %5307 = vmatprep.subr.bf16.mxu0 0
        %5308 = vmatpush1.bf16.msra.mxu0 0
        %5309 = vmatprep.subr.bf16.mxu0 0
        %5310 = vmatpush1.bf16.msra.mxu0 0
        %5311 = vmatprep.subr.bf16.mxu0 0
        %5312 = vmatpush1.bf16.msra.mxu0 0
        %5313 = vmatprep.subr.bf16.mxu0 0
        %5314 = vmatpush1.bf16.msra.mxu0 0
        %5315 = vmatprep.subr.bf16.mxu0 0
        %5316 = vmatpush1.bf16.msra.mxu0 0
        %5317 = vmatprep.subr.bf16.mxu0 0
        %5318 = vmatpush1.bf16.msra.mxu0 0
        %5319 = vmatprep.subr.bf16.mxu0 0
        %5320 = vmatpush1.bf16.msra.mxu0 0
        %5321 = vmatprep.subr.bf16.mxu0 0
        %5322 = vmatpush1.bf16.msra.mxu0 0
        %5323 = vmatprep.subr.bf16.mxu0 0
        %5324 = vmatpush1.bf16.msra.mxu0 0
        %5325 = vmatprep.subr.bf16.mxu0 0
        %5326 = vmatpush1.bf16.msra.mxu0 0
        %5327 = vmatprep.mubr.bf16.mxu0 0
        %5328 = vmatmul.mubr.bf16.gmra.mrb[0].mxu0 %v5293
        %v5329 = vpop.f32.mrb[0].mxu0
        %v5330 = vadd.f32 %v5279, %v5329
        %v5331 = vpop.f32.mrb[0].mxu0
        %v5332 = vpop.f32.mrb[0].mxu0
        %v5333 = vpop.f32.mrb[0].mxu0
        %5334 = vdwg.mxu0
        %5335 = vst [vmem:[%s460] sm:$0x1] %v5330
        %s5336 = sand.u32 %s302, 1
        %s5337 = scalar_lea.sflag [#allocation4], %s5336
        %s5338 = sand.u32 %s302, 1
        %s5339 = scalar_lea.vmem [#allocation5], %s5338
        %s5340 = sand.u32 %s328, 1
        %s5341 = scalar_lea.sflag [#allocation7], %s5340
        %s5342 = sand.u32 %s328, 1
        %s5343 = smul.addr %s5342, 8
        %s5344 = scalar_lea.vmem [#allocation6], %s5343
        // Predicated region
        $region73: #{e2e_bertweet_forward.1} parent=67 // pred_check
          %p5345 = pneg %p312
        $region74: #{e2e_bertweet_forward.1} parent=67 // pred_check_branch
          %5347 = sbr.rel (%p5345) target = $region76
        $region75: #{e2e_bertweet_forward.1} parent=67 // pred_region
          %s5349 = ssub.s32 16, 16
          %5350 = vsyncadd %s5337, %s5349
          %s5351 = smul.addr %s32, 16
          %s5352 = scalar_lea.hbm %s12, %s5351
          %s5354 = sshll.u32 %s5339, 4
          %s5355 = int_to_ptr.vmem [resolvable:$true] %s5354
          %5357 = dma.vmem_to_hbm [thread:$0]  %s5355, 16, %s5352, %s5337
        $region76: #{e2e_bertweet_forward.1} parent=67 // pred_fallthru
          _
        // Predicated region
        $region77: #{e2e_bertweet_forward.1} parent=67 // pred_check
          %p5358 = pneg %p338
        $region78: #{e2e_bertweet_forward.1} parent=67 // pred_check_branch
          %5360 = sbr.rel (%p5358) target = $region80
        $region79: #{e2e_bertweet_forward.1} parent=67 // pred_region
          %s5362 = ssub.s32 128, 128
          %5363 = vsyncadd %s5341, %s5362
          %s5364 = smul.addr %s32, 128
          %s5365 = scalar_lea.hbm %s13, %s5364
          %s5367 = sshll.u32 %s5344, 4
          %s5368 = int_to_ptr.vmem [resolvable:$true] %s5367
          %5370 = dma.vmem_to_hbm [thread:$0]  %s5368, 128, %s5365, %s5341
        $region80: #{e2e_bertweet_forward.1} parent=67 // pred_fallthru
          _
      $region68: #{e2e_bertweet_forward.1} parent=5 // pred_fallthru
        _
      %p5371 = scmp.le.s32.totalorder 2, %s27
      // Predicated region
      $region81: #{e2e_bertweet_forward.1} parent=5 // pred_check
        %p5372 = pneg %p5371
      $region82: #{e2e_bertweet_forward.1} parent=5 // pred_check_branch
        %5374 = sbr.rel (%p5372) target = $region84
      $region83: #{e2e_bertweet_forward.1} parent=5 // pred_region
        %s5375 = ssub.s32 %s27, 2
        // Predicated region
        $region85: #{e2e_bertweet_forward.1} parent=83 // pred_check
          %p5376 = pneg %p318
        $region86: #{e2e_bertweet_forward.1} parent=83 // pred_check_branch
          %5378 = sbr.rel (%p5376) target = $region88
        $region87: #{e2e_bertweet_forward.1} parent=83 // pred_region
          %s5379 = sand.u32 %s303, 1
          %s5380 = scalar_lea.sflag [#allocation4], %s5379
          %s5381 = sand.u32 %s303, 1
          %s5382 = scalar_lea.vmem [#allocation5], %s5381
          %5383 = dma.done %s5380, 16
        $region88: #{e2e_bertweet_forward.1} parent=83 // pred_fallthru
          _
        // Predicated region
        $region89: #{e2e_bertweet_forward.1} parent=83 // pred_check
          %p5384 = pneg %p344
        $region90: #{e2e_bertweet_forward.1} parent=83 // pred_check_branch
          %5386 = sbr.rel (%p5384) target = $region92
        $region91: #{e2e_bertweet_forward.1} parent=83 // pred_region
          %s5387 = sand.u32 %s329, 1
          %s5388 = scalar_lea.sflag [#allocation7], %s5387
          %s5389 = sand.u32 %s329, 1
          %s5390 = smul.addr %s5389, 8
          %s5391 = scalar_lea.vmem [#allocation6], %s5390
          %5392 = dma.done %s5388, 128
        $region92: #{e2e_bertweet_forward.1} parent=83 // pred_fallthru
          _
      $region84: #{e2e_bertweet_forward.1} parent=5 // pred_fallthru
        _
    $region6: #{e2e_bertweet_forward.1} parent=1 // loop_footer
      %s31 = sadd.s32 1, %s27
    $region7: #{e2e_bertweet_forward.1} parent=1 // loop_footer_branch
      %26 = sbr.rel target = $region3
    $region8: #{e2e_bertweet_forward.1} parent=1 // loop_exit
      _
    %5393 = vsyncpa [#allocation3], 1
    %s5394 = scalar_lea.sflag [#allocation3], 1
    %5395 = vsyncpa %s5394, 1
    %5396 = vsyncpa [#allocation4], 1
    %s5397 = scalar_lea.sflag [#allocation4], 1
    %5398 = vsyncpa %s5397, 1
    %5399 = vsyncpa [#allocation7], 1
    %s5400 = scalar_lea.sflag [#allocation7], 1
    %5401 = vsyncpa %s5400, 1

</llo_original>
